<compile_context>
chip_gen: v5e
topology: v5e:2x2
jax: 0.10.0
libtpu: 0.0.40
codegen_flags: <defaults>
</compile_context>

<pallas_src>
import jax
import jax.numpy as jnp
from jax.experimental import pallas as pl
from jax.experimental.pallas import tpu as pltpu

_INV_SQRT2 = 0.7071067811865476
_LN_EPS = 1e-5

# Static encoder geometry (Conv1d(17,24,16,2,3) -> Conv1d(24,48,16,2,3) -> Proj(2688,1024)).
_C_IN, _L_IN = 17, 248
_C1, _C2 = 24, 48
_K, _STRIDE, _PAD = 16, 2, 3
_L1 = (_L_IN + 2 * _PAD - _K) // _STRIDE + 1      # 120
_L2 = (_L1 + 2 * _PAD - _K) // _STRIDE + 1        # 56
_EMB = _C2 * _L2                                  # 2688
_PROJ = 1024
_TK = 896                                         # fc1 reduction tile (2688 = 3*896)


# ----------------------------------------------------------------------------
# Kernel 1: conv1 + ReLU + conv2 + ReLU, fused, one batch element per grid step
# ----------------------------------------------------------------------------
def _conv_stack_kernel(tap_ref, w1q_ref, b1_ref, w2m_ref, b2_ref, out_ref, eo_scr):
    """tap_ref: (4, 128, 68) per-tap-quad views of the padded input for this batch.
               Rows 0..59 feed the even conv1 outputs, rows 64..123 the odd ones
               (pre-shifted in the wrapper so every MXU LHS slice starts at row 0).
    w1q: (4, 68, 24) conv1 taps grouped 4 at a time (k = 4u+w).
    w2m: (8, 48, 48) conv2 taps: rows 0:24 = tap 2j, rows 24:48 = tap 2j+1.
    out: (56, 48) conv2 output for this batch (NWC), bf16.
    eo_scr: (64, 48) zero-padded conv1 output split by parity (E | O in lanes)."""
    # conv1: 4 MXU passes of (128,68)@(68,24) with f32 accumulation.
    acc1 = jnp.zeros((128, _C1), jnp.float32)
    for u in range(4):
        acc1 += jnp.dot(tap_ref[u], w1q_ref[u], preferred_element_type=jnp.float32)
    y1 = jnp.maximum(acc1 + b1_ref[...], 0.0)
    y1_even = y1[0:_L1 // 2]             # conv1 outputs 0,2,...,118 (rows 0..59)
    y1_odd = y1[64:64 + _L1 // 2]        # conv1 outputs 1,3,...,119 (rows 64..123)

    # Zero-padded (pad=3) conv2 input, split by parity of the padded sequence:
    #   lanes  0:24  E[m] = y1pad[2m]   -> rows 2..61 hold y1_odd
    #   lanes 24:48  O[m] = y1pad[2m+1] -> rows 1..60 hold y1_even
    eo_scr[...] = jnp.zeros_like(eo_scr)
    eo_scr[pl.ds(2, _L1 // 2), pl.ds(0, _C1)] = y1_odd
    eo_scr[pl.ds(1, _L1 // 2), pl.ds(_C1, _C1)] = y1_even

    # conv2: y2[lo] = sum_j [E[lo+j] | O[lo+j]] @ [W2_{2j} ; W2_{2j+1}]  (8 dots).
    acc2 = jnp.zeros((_L2, _C2), jnp.float32)
    for j in range(8):
        acc2 += jnp.dot(eo_scr[pl.ds(j, _L2), :], w2m_ref[j],
                        preferred_element_type=jnp.float32)
    # bf16 output halves the inter-kernel activation traffic.
    out_ref[...] = jnp.maximum(acc2 + b2_ref[...], 0.0).astype(out_ref.dtype)


# ----------------------------------------------------------------------------
# Kernel 2: ProjectLayer = fc1 -> GELU -> fc2 -> ResidualAdd -> LayerNorm
# (fc1 reduction tiled over the grid; fc2_w fetched with an overlapped manual DMA)
# ----------------------------------------------------------------------------
def _project_kernel(x_ref, w1_ref, b1_ref, w2_hbm, b2_ref, g_ref, be_ref,
                    o_ref, h_acc, w2_vmem, w2_sem):
    k = pl.program_id(0)

    @pl.when(k == 0)
    def _init():
        h_acc[...] = jnp.zeros_like(h_acc)
        # Start fetching fc2_w now; it overlaps all fc1 grid steps instead of being
        # serialized in the iteration-0 pipeline prologue.
        pltpu.make_async_copy(w2_hbm, w2_vmem, w2_sem).start()

    # Partial fc1: bf16 x bf16 MXU pass with f32 accumulation (x is already bf16).
    h_acc[...] += jnp.dot(x_ref[...], w1_ref[...],
                          preferred_element_type=jnp.float32)

    @pl.when(k == pl.num_programs(0) - 1)
    def _finalize():
        pltpu.make_async_copy(w2_hbm, w2_vmem, w2_sem).wait()
        h = h_acc[...] + b1_ref[...]                           # fc1 output (f32)
        g = 0.5 * h * (1.0 + jax.lax.erf(h * _INV_SQRT2))      # exact GELU (f32)
        # TODO(synk): nn.Dropout inside ResidualAdd.fn treated as identity (inference).
        r = jnp.dot(g.astype(jnp.bfloat16), w2_vmem[...],
                    preferred_element_type=jnp.float32) + b2_ref[...]
        y = h + r                                              # ResidualAdd: x + fn(x)
        mu = jnp.mean(y, axis=-1, keepdims=True)
        var = jnp.mean(jnp.square(y - mu), axis=-1, keepdims=True)
        yn = (y - mu) * jax.lax.rsqrt(var + _LN_EPS)           # LayerNorm (f32)
        o_ref[...] = yn * g_ref[...] + be_ref[...]


# ----------------------------------------------------------------------------
# Wrappers
# ----------------------------------------------------------------------------
def conv_stack(packed, x):
    """x: (B, 17, 248) NCW float32 -> (B, 56, 48) bfloat16 conv2 output (NWC)."""
    B = x.shape[0]
    # One-time tiny layout prep on the ~33 KB input (one XLA fusion): NCW->NWC,
    # zero-pad by the conv padding, then build per-tap-quad, per-phase views whose
    # rows already carry the tap offset (so in-kernel MXU LHS slices are aligned).
    x_nwc = jnp.transpose(x, (0, 2, 1))                        # (B, 248, 17)
    xp = jnp.pad(x_nwc, ((0, 0), (_PAD, _PAD), (0, 0)))        # (B, 254, 17)
    zero = jnp.zeros((B, 4, 4 * _C_IN), jnp.float32)
    taps = []
    for u in range(4):
        ev = xp[:, 4 * u:4 * u + 240, :].reshape(B, 60, 4 * _C_IN)       # even phase
        od = xp[:, 4 * u + 2:4 * u + 242, :].reshape(B, 60, 4 * _C_IN)   # odd phase
        taps.append(jnp.concatenate([ev, zero, od, zero], axis=1))       # (B, 128, 68)
    taps = jnp.stack(taps, axis=1)                             # (B, 4, 128, 68)

    return pl.pallas_call(
        _conv_stack_kernel,
        out_shape=jax.ShapeDtypeStruct((B, _L2, _C2), jnp.bfloat16),
        grid_spec=pltpu.PrefetchScalarGridSpec(
            num_scalar_prefetch=0,
            grid=(B,),
            in_specs=[
                pl.BlockSpec((None, 4, 128, 4 * _C_IN), lambda b: (b, 0, 0, 0)),
                pl.BlockSpec((4, 4 * _C_IN, _C1), lambda b: (0, 0, 0)),
                pl.BlockSpec((1, _C1), lambda b: (0, 0)),
                pl.BlockSpec((8, 2 * _C1, _C2), lambda b: (0, 0, 0)),
                pl.BlockSpec((1, _C2), lambda b: (0, 0)),
            ],
            out_specs=pl.BlockSpec((None, _L2, _C2), lambda b: (b, 0, 0)),
            scratch_shapes=[pltpu.VMEM((64, _C2), jnp.float32)],
        ),
        compiler_params=pltpu.CompilerParams(
            dimension_semantics=("parallel",),                 # shard batch over TCs
        ),
    )(taps, packed["w1q"], packed["b1"], packed["w2m"], packed["b2"])


def project(packed, x_flat):
    """x_flat: (B, 2688) bf16 position-major flatten -> (B, 1024) f32."""
    B = x_flat.shape[0]
    kt = _EMB // _TK                                           # 3
    grid_spec = pltpu.PrefetchScalarGridSpec(
        num_scalar_prefetch=0,
        grid=(kt,),
        in_specs=[
            pl.BlockSpec((B, _TK), lambda k: (0, k)),          # activation chunk (bf16)
            pl.BlockSpec((_TK, _PROJ), lambda k: (k, 0)),      # fc1_w chunk (bf16)
            pl.BlockSpec((1, _PROJ), lambda k: (0, 0)),        # fc1_b
            pl.BlockSpec(memory_space=pl.ANY),                 # fc2_w stays in HBM
            pl.BlockSpec((1, _PROJ), lambda k: (0, 0)),        # fc2_b
            pl.BlockSpec((1, _PROJ), lambda k: (0, 0)),        # ln gamma
            pl.BlockSpec((1, _PROJ), lambda k: (0, 0)),        # ln beta
        ],
        out_specs=pl.BlockSpec((B, _PROJ), lambda k: (0, 0)),
        scratch_shapes=[pltpu.VMEM((B, _PROJ), jnp.float32),       # fc1 accumulator
                        pltpu.VMEM((_PROJ, _PROJ), jnp.bfloat16),  # fc2_w landing pad
                        pltpu.SemaphoreType.DMA(())],
    )
    return pl.pallas_call(
        _project_kernel,
        out_shape=jax.ShapeDtypeStruct((B, _PROJ), jnp.float32),
        grid_spec=grid_spec,
        compiler_params=pltpu.CompilerParams(
            dimension_semantics=("arbitrary",),                # K is a reduction axis
            # ~6 MiB actually resident (2x-buffered 1.75 MiB fc1 tiles + 2 MiB fc2_w
            # scratch + accumulator/params); 32 MiB is ample headroom on all chips.
            vmem_limit_bytes=32 * 1024 * 1024,
        ),
    )(x_flat, packed["fc1_w"], packed["fc1_b"], packed["fc2_w"],
      packed["fc2_b"], packed["ln_g"], packed["ln_b"])


@jax.jit
def encoder_forward(packed, x):
    conv_out = conv_stack(packed, x)                           # (B, 56, 48) bf16
    x_flat = conv_out.reshape(x.shape[0], _EMB)                # position-major flatten
    return project(packed, x_flat)                             # (B, 1024)


# ----------------------------------------------------------------------------
# Parameters (PyTorch layout) + one-time repack into kernel layouts
# ----------------------------------------------------------------------------
def _uniform(key, shape, fan_in):
    bound = fan_in ** -0.5
    return jax.random.uniform(key, shape, jnp.float32, -bound, bound)


def init_params(key, input_channels=_C_IN, latent_dim=512):
    ks = jax.random.split(key, 8)
    proj = 2 * latent_dim                                      # 1024
    return {
        "conv1_w": _uniform(ks[0], (_C1, input_channels, _K), input_channels * _K),
        "conv1_b": _uniform(ks[1], (_C1,), input_channels * _K),
        "conv2_w": _uniform(ks[2], (_C2, _C1, _K), _C1 * _K),
        "conv2_b": _uniform(ks[3], (_C2,), _C1 * _K),
        "fc1_w": _uniform(ks[4], (_EMB, proj), _EMB),          # (in, out), torch (C,W) flatten rows
        "fc1_b": _uniform(ks[5], (proj,), _EMB),
        "fc2_w": _uniform(ks[6], (proj, proj), proj),
        "fc2_b": _uniform(ks[7], (proj,), proj),
        "ln_g": jnp.ones((proj,), jnp.float32),
        "ln_b": jnp.zeros((proj,), jnp.float32),
        "logit_scale": jnp.asarray(jnp.log(1.0 / 0.07), jnp.float32),  # unused in forward
    }


def pack_params(p):
    """One-time repack: per-tap conv weights (conv2 taps stacked even|odd along K),
    fc1_w row permutation folding the NWC flatten into the weight, bf16 fc weights."""
    w1q = p["conv1_w"].transpose(2, 1, 0).reshape(4, 4 * _C_IN, _C1)   # [u, w*17+c, co]
    w2taps = p["conv2_w"].transpose(2, 1, 0)                           # (16, 24, 48)
    w2m = jnp.concatenate([w2taps[0::2], w2taps[1::2]], axis=1)        # (8, 48, 48)
    fc1 = p["fc1_w"].reshape(_C2, _L2, _PROJ).transpose(1, 0, 2).reshape(_EMB, _PROJ)
    return {
        "w1q": w1q.astype(jnp.float32),
        "b1": p["conv1_b"].reshape(1, _C1).astype(jnp.float32),
        "w2m": w2m.astype(jnp.float32),
        "b2": p["conv2_b"].reshape(1, _C2).astype(jnp.float32),
        "fc1_w": fc1.astype(jnp.bfloat16),
        "fc1_b": p["fc1_b"].reshape(1, _PROJ).astype(jnp.float32),
        "fc2_w": p["fc2_w"].astype(jnp.bfloat16),
        "fc2_b": p["fc2_b"].reshape(1, _PROJ).astype(jnp.float32),
        "ln_g": p["ln_g"].reshape(1, _PROJ).astype(jnp.float32),
        "ln_b": p["ln_b"].reshape(1, _PROJ).astype(jnp.float32),
    }


# ----------------------------------------------------------------------------
# Plain-JAX reference (for a sanity check only)
# ----------------------------------------------------------------------------
def _reference_conv_stack(p, x):
    hi = jax.lax.Precision.HIGHEST

    def conv_relu(h, w, b):
        y = jax.lax.conv_general_dilated(
            h, w, window_strides=(_STRIDE,), padding=[(_PAD, _PAD)],
            dimension_numbers=("NCH", "OIH", "NCH"), precision=hi)
        return jnp.maximum(y + b[None, :, None], 0.0)

    h = conv_relu(x, p["conv1_w"], p["conv1_b"])
    return conv_relu(h, p["conv2_w"], p["conv2_b"])             # (B, 48, 56)


def _reference_forward(p, x):
    hi = jax.lax.Precision.HIGHEST
    h = _reference_conv_stack(p, x)
    flat = h.reshape(h.shape[0], -1)                            # channel-major, like torch
    hh = jnp.matmul(flat, p["fc1_w"], precision=hi) + p["fc1_b"]
    g = 0.5 * hh * (1.0 + jax.lax.erf(hh * _INV_SQRT2))
    r = jnp.matmul(g, p["fc2_w"], precision=hi) + p["fc2_b"]
    y = hh + r
    mu = y.mean(-1, keepdims=True)
    var = jnp.square(y - mu).mean(-1, keepdims=True)
    return (y - mu) * jax.lax.rsqrt(var + _LN_EPS) * p["ln_g"] + p["ln_b"]


if __name__ == "__main__":
    key = jax.random.PRNGKey(0)
    kx, kp = jax.random.split(key)
    B = 2
    x = jax.random.normal(kx, (B, _C_IN, _L_IN), jnp.float32)
    params = init_params(kp)
    packed = pack_params(params)

    y = encoder_forward(packed, x)
    jax.block_until_ready(y)
    assert y.shape == (B, _PROJ) and bool(jnp.all(jnp.isfinite(y)))

    # Sanity checks. Conv path computes in f32 but emits bf16 (tol covers the output
    # rounding); a parity/off-by-one error at sequence boundaries would show up as an
    # O(1) max-abs error, far above the tolerance, so this check also covers edges.
    conv_pallas = jax.jit(conv_stack)(packed, x)                # (B, 56, 48) bf16
    conv_ref = _reference_conv_stack(params, x)                 # (B, 48, 56)
    conv_err = float(jnp.max(jnp.abs(
        conv_pallas.astype(jnp.float32).transpose(0, 2, 1) - conv_ref)))
    out_err = float(jnp.max(jnp.abs(y - _reference_forward(params, x))))
    assert conv_err < 3e-2, f"conv mismatch: {conv_err}"
    assert out_err < 1.5e-1, f"projection mismatch: {out_err}"

    print("KERNEL_OK")
</pallas_src>

<mosaic_0001>
module attributes {stable_mosaic.version = 11 : i64} {
  func.func @_conv_stack_kernel(%arg0: i32, %arg1: memref<1x4x128x68xf32, #tpu.memory_space<vmem>>, %arg2: memref<4x68x24xf32, #tpu.memory_space<vmem>>, %arg3: memref<1x24xf32, #tpu.memory_space<vmem>>, %arg4: memref<8x48x48xf32, #tpu.memory_space<vmem>>, %arg5: memref<1x48xf32, #tpu.memory_space<vmem>>, %arg6: memref<1x56x48xbf16, #tpu.memory_space<vmem>>, %arg7: memref<64x48xf32, #tpu.memory_space<vmem>>) attributes {dimension_semantics = [#tpu.dimension_semantics<parallel>], iteration_bounds = array<i64: 2>, scalar_prefetch = 0 : i64, scratch_operands = 1 : i64, tpu.core_type = #tpu.core_type<tc>, window_params = [{transform_indices = @transform_0, window_bounds = array<i64: 1, 4, 128, 68>}, {pipeline_mode = #tpu.pipeline_mode<synchronous>, transform_indices = @transform_1, window_bounds = array<i64: 4, 68, 24>}, {pipeline_mode = #tpu.pipeline_mode<synchronous>, transform_indices = @transform_2, window_bounds = array<i64: 1, 24>}, {pipeline_mode = #tpu.pipeline_mode<synchronous>, transform_indices = @transform_3, window_bounds = array<i64: 8, 48, 48>}, {pipeline_mode = #tpu.pipeline_mode<synchronous>, transform_indices = @transform_4, window_bounds = array<i64: 1, 48>}, {transform_indices = @transform_5, window_bounds = array<i64: 1, 56, 48>}]} {
    %cst = arith.constant 0.000000e+00 : f32
    %0 = vector.broadcast %cst : f32 to vector<128x24xf32>
    %c0 = arith.constant 0 : index
    %c0_0 = arith.constant 0 : index
    %c0_1 = arith.constant 0 : index
    %c0_2 = arith.constant 0 : index
    %1 = vector.load %arg1[%c0, %c0_0, %c0_1, %c0_2] : memref<1x4x128x68xf32, #tpu.memory_space<vmem>>, vector<1x1x128x68xf32>
    %2 = vector.shape_cast %1 : vector<1x1x128x68xf32> to vector<128x68xf32>
    %c0_3 = arith.constant 0 : index
    %c0_4 = arith.constant 0 : index
    %c0_5 = arith.constant 0 : index
    %3 = vector.load %arg2[%c0_3, %c0_4, %c0_5] : memref<4x68x24xf32, #tpu.memory_space<vmem>>, vector<1x68x24xf32>
    %4 = vector.shape_cast %3 : vector<1x68x24xf32> to vector<68x24xf32>
    %cst_6 = arith.constant dense<0.000000e+00> : vector<128x24xf32>
    %5 = tpu.matmul %2, %4, %cst_6 {dimension_numbers = #tpu.dot_dimension_numbers<[1], [0], [0], [1], [0, 0, 1, 1], [], []>} : vector<128x68xf32>, vector<68x24xf32>, vector<128x24xf32> -> vector<128x24xf32>
    %6 = arith.addf %0, %5 : vector<128x24xf32>
    %c0_7 = arith.constant 0 : index
    %c1 = arith.constant 1 : index
    %c0_8 = arith.constant 0 : index
    %c0_9 = arith.constant 0 : index
    %7 = vector.load %arg1[%c0_7, %c1, %c0_8, %c0_9] : memref<1x4x128x68xf32, #tpu.memory_space<vmem>>, vector<1x1x128x68xf32>
    %8 = vector.shape_cast %7 : vector<1x1x128x68xf32> to vector<128x68xf32>
    %c1_10 = arith.constant 1 : index
    %c0_11 = arith.constant 0 : index
    %c0_12 = arith.constant 0 : index
    %9 = vector.load %arg2[%c1_10, %c0_11, %c0_12] : memref<4x68x24xf32, #tpu.memory_space<vmem>>, vector<1x68x24xf32>
    %10 = vector.shape_cast %9 : vector<1x68x24xf32> to vector<68x24xf32>
    %cst_13 = arith.constant dense<0.000000e+00> : vector<128x24xf32>
    %11 = tpu.matmul %8, %10, %cst_13 {dimension_numbers = #tpu.dot_dimension_numbers<[1], [0], [0], [1], [0, 0, 1, 1], [], []>} : vector<128x68xf32>, vector<68x24xf32>, vector<128x24xf32> -> vector<128x24xf32>
    %12 = arith.addf %6, %11 : vector<128x24xf32>
    %c0_14 = arith.constant 0 : index
    %c2 = arith.constant 2 : index
    %c0_15 = arith.constant 0 : index
    %c0_16 = arith.constant 0 : index
    %13 = vector.load %arg1[%c0_14, %c2, %c0_15, %c0_16] : memref<1x4x128x68xf32, #tpu.memory_space<vmem>>, vector<1x1x128x68xf32>
    %14 = vector.shape_cast %13 : vector<1x1x128x68xf32> to vector<128x68xf32>
    %c2_17 = arith.constant 2 : index
    %c0_18 = arith.constant 0 : index
    %c0_19 = arith.constant 0 : index
    %15 = vector.load %arg2[%c2_17, %c0_18, %c0_19] : memref<4x68x24xf32, #tpu.memory_space<vmem>>, vector<1x68x24xf32>
    %16 = vector.shape_cast %15 : vector<1x68x24xf32> to vector<68x24xf32>
    %cst_20 = arith.constant dense<0.000000e+00> : vector<128x24xf32>
    %17 = tpu.matmul %14, %16, %cst_20 {dimension_numbers = #tpu.dot_dimension_numbers<[1], [0], [0], [1], [0, 0, 1, 1], [], []>} : vector<128x68xf32>, vector<68x24xf32>, vector<128x24xf32> -> vector<128x24xf32>
    %18 = arith.addf %12, %17 : vector<128x24xf32>
    %c0_21 = arith.constant 0 : index
    %c3 = arith.constant 3 : index
    %c0_22 = arith.constant 0 : index
    %c0_23 = arith.constant 0 : index
    %19 = vector.load %arg1[%c0_21, %c3, %c0_22, %c0_23] : memref<1x4x128x68xf32, #tpu.memory_space<vmem>>, vector<1x1x128x68xf32>
    %20 = vector.shape_cast %19 : vector<1x1x128x68xf32> to vector<128x68xf32>
    %c3_24 = arith.constant 3 : index
    %c0_25 = arith.constant 0 : index
    %c0_26 = arith.constant 0 : index
    %21 = vector.load %arg2[%c3_24, %c0_25, %c0_26] : memref<4x68x24xf32, #tpu.memory_space<vmem>>, vector<1x68x24xf32>
    %22 = vector.shape_cast %21 : vector<1x68x24xf32> to vector<68x24xf32>
    %cst_27 = arith.constant dense<0.000000e+00> : vector<128x24xf32>
    %23 = tpu.matmul %20, %22, %cst_27 {dimension_numbers = #tpu.dot_dimension_numbers<[1], [0], [0], [1], [0, 0, 1, 1], [], []>} : vector<128x68xf32>, vector<68x24xf32>, vector<128x24xf32> -> vector<128x24xf32>
    %24 = arith.addf %18, %23 : vector<128x24xf32>
    %c0_28 = arith.constant 0 : index
    %c0_29 = arith.constant 0 : index
    %25 = vector.load %arg3[%c0_28, %c0_29] : memref<1x24xf32, #tpu.memory_space<vmem>>, vector<1x24xf32>
    %26 = vector.broadcast %25 : vector<1x24xf32> to vector<128x24xf32>
    %27 = arith.addf %24, %26 : vector<128x24xf32>
    %cst_30 = arith.constant 0.000000e+00 : f32
    %28 = vector.broadcast %cst_30 : f32 to vector<128x24xf32>
    %29 = arith.maximumf %27, %28 : vector<128x24xf32>
    %30 = vector.extract_strided_slice %29 {offsets = [0, 0], sizes = [60, 24], strides = [1, 1]} : vector<128x24xf32> to vector<60x24xf32>
    %31 = vector.extract_strided_slice %29 {offsets = [64, 0], sizes = [60, 24], strides = [1, 1]} : vector<128x24xf32> to vector<60x24xf32>
    %cst_31 = arith.constant 0.000000e+00 : f32
    %32 = vector.broadcast %cst_31 : f32 to vector<64x48xf32>
    %c0_32 = arith.constant 0 : index
    %c0_33 = arith.constant 0 : index
    %33 = vector.load %arg7[%c0_32, %c0_33] : memref<64x48xf32, #tpu.memory_space<vmem>>, vector<64x48xf32>
    tpu.vector_store %arg7[%c0_32, %c0_33], %32 {strides = array<i32>} : memref<64x48xf32, #tpu.memory_space<vmem>>, vector<64x48xf32>,
    %c2_34 = arith.constant 2 : index
    %c0_35 = arith.constant 0 : index
    %34 = vector.load %arg7[%c2_34, %c0_35] : memref<64x48xf32, #tpu.memory_space<vmem>>, vector<60x24xf32>
    tpu.vector_store %arg7[%c2_34, %c0_35], %31 {strides = array<i32>} : memref<64x48xf32, #tpu.memory_space<vmem>>, vector<60x24xf32>,
    %c1_36 = arith.constant 1 : index
    %c24 = arith.constant 24 : index
    %35 = vector.load %arg7[%c1_36, %c24] : memref<64x48xf32, #tpu.memory_space<vmem>>, vector<60x24xf32>
    tpu.vector_store %arg7[%c1_36, %c24], %30 {strides = array<i32>} : memref<64x48xf32, #tpu.memory_space<vmem>>, vector<60x24xf32>,
    %cst_37 = arith.constant 0.000000e+00 : f32
    %36 = vector.broadcast %cst_37 : f32 to vector<56x48xf32>
    %c0_38 = arith.constant 0 : index
    %c0_39 = arith.constant 0 : index
    %37 = vector.load %arg7[%c0_38, %c0_39] : memref<64x48xf32, #tpu.memory_space<vmem>>, vector<56x48xf32>
    %c0_40 = arith.constant 0 : index
    %c0_41 = arith.constant 0 : index
    %c0_42 = arith.constant 0 : index
    %38 = vector.load %arg4[%c0_40, %c0_41, %c0_42] : memref<8x48x48xf32, #tpu.memory_space<vmem>>, vector<1x48x48xf32>
    %39 = vector.shape_cast %38 : vector<1x48x48xf32> to vector<48x48xf32>
    %cst_43 = arith.constant dense<0.000000e+00> : vector<56x48xf32>
    %40 = tpu.matmul %37, %39, %cst_43 {dimension_numbers = #tpu.dot_dimension_numbers<[1], [0], [0], [1], [0, 0, 1, 1], [], []>} : vector<56x48xf32>, vector<48x48xf32>, vector<56x48xf32> -> vector<56x48xf32>
    %41 = arith.addf %36, %40 : vector<56x48xf32>
    %c1_44 = arith.constant 1 : index
    %c0_45 = arith.constant 0 : index
    %42 = vector.load %arg7[%c1_44, %c0_45] : memref<64x48xf32, #tpu.memory_space<vmem>>, vector<56x48xf32>
    %c1_46 = arith.constant 1 : index
    %c0_47 = arith.constant 0 : index
    %c0_48 = arith.constant 0 : index
    %43 = vector.load %arg4[%c1_46, %c0_47, %c0_48] : memref<8x48x48xf32, #tpu.memory_space<vmem>>, vector<1x48x48xf32>
    %44 = vector.shape_cast %43 : vector<1x48x48xf32> to vector<48x48xf32>
    %cst_49 = arith.constant dense<0.000000e+00> : vector<56x48xf32>
    %45 = tpu.matmul %42, %44, %cst_49 {dimension_numbers = #tpu.dot_dimension_numbers<[1], [0], [0], [1], [0, 0, 1, 1], [], []>} : vector<56x48xf32>, vector<48x48xf32>, vector<56x48xf32> -> vector<56x48xf32>
    %46 = arith.addf %41, %45 : vector<56x48xf32>
    %c2_50 = arith.constant 2 : index
    %c0_51 = arith.constant 0 : index
    %47 = vector.load %arg7[%c2_50, %c0_51] : memref<64x48xf32, #tpu.memory_space<vmem>>, vector<56x48xf32>
    %c2_52 = arith.constant 2 : index
    %c0_53 = arith.constant 0 : index
    %c0_54 = arith.constant 0 : index
    %48 = vector.load %arg4[%c2_52, %c0_53, %c0_54] : memref<8x48x48xf32, #tpu.memory_space<vmem>>, vector<1x48x48xf32>
    %49 = vector.shape_cast %48 : vector<1x48x48xf32> to vector<48x48xf32>
    %cst_55 = arith.constant dense<0.000000e+00> : vector<56x48xf32>
    %50 = tpu.matmul %47, %49, %cst_55 {dimension_numbers = #tpu.dot_dimension_numbers<[1], [0], [0], [1], [0, 0, 1, 1], [], []>} : vector<56x48xf32>, vector<48x48xf32>, vector<56x48xf32> -> vector<56x48xf32>
    %51 = arith.addf %46, %50 : vector<56x48xf32>
    %c3_56 = arith.constant 3 : index
    %c0_57 = arith.constant 0 : index
    %52 = vector.load %arg7[%c3_56, %c0_57] : memref<64x48xf32, #tpu.memory_space<vmem>>, vector<56x48xf32>
    %c3_58 = arith.constant 3 : index
    %c0_59 = arith.constant 0 : index
    %c0_60 = arith.constant 0 : index
    %53 = vector.load %arg4[%c3_58, %c0_59, %c0_60] : memref<8x48x48xf32, #tpu.memory_space<vmem>>, vector<1x48x48xf32>
    %54 = vector.shape_cast %53 : vector<1x48x48xf32> to vector<48x48xf32>
    %cst_61 = arith.constant dense<0.000000e+00> : vector<56x48xf32>
    %55 = tpu.matmul %52, %54, %cst_61 {dimension_numbers = #tpu.dot_dimension_numbers<[1], [0], [0], [1], [0, 0, 1, 1], [], []>} : vector<56x48xf32>, vector<48x48xf32>, vector<56x48xf32> -> vector<56x48xf32>
    %56 = arith.addf %51, %55 : vector<56x48xf32>
    %c4 = arith.constant 4 : index
    %c0_62 = arith.constant 0 : index
    %57 = vector.load %arg7[%c4, %c0_62] : memref<64x48xf32, #tpu.memory_space<vmem>>, vector<56x48xf32>
    %c4_63 = arith.constant 4 : index
    %c0_64 = arith.constant 0 : index
    %c0_65 = arith.constant 0 : index
    %58 = vector.load %arg4[%c4_63, %c0_64, %c0_65] : memref<8x48x48xf32, #tpu.memory_space<vmem>>, vector<1x48x48xf32>
    %59 = vector.shape_cast %58 : vector<1x48x48xf32> to vector<48x48xf32>
    %cst_66 = arith.constant dense<0.000000e+00> : vector<56x48xf32>
    %60 = tpu.matmul %57, %59, %cst_66 {dimension_numbers = #tpu.dot_dimension_numbers<[1], [0], [0], [1], [0, 0, 1, 1], [], []>} : vector<56x48xf32>, vector<48x48xf32>, vector<56x48xf32> -> vector<56x48xf32>
    %61 = arith.addf %56, %60 : vector<56x48xf32>
    %c5 = arith.constant 5 : index
    %c0_67 = arith.constant 0 : index
    %62 = vector.load %arg7[%c5, %c0_67] : memref<64x48xf32, #tpu.memory_space<vmem>>, vector<56x48xf32>
    %c5_68 = arith.constant 5 : index
    %c0_69 = arith.constant 0 : index
    %c0_70 = arith.constant 0 : index
    %63 = vector.load %arg4[%c5_68, %c0_69, %c0_70] : memref<8x48x48xf32, #tpu.memory_space<vmem>>, vector<1x48x48xf32>
    %64 = vector.shape_cast %63 : vector<1x48x48xf32> to vector<48x48xf32>
    %cst_71 = arith.constant dense<0.000000e+00> : vector<56x48xf32>
    %65 = tpu.matmul %62, %64, %cst_71 {dimension_numbers = #tpu.dot_dimension_numbers<[1], [0], [0], [1], [0, 0, 1, 1], [], []>} : vector<56x48xf32>, vector<48x48xf32>, vector<56x48xf32> -> vector<56x48xf32>
    %66 = arith.addf %61, %65 : vector<56x48xf32>
    %c6 = arith.constant 6 : index
    %c0_72 = arith.constant 0 : index
    %67 = vector.load %arg7[%c6, %c0_72] : memref<64x48xf32, #tpu.memory_space<vmem>>, vector<56x48xf32>
    %c6_73 = arith.constant 6 : index
    %c0_74 = arith.constant 0 : index
    %c0_75 = arith.constant 0 : index
    %68 = vector.load %arg4[%c6_73, %c0_74, %c0_75] : memref<8x48x48xf32, #tpu.memory_space<vmem>>, vector<1x48x48xf32>
    %69 = vector.shape_cast %68 : vector<1x48x48xf32> to vector<48x48xf32>
    %cst_76 = arith.constant dense<0.000000e+00> : vector<56x48xf32>
    %70 = tpu.matmul %67, %69, %cst_76 {dimension_numbers = #tpu.dot_dimension_numbers<[1], [0], [0], [1], [0, 0, 1, 1], [], []>} : vector<56x48xf32>, vector<48x48xf32>, vector<56x48xf32> -> vector<56x48xf32>
    %71 = arith.addf %66, %70 : vector<56x48xf32>
    %c7 = arith.constant 7 : index
    %c0_77 = arith.constant 0 : index
    %72 = vector.load %arg7[%c7, %c0_77] : memref<64x48xf32, #tpu.memory_space<vmem>>, vector<56x48xf32>
    %c7_78 = arith.constant 7 : index
    %c0_79 = arith.constant 0 : index
    %c0_80 = arith.constant 0 : index
    %73 = vector.load %arg4[%c7_78, %c0_79, %c0_80] : memref<8x48x48xf32, #tpu.memory_space<vmem>>, vector<1x48x48xf32>
    %74 = vector.shape_cast %73 : vector<1x48x48xf32> to vector<48x48xf32>
    %cst_81 = arith.constant dense<0.000000e+00> : vector<56x48xf32>
    %75 = tpu.matmul %72, %74, %cst_81 {dimension_numbers = #tpu.dot_dimension_numbers<[1], [0], [0], [1], [0, 0, 1, 1], [], []>} : vector<56x48xf32>, vector<48x48xf32>, vector<56x48xf32> -> vector<56x48xf32>
    %76 = arith.addf %71, %75 : vector<56x48xf32>
    %c0_82 = arith.constant 0 : index
    %c0_83 = arith.constant 0 : index
    %77 = vector.load %arg5[%c0_82, %c0_83] : memref<1x48xf32, #tpu.memory_space<vmem>>, vector<1x48xf32>
    %78 = vector.broadcast %77 : vector<1x48xf32> to vector<56x48xf32>
    %79 = arith.addf %76, %78 : vector<56x48xf32>
    %cst_84 = arith.constant 0.000000e+00 : f32
    %80 = vector.broadcast %cst_84 : f32 to vector<56x48xf32>
    %81 = arith.maximumf %79, %80 : vector<56x48xf32>
    %82 = arith.truncf %81 : vector<56x48xf32> to vector<56x48xbf16>
    %c0_85 = arith.constant 0 : index
    %c0_86 = arith.constant 0 : index
    %c0_87 = arith.constant 0 : index
    %83 = vector.load %arg6[%c0_85, %c0_86, %c0_87] : memref<1x56x48xbf16, #tpu.memory_space<vmem>>, vector<1x56x48xbf16>
    %84 = vector.shape_cast %83 : vector<1x56x48xbf16> to vector<56x48xbf16>
    %85 = vector.shape_cast %82 : vector<56x48xbf16> to vector<1x56x48xbf16>
    tpu.vector_store %arg6[%c0_85, %c0_86, %c0_87], %85 {strides = array<i32>} : memref<1x56x48xbf16, #tpu.memory_space<vmem>>, vector<1x56x48xbf16>,
    return
  }
  func.func @transform_0(%arg0: i32) -> (i32, i32, i32, i32) {
    %c0_i32 = arith.constant 0 : i32
    %c0_i32_0 = arith.constant 0 : i32
    %c0_i32_1 = arith.constant 0 : i32
    %c0_i32_2 = arith.constant 0 : i32
    return %arg0, %c0_i32, %c0_i32_0, %c0_i32_1 : i32, i32, i32, i32
  }
  func.func @transform_1(%arg0: i32) -> (i32, i32, i32) {
    %c0_i32 = arith.constant 0 : i32
    %c0_i32_0 = arith.constant 0 : i32
    %c0_i32_1 = arith.constant 0 : i32
    %c0_i32_2 = arith.constant 0 : i32
    return %c0_i32, %c0_i32_0, %c0_i32_1 : i32, i32, i32
  }
  func.func @transform_2(%arg0: i32) -> (i32, i32) {
    %c0_i32 = arith.constant 0 : i32
    %c0_i32_0 = arith.constant 0 : i32
    %c0_i32_1 = arith.constant 0 : i32
    return %c0_i32, %c0_i32_0 : i32, i32
  }
  func.func @transform_3(%arg0: i32) -> (i32, i32, i32) {
    %c0_i32 = arith.constant 0 : i32
    %c0_i32_0 = arith.constant 0 : i32
    %c0_i32_1 = arith.constant 0 : i32
    %c0_i32_2 = arith.constant 0 : i32
    return %c0_i32, %c0_i32_0, %c0_i32_1 : i32, i32, i32
  }
  func.func @transform_4(%arg0: i32) -> (i32, i32) {
    %c0_i32 = arith.constant 0 : i32
    %c0_i32_0 = arith.constant 0 : i32
    %c0_i32_1 = arith.constant 0 : i32
    return %c0_i32, %c0_i32_0 : i32, i32
  }
  func.func @transform_5(%arg0: i32) -> (i32, i32, i32) {
    %c0_i32 = arith.constant 0 : i32
    %c0_i32_0 = arith.constant 0 : i32
    %c0_i32_1 = arith.constant 0 : i32
    return %arg0, %c0_i32, %c0_i32_0 : i32, i32, i32
  }
}

module attributes {stable_mosaic.version = 11 : i64} {
  func.func @_project_kernel(%arg0: i32, %arg1: memref<2x896xbf16, #tpu.memory_space<vmem>>, %arg2: memref<896x1024xbf16, #tpu.memory_space<vmem>>, %arg3: memref<1x1024xf32, #tpu.memory_space<vmem>>, %arg4: memref<1024x1024xbf16, #tpu.memory_space<any>>, %arg5: memref<1x1024xf32, #tpu.memory_space<vmem>>, %arg6: memref<1x1024xf32, #tpu.memory_space<vmem>>, %arg7: memref<1x1024xf32, #tpu.memory_space<vmem>>, %arg8: memref<2x1024xf32, #tpu.memory_space<vmem>>, %arg9: memref<2x1024xf32, #tpu.memory_space<vmem>>, %arg10: memref<1024x1024xbf16, #tpu.memory_space<vmem>>, %arg11: memref<!tpu.dma_semaphore, #tpu.memory_space<semaphore_mem>>) attributes {dimension_semantics = [#tpu.dimension_semantics<arbitrary>], iteration_bounds = array<i64: 3>, scalar_prefetch = 0 : i64, scratch_operands = 3 : i64, tpu.core_type = #tpu.core_type<tc>, window_params = [{transform_indices = @transform_0, window_bounds = array<i64: 2, 896>}, {transform_indices = @transform_1, window_bounds = array<i64: 896, 1024>}, {pipeline_mode = #tpu.pipeline_mode<synchronous>, transform_indices = @transform_2, window_bounds = array<i64: 1, 1024>}, {}, {pipeline_mode = #tpu.pipeline_mode<synchronous>, transform_indices = @transform_4, window_bounds = array<i64: 1, 1024>}, {pipeline_mode = #tpu.pipeline_mode<synchronous>, transform_indices = @transform_5, window_bounds = array<i64: 1, 1024>}, {pipeline_mode = #tpu.pipeline_mode<synchronous>, transform_indices = @transform_6, window_bounds = array<i64: 1, 1024>}, {pipeline_mode = #tpu.pipeline_mode<synchronous>, transform_indices = @transform_7, window_bounds = array<i64: 2, 1024>}]} {
    %c0_i32 = arith.constant 0 : i32
    %0 = arith.cmpi eq, %arg0, %c0_i32 : i32
    %1 = arith.extui %0 : i1 to i32
    %c0_i32_0 = arith.constant 0 : i32
    %2 = arith.cmpi ne, %1, %c0_i32_0 : i32
    scf.if %2 {
      %cst_9 = arith.constant 0.000000e+00 : f32
      %12 = vector.broadcast %cst_9 : f32 to vector<2x1024xf32>
      %c0_10 = arith.constant 0 : index
      %c0_11 = arith.constant 0 : index
      %13 = vector.load %arg9[%c0_10, %c0_11] : memref<2x1024xf32, #tpu.memory_space<vmem>>, vector<2x1024xf32>
      tpu.vector_store %arg9[%c0_10, %c0_11], %12 {strides = array<i32>} : memref<2x1024xf32, #tpu.memory_space<vmem>>, vector<2x1024xf32>,
      tpu.enqueue_dma source(%arg4 : memref<1024x1024xbf16, #tpu.memory_space<any>>) target(%arg10 : memref<1024x1024xbf16, #tpu.memory_space<vmem>>) target_semaphore(%arg11 : memref<!tpu.dma_semaphore, #tpu.memory_space<semaphore_mem>>)
    } else {
    }
    %c0 = arith.constant 0 : index
    %c0_1 = arith.constant 0 : index
    %3 = vector.load %arg9[%c0, %c0_1] : memref<2x1024xf32, #tpu.memory_space<vmem>>, vector<2x1024xf32>
    %c0_2 = arith.constant 0 : index
    %c0_3 = arith.constant 0 : index
    %4 = vector.load %arg1[%c0_2, %c0_3] : memref<2x896xbf16, #tpu.memory_space<vmem>>, vector<2x896xbf16>
    %c0_4 = arith.constant 0 : index
    %c0_5 = arith.constant 0 : index
    %5 = vector.load %arg2[%c0_4, %c0_5] : memref<896x1024xbf16, #tpu.memory_space<vmem>>, vector<896x1024xbf16>
    %cst = arith.constant dense<0.000000e+00> : vector<2x1024xf32>
    %6 = tpu.matmul %4, %5, %cst {dimension_numbers = #tpu.dot_dimension_numbers<[1], [0], [0], [1], [0, 0, 1, 1], [], []>} : vector<2x896xbf16>, vector<896x1024xbf16>, vector<2x1024xf32> -> vector<2x1024xf32>
    %7 = arith.addf %3, %6 : vector<2x1024xf32>
    %c0_6 = arith.constant 0 : index
    %c0_7 = arith.constant 0 : index
    %8 = vector.load %arg9[%c0_6, %c0_7] : memref<2x1024xf32, #tpu.memory_space<vmem>>, vector<2x1024xf32>
    tpu.vector_store %arg9[%c0_6, %c0_7], %7 {strides = array<i32>} : memref<2x1024xf32, #tpu.memory_space<vmem>>, vector<2x1024xf32>,
    %c2_i32 = arith.constant 2 : i32
    %9 = arith.cmpi eq, %arg0, %c2_i32 : i32
    %10 = arith.extui %9 : i1 to i32
    %c0_i32_8 = arith.constant 0 : i32
    %11 = arith.cmpi ne, %10, %c0_i32_8 : i32
    scf.if %11 {
      tpu.wait_dma2 semaphore(%arg11 : memref<!tpu.dma_semaphore, #tpu.memory_space<semaphore_mem>>) src(%arg4 : memref<1024x1024xbf16, #tpu.memory_space<any>>) dst(%arg10 : memref<1024x1024xbf16, #tpu.memory_space<vmem>>)
      %c0_9 = arith.constant 0 : index
      %c0_10 = arith.constant 0 : index
      %12 = vector.load %arg9[%c0_9, %c0_10] : memref<2x1024xf32, #tpu.memory_space<vmem>>, vector<2x1024xf32>
      %c0_11 = arith.constant 0 : index
      %c0_12 = arith.constant 0 : index
      %13 = vector.load %arg3[%c0_11, %c0_12] : memref<1x1024xf32, #tpu.memory_space<vmem>>, vector<1x1024xf32>
      %14 = vector.broadcast %13 : vector<1x1024xf32> to vector<2x1024xf32>
      %15 = arith.addf %12, %14 : vector<2x1024xf32>
      %cst_13 = arith.constant 5.000000e-01 : f32
      %16 = vector.broadcast %cst_13 : f32 to vector<2x1024xf32>
      %17 = arith.mulf %16, %15 : vector<2x1024xf32>
      %cst_14 = arith.constant 0.707106769 : f32
      %18 = vector.broadcast %cst_14 : f32 to vector<2x1024xf32>
      %19 = arith.mulf %15, %18 : vector<2x1024xf32>
      %20 = math.erf %19 : vector<2x1024xf32>
      %cst_15 = arith.constant 1.000000e+00 : f32
      %21 = vector.broadcast %cst_15 : f32 to vector<2x1024xf32>
      %22 = arith.addf %21, %20 : vector<2x1024xf32>
      %23 = arith.mulf %17, %22 : vector<2x1024xf32>
      %24 = arith.truncf %23 : vector<2x1024xf32> to vector<2x1024xbf16>
      %c0_16 = arith.constant 0 : index
      %c0_17 = arith.constant 0 : index
      %25 = vector.load %arg10[%c0_16, %c0_17] : memref<1024x1024xbf16, #tpu.memory_space<vmem>>, vector<1024x1024xbf16>
      %cst_18 = arith.constant dense<0.000000e+00> : vector<2x1024xf32>
      %26 = tpu.matmul %24, %25, %cst_18 {dimension_numbers = #tpu.dot_dimension_numbers<[1], [0], [0], [1], [0, 0, 1, 1], [], []>} : vector<2x1024xbf16>, vector<1024x1024xbf16>, vector<2x1024xf32> -> vector<2x1024xf32>
      %c0_19 = arith.constant 0 : index
      %c0_20 = arith.constant 0 : index
      %27 = vector.load %arg5[%c0_19, %c0_20] : memref<1x1024xf32, #tpu.memory_space<vmem>>, vector<1x1024xf32>
      %28 = vector.broadcast %27 : vector<1x1024xf32> to vector<2x1024xf32>
      %29 = arith.addf %26, %28 : vector<2x1024xf32>
      %30 = arith.addf %15, %29 : vector<2x1024xf32>
      %cst_21 = arith.constant dense<0.000000e+00> : vector<2xf32>
      %31 = vector.multi_reduction <add>, %30, %cst_21 [1] : vector<2x1024xf32> to vector<2xf32>
      %32 = vector.shape_cast %31 : vector<2xf32> to vector<2x1xf32>
      %cst_22 = arith.constant 1.024000e+03 : f32
      %33 = vector.broadcast %cst_22 : f32 to vector<2x1xf32>
      %34 = arith.divf %32, %33 : vector<2x1xf32>
      %35 = vector.broadcast %34 : vector<2x1xf32> to vector<2x1024xf32>
      %36 = arith.subf %30, %35 : vector<2x1024xf32>
      %37 = arith.mulf %36, %36 : vector<2x1024xf32>
      %cst_23 = arith.constant dense<0.000000e+00> : vector<2xf32>
      %38 = vector.multi_reduction <add>, %37, %cst_23 [1] : vector<2x1024xf32> to vector<2xf32>
      %39 = vector.shape_cast %38 : vector<2xf32> to vector<2x1xf32>
      %cst_24 = arith.constant 1.024000e+03 : f32
      %40 = vector.broadcast %cst_24 : f32 to vector<2x1xf32>
      %41 = arith.divf %39, %40 : vector<2x1xf32>
      %42 = vector.broadcast %34 : vector<2x1xf32> to vector<2x1024xf32>
      %43 = arith.subf %30, %42 : vector<2x1024xf32>
      %cst_25 = arith.constant 9.99999974E-6 : f32
      %44 = vector.broadcast %cst_25 : f32 to vector<2x1xf32>
      %45 = arith.addf %41, %44 : vector<2x1xf32>
      %46 = math.rsqrt %45 : vector<2x1xf32>
      %47 = vector.broadcast %46 : vector<2x1xf32> to vector<2x1024xf32>
      %48 = arith.mulf %43, %47 : vector<2x1024xf32>
      %c0_26 = arith.constant 0 : index
      %c0_27 = arith.constant 0 : index
      %49 = vector.load %arg6[%c0_26, %c0_27] : memref<1x1024xf32, #tpu.memory_space<vmem>>, vector<1x1024xf32>
      %50 = vector.broadcast %49 : vector<1x1024xf32> to vector<2x1024xf32>
      %51 = arith.mulf %48, %50 : vector<2x1024xf32>
      %c0_28 = arith.constant 0 : index
      %c0_29 = arith.constant 0 : index
      %52 = vector.load %arg7[%c0_28, %c0_29] : memref<1x1024xf32, #tpu.memory_space<vmem>>, vector<1x1024xf32>
      %53 = vector.broadcast %52 : vector<1x1024xf32> to vector<2x1024xf32>
      %54 = arith.addf %51, %53 : vector<2x1024xf32>
      %c0_30 = arith.constant 0 : index
      %c0_31 = arith.constant 0 : index
      %55 = vector.load %arg8[%c0_30, %c0_31] : memref<2x1024xf32, #tpu.memory_space<vmem>>, vector<2x1024xf32>
      tpu.vector_store %arg8[%c0_30, %c0_31], %54 {strides = array<i32>} : memref<2x1024xf32, #tpu.memory_space<vmem>>, vector<2x1024xf32>,
    } else {
    }
    return
  }
  func.func @transform_0(%arg0: i32) -> (i32, i32) {
    %c0_i32 = arith.constant 0 : i32
    %c0_i32_0 = arith.constant 0 : i32
    return %c0_i32, %arg0 : i32, i32
  }
  func.func @transform_1(%arg0: i32) -> (i32, i32) {
    %c0_i32 = arith.constant 0 : i32
    %c0_i32_0 = arith.constant 0 : i32
    return %arg0, %c0_i32 : i32, i32
  }
  func.func @transform_2(%arg0: i32) -> (i32, i32) {
    %c0_i32 = arith.constant 0 : i32
    %c0_i32_0 = arith.constant 0 : i32
    %c0_i32_1 = arith.constant 0 : i32
    return %c0_i32, %c0_i32_0 : i32, i32
  }
  func.func @transform_4(%arg0: i32) -> (i32, i32) {
    %c0_i32 = arith.constant 0 : i32
    %c0_i32_0 = arith.constant 0 : i32
    %c0_i32_1 = arith.constant 0 : i32
    return %c0_i32, %c0_i32_0 : i32, i32
  }
  func.func @transform_5(%arg0: i32) -> (i32, i32) {
    %c0_i32 = arith.constant 0 : i32
    %c0_i32_0 = arith.constant 0 : i32
    %c0_i32_1 = arith.constant 0 : i32
    return %c0_i32, %c0_i32_0 : i32, i32
  }
  func.func @transform_6(%arg0: i32) -> (i32, i32) {
    %c0_i32 = arith.constant 0 : i32
    %c0_i32_0 = arith.constant 0 : i32
    %c0_i32_1 = arith.constant 0 : i32
    return %c0_i32, %c0_i32_0 : i32, i32
  }
  func.func @transform_7(%arg0: i32) -> (i32, i32) {
    %c0_i32 = arith.constant 0 : i32
    %c0_i32_0 = arith.constant 0 : i32
    %c0_i32_1 = arith.constant 0 : i32
    return %c0_i32, %c0_i32_0 : i32, i32
  }
}

</mosaic_0001>

<llo_original>
// kernel: encoder_forward.2
$region0: #{encoder_forward.2}
  #allocation0 [shape = 'u32[]', space=smem, size = 0x4, offset = 0x4, fixed_abs, tag = 'smem constant byte address 0x4 - core index']
  #allocation1 [shape = 'u32[72,128]{1,0:T(1,128)}', space=vmem, size = 0x9000, scoped, tag = 'internal scratch']
  #allocation2 [shape = 'f32[64,48]{1,0:T(8,128)}', space=vmem, size = 0x8000, scoped, tag = 'scratch operand']
  %s0 = inlined_call_operand.vmem [shape: f32[2,4,128,68], index: 0, kind: input, shape index: {}]
  %s1 = inlined_call_operand.vmem [shape: f32[4,68,24], index: 1, kind: input, shape index: {}]
  %s2 = inlined_call_operand.vmem [shape: f32[1,24], index: 2, kind: input, shape index: {}]
  %s3 = inlined_call_operand.vmem [shape: f32[8,48,48], index: 3, kind: input, shape index: {}]
  %s4 = inlined_call_operand.vmem [shape: f32[1,48], index: 4, kind: input, shape index: {}]
  %s5 = inlined_call_operand.vmem [shape: bf16[2,56,48], index: 5, kind: output, shape index: {}]
  %s6 = sld [smem:[#allocation0]]
  $region53: #{encoder_forward.2} parent=0
    _
  %s8 = ssub.s32 1, %s6
  %s9 = scalar_select 0, %s8, %s6
  loop: start=0, step=1, limit=4
  $region2: #{encoder_forward.2} parent=0 // loop_pre_header
    _
  $region3: #{encoder_forward.2} parent=0 // loop_header
    %s11 = sphi 0, %s15
    %p12 = scmp.ge.s32.totalorder %s11, 4
    %s21 = sphi 0, %s23
    %s24 = sphi 0, %s21
    %s25 = sphi 0, %s24
    %s41 = sphi 0, %s25
    %s45 = sphi 0, %s45
    %s47 = sphi 0, %s45
    %s48 = sphi 0, %s47
    %s62 = sphi 0, %s48
    %s66 = sphi 0, %s66
    %s68 = sphi 0, %s66
    %s69 = sphi 0, %s68
    %s83 = sphi 0, %s69
    %s87 = sphi 0, %s87
    %s89 = sphi 0, %s87
    %s90 = sphi 0, %s89
    %s104 = sphi 0, %s90
    %s108 = sphi 0, %s108
    %s110 = sphi 0, %s108
    %s111 = sphi 0, %s110
    %s125 = sphi 0, %s111
    %s131 = sphi 0, %s133
    %s134 = sphi 0, %s131
    %s135 = sphi 0, %s134
    %s151 = sphi 0, %s135
  $region4: #{encoder_forward.2} parent=0 // loop_header_branch
    %14 = sbr.rel (%p12) target = $region8
  $region5: #{encoder_forward.2} parent=0 // loop_body
    %s16 = ssub.s32 %s11, 1
    %s17 = ssub.s32 %s11, 2
    %s18 = sadd.s32 %s11, 1
    %s19 = ssub.s32 %s11, %s18
    %p20 = scmp.eq.s32.totalorder %s19, 0
    %s22 = sadd.s32 %s21, 1
    %s23 = scalar_select %p20, %s21, %s22
    %p26 = pneg %p20
    %p27 = scmp.eq.s32.totalorder %s11, 1
    %p28 = por %p26, %p27
    %p29 = scmp.ne.s32.totalorder %s21, %s24
    %p30 = scmp.eq.s32.totalorder %s11, 0
    %p31 = por %p29, %p30
    %p32 = scmp.ne.s32.totalorder %s21, %s24
    %p33 = scmp.eq.s32.totalorder %s16, 1
    %p34 = por %p32, %p33
    %p35 = scmp.ne.s32.totalorder %s24, %s25
    %p36 = scmp.eq.s32.totalorder %s16, 0
    %p37 = por %p35, %p36
    %p38 = scmp.ne.s32.totalorder %s24, %s25
    %p39 = scmp.eq.s32.totalorder %s17, 1
    %p40 = por %p38, %p39
    %p42 = scmp.ne.s32.totalorder %s25, %s41
    %p43 = scmp.eq.s32.totalorder %s17, 0
    %p44 = por %p42, %p43
    %s46 = sadd.s32 %s45, 1
    %p49 = scmp.eq.s32.totalorder %s11, 1
    %p50 = scmp.ne.s32.totalorder %s45, %s47
    %p51 = scmp.eq.s32.totalorder %s11, 0
    %p52 = por %p50, %p51
    %p53 = scmp.ne.s32.totalorder %s45, %s47
    %p54 = scmp.eq.s32.totalorder %s16, 1
    %p55 = por %p53, %p54
    %p56 = scmp.ne.s32.totalorder %s47, %s48
    %p57 = scmp.eq.s32.totalorder %s16, 0
    %p58 = por %p56, %p57
    %p59 = scmp.ne.s32.totalorder %s47, %s48
    %p60 = scmp.eq.s32.totalorder %s17, 1
    %p61 = por %p59, %p60
    %p63 = scmp.ne.s32.totalorder %s48, %s62
    %p64 = scmp.eq.s32.totalorder %s17, 0
    %p65 = por %p63, %p64
    %s67 = sadd.s32 %s66, 1
    %p70 = scmp.eq.s32.totalorder %s11, 1
    %p71 = scmp.ne.s32.totalorder %s66, %s68
    %p72 = scmp.eq.s32.totalorder %s11, 0
    %p73 = por %p71, %p72
    %p74 = scmp.ne.s32.totalorder %s66, %s68
    %p75 = scmp.eq.s32.totalorder %s16, 1
    %p76 = por %p74, %p75
    %p77 = scmp.ne.s32.totalorder %s68, %s69
    %p78 = scmp.eq.s32.totalorder %s16, 0
    %p79 = por %p77, %p78
    %p80 = scmp.ne.s32.totalorder %s68, %s69
    %p81 = scmp.eq.s32.totalorder %s17, 1
    %p82 = por %p80, %p81
    %p84 = scmp.ne.s32.totalorder %s69, %s83
    %p85 = scmp.eq.s32.totalorder %s17, 0
    %p86 = por %p84, %p85
    %s88 = sadd.s32 %s87, 1
    %p91 = scmp.eq.s32.totalorder %s11, 1
    %p92 = scmp.ne.s32.totalorder %s87, %s89
    %p93 = scmp.eq.s32.totalorder %s11, 0
    %p94 = por %p92, %p93
    %p95 = scmp.ne.s32.totalorder %s87, %s89
    %p96 = scmp.eq.s32.totalorder %s16, 1
    %p97 = por %p95, %p96
    %p98 = scmp.ne.s32.totalorder %s89, %s90
    %p99 = scmp.eq.s32.totalorder %s16, 0
    %p100 = por %p98, %p99
    %p101 = scmp.ne.s32.totalorder %s89, %s90
    %p102 = scmp.eq.s32.totalorder %s17, 1
    %p103 = por %p101, %p102
    %p105 = scmp.ne.s32.totalorder %s90, %s104
    %p106 = scmp.eq.s32.totalorder %s17, 0
    %p107 = por %p105, %p106
    %s109 = sadd.s32 %s108, 1
    %p112 = scmp.eq.s32.totalorder %s11, 1
    %p113 = scmp.ne.s32.totalorder %s108, %s110
    %p114 = scmp.eq.s32.totalorder %s11, 0
    %p115 = por %p113, %p114
    %p116 = scmp.ne.s32.totalorder %s108, %s110
    %p117 = scmp.eq.s32.totalorder %s16, 1
    %p118 = por %p116, %p117
    %p119 = scmp.ne.s32.totalorder %s110, %s111
    %p120 = scmp.eq.s32.totalorder %s16, 0
    %p121 = por %p119, %p120
    %p122 = scmp.ne.s32.totalorder %s110, %s111
    %p123 = scmp.eq.s32.totalorder %s17, 1
    %p124 = por %p122, %p123
    %p126 = scmp.ne.s32.totalorder %s111, %s125
    %p127 = scmp.eq.s32.totalorder %s17, 0
    %p128 = por %p126, %p127
    %s129 = ssub.s32 %s11, %s18
    %p130 = scmp.eq.s32.totalorder %s129, 0
    %s132 = sadd.s32 %s131, 1
    %s133 = scalar_select %p130, %s131, %s132
    %p136 = pneg %p130
    %p137 = scmp.eq.s32.totalorder %s11, 1
    %p138 = por %p136, %p137
    %p139 = scmp.ne.s32.totalorder %s131, %s134
    %p140 = scmp.eq.s32.totalorder %s11, 0
    %p141 = por %p139, %p140
    %p142 = scmp.ne.s32.totalorder %s131, %s134
    %p143 = scmp.eq.s32.totalorder %s16, 1
    %p144 = por %p142, %p143
    %p145 = scmp.ne.s32.totalorder %s134, %s135
    %p146 = scmp.eq.s32.totalorder %s16, 0
    %p147 = por %p145, %p146
    %p148 = scmp.ne.s32.totalorder %s134, %s135
    %p149 = scmp.eq.s32.totalorder %s17, 1
    %p150 = por %p148, %p149
    %p152 = scmp.ne.s32.totalorder %s135, %s151
    %p153 = scmp.eq.s32.totalorder %s17, 0
    %p154 = por %p152, %p153
    %p155 = scmp.le.s32.totalorder 1, %s11
    %p156 = scmp.lt.s32.totalorder %s11, 3
    %p157 = pnand %p155, %p156
    %p158 = pneg %p157
    // Predicated region
    $region9: #{encoder_forward.2} parent=5 // pred_check
      _
    $region10: #{encoder_forward.2} parent=5 // pred_check_branch
      %160 = sbr.rel (%p157) target = $region12
    $region11: #{encoder_forward.2} parent=5 // pred_region
      %s161 = ssub.s32 %s11, 1
      // Predicated region
      $region13: #{encoder_forward.2} parent=11 // pred_check
        %p162 = pneg %p58
      $region14: #{encoder_forward.2} parent=11 // pred_check_branch
        %164 = sbr.rel (%p162) target = $region16
      $region15: #{encoder_forward.2} parent=11 // pred_region
        _
      $region16: #{encoder_forward.2} parent=11 // pred_fallthru
        _
      // Predicated region
      $region17: #{encoder_forward.2} parent=11 // pred_check
        %p165 = pneg %p79
      $region18: #{encoder_forward.2} parent=11 // pred_check_branch
        %167 = sbr.rel (%p165) target = $region20
      $region19: #{encoder_forward.2} parent=11 // pred_region
        _
      $region20: #{encoder_forward.2} parent=11 // pred_fallthru
        _
      // Predicated region
      $region21: #{encoder_forward.2} parent=11 // pred_check
        %p168 = pneg %p100
      $region22: #{encoder_forward.2} parent=11 // pred_check_branch
        %170 = sbr.rel (%p168) target = $region24
      $region23: #{encoder_forward.2} parent=11 // pred_region
        _
      $region24: #{encoder_forward.2} parent=11 // pred_fallthru
        _
      // Predicated region
      $region25: #{encoder_forward.2} parent=11 // pred_check
        %p171 = pneg %p121
      $region26: #{encoder_forward.2} parent=11 // pred_check_branch
        %173 = sbr.rel (%p171) target = $region28
      $region27: #{encoder_forward.2} parent=11 // pred_region
        _
      $region28: #{encoder_forward.2} parent=11 // pred_fallthru
        _
    $region12: #{encoder_forward.2} parent=5 // pred_fallthru
      _
    %p174 = scmp.lt.s32.totalorder %s11, 2
    // Predicated region
    $region29: #{encoder_forward.2} parent=5 // pred_check
      %p175 = pneg %p174
    $region30: #{encoder_forward.2} parent=5 // pred_check_branch
      %177 = sbr.rel (%p175) target = $region32
    $region31: #{encoder_forward.2} parent=5 // pred_region
      // Predicated region
      $region33: #{encoder_forward.2} parent=31 // pred_check
        %p178 = pneg %p31
      $region34: #{encoder_forward.2} parent=31 // pred_check_branch
        %180 = sbr.rel (%p178) target = $region36
      $region35: #{encoder_forward.2} parent=31 // pred_region
        %p181 = scmp.lt.s32.totalorder %s11, 1
        %s182 = scalar_select %p181, %s11, 1
        %s183 = smul.addr %s182, 64
        %s184 = smul.addr %s183, 8
        %s185 = scalar_lea.vmem %s0, %s184
      $region36: #{encoder_forward.2} parent=31 // pred_fallthru
        _
    $region32: #{encoder_forward.2} parent=5 // pred_fallthru
      _
    %p186 = scmp.le.s32.totalorder 1, %s11
    %p187 = scmp.lt.s32.totalorder %s11, 3
    %p188 = pnand %p186, %p187
    %p189 = pneg %p188
    // Predicated region
    $region37: #{encoder_forward.2} parent=5 // pred_check
      _
    $region38: #{encoder_forward.2} parent=5 // pred_check_branch
      %191 = sbr.rel (%p188) target = $region40
    $region39: #{encoder_forward.2} parent=5 // pred_region
      %s192 = ssub.s32 %s11, 1
      %p193 = scmp.lt.s32.totalorder %s16, 1
      %s194 = scalar_select %p193, %s16, 1
      %s195 = smul.addr %s194, 64
      %s196 = smul.addr %s195, 8
      %s197 = scalar_lea.vmem %s0, %s196
      %p198 = pneg %p37
      %p199 = pneg %p34
      %p200 = pneg %p58
      %p201 = pneg %p55
      %p202 = pneg %p79
      %p203 = pneg %p76
      %p204 = pneg %p100
      %p205 = pneg %p97
      %p206 = pneg %p121
      %p207 = pneg %p118
      %p208 = pneg %p147
      %p209 = pneg %p144
      %p210 = scmp.lt.s32.totalorder %s16, 1
      %s211 = scalar_select %p210, %s16, 1
      %s212 = smul.addr %s211, 7
      %s213 = smul.addr %s212, 4
      %s214 = scalar_lea.vmem %s5, %s213
      %p215 = scmp.lt.s32.totalorder %s16, 1
      %s216 = scalar_select %p215, %s16, 1
      %s217 = smul.addr %s216, 64
      %s218 = smul.addr %s217, 8
      %s219 = scalar_lea.vmem %s0, %s218
      %p220 = scmp.lt.s32.totalorder %s16, 1
      %s221 = scalar_select %p220, %s16, 1
      %s222 = smul.addr %s221, 7
      %s223 = smul.addr %s222, 4
      %s224 = scalar_lea.vmem %s5, %s223
      %v225 = vld [vmem:[%s219] sm:$0xff]
      %v226 = vld [vmem:[%s219 + $0x8] sm:$0xff]
      %v227 = vld [vmem:[%s219 + $0x10] sm:$0xff]
      %v228 = vld [vmem:[%s219 + $0x18] sm:$0xff]
      %v229 = vld [vmem:[%s219 + $0x20] sm:$0xff]
      %v230 = vld [vmem:[%s219 + $0x28] sm:$0xff]
      %v231 = vld [vmem:[%s219 + $0x30] sm:$0xff]
      %v232 = vld [vmem:[%s219 + $0x38] sm:$0xff]
      %v233 = vld [vmem:[%s219 + $0x40] sm:$0xff]
      %v234 = vld [vmem:[%s219 + $0x48] sm:$0xff]
      %v235 = vld [vmem:[%s219 + $0x50] sm:$0xff]
      %v236 = vld [vmem:[%s219 + $0x58] sm:$0xff]
      %v237 = vld [vmem:[%s219 + $0x60] sm:$0xff]
      %v238 = vld [vmem:[%s219 + $0x68] sm:$0xff]
      %v239 = vld [vmem:[%s219 + $0x70] sm:$0xff]
      %v240 = vld [vmem:[%s219 + $0x78] sm:$0xff]
      %v241 = vld [vmem:[%s1] sm:$0xff]
      %v242 = vld [vmem:[%s1 + $0x8] sm:$0xff]
      %v243 = vld [vmem:[%s1 + $0x10] sm:$0xff]
      %v244 = vld [vmem:[%s1 + $0x18] sm:$0xff]
      %v245 = vld [vmem:[%s1 + $0x20] sm:$0xff]
      %v246 = vld [vmem:[%s1 + $0x28] sm:$0xff]
      %v247 = vld [vmem:[%s1 + $0x30] sm:$0xff]
      %v248 = vld [vmem:[%s1 + $0x38] sm:$0xff]
      %v249 = vld [vmem:[%s1 + $0x40] sm:$0xf]
      %s250 = scalar_lea.vmem %s219, 128
      %v251 = vld [vmem:[%s250] sm:$0xff]
      %v252 = vld [vmem:[%s250 + $0x8] sm:$0xff]
      %v253 = vld [vmem:[%s250 + $0x10] sm:$0xff]
      %v254 = vld [vmem:[%s250 + $0x18] sm:$0xff]
      %v255 = vld [vmem:[%s250 + $0x20] sm:$0xff]
      %v256 = vld [vmem:[%s250 + $0x28] sm:$0xff]
      %v257 = vld [vmem:[%s250 + $0x30] sm:$0xff]
      %v258 = vld [vmem:[%s250 + $0x38] sm:$0xff]
      %v259 = vld [vmem:[%s250 + $0x40] sm:$0xff]
      %v260 = vld [vmem:[%s250 + $0x48] sm:$0xff]
      %v261 = vld [vmem:[%s250 + $0x50] sm:$0xff]
      %v262 = vld [vmem:[%s250 + $0x58] sm:$0xff]
      %v263 = vld [vmem:[%s250 + $0x60] sm:$0xff]
      %v264 = vld [vmem:[%s250 + $0x68] sm:$0xff]
      %v265 = vld [vmem:[%s250 + $0x70] sm:$0xff]
      %v266 = vld [vmem:[%s250 + $0x78] sm:$0xff]
      %s267 = scalar_lea.vmem %s1, 72
      %v268 = vld [vmem:[%s267] sm:$0xff]
      %v269 = vld [vmem:[%s267 + $0x8] sm:$0xff]
      %v270 = vld [vmem:[%s267 + $0x10] sm:$0xff]
      %v271 = vld [vmem:[%s267 + $0x18] sm:$0xff]
      %v272 = vld [vmem:[%s267 + $0x20] sm:$0xff]
      %v273 = vld [vmem:[%s267 + $0x28] sm:$0xff]
      %v274 = vld [vmem:[%s267 + $0x30] sm:$0xff]
      %v275 = vld [vmem:[%s267 + $0x38] sm:$0xff]
      %v276 = vld [vmem:[%s267 + $0x40] sm:$0xf]
      %vm277 = vcmask 556032
      %v279 = vsel %vm277, %v251, 0
      %v282 = vsel %vm277, %v252, 0
      %v285 = vsel %vm277, %v253, 0
      %v288 = vsel %vm277, %v254, 0
      %v291 = vsel %vm277, %v255, 0
      %v294 = vsel %vm277, %v256, 0
      %v297 = vsel %vm277, %v257, 0
      %v300 = vsel %vm277, %v258, 0
      %v303 = vsel %vm277, %v259, 0
      %v306 = vsel %vm277, %v260, 0
      %v309 = vsel %vm277, %v261, 0
      %v312 = vsel %vm277, %v262, 0
      %v315 = vsel %vm277, %v263, 0
      %v318 = vsel %vm277, %v264, 0
      %v321 = vsel %vm277, %v265, 0
      %v324 = vsel %vm277, %v266, 0
      %vm326 = vcmask 1043456
      %v328 = vsel %vm326, %v276, 0
      %330 = vmatpush.msra.mxu0 0.0
      %331 = vmatpush.msra.mxu0 0.0
      %332 = vmatpush.msra.mxu0 0.0
      %333 = vmatpush.msra.mxu0 0.0
      %334 = vmatpush.msra.mxu0 0.0
      %335 = vmatpush.msra.mxu0 0.0
      %336 = vmatpush.msra.mxu0 0.0
      %337 = vmatpush.msra.mxu0 %v328
      %338 = vmatpush.msra.mxu0 %v275
      %339 = vmatpush.msra.mxu0 %v274
      %340 = vmatpush.msra.mxu0 %v273
      %341 = vmatpush.msra.mxu0 %v272
      %342 = vmatpush.msra.mxu0 %v271
      %343 = vmatpush.msra.mxu0 %v270
      %344 = vmatpush.msra.mxu0 %v269
      %345 = vmatpush.msra.mxu0 %v268
      %346 = vmatmul.f32.gmra.mxu0 %v279
      %v347 = vpop.f32.mrf.mxu0
      %v348 = vadd.f32 0.0, %v347
      %349 = vmatmul.f32.gmra.mxu0 %v282
      %v350 = vpop.f32.mrf.mxu0
      %v351 = vadd.f32 0.0, %v350
      %352 = vmatmul.f32.gmra.mxu0 %v285
      %v353 = vpop.f32.mrf.mxu0
      %v354 = vadd.f32 0.0, %v353
      %355 = vmatmul.f32.gmra.mxu0 %v288
      %v356 = vpop.f32.mrf.mxu0
      %v357 = vadd.f32 0.0, %v356
      %358 = vmatmul.f32.gmra.mxu0 %v291
      %v359 = vpop.f32.mrf.mxu0
      %v360 = vadd.f32 0.0, %v359
      %361 = vmatmul.f32.gmra.mxu0 %v294
      %v362 = vpop.f32.mrf.mxu0
      %v363 = vadd.f32 0.0, %v362
      %364 = vmatmul.f32.gmra.mxu0 %v297
      %v365 = vpop.f32.mrf.mxu0
      %v366 = vadd.f32 0.0, %v365
      %367 = vmatmul.f32.gmra.mxu0 %v300
      %v368 = vpop.f32.mrf.mxu0
      %v369 = vadd.f32 0.0, %v368
      %370 = vmatmul.f32.gmra.mxu0 %v303
      %v371 = vpop.f32.mrf.mxu0
      %v372 = vadd.f32 0.0, %v371
      %373 = vmatmul.f32.gmra.mxu0 %v306
      %v374 = vpop.f32.mrf.mxu0
      %v375 = vadd.f32 0.0, %v374
      %376 = vmatmul.f32.gmra.mxu0 %v309
      %v377 = vpop.f32.mrf.mxu0
      %v378 = vadd.f32 0.0, %v377
      %379 = vmatmul.f32.gmra.mxu0 %v312
      %v380 = vpop.f32.mrf.mxu0
      %v381 = vadd.f32 0.0, %v380
      %382 = vmatmul.f32.gmra.mxu0 %v315
      %v383 = vpop.f32.mrf.mxu0
      %v384 = vadd.f32 0.0, %v383
      %385 = vmatmul.f32.gmra.mxu0 %v318
      %v386 = vpop.f32.mrf.mxu0
      %v387 = vadd.f32 0.0, %v386
      %388 = vmatmul.f32.gmra.mxu0 %v321
      %v389 = vpop.f32.mrf.mxu0
      %v390 = vadd.f32 0.0, %v389
      %391 = vmatmul.f32.gmra.mxu0 %v324
      %v392 = vpop.f32.mrf.mxu0
      %v393 = vadd.f32 0.0, %v392
      %394 = vdwg.mxu0
      %v396 = vsel %vm277, %v225, 0
      %v399 = vsel %vm277, %v226, 0
      %v402 = vsel %vm277, %v227, 0
      %v405 = vsel %vm277, %v228, 0
      %v408 = vsel %vm277, %v229, 0
      %v411 = vsel %vm277, %v230, 0
      %v414 = vsel %vm277, %v231, 0
      %v417 = vsel %vm277, %v232, 0
      %v420 = vsel %vm277, %v233, 0
      %v423 = vsel %vm277, %v234, 0
      %v426 = vsel %vm277, %v235, 0
      %v429 = vsel %vm277, %v236, 0
      %v432 = vsel %vm277, %v237, 0
      %v435 = vsel %vm277, %v238, 0
      %v438 = vsel %vm277, %v239, 0
      %v441 = vsel %vm277, %v240, 0
      %v444 = vsel %vm326, %v249, 0
      %446 = vmatpush.msra.mxu0 0.0
      %447 = vmatpush.msra.mxu0 0.0
      %448 = vmatpush.msra.mxu0 0.0
      %449 = vmatpush.msra.mxu0 0.0
      %450 = vmatpush.msra.mxu0 0.0
      %451 = vmatpush.msra.mxu0 0.0
      %452 = vmatpush.msra.mxu0 0.0
      %453 = vmatpush.msra.mxu0 %v444
      %454 = vmatpush.msra.mxu0 %v248
      %455 = vmatpush.msra.mxu0 %v247
      %456 = vmatpush.msra.mxu0 %v246
      %457 = vmatpush.msra.mxu0 %v245
      %458 = vmatpush.msra.mxu0 %v244
      %459 = vmatpush.msra.mxu0 %v243
      %460 = vmatpush.msra.mxu0 %v242
      %461 = vmatpush.msra.mxu0 %v241
      %462 = vmatmul.f32.gmra.mxu0 %v396
      %v463 = vpop.f32.mrf.mxu0
      %v464 = vadd.f32 %v348, %v463
      %465 = vmatmul.f32.gmra.mxu0 %v399
      %v466 = vpop.f32.mrf.mxu0
      %v467 = vadd.f32 %v351, %v466
      %468 = vmatmul.f32.gmra.mxu0 %v402
      %v469 = vpop.f32.mrf.mxu0
      %v470 = vadd.f32 %v354, %v469
      %471 = vmatmul.f32.gmra.mxu0 %v405
      %v472 = vpop.f32.mrf.mxu0
      %v473 = vadd.f32 %v357, %v472
      %474 = vmatmul.f32.gmra.mxu0 %v408
      %v475 = vpop.f32.mrf.mxu0
      %v476 = vadd.f32 %v360, %v475
      %477 = vmatmul.f32.gmra.mxu0 %v411
      %v478 = vpop.f32.mrf.mxu0
      %v479 = vadd.f32 %v363, %v478
      %480 = vmatmul.f32.gmra.mxu0 %v414
      %v481 = vpop.f32.mrf.mxu0
      %v482 = vadd.f32 %v366, %v481
      %483 = vmatmul.f32.gmra.mxu0 %v417
      %v484 = vpop.f32.mrf.mxu0
      %v485 = vadd.f32 %v369, %v484
      %486 = vmatmul.f32.gmra.mxu0 %v420
      %v487 = vpop.f32.mrf.mxu0
      %v488 = vadd.f32 %v372, %v487
      %489 = vmatmul.f32.gmra.mxu0 %v423
      %v490 = vpop.f32.mrf.mxu0
      %v491 = vadd.f32 %v375, %v490
      %492 = vmatmul.f32.gmra.mxu0 %v426
      %v493 = vpop.f32.mrf.mxu0
      %v494 = vadd.f32 %v378, %v493
      %495 = vmatmul.f32.gmra.mxu0 %v429
      %v496 = vpop.f32.mrf.mxu0
      %v497 = vadd.f32 %v381, %v496
      %498 = vmatmul.f32.gmra.mxu0 %v432
      %v499 = vpop.f32.mrf.mxu0
      %v500 = vadd.f32 %v384, %v499
      %501 = vmatmul.f32.gmra.mxu0 %v435
      %v502 = vpop.f32.mrf.mxu0
      %v503 = vadd.f32 %v387, %v502
      %504 = vmatmul.f32.gmra.mxu0 %v438
      %v505 = vpop.f32.mrf.mxu0
      %v506 = vadd.f32 %v390, %v505
      %507 = vmatmul.f32.gmra.mxu0 %v441
      %v508 = vpop.f32.mrf.mxu0
      %v509 = vadd.f32 %v393, %v508
      %510 = vdwg.mxu0
      %s511 = scalar_lea.vmem %s219, 256
      %v512 = vld [vmem:[%s511] sm:$0xff]
      %v513 = vld [vmem:[%s511 + $0x8] sm:$0xff]
      %v514 = vld [vmem:[%s511 + $0x10] sm:$0xff]
      %v515 = vld [vmem:[%s511 + $0x18] sm:$0xff]
      %v516 = vld [vmem:[%s511 + $0x20] sm:$0xff]
      %v517 = vld [vmem:[%s511 + $0x28] sm:$0xff]
      %v518 = vld [vmem:[%s511 + $0x30] sm:$0xff]
      %v519 = vld [vmem:[%s511 + $0x38] sm:$0xff]
      %v520 = vld [vmem:[%s511 + $0x40] sm:$0xff]
      %v521 = vld [vmem:[%s511 + $0x48] sm:$0xff]
      %v522 = vld [vmem:[%s511 + $0x50] sm:$0xff]
      %v523 = vld [vmem:[%s511 + $0x58] sm:$0xff]
      %v524 = vld [vmem:[%s511 + $0x60] sm:$0xff]
      %v525 = vld [vmem:[%s511 + $0x68] sm:$0xff]
      %v526 = vld [vmem:[%s511 + $0x70] sm:$0xff]
      %v527 = vld [vmem:[%s511 + $0x78] sm:$0xff]
      %s528 = scalar_lea.vmem %s1, 144
      %v529 = vld [vmem:[%s528] sm:$0xff]
      %v530 = vld [vmem:[%s528 + $0x8] sm:$0xff]
      %v531 = vld [vmem:[%s528 + $0x10] sm:$0xff]
      %v532 = vld [vmem:[%s528 + $0x18] sm:$0xff]
      %v533 = vld [vmem:[%s528 + $0x20] sm:$0xff]
      %v534 = vld [vmem:[%s528 + $0x28] sm:$0xff]
      %v535 = vld [vmem:[%s528 + $0x30] sm:$0xff]
      %v536 = vld [vmem:[%s528 + $0x38] sm:$0xff]
      %v537 = vld [vmem:[%s528 + $0x40] sm:$0xf]
      %v539 = vsel %vm277, %v512, 0
      %v542 = vsel %vm277, %v513, 0
      %v545 = vsel %vm277, %v514, 0
      %v548 = vsel %vm277, %v515, 0
      %v551 = vsel %vm277, %v516, 0
      %v554 = vsel %vm277, %v517, 0
      %v557 = vsel %vm277, %v518, 0
      %v560 = vsel %vm277, %v519, 0
      %v563 = vsel %vm277, %v520, 0
      %v566 = vsel %vm277, %v521, 0
      %v569 = vsel %vm277, %v522, 0
      %v572 = vsel %vm277, %v523, 0
      %v575 = vsel %vm277, %v524, 0
      %v578 = vsel %vm277, %v525, 0
      %v581 = vsel %vm277, %v526, 0
      %v584 = vsel %vm277, %v527, 0
      %v587 = vsel %vm326, %v537, 0
      %589 = vmatpush.msra.mxu0 0.0
      %590 = vmatpush.msra.mxu0 0.0
      %591 = vmatpush.msra.mxu0 0.0
      %592 = vmatpush.msra.mxu0 0.0
      %593 = vmatpush.msra.mxu0 0.0
      %594 = vmatpush.msra.mxu0 0.0
      %595 = vmatpush.msra.mxu0 0.0
      %596 = vmatpush.msra.mxu0 %v587
      %597 = vmatpush.msra.mxu0 %v536
      %598 = vmatpush.msra.mxu0 %v535
      %599 = vmatpush.msra.mxu0 %v534
      %600 = vmatpush.msra.mxu0 %v533
      %601 = vmatpush.msra.mxu0 %v532
      %602 = vmatpush.msra.mxu0 %v531
      %603 = vmatpush.msra.mxu0 %v530
      %604 = vmatpush.msra.mxu0 %v529
      %605 = vmatmul.f32.gmra.mxu0 %v539
      %v606 = vpop.f32.mrf.mxu0
      %v607 = vadd.f32 0.0, %v606
      %608 = vmatmul.f32.gmra.mxu0 %v542
      %v609 = vpop.f32.mrf.mxu0
      %v610 = vadd.f32 0.0, %v609
      %611 = vmatmul.f32.gmra.mxu0 %v545
      %v612 = vpop.f32.mrf.mxu0
      %v613 = vadd.f32 0.0, %v612
      %614 = vmatmul.f32.gmra.mxu0 %v548
      %v615 = vpop.f32.mrf.mxu0
      %v616 = vadd.f32 0.0, %v615
      %617 = vmatmul.f32.gmra.mxu0 %v551
      %v618 = vpop.f32.mrf.mxu0
      %v619 = vadd.f32 0.0, %v618
      %620 = vmatmul.f32.gmra.mxu0 %v554
      %v621 = vpop.f32.mrf.mxu0
      %v622 = vadd.f32 0.0, %v621
      %623 = vmatmul.f32.gmra.mxu0 %v557
      %v624 = vpop.f32.mrf.mxu0
      %v625 = vadd.f32 0.0, %v624
      %626 = vmatmul.f32.gmra.mxu0 %v560
      %v627 = vpop.f32.mrf.mxu0
      %v628 = vadd.f32 0.0, %v627
      %629 = vmatmul.f32.gmra.mxu0 %v563
      %v630 = vpop.f32.mrf.mxu0
      %v631 = vadd.f32 0.0, %v630
      %632 = vmatmul.f32.gmra.mxu0 %v566
      %v633 = vpop.f32.mrf.mxu0
      %v634 = vadd.f32 0.0, %v633
      %635 = vmatmul.f32.gmra.mxu0 %v569
      %v636 = vpop.f32.mrf.mxu0
      %v637 = vadd.f32 0.0, %v636
      %638 = vmatmul.f32.gmra.mxu0 %v572
      %v639 = vpop.f32.mrf.mxu0
      %v640 = vadd.f32 0.0, %v639
      %641 = vmatmul.f32.gmra.mxu0 %v575
      %v642 = vpop.f32.mrf.mxu0
      %v643 = vadd.f32 0.0, %v642
      %644 = vmatmul.f32.gmra.mxu0 %v578
      %v645 = vpop.f32.mrf.mxu0
      %v646 = vadd.f32 0.0, %v645
      %647 = vmatmul.f32.gmra.mxu0 %v581
      %v648 = vpop.f32.mrf.mxu0
      %v649 = vadd.f32 0.0, %v648
      %650 = vmatmul.f32.gmra.mxu0 %v584
      %v651 = vpop.f32.mrf.mxu0
      %v652 = vadd.f32 0.0, %v651
      %653 = vdwg.mxu0
      %v654 = vadd.f32 %v464, %v607
      %v655 = vadd.f32 %v467, %v610
      %v656 = vadd.f32 %v470, %v613
      %v657 = vadd.f32 %v473, %v616
      %v658 = vadd.f32 %v476, %v619
      %v659 = vadd.f32 %v479, %v622
      %v660 = vadd.f32 %v482, %v625
      %v661 = vadd.f32 %v485, %v628
      %v662 = vadd.f32 %v488, %v631
      %v663 = vadd.f32 %v491, %v634
      %v664 = vadd.f32 %v494, %v637
      %v665 = vadd.f32 %v497, %v640
      %v666 = vadd.f32 %v500, %v643
      %v667 = vadd.f32 %v503, %v646
      %v668 = vadd.f32 %v506, %v649
      %v669 = vadd.f32 %v509, %v652
      %s670 = scalar_lea.vmem %s219, 384
      %v671 = vld [vmem:[%s670] sm:$0xff]
      %v672 = vld [vmem:[%s670 + $0x8] sm:$0xff]
      %v673 = vld [vmem:[%s670 + $0x10] sm:$0xff]
      %v674 = vld [vmem:[%s670 + $0x18] sm:$0xff]
      %v675 = vld [vmem:[%s670 + $0x20] sm:$0xff]
      %v676 = vld [vmem:[%s670 + $0x28] sm:$0xff]
      %v677 = vld [vmem:[%s670 + $0x30] sm:$0xff]
      %v678 = vld [vmem:[%s670 + $0x38] sm:$0xff]
      %v679 = vld [vmem:[%s670 + $0x40] sm:$0xff]
      %v680 = vld [vmem:[%s670 + $0x48] sm:$0xff]
      %v681 = vld [vmem:[%s670 + $0x50] sm:$0xff]
      %v682 = vld [vmem:[%s670 + $0x58] sm:$0xff]
      %v683 = vld [vmem:[%s670 + $0x60] sm:$0xff]
      %v684 = vld [vmem:[%s670 + $0x68] sm:$0xff]
      %v685 = vld [vmem:[%s670 + $0x70] sm:$0xff]
      %v686 = vld [vmem:[%s670 + $0x78] sm:$0xff]
      %s687 = scalar_lea.vmem %s1, 216
      %v688 = vld [vmem:[%s687] sm:$0xff]
      %v689 = vld [vmem:[%s687 + $0x8] sm:$0xff]
      %v690 = vld [vmem:[%s687 + $0x10] sm:$0xff]
      %v691 = vld [vmem:[%s687 + $0x18] sm:$0xff]
      %v692 = vld [vmem:[%s687 + $0x20] sm:$0xff]
      %v693 = vld [vmem:[%s687 + $0x28] sm:$0xff]
      %v694 = vld [vmem:[%s687 + $0x30] sm:$0xff]
      %v695 = vld [vmem:[%s687 + $0x38] sm:$0xff]
      %v696 = vld [vmem:[%s687 + $0x40] sm:$0xf]
      %v698 = vsel %vm277, %v671, 0
      %v701 = vsel %vm277, %v672, 0
      %v704 = vsel %vm277, %v673, 0
      %v707 = vsel %vm277, %v674, 0
      %v710 = vsel %vm277, %v675, 0
      %v713 = vsel %vm277, %v676, 0
      %v716 = vsel %vm277, %v677, 0
      %v719 = vsel %vm277, %v678, 0
      %v722 = vsel %vm277, %v679, 0
      %v725 = vsel %vm277, %v680, 0
      %v728 = vsel %vm277, %v681, 0
      %v731 = vsel %vm277, %v682, 0
      %v734 = vsel %vm277, %v683, 0
      %v737 = vsel %vm277, %v684, 0
      %v740 = vsel %vm277, %v685, 0
      %v743 = vsel %vm277, %v686, 0
      %v746 = vsel %vm326, %v696, 0
      %748 = vmatpush.msra.mxu0 0.0
      %749 = vmatpush.msra.mxu0 0.0
      %750 = vmatpush.msra.mxu0 0.0
      %751 = vmatpush.msra.mxu0 0.0
      %752 = vmatpush.msra.mxu0 0.0
      %753 = vmatpush.msra.mxu0 0.0
      %754 = vmatpush.msra.mxu0 0.0
      %755 = vmatpush.msra.mxu0 %v746
      %756 = vmatpush.msra.mxu0 %v695
      %757 = vmatpush.msra.mxu0 %v694
      %758 = vmatpush.msra.mxu0 %v693
      %759 = vmatpush.msra.mxu0 %v692
      %760 = vmatpush.msra.mxu0 %v691
      %761 = vmatpush.msra.mxu0 %v690
      %762 = vmatpush.msra.mxu0 %v689
      %763 = vmatpush.msra.mxu0 %v688
      %764 = vmatmul.f32.gmra.mxu0 %v698
      %v765 = vpop.f32.mrf.mxu0
      %v766 = vadd.f32 0.0, %v765
      %767 = vmatmul.f32.gmra.mxu0 %v701
      %v768 = vpop.f32.mrf.mxu0
      %v769 = vadd.f32 0.0, %v768
      %770 = vmatmul.f32.gmra.mxu0 %v704
      %v771 = vpop.f32.mrf.mxu0
      %v772 = vadd.f32 0.0, %v771
      %773 = vmatmul.f32.gmra.mxu0 %v707
      %v774 = vpop.f32.mrf.mxu0
      %v775 = vadd.f32 0.0, %v774
      %776 = vmatmul.f32.gmra.mxu0 %v710
      %v777 = vpop.f32.mrf.mxu0
      %v778 = vadd.f32 0.0, %v777
      %779 = vmatmul.f32.gmra.mxu0 %v713
      %v780 = vpop.f32.mrf.mxu0
      %v781 = vadd.f32 0.0, %v780
      %782 = vmatmul.f32.gmra.mxu0 %v716
      %v783 = vpop.f32.mrf.mxu0
      %v784 = vadd.f32 0.0, %v783
      %785 = vmatmul.f32.gmra.mxu0 %v719
      %v786 = vpop.f32.mrf.mxu0
      %v787 = vadd.f32 0.0, %v786
      %788 = vmatmul.f32.gmra.mxu0 %v722
      %v789 = vpop.f32.mrf.mxu0
      %v790 = vadd.f32 0.0, %v789
      %791 = vmatmul.f32.gmra.mxu0 %v725
      %v792 = vpop.f32.mrf.mxu0
      %v793 = vadd.f32 0.0, %v792
      %794 = vmatmul.f32.gmra.mxu0 %v728
      %v795 = vpop.f32.mrf.mxu0
      %v796 = vadd.f32 0.0, %v795
      %797 = vmatmul.f32.gmra.mxu0 %v731
      %v798 = vpop.f32.mrf.mxu0
      %v799 = vadd.f32 0.0, %v798
      %800 = vmatmul.f32.gmra.mxu0 %v734
      %v801 = vpop.f32.mrf.mxu0
      %v802 = vadd.f32 0.0, %v801
      %803 = vmatmul.f32.gmra.mxu0 %v737
      %v804 = vpop.f32.mrf.mxu0
      %v805 = vadd.f32 0.0, %v804
      %806 = vmatmul.f32.gmra.mxu0 %v740
      %v807 = vpop.f32.mrf.mxu0
      %v808 = vadd.f32 0.0, %v807
      %809 = vmatmul.f32.gmra.mxu0 %v743
      %v810 = vpop.f32.mrf.mxu0
      %v811 = vadd.f32 0.0, %v810
      %812 = vdwg.mxu0
      %v813 = vadd.f32 %v654, %v766
      %v814 = vadd.f32 %v655, %v769
      %v815 = vadd.f32 %v656, %v772
      %v816 = vadd.f32 %v657, %v775
      %v817 = vadd.f32 %v658, %v778
      %v818 = vadd.f32 %v659, %v781
      %v819 = vadd.f32 %v660, %v784
      %v820 = vadd.f32 %v661, %v787
      %v821 = vadd.f32 %v662, %v790
      %v822 = vadd.f32 %v663, %v793
      %v823 = vadd.f32 %v664, %v796
      %v824 = vadd.f32 %v665, %v799
      %v825 = vadd.f32 %v666, %v802
      %v826 = vadd.f32 %v667, %v805
      %v827 = vadd.f32 %v668, %v808
      %v828 = vadd.f32 %v669, %v811
      %v829 = vld [vmem:[%s2] sm:$0x1]
      %v831 = vperm.slane %v829, 0
      %v833 = vadd.f32 %v813, %v831
      %v834 = vadd.f32 %v814, %v831
      %v835 = vadd.f32 %v815, %v831
      %v836 = vadd.f32 %v816, %v831
      %v837 = vadd.f32 %v817, %v831
      %v838 = vadd.f32 %v818, %v831
      %v839 = vadd.f32 %v819, %v831
      %v840 = vadd.f32 %v820, %v831
      %v841 = vadd.f32 %v821, %v831
      %v842 = vadd.f32 %v822, %v831
      %v843 = vadd.f32 %v823, %v831
      %v844 = vadd.f32 %v824, %v831
      %v845 = vadd.f32 %v825, %v831
      %v846 = vadd.f32 %v826, %v831
      %v847 = vadd.f32 %v827, %v831
      %v848 = vadd.f32 %v828, %v831
      %v849 = vmax.f32 %v833, 0.0
      %v850 = vmax.f32 %v834, 0.0
      %v851 = vmax.f32 %v835, 0.0
      %v852 = vmax.f32 %v836, 0.0
      %v853 = vmax.f32 %v837, 0.0
      %v854 = vmax.f32 %v838, 0.0
      %v855 = vmax.f32 %v839, 0.0
      %v856 = vmax.f32 %v840, 0.0
      %v857 = vmax.f32 %v841, 0.0
      %v858 = vmax.f32 %v842, 0.0
      %v859 = vmax.f32 %v843, 0.0
      %v860 = vmax.f32 %v844, 0.0
      %v861 = vmax.f32 %v845, 0.0
      %v862 = vmax.f32 %v846, 0.0
      %v863 = vmax.f32 %v847, 0.0
      %v864 = vmax.f32 %v848, 0.0
      %vm865 = vcmask 392192
      %866 = vst.msk [vmem:[#allocation2] sm:$0xff] %vm865, 0.0
      %867 = vst.msk [vmem:[#allocation2 + $0x8] sm:$0xff] %vm865, 0.0
      %868 = vst.msk [vmem:[#allocation2 + $0x10] sm:$0xff] %vm865, 0.0
      %869 = vst.msk [vmem:[#allocation2 + $0x18] sm:$0xff] %vm865, 0.0
      %870 = vst.msk [vmem:[#allocation2 + $0x20] sm:$0xff] %vm865, 0.0
      %871 = vst.msk [vmem:[#allocation2 + $0x28] sm:$0xff] %vm865, 0.0
      %872 = vst.msk [vmem:[#allocation2 + $0x30] sm:$0xff] %vm865, 0.0
      %873 = vst.msk [vmem:[#allocation2 + $0x38] sm:$0xff] %vm865, 0.0
      %vm874 = vcmask 195584
      %875 = vst.msk [vmem:[#allocation2 + $0x2] sm:$0xff] %vm874, %v857
      %876 = vst.msk [vmem:[#allocation2 + $0xa] sm:$0xff] %vm874, %v858
      %877 = vst.msk [vmem:[#allocation2 + $0x12] sm:$0xff] %vm874, %v859
      %878 = vst.msk [vmem:[#allocation2 + $0x1a] sm:$0xff] %vm874, %v860
      %879 = vst.msk [vmem:[#allocation2 + $0x22] sm:$0xff] %vm874, %v861
      %880 = vst.msk [vmem:[#allocation2 + $0x2a] sm:$0xff] %vm874, %v862
      %881 = vst.msk [vmem:[#allocation2 + $0x32] sm:$0xff] %vm874, %v863
      %vm882 = vcmask 191488
      %883 = vst.msk [vmem:[#allocation2 + $0x3a] sm:$0xf] %vm882, %v864
      %892 = vrot.lane.b32.xlu0 %v849, 24
      %v893 = vpop.permute.xlu0 %892
      %894 = vrot.lane.b32.xlu0 %v850, 24
      %v895 = vpop.permute.xlu0 %894
      %896 = vrot.lane.b32.xlu0 %v851, 24
      %v897 = vpop.permute.xlu0 %896
      %898 = vrot.lane.b32.xlu0 %v852, 24
      %v899 = vpop.permute.xlu0 %898
      %900 = vrot.lane.b32.xlu0 %v853, 24
      %v901 = vpop.permute.xlu0 %900
      %902 = vrot.lane.b32.xlu0 %v854, 24
      %v903 = vpop.permute.xlu0 %902
      %904 = vrot.lane.b32.xlu0 %v855, 24
      %v905 = vpop.permute.xlu0 %904
      %906 = vrot.lane.b32.xlu0 %v856, 24
      %v907 = vpop.permute.xlu0 %906
      %vm916 = vcmask 392384
      %917 = vst.msk [vmem:[#allocation2 + $0x1] sm:$0xff] %vm916, %v893
      %918 = vst.msk [vmem:[#allocation2 + $0x9] sm:$0xff] %vm916, %v895
      %919 = vst.msk [vmem:[#allocation2 + $0x11] sm:$0xff] %vm916, %v897
      %920 = vst.msk [vmem:[#allocation2 + $0x19] sm:$0xff] %vm916, %v899
      %921 = vst.msk [vmem:[#allocation2 + $0x21] sm:$0xff] %vm916, %v901
      %922 = vst.msk [vmem:[#allocation2 + $0x29] sm:$0xff] %vm916, %v903
      %923 = vst.msk [vmem:[#allocation2 + $0x31] sm:$0xff] %vm916, %v905
      %vm924 = vcmask 388288
      %925 = vst.msk [vmem:[#allocation2 + $0x39] sm:$0xf] %vm924, %v907
      %v926 = vld [vmem:[#allocation2] sm:$0xff]
      %v927 = vld [vmem:[#allocation2 + $0x8] sm:$0xff]
      %v928 = vld [vmem:[#allocation2 + $0x10] sm:$0xff]
      %v929 = vld [vmem:[#allocation2 + $0x18] sm:$0xff]
      %v930 = vld [vmem:[#allocation2 + $0x20] sm:$0xff]
      %v931 = vld [vmem:[#allocation2 + $0x28] sm:$0xff]
      %v932 = vld [vmem:[#allocation2 + $0x30] sm:$0xff]
      %v933 = vld [vmem:[%s3] sm:$0xff]
      %v934 = vld [vmem:[%s3 + $0x8] sm:$0xff]
      %v935 = vld [vmem:[%s3 + $0x10] sm:$0xff]
      %v936 = vld [vmem:[%s3 + $0x18] sm:$0xff]
      %v937 = vld [vmem:[%s3 + $0x20] sm:$0xff]
      %v938 = vld [vmem:[%s3 + $0x28] sm:$0xff]
      %v939 = vld [vmem:[#allocation2 + $0x1] sm:$0xff]
      %v940 = vld [vmem:[#allocation2 + $0x9] sm:$0xff]
      %v941 = vld [vmem:[#allocation2 + $0x11] sm:$0xff]
      %v942 = vld [vmem:[#allocation2 + $0x19] sm:$0xff]
      %v943 = vld [vmem:[#allocation2 + $0x21] sm:$0xff]
      %v944 = vld [vmem:[#allocation2 + $0x29] sm:$0xff]
      %v945 = vld [vmem:[#allocation2 + $0x31] sm:$0xff]
      %s946 = scalar_lea.vmem %s3, 48
      %v947 = vld [vmem:[%s946] sm:$0xff]
      %v948 = vld [vmem:[%s946 + $0x8] sm:$0xff]
      %v949 = vld [vmem:[%s946 + $0x10] sm:$0xff]
      %v950 = vld [vmem:[%s946 + $0x18] sm:$0xff]
      %v951 = vld [vmem:[%s946 + $0x20] sm:$0xff]
      %v952 = vld [vmem:[%s946 + $0x28] sm:$0xff]
      %v954 = vsel %vm865, %v939, 0
      %v957 = vsel %vm865, %v940, 0
      %v960 = vsel %vm865, %v941, 0
      %v963 = vsel %vm865, %v942, 0
      %v966 = vsel %vm865, %v943, 0
      %v969 = vsel %vm865, %v944, 0
      %v972 = vsel %vm865, %v945, 0
      %974 = vmatpush.msra.mxu0 0.0
      %975 = vmatpush.msra.mxu0 0.0
      %976 = vmatpush.msra.mxu0 0.0
      %977 = vmatpush.msra.mxu0 0.0
      %978 = vmatpush.msra.mxu0 0.0
      %979 = vmatpush.msra.mxu0 0.0
      %980 = vmatpush.msra.mxu0 0.0
      %981 = vmatpush.msra.mxu0 0.0
      %982 = vmatpush.msra.mxu0 0.0
      %983 = vmatpush.msra.mxu0 0.0
      %984 = vmatpush.msra.mxu0 %v952
      %985 = vmatpush.msra.mxu0 %v951
      %986 = vmatpush.msra.mxu0 %v950
      %987 = vmatpush.msra.mxu0 %v949
      %988 = vmatpush.msra.mxu0 %v948
      %989 = vmatpush.msra.mxu0 %v947
      %990 = vmatmul.f32.gmra.mxu0 %v954
      %v991 = vpop.f32.mrf.mxu0
      %v992 = vadd.f32 0.0, %v991
      %993 = vmatmul.f32.gmra.mxu0 %v957
      %v994 = vpop.f32.mrf.mxu0
      %v995 = vadd.f32 0.0, %v994
      %996 = vmatmul.f32.gmra.mxu0 %v960
      %v997 = vpop.f32.mrf.mxu0
      %v998 = vadd.f32 0.0, %v997
      %999 = vmatmul.f32.gmra.mxu0 %v963
      %v1000 = vpop.f32.mrf.mxu0
      %v1001 = vadd.f32 0.0, %v1000
      %1002 = vmatmul.f32.gmra.mxu0 %v966
      %v1003 = vpop.f32.mrf.mxu0
      %v1004 = vadd.f32 0.0, %v1003
      %1005 = vmatmul.f32.gmra.mxu0 %v969
      %v1006 = vpop.f32.mrf.mxu0
      %v1007 = vadd.f32 0.0, %v1006
      %1008 = vmatmul.f32.gmra.mxu0 %v972
      %v1009 = vpop.f32.mrf.mxu0
      %v1010 = vadd.f32 0.0, %v1009
      %1011 = vdwg.mxu0
      %v1013 = vsel %vm865, %v926, 0
      %v1016 = vsel %vm865, %v927, 0
      %v1019 = vsel %vm865, %v928, 0
      %v1022 = vsel %vm865, %v929, 0
      %v1025 = vsel %vm865, %v930, 0
      %v1028 = vsel %vm865, %v931, 0
      %v1031 = vsel %vm865, %v932, 0
      %1033 = vmatpush.msra.mxu0 0.0
      %1034 = vmatpush.msra.mxu0 0.0
      %1035 = vmatpush.msra.mxu0 0.0
      %1036 = vmatpush.msra.mxu0 0.0
      %1037 = vmatpush.msra.mxu0 0.0
      %1038 = vmatpush.msra.mxu0 0.0
      %1039 = vmatpush.msra.mxu0 0.0
      %1040 = vmatpush.msra.mxu0 0.0
      %1041 = vmatpush.msra.mxu0 0.0
      %1042 = vmatpush.msra.mxu0 0.0
      %1043 = vmatpush.msra.mxu0 %v938
      %1044 = vmatpush.msra.mxu0 %v937
      %1045 = vmatpush.msra.mxu0 %v936
      %1046 = vmatpush.msra.mxu0 %v935
      %1047 = vmatpush.msra.mxu0 %v934
      %1048 = vmatpush.msra.mxu0 %v933
      %1049 = vmatmul.f32.gmra.mxu0 %v1013
      %v1050 = vpop.f32.mrf.mxu0
      %v1051 = vadd.f32 %v992, %v1050
      %1052 = vmatmul.f32.gmra.mxu0 %v1016
      %v1053 = vpop.f32.mrf.mxu0
      %v1054 = vadd.f32 %v995, %v1053
      %1055 = vmatmul.f32.gmra.mxu0 %v1019
      %v1056 = vpop.f32.mrf.mxu0
      %v1057 = vadd.f32 %v998, %v1056
      %1058 = vmatmul.f32.gmra.mxu0 %v1022
      %v1059 = vpop.f32.mrf.mxu0
      %v1060 = vadd.f32 %v1001, %v1059
      %1061 = vmatmul.f32.gmra.mxu0 %v1025
      %v1062 = vpop.f32.mrf.mxu0
      %v1063 = vadd.f32 %v1004, %v1062
      %1064 = vmatmul.f32.gmra.mxu0 %v1028
      %v1065 = vpop.f32.mrf.mxu0
      %v1066 = vadd.f32 %v1007, %v1065
      %1067 = vmatmul.f32.gmra.mxu0 %v1031
      %v1068 = vpop.f32.mrf.mxu0
      %v1069 = vadd.f32 %v1010, %v1068
      %1070 = vdwg.mxu0
      %v1071 = vld [vmem:[#allocation2 + $0x2] sm:$0xff]
      %v1072 = vld [vmem:[#allocation2 + $0xa] sm:$0xff]
      %v1073 = vld [vmem:[#allocation2 + $0x12] sm:$0xff]
      %v1074 = vld [vmem:[#allocation2 + $0x1a] sm:$0xff]
      %v1075 = vld [vmem:[#allocation2 + $0x22] sm:$0xff]
      %v1076 = vld [vmem:[#allocation2 + $0x2a] sm:$0xff]
      %v1077 = vld [vmem:[#allocation2 + $0x32] sm:$0xff]
      %s1078 = scalar_lea.vmem %s3, 96
      %v1079 = vld [vmem:[%s1078] sm:$0xff]
      %v1080 = vld [vmem:[%s1078 + $0x8] sm:$0xff]
      %v1081 = vld [vmem:[%s1078 + $0x10] sm:$0xff]
      %v1082 = vld [vmem:[%s1078 + $0x18] sm:$0xff]
      %v1083 = vld [vmem:[%s1078 + $0x20] sm:$0xff]
      %v1084 = vld [vmem:[%s1078 + $0x28] sm:$0xff]
      %v1086 = vsel %vm865, %v1071, 0
      %v1089 = vsel %vm865, %v1072, 0
      %v1092 = vsel %vm865, %v1073, 0
      %v1095 = vsel %vm865, %v1074, 0
      %v1098 = vsel %vm865, %v1075, 0
      %v1101 = vsel %vm865, %v1076, 0
      %v1104 = vsel %vm865, %v1077, 0
      %1106 = vmatpush.msra.mxu0 0.0
      %1107 = vmatpush.msra.mxu0 0.0
      %1108 = vmatpush.msra.mxu0 0.0
      %1109 = vmatpush.msra.mxu0 0.0
      %1110 = vmatpush.msra.mxu0 0.0
      %1111 = vmatpush.msra.mxu0 0.0
      %1112 = vmatpush.msra.mxu0 0.0
      %1113 = vmatpush.msra.mxu0 0.0
      %1114 = vmatpush.msra.mxu0 0.0
      %1115 = vmatpush.msra.mxu0 0.0
      %1116 = vmatpush.msra.mxu0 %v1084
      %1117 = vmatpush.msra.mxu0 %v1083
      %1118 = vmatpush.msra.mxu0 %v1082
      %1119 = vmatpush.msra.mxu0 %v1081
      %1120 = vmatpush.msra.mxu0 %v1080
      %1121 = vmatpush.msra.mxu0 %v1079
      %1122 = vmatmul.f32.gmra.mxu0 %v1086
      %v1123 = vpop.f32.mrf.mxu0
      %v1124 = vadd.f32 0.0, %v1123
      %1125 = vmatmul.f32.gmra.mxu0 %v1089
      %v1126 = vpop.f32.mrf.mxu0
      %v1127 = vadd.f32 0.0, %v1126
      %1128 = vmatmul.f32.gmra.mxu0 %v1092
      %v1129 = vpop.f32.mrf.mxu0
      %v1130 = vadd.f32 0.0, %v1129
      %1131 = vmatmul.f32.gmra.mxu0 %v1095
      %v1132 = vpop.f32.mrf.mxu0
      %v1133 = vadd.f32 0.0, %v1132
      %1134 = vmatmul.f32.gmra.mxu0 %v1098
      %v1135 = vpop.f32.mrf.mxu0
      %v1136 = vadd.f32 0.0, %v1135
      %1137 = vmatmul.f32.gmra.mxu0 %v1101
      %v1138 = vpop.f32.mrf.mxu0
      %v1139 = vadd.f32 0.0, %v1138
      %1140 = vmatmul.f32.gmra.mxu0 %v1104
      %v1141 = vpop.f32.mrf.mxu0
      %v1142 = vadd.f32 0.0, %v1141
      %1143 = vdwg.mxu0
      %v1144 = vadd.f32 %v1051, %v1124
      %v1145 = vadd.f32 %v1054, %v1127
      %v1146 = vadd.f32 %v1057, %v1130
      %v1147 = vadd.f32 %v1060, %v1133
      %v1148 = vadd.f32 %v1063, %v1136
      %v1149 = vadd.f32 %v1066, %v1139
      %v1150 = vadd.f32 %v1069, %v1142
      %v1151 = vld [vmem:[#allocation2 + $0x3] sm:$0xff]
      %v1152 = vld [vmem:[#allocation2 + $0xb] sm:$0xff]
      %v1153 = vld [vmem:[#allocation2 + $0x13] sm:$0xff]
      %v1154 = vld [vmem:[#allocation2 + $0x1b] sm:$0xff]
      %v1155 = vld [vmem:[#allocation2 + $0x23] sm:$0xff]
      %v1156 = vld [vmem:[#allocation2 + $0x2b] sm:$0xff]
      %v1157 = vld [vmem:[#allocation2 + $0x33] sm:$0xff]
      %s1158 = scalar_lea.vmem %s3, 144
      %v1159 = vld [vmem:[%s1158] sm:$0xff]
      %v1160 = vld [vmem:[%s1158 + $0x8] sm:$0xff]
      %v1161 = vld [vmem:[%s1158 + $0x10] sm:$0xff]
      %v1162 = vld [vmem:[%s1158 + $0x18] sm:$0xff]
      %v1163 = vld [vmem:[%s1158 + $0x20] sm:$0xff]
      %v1164 = vld [vmem:[%s1158 + $0x28] sm:$0xff]
      %v1166 = vsel %vm865, %v1151, 0
      %v1169 = vsel %vm865, %v1152, 0
      %v1172 = vsel %vm865, %v1153, 0
      %v1175 = vsel %vm865, %v1154, 0
      %v1178 = vsel %vm865, %v1155, 0
      %v1181 = vsel %vm865, %v1156, 0
      %v1184 = vsel %vm865, %v1157, 0
      %1186 = vmatpush.msra.mxu0 0.0
      %1187 = vmatpush.msra.mxu0 0.0
      %1188 = vmatpush.msra.mxu0 0.0
      %1189 = vmatpush.msra.mxu0 0.0
      %1190 = vmatpush.msra.mxu0 0.0
      %1191 = vmatpush.msra.mxu0 0.0
      %1192 = vmatpush.msra.mxu0 0.0
      %1193 = vmatpush.msra.mxu0 0.0
      %1194 = vmatpush.msra.mxu0 0.0
      %1195 = vmatpush.msra.mxu0 0.0
      %1196 = vmatpush.msra.mxu0 %v1164
      %1197 = vmatpush.msra.mxu0 %v1163
      %1198 = vmatpush.msra.mxu0 %v1162
      %1199 = vmatpush.msra.mxu0 %v1161
      %1200 = vmatpush.msra.mxu0 %v1160
      %1201 = vmatpush.msra.mxu0 %v1159
      %1202 = vmatmul.f32.gmra.mxu0 %v1166
      %v1203 = vpop.f32.mrf.mxu0
      %v1204 = vadd.f32 0.0, %v1203
      %1205 = vmatmul.f32.gmra.mxu0 %v1169
      %v1206 = vpop.f32.mrf.mxu0
      %v1207 = vadd.f32 0.0, %v1206
      %1208 = vmatmul.f32.gmra.mxu0 %v1172
      %v1209 = vpop.f32.mrf.mxu0
      %v1210 = vadd.f32 0.0, %v1209
      %1211 = vmatmul.f32.gmra.mxu0 %v1175
      %v1212 = vpop.f32.mrf.mxu0
      %v1213 = vadd.f32 0.0, %v1212
      %1214 = vmatmul.f32.gmra.mxu0 %v1178
      %v1215 = vpop.f32.mrf.mxu0
      %v1216 = vadd.f32 0.0, %v1215
      %1217 = vmatmul.f32.gmra.mxu0 %v1181
      %v1218 = vpop.f32.mrf.mxu0
      %v1219 = vadd.f32 0.0, %v1218
      %1220 = vmatmul.f32.gmra.mxu0 %v1184
      %v1221 = vpop.f32.mrf.mxu0
      %v1222 = vadd.f32 0.0, %v1221
      %1223 = vdwg.mxu0
      %v1224 = vadd.f32 %v1144, %v1204
      %v1225 = vadd.f32 %v1145, %v1207
      %v1226 = vadd.f32 %v1146, %v1210
      %v1227 = vadd.f32 %v1147, %v1213
      %v1228 = vadd.f32 %v1148, %v1216
      %v1229 = vadd.f32 %v1149, %v1219
      %v1230 = vadd.f32 %v1150, %v1222
      %v1231 = vld [vmem:[#allocation2 + $0x4] sm:$0xff]
      %v1232 = vld [vmem:[#allocation2 + $0xc] sm:$0xff]
      %v1233 = vld [vmem:[#allocation2 + $0x14] sm:$0xff]
      %v1234 = vld [vmem:[#allocation2 + $0x1c] sm:$0xff]
      %v1235 = vld [vmem:[#allocation2 + $0x24] sm:$0xff]
      %v1236 = vld [vmem:[#allocation2 + $0x2c] sm:$0xff]
      %v1237 = vld [vmem:[#allocation2 + $0x34] sm:$0xff]
      %s1238 = scalar_lea.vmem %s3, 192
      %v1239 = vld [vmem:[%s1238] sm:$0xff]
      %v1240 = vld [vmem:[%s1238 + $0x8] sm:$0xff]
      %v1241 = vld [vmem:[%s1238 + $0x10] sm:$0xff]
      %v1242 = vld [vmem:[%s1238 + $0x18] sm:$0xff]
      %v1243 = vld [vmem:[%s1238 + $0x20] sm:$0xff]
      %v1244 = vld [vmem:[%s1238 + $0x28] sm:$0xff]
      %v1246 = vsel %vm865, %v1231, 0
      %v1249 = vsel %vm865, %v1232, 0
      %v1252 = vsel %vm865, %v1233, 0
      %v1255 = vsel %vm865, %v1234, 0
      %v1258 = vsel %vm865, %v1235, 0
      %v1261 = vsel %vm865, %v1236, 0
      %v1264 = vsel %vm865, %v1237, 0
      %1266 = vmatpush.msra.mxu0 0.0
      %1267 = vmatpush.msra.mxu0 0.0
      %1268 = vmatpush.msra.mxu0 0.0
      %1269 = vmatpush.msra.mxu0 0.0
      %1270 = vmatpush.msra.mxu0 0.0
      %1271 = vmatpush.msra.mxu0 0.0
      %1272 = vmatpush.msra.mxu0 0.0
      %1273 = vmatpush.msra.mxu0 0.0
      %1274 = vmatpush.msra.mxu0 0.0
      %1275 = vmatpush.msra.mxu0 0.0
      %1276 = vmatpush.msra.mxu0 %v1244
      %1277 = vmatpush.msra.mxu0 %v1243
      %1278 = vmatpush.msra.mxu0 %v1242
      %1279 = vmatpush.msra.mxu0 %v1241
      %1280 = vmatpush.msra.mxu0 %v1240
      %1281 = vmatpush.msra.mxu0 %v1239
      %1282 = vmatmul.f32.gmra.mxu0 %v1246
      %v1283 = vpop.f32.mrf.mxu0
      %v1284 = vadd.f32 0.0, %v1283
      %1285 = vmatmul.f32.gmra.mxu0 %v1249
      %v1286 = vpop.f32.mrf.mxu0
      %v1287 = vadd.f32 0.0, %v1286
      %1288 = vmatmul.f32.gmra.mxu0 %v1252
      %v1289 = vpop.f32.mrf.mxu0
      %v1290 = vadd.f32 0.0, %v1289
      %1291 = vmatmul.f32.gmra.mxu0 %v1255
      %v1292 = vpop.f32.mrf.mxu0
      %v1293 = vadd.f32 0.0, %v1292
      %1294 = vmatmul.f32.gmra.mxu0 %v1258
      %v1295 = vpop.f32.mrf.mxu0
      %v1296 = vadd.f32 0.0, %v1295
      %1297 = vmatmul.f32.gmra.mxu0 %v1261
      %v1298 = vpop.f32.mrf.mxu0
      %v1299 = vadd.f32 0.0, %v1298
      %1300 = vmatmul.f32.gmra.mxu0 %v1264
      %v1301 = vpop.f32.mrf.mxu0
      %v1302 = vadd.f32 0.0, %v1301
      %1303 = vdwg.mxu0
      %v1304 = vadd.f32 %v1224, %v1284
      %v1305 = vadd.f32 %v1225, %v1287
      %v1306 = vadd.f32 %v1226, %v1290
      %v1307 = vadd.f32 %v1227, %v1293
      %v1308 = vadd.f32 %v1228, %v1296
      %v1309 = vadd.f32 %v1229, %v1299
      %v1310 = vadd.f32 %v1230, %v1302
      %v1311 = vld [vmem:[#allocation2 + $0x5] sm:$0xff]
      %v1312 = vld [vmem:[#allocation2 + $0xd] sm:$0xff]
      %v1313 = vld [vmem:[#allocation2 + $0x15] sm:$0xff]
      %v1314 = vld [vmem:[#allocation2 + $0x1d] sm:$0xff]
      %v1315 = vld [vmem:[#allocation2 + $0x25] sm:$0xff]
      %v1316 = vld [vmem:[#allocation2 + $0x2d] sm:$0xff]
      %v1317 = vld [vmem:[#allocation2 + $0x35] sm:$0xff]
      %s1318 = scalar_lea.vmem %s3, 240
      %v1319 = vld [vmem:[%s1318] sm:$0xff]
      %v1320 = vld [vmem:[%s1318 + $0x8] sm:$0xff]
      %v1321 = vld [vmem:[%s1318 + $0x10] sm:$0xff]
      %v1322 = vld [vmem:[%s1318 + $0x18] sm:$0xff]
      %v1323 = vld [vmem:[%s1318 + $0x20] sm:$0xff]
      %v1324 = vld [vmem:[%s1318 + $0x28] sm:$0xff]
      %v1326 = vsel %vm865, %v1311, 0
      %v1329 = vsel %vm865, %v1312, 0
      %v1332 = vsel %vm865, %v1313, 0
      %v1335 = vsel %vm865, %v1314, 0
      %v1338 = vsel %vm865, %v1315, 0
      %v1341 = vsel %vm865, %v1316, 0
      %v1344 = vsel %vm865, %v1317, 0
      %1346 = vmatpush.msra.mxu0 0.0
      %1347 = vmatpush.msra.mxu0 0.0
      %1348 = vmatpush.msra.mxu0 0.0
      %1349 = vmatpush.msra.mxu0 0.0
      %1350 = vmatpush.msra.mxu0 0.0
      %1351 = vmatpush.msra.mxu0 0.0
      %1352 = vmatpush.msra.mxu0 0.0
      %1353 = vmatpush.msra.mxu0 0.0
      %1354 = vmatpush.msra.mxu0 0.0
      %1355 = vmatpush.msra.mxu0 0.0
      %1356 = vmatpush.msra.mxu0 %v1324
      %1357 = vmatpush.msra.mxu0 %v1323
      %1358 = vmatpush.msra.mxu0 %v1322
      %1359 = vmatpush.msra.mxu0 %v1321
      %1360 = vmatpush.msra.mxu0 %v1320
      %1361 = vmatpush.msra.mxu0 %v1319
      %1362 = vmatmul.f32.gmra.mxu0 %v1326
      %v1363 = vpop.f32.mrf.mxu0
      %v1364 = vadd.f32 0.0, %v1363
      %1365 = vmatmul.f32.gmra.mxu0 %v1329
      %v1366 = vpop.f32.mrf.mxu0
      %v1367 = vadd.f32 0.0, %v1366
      %1368 = vmatmul.f32.gmra.mxu0 %v1332
      %v1369 = vpop.f32.mrf.mxu0
      %v1370 = vadd.f32 0.0, %v1369
      %1371 = vmatmul.f32.gmra.mxu0 %v1335
      %v1372 = vpop.f32.mrf.mxu0
      %v1373 = vadd.f32 0.0, %v1372
      %1374 = vmatmul.f32.gmra.mxu0 %v1338
      %v1375 = vpop.f32.mrf.mxu0
      %v1376 = vadd.f32 0.0, %v1375
      %1377 = vmatmul.f32.gmra.mxu0 %v1341
      %v1378 = vpop.f32.mrf.mxu0
      %v1379 = vadd.f32 0.0, %v1378
      %1380 = vmatmul.f32.gmra.mxu0 %v1344
      %v1381 = vpop.f32.mrf.mxu0
      %v1382 = vadd.f32 0.0, %v1381
      %1383 = vdwg.mxu0
      %v1384 = vadd.f32 %v1304, %v1364
      %v1385 = vadd.f32 %v1305, %v1367
      %v1386 = vadd.f32 %v1306, %v1370
      %v1387 = vadd.f32 %v1307, %v1373
      %v1388 = vadd.f32 %v1308, %v1376
      %v1389 = vadd.f32 %v1309, %v1379
      %v1390 = vadd.f32 %v1310, %v1382
      %v1391 = vld [vmem:[#allocation2 + $0x6] sm:$0xff]
      %v1392 = vld [vmem:[#allocation2 + $0xe] sm:$0xff]
      %v1393 = vld [vmem:[#allocation2 + $0x16] sm:$0xff]
      %v1394 = vld [vmem:[#allocation2 + $0x1e] sm:$0xff]
      %v1395 = vld [vmem:[#allocation2 + $0x26] sm:$0xff]
      %v1396 = vld [vmem:[#allocation2 + $0x2e] sm:$0xff]
      %v1397 = vld [vmem:[#allocation2 + $0x36] sm:$0xff]
      %s1398 = scalar_lea.vmem %s3, 288
      %v1399 = vld [vmem:[%s1398] sm:$0xff]
      %v1400 = vld [vmem:[%s1398 + $0x8] sm:$0xff]
      %v1401 = vld [vmem:[%s1398 + $0x10] sm:$0xff]
      %v1402 = vld [vmem:[%s1398 + $0x18] sm:$0xff]
      %v1403 = vld [vmem:[%s1398 + $0x20] sm:$0xff]
      %v1404 = vld [vmem:[%s1398 + $0x28] sm:$0xff]
      %v1406 = vsel %vm865, %v1391, 0
      %v1409 = vsel %vm865, %v1392, 0
      %v1412 = vsel %vm865, %v1393, 0
      %v1415 = vsel %vm865, %v1394, 0
      %v1418 = vsel %vm865, %v1395, 0
      %v1421 = vsel %vm865, %v1396, 0
      %v1424 = vsel %vm865, %v1397, 0
      %1426 = vmatpush.msra.mxu0 0.0
      %1427 = vmatpush.msra.mxu0 0.0
      %1428 = vmatpush.msra.mxu0 0.0
      %1429 = vmatpush.msra.mxu0 0.0
      %1430 = vmatpush.msra.mxu0 0.0
      %1431 = vmatpush.msra.mxu0 0.0
      %1432 = vmatpush.msra.mxu0 0.0
      %1433 = vmatpush.msra.mxu0 0.0
      %1434 = vmatpush.msra.mxu0 0.0
      %1435 = vmatpush.msra.mxu0 0.0
      %1436 = vmatpush.msra.mxu0 %v1404
      %1437 = vmatpush.msra.mxu0 %v1403
      %1438 = vmatpush.msra.mxu0 %v1402
      %1439 = vmatpush.msra.mxu0 %v1401
      %1440 = vmatpush.msra.mxu0 %v1400
      %1441 = vmatpush.msra.mxu0 %v1399
      %1442 = vmatmul.f32.gmra.mxu0 %v1406
      %v1443 = vpop.f32.mrf.mxu0
      %v1444 = vadd.f32 0.0, %v1443
      %1445 = vmatmul.f32.gmra.mxu0 %v1409
      %v1446 = vpop.f32.mrf.mxu0
      %v1447 = vadd.f32 0.0, %v1446
      %1448 = vmatmul.f32.gmra.mxu0 %v1412
      %v1449 = vpop.f32.mrf.mxu0
      %v1450 = vadd.f32 0.0, %v1449
      %1451 = vmatmul.f32.gmra.mxu0 %v1415
      %v1452 = vpop.f32.mrf.mxu0
      %v1453 = vadd.f32 0.0, %v1452
      %1454 = vmatmul.f32.gmra.mxu0 %v1418
      %v1455 = vpop.f32.mrf.mxu0
      %v1456 = vadd.f32 0.0, %v1455
      %1457 = vmatmul.f32.gmra.mxu0 %v1421
      %v1458 = vpop.f32.mrf.mxu0
      %v1459 = vadd.f32 0.0, %v1458
      %1460 = vmatmul.f32.gmra.mxu0 %v1424
      %v1461 = vpop.f32.mrf.mxu0
      %v1462 = vadd.f32 0.0, %v1461
      %1463 = vdwg.mxu0
      %v1464 = vadd.f32 %v1384, %v1444
      %v1465 = vadd.f32 %v1385, %v1447
      %v1466 = vadd.f32 %v1386, %v1450
      %v1467 = vadd.f32 %v1387, %v1453
      %v1468 = vadd.f32 %v1388, %v1456
      %v1469 = vadd.f32 %v1389, %v1459
      %v1470 = vadd.f32 %v1390, %v1462
      %v1471 = vld [vmem:[#allocation2 + $0x7] sm:$0xff]
      %v1472 = vld [vmem:[#allocation2 + $0xf] sm:$0xff]
      %v1473 = vld [vmem:[#allocation2 + $0x17] sm:$0xff]
      %v1474 = vld [vmem:[#allocation2 + $0x1f] sm:$0xff]
      %v1475 = vld [vmem:[#allocation2 + $0x27] sm:$0xff]
      %v1476 = vld [vmem:[#allocation2 + $0x2f] sm:$0xff]
      %v1477 = vld [vmem:[#allocation2 + $0x37] sm:$0xff]
      %s1478 = scalar_lea.vmem %s3, 336
      %v1479 = vld [vmem:[%s1478] sm:$0xff]
      %v1480 = vld [vmem:[%s1478 + $0x8] sm:$0xff]
      %v1481 = vld [vmem:[%s1478 + $0x10] sm:$0xff]
      %v1482 = vld [vmem:[%s1478 + $0x18] sm:$0xff]
      %v1483 = vld [vmem:[%s1478 + $0x20] sm:$0xff]
      %v1484 = vld [vmem:[%s1478 + $0x28] sm:$0xff]
      %v1486 = vsel %vm865, %v1471, 0
      %v1489 = vsel %vm865, %v1472, 0
      %v1492 = vsel %vm865, %v1473, 0
      %v1495 = vsel %vm865, %v1474, 0
      %v1498 = vsel %vm865, %v1475, 0
      %v1501 = vsel %vm865, %v1476, 0
      %v1504 = vsel %vm865, %v1477, 0
      %1506 = vmatpush.msra.mxu0 0.0
      %1507 = vmatpush.msra.mxu0 0.0
      %1508 = vmatpush.msra.mxu0 0.0
      %1509 = vmatpush.msra.mxu0 0.0
      %1510 = vmatpush.msra.mxu0 0.0
      %1511 = vmatpush.msra.mxu0 0.0
      %1512 = vmatpush.msra.mxu0 0.0
      %1513 = vmatpush.msra.mxu0 0.0
      %1514 = vmatpush.msra.mxu0 0.0
      %1515 = vmatpush.msra.mxu0 0.0
      %1516 = vmatpush.msra.mxu0 %v1484
      %1517 = vmatpush.msra.mxu0 %v1483
      %1518 = vmatpush.msra.mxu0 %v1482
      %1519 = vmatpush.msra.mxu0 %v1481
      %1520 = vmatpush.msra.mxu0 %v1480
      %1521 = vmatpush.msra.mxu0 %v1479
      %1522 = vmatmul.f32.gmra.mxu0 %v1486
      %v1523 = vpop.f32.mrf.mxu0
      %v1524 = vadd.f32 0.0, %v1523
      %1525 = vmatmul.f32.gmra.mxu0 %v1489
      %v1526 = vpop.f32.mrf.mxu0
      %v1527 = vadd.f32 0.0, %v1526
      %1528 = vmatmul.f32.gmra.mxu0 %v1492
      %v1529 = vpop.f32.mrf.mxu0
      %v1530 = vadd.f32 0.0, %v1529
      %1531 = vmatmul.f32.gmra.mxu0 %v1495
      %v1532 = vpop.f32.mrf.mxu0
      %v1533 = vadd.f32 0.0, %v1532
      %1534 = vmatmul.f32.gmra.mxu0 %v1498
      %v1535 = vpop.f32.mrf.mxu0
      %v1536 = vadd.f32 0.0, %v1535
      %1537 = vmatmul.f32.gmra.mxu0 %v1501
      %v1538 = vpop.f32.mrf.mxu0
      %v1539 = vadd.f32 0.0, %v1538
      %1540 = vmatmul.f32.gmra.mxu0 %v1504
      %v1541 = vpop.f32.mrf.mxu0
      %v1542 = vadd.f32 0.0, %v1541
      %1543 = vdwg.mxu0
      %v1544 = vadd.f32 %v1464, %v1524
      %v1545 = vadd.f32 %v1465, %v1527
      %v1546 = vadd.f32 %v1466, %v1530
      %v1547 = vadd.f32 %v1467, %v1533
      %v1548 = vadd.f32 %v1468, %v1536
      %v1549 = vadd.f32 %v1469, %v1539
      %v1550 = vadd.f32 %v1470, %v1542
      %v1551 = vld [vmem:[%s4] sm:$0x1]
      %v1553 = vperm.slane %v1551, 0
      %v1555 = vadd.f32 %v1544, %v1553
      %v1556 = vadd.f32 %v1545, %v1553
      %v1557 = vadd.f32 %v1546, %v1553
      %v1558 = vadd.f32 %v1547, %v1553
      %v1559 = vadd.f32 %v1548, %v1553
      %v1560 = vadd.f32 %v1549, %v1553
      %v1561 = vadd.f32 %v1550, %v1553
      %v1562 = vmax.f32 %v1555, 0.0
      %v1563 = vmax.f32 %v1556, 0.0
      %v1564 = vmax.f32 %v1557, 0.0
      %v1565 = vmax.f32 %v1558, 0.0
      %v1566 = vmax.f32 %v1559, 0.0
      %v1567 = vmax.f32 %v1560, 0.0
      %v1568 = vmax.f32 %v1561, 0.0
      %v1569 = vpack.c.bf16 %v1562, %v1562
      %v1570 = vpack.c.bf16 %v1563, %v1563
      %v1571 = vpack.c.bf16 %v1564, %v1564
      %v1572 = vpack.c.bf16 %v1565, %v1565
      %v1573 = vpack.c.bf16 %v1566, %v1566
      %v1574 = vpack.c.bf16 %v1567, %v1567
      %v1575 = vpack.c.bf16 %v1568, %v1568
      %vm1576 = vcmask 388096
      %1577 = vst.msk [vmem:[%s224] sm:$0xf] %vm1576, %v1569
      %1578 = vst.msk [vmem:[%s224 + $0x4] sm:$0xf] %vm1576, %v1570
      %1579 = vst.msk [vmem:[%s224 + $0x8] sm:$0xf] %vm1576, %v1571
      %1580 = vst.msk [vmem:[%s224 + $0xc] sm:$0xf] %vm1576, %v1572
      %1581 = vst.msk [vmem:[%s224 + $0x10] sm:$0xf] %vm1576, %v1573
      %1582 = vst.msk [vmem:[%s224 + $0x14] sm:$0xf] %vm1576, %v1574
      %1583 = vst.msk [vmem:[%s224 + $0x18] sm:$0xf] %vm1576, %v1575
      %p1584 = scmp.lt.s32.totalorder %s16, 1
      %s1585 = scalar_select %p1584, %s16, 1
      %s1586 = smul.addr %s1585, 7
      %s1587 = smul.addr %s1586, 4
      %s1588 = scalar_lea.vmem %s5, %s1587
      // Predicated region
      $region41: #{encoder_forward.2} parent=39 // pred_check
        %p1589 = pneg %p144
      $region42: #{encoder_forward.2} parent=39 // pred_check_branch
        %1591 = sbr.rel (%p1589) target = $region44
      $region43: #{encoder_forward.2} parent=39 // pred_region
        _
      $region44: #{encoder_forward.2} parent=39 // pred_fallthru
        _
    $region40: #{encoder_forward.2} parent=5 // pred_fallthru
      _
    %p1592 = scmp.le.s32.totalorder 2, %s11
    // Predicated region
    $region45: #{encoder_forward.2} parent=5 // pred_check
      %p1593 = pneg %p1592
    $region46: #{encoder_forward.2} parent=5 // pred_check_branch
      %1595 = sbr.rel (%p1593) target = $region48
    $region47: #{encoder_forward.2} parent=5 // pred_region
      %s1596 = ssub.s32 %s11, 2
      // Predicated region
      $region49: #{encoder_forward.2} parent=47 // pred_check
        %p1597 = pneg %p150
      $region50: #{encoder_forward.2} parent=47 // pred_check_branch
        %1599 = sbr.rel (%p1597) target = $region52
      $region51: #{encoder_forward.2} parent=47 // pred_region
        %p1600 = scmp.lt.s32.totalorder %s17, 1
        %s1601 = scalar_select %p1600, %s17, 1
        %s1602 = smul.addr %s1601, 7
        %s1603 = smul.addr %s1602, 4
        %s1604 = scalar_lea.vmem %s5, %s1603
      $region52: #{encoder_forward.2} parent=47 // pred_fallthru
        _
    $region48: #{encoder_forward.2} parent=5 // pred_fallthru
      _
  $region6: #{encoder_forward.2} parent=0 // loop_footer
    %s15 = sadd.s32 1, %s11
  $region7: #{encoder_forward.2} parent=0 // loop_footer_branch
    %10 = sbr.rel target = $region3
  $region8: #{encoder_forward.2} parent=0 // loop_exit
    _

// kernel: encoder_forward.3
$region0: #{encoder_forward.3}
  #allocation0 [shape = 'u32[]', space=smem, size = 0x4, offset = 0x4, fixed_abs, tag = 'smem constant byte address 0x4 - core index']
  #allocation1 [shape = 'u32[72,128]{1,0:T(1,128)}', space=vmem, size = 0x9000, scoped, tag = 'internal scratch']
  #allocation2 [shape = 'f32[2,1024]{1,0:T(2,128)}', space=vmem, size = 0x2000, scoped, tag = 'scratch operand']
  #allocation3 [shape = 'bf16[1024,1024]{1,0:T(8,128)(2,1)}', space=vmem, size = 0x200000, scoped, tag = 'scratch operand']
  #allocation4 [shape = 's32[1]{0}', space=sflag, size = 0x4, scoped, tag = 'scratch operand']
  #allocation7 [shape = 's32[]', space=sflag, size = 0x4, offset = 0, fixed_abs, tag = 'sflag constant byte address 0x0 - dummy sync flag']
  #allocation8 [shape = 's32[]', space=sflag, size = 0x4, offset = 0, fixed_abs, tag = 'sflag constant byte address 0x0 - dummy sync flag']
  #allocation9 [shape = 'u32[]', space=smem, size = 0x4, offset = 0x44, fixed_abs, tag = 'smem constant byte address 0x44 - assertion arg 0']
  #allocation10 [shape = 'u32[]', space=smem, size = 0x4, offset = 0x48, fixed_abs, tag = 'smem constant byte address 0x48 - assertion arg 1']
  %s0 = inlined_call_operand.vmem [shape: bf16[2,2688], index: 0, kind: input, shape index: {}]
  %s1 = inlined_call_operand.vmem [shape: bf16[2688,1024], index: 1, kind: input, shape index: {}]
  %s2 = inlined_call_operand.vmem [shape: f32[1,1024], index: 2, kind: input, shape index: {}]
  %s3 = inlined_call_operand.hbm [shape: bf16[1024,1024], index: 3, kind: input, shape index: {}]
  %s4 = inlined_call_operand.vmem [shape: f32[1,1024], index: 4, kind: input, shape index: {}]
  %s5 = inlined_call_operand.vmem [shape: f32[1,1024], index: 5, kind: input, shape index: {}]
  %s6 = inlined_call_operand.vmem [shape: f32[1,1024], index: 6, kind: input, shape index: {}]
  %s7 = inlined_call_operand.hbm [shape: f32[2,1024], index: 7, kind: output, shape index: {}]
  %s8 = sld [smem:[#allocation0]]
  $region69: #{encoder_forward.3} parent=0
    _
  %s10 = ssub.s32 1, %s8
  %s11 = scalar_select 0, %s10, %s8
  $region1: #{encoder_forward.3} parent=0
    #allocation5 [shape = 'u8[8192]{0}', space=vmem, size = 0x2000, scoped, tag = 'output window, operand 0, single buffered']
    #allocation6 [shape = 's32[2]{0}', space=sflag, size = 0x8, scoped, tag = 'scoped memory for encoder_forward.3']
    %12 = vsyncpa [#allocation6], 0
    loop: start=0, step=1, limit=5
    $region2: #{encoder_forward.3} parent=1 // loop_pre_header
      _
    $region3: #{encoder_forward.3} parent=1 // loop_header
      %s14 = sphi 0, %s18
      %p15 = scmp.ge.s32.totalorder %s14, 5
      %s24 = sphi 0, %s26
      %s27 = sphi 0, %s24
      %s28 = sphi 0, %s27
      %s44 = sphi 0, %s28
      %s50 = sphi 0, %s52
      %s53 = sphi 0, %s50
      %s54 = sphi 0, %s53
      %s70 = sphi 0, %s54
      %s74 = sphi 0, %s74
      %s76 = sphi 0, %s74
      %s77 = sphi 0, %s76
      %s91 = sphi 0, %s77
      %s95 = sphi 0, %s95
      %s97 = sphi 0, %s95
      %s98 = sphi 0, %s97
      %s112 = sphi 0, %s98
      %s116 = sphi 0, %s116
      %s118 = sphi 0, %s116
      %s119 = sphi 0, %s118
      %s133 = sphi 0, %s119
      %s137 = sphi 0, %s137
      %s139 = sphi 0, %s137
      %s140 = sphi 0, %s139
      %s154 = sphi 0, %s140
      %s158 = sphi 0, %s158
      %s160 = sphi 0, %s158
      %s161 = sphi 0, %s160
      %s175 = sphi 0, %s161
    $region4: #{encoder_forward.3} parent=1 // loop_header_branch
      %17 = sbr.rel (%p15) target = $region8
    $region5: #{encoder_forward.3} parent=1 // loop_body
      %s19 = ssub.s32 %s14, 1
      %s20 = ssub.s32 %s14, 2
      %s21 = sadd.s32 %s14, 1
      %s22 = ssub.s32 %s14, %s21
      %p23 = scmp.eq.s32.totalorder %s22, 0
      %s25 = sadd.s32 %s24, 1
      %s26 = scalar_select %p23, %s24, %s25
      %p29 = pneg %p23
      %p30 = scmp.eq.s32.totalorder %s14, 2
      %p31 = por %p29, %p30
      %p32 = scmp.ne.s32.totalorder %s24, %s27
      %p33 = scmp.eq.s32.totalorder %s14, 0
      %p34 = por %p32, %p33
      %p35 = scmp.ne.s32.totalorder %s24, %s27
      %p36 = scmp.eq.s32.totalorder %s19, 2
      %p37 = por %p35, %p36
      %p38 = scmp.ne.s32.totalorder %s27, %s28
      %p39 = scmp.eq.s32.totalorder %s19, 0
      %p40 = por %p38, %p39
      %p41 = scmp.ne.s32.totalorder %s27, %s28
      %p42 = scmp.eq.s32.totalorder %s20, 2
      %p43 = por %p41, %p42
      %p45 = scmp.ne.s32.totalorder %s28, %s44
      %p46 = scmp.eq.s32.totalorder %s20, 0
      %p47 = por %p45, %p46
      %s48 = ssub.s32 %s14, %s21
      %p49 = scmp.eq.s32.totalorder %s48, 0
      %s51 = sadd.s32 %s50, 1
      %s52 = scalar_select %p49, %s50, %s51
      %p55 = pneg %p49
      %p56 = scmp.eq.s32.totalorder %s14, 2
      %p57 = por %p55, %p56
      %p58 = scmp.ne.s32.totalorder %s50, %s53
      %p59 = scmp.eq.s32.totalorder %s14, 0
      %p60 = por %p58, %p59
      %p61 = scmp.ne.s32.totalorder %s50, %s53
      %p62 = scmp.eq.s32.totalorder %s19, 2
      %p63 = por %p61, %p62
      %p64 = scmp.ne.s32.totalorder %s53, %s54
      %p65 = scmp.eq.s32.totalorder %s19, 0
      %p66 = por %p64, %p65
      %p67 = scmp.ne.s32.totalorder %s53, %s54
      %p68 = scmp.eq.s32.totalorder %s20, 2
      %p69 = por %p67, %p68
      %p71 = scmp.ne.s32.totalorder %s54, %s70
      %p72 = scmp.eq.s32.totalorder %s20, 0
      %p73 = por %p71, %p72
      %s75 = sadd.s32 %s74, 1
      %p78 = scmp.eq.s32.totalorder %s14, 2
      %p79 = scmp.ne.s32.totalorder %s74, %s76
      %p80 = scmp.eq.s32.totalorder %s14, 0
      %p81 = por %p79, %p80
      %p82 = scmp.ne.s32.totalorder %s74, %s76
      %p83 = scmp.eq.s32.totalorder %s19, 2
      %p84 = por %p82, %p83
      %p85 = scmp.ne.s32.totalorder %s76, %s77
      %p86 = scmp.eq.s32.totalorder %s19, 0
      %p87 = por %p85, %p86
      %p88 = scmp.ne.s32.totalorder %s76, %s77
      %p89 = scmp.eq.s32.totalorder %s20, 2
      %p90 = por %p88, %p89
      %p92 = scmp.ne.s32.totalorder %s77, %s91
      %p93 = scmp.eq.s32.totalorder %s20, 0
      %p94 = por %p92, %p93
      %s96 = sadd.s32 %s95, 1
      %p99 = scmp.eq.s32.totalorder %s14, 2
      %p100 = scmp.ne.s32.totalorder %s95, %s97
      %p101 = scmp.eq.s32.totalorder %s14, 0
      %p102 = por %p100, %p101
      %p103 = scmp.ne.s32.totalorder %s95, %s97
      %p104 = scmp.eq.s32.totalorder %s19, 2
      %p105 = por %p103, %p104
      %p106 = scmp.ne.s32.totalorder %s97, %s98
      %p107 = scmp.eq.s32.totalorder %s19, 0
      %p108 = por %p106, %p107
      %p109 = scmp.ne.s32.totalorder %s97, %s98
      %p110 = scmp.eq.s32.totalorder %s20, 2
      %p111 = por %p109, %p110
      %p113 = scmp.ne.s32.totalorder %s98, %s112
      %p114 = scmp.eq.s32.totalorder %s20, 0
      %p115 = por %p113, %p114
      %s117 = sadd.s32 %s116, 1
      %p120 = scmp.eq.s32.totalorder %s14, 2
      %p121 = scmp.ne.s32.totalorder %s116, %s118
      %p122 = scmp.eq.s32.totalorder %s14, 0
      %p123 = por %p121, %p122
      %p124 = scmp.ne.s32.totalorder %s116, %s118
      %p125 = scmp.eq.s32.totalorder %s19, 2
      %p126 = por %p124, %p125
      %p127 = scmp.ne.s32.totalorder %s118, %s119
      %p128 = scmp.eq.s32.totalorder %s19, 0
      %p129 = por %p127, %p128
      %p130 = scmp.ne.s32.totalorder %s118, %s119
      %p131 = scmp.eq.s32.totalorder %s20, 2
      %p132 = por %p130, %p131
      %p134 = scmp.ne.s32.totalorder %s119, %s133
      %p135 = scmp.eq.s32.totalorder %s20, 0
      %p136 = por %p134, %p135
      %s138 = sadd.s32 %s137, 1
      %p141 = scmp.eq.s32.totalorder %s14, 2
      %p142 = scmp.ne.s32.totalorder %s137, %s139
      %p143 = scmp.eq.s32.totalorder %s14, 0
      %p144 = por %p142, %p143
      %p145 = scmp.ne.s32.totalorder %s137, %s139
      %p146 = scmp.eq.s32.totalorder %s19, 2
      %p147 = por %p145, %p146
      %p148 = scmp.ne.s32.totalorder %s139, %s140
      %p149 = scmp.eq.s32.totalorder %s19, 0
      %p150 = por %p148, %p149
      %p151 = scmp.ne.s32.totalorder %s139, %s140
      %p152 = scmp.eq.s32.totalorder %s20, 2
      %p153 = por %p151, %p152
      %p155 = scmp.ne.s32.totalorder %s140, %s154
      %p156 = scmp.eq.s32.totalorder %s20, 0
      %p157 = por %p155, %p156
      %s159 = sadd.s32 %s158, 1
      %p162 = scmp.eq.s32.totalorder %s14, 2
      %p163 = scmp.ne.s32.totalorder %s158, %s160
      %p164 = scmp.eq.s32.totalorder %s14, 0
      %p165 = por %p163, %p164
      %p166 = scmp.ne.s32.totalorder %s158, %s160
      %p167 = scmp.eq.s32.totalorder %s19, 2
      %p168 = por %p166, %p167
      %p169 = scmp.ne.s32.totalorder %s160, %s161
      %p170 = scmp.eq.s32.totalorder %s19, 0
      %p171 = por %p169, %p170
      %p172 = scmp.ne.s32.totalorder %s160, %s161
      %p173 = scmp.eq.s32.totalorder %s20, 2
      %p174 = por %p172, %p173
      %p176 = scmp.ne.s32.totalorder %s161, %s175
      %p177 = scmp.eq.s32.totalorder %s20, 0
      %p178 = por %p176, %p177
      %p179 = scmp.le.s32.totalorder 1, %s14
      %p180 = scmp.lt.s32.totalorder %s14, 4
      %p181 = pnand %p179, %p180
      %p182 = pneg %p181
      // Predicated region
      $region9: #{encoder_forward.3} parent=5 // pred_check
        _
      $region10: #{encoder_forward.3} parent=5 // pred_check_branch
        %184 = sbr.rel (%p181) target = $region12
      $region11: #{encoder_forward.3} parent=5 // pred_region
        %s185 = ssub.s32 %s14, 1
        // Predicated region
        $region13: #{encoder_forward.3} parent=11 // pred_check
          %p186 = pneg %p87
        $region14: #{encoder_forward.3} parent=11 // pred_check_branch
          %188 = sbr.rel (%p186) target = $region16
        $region15: #{encoder_forward.3} parent=11 // pred_region
          _
        $region16: #{encoder_forward.3} parent=11 // pred_fallthru
          _
        // Predicated region
        $region17: #{encoder_forward.3} parent=11 // pred_check
          %p189 = pneg %p108
        $region18: #{encoder_forward.3} parent=11 // pred_check_branch
          %191 = sbr.rel (%p189) target = $region20
        $region19: #{encoder_forward.3} parent=11 // pred_region
          _
        $region20: #{encoder_forward.3} parent=11 // pred_fallthru
          _
        // Predicated region
        $region21: #{encoder_forward.3} parent=11 // pred_check
          %p192 = pneg %p129
        $region22: #{encoder_forward.3} parent=11 // pred_check_branch
          %194 = sbr.rel (%p192) target = $region24
        $region23: #{encoder_forward.3} parent=11 // pred_region
          _
        $region24: #{encoder_forward.3} parent=11 // pred_fallthru
          _
        // Predicated region
        $region25: #{encoder_forward.3} parent=11 // pred_check
          %p195 = pneg %p150
        $region26: #{encoder_forward.3} parent=11 // pred_check_branch
          %197 = sbr.rel (%p195) target = $region28
        $region27: #{encoder_forward.3} parent=11 // pred_region
          _
        $region28: #{encoder_forward.3} parent=11 // pred_fallthru
          _
      $region12: #{encoder_forward.3} parent=5 // pred_fallthru
        _
      %p198 = scmp.lt.s32.totalorder %s14, 3
      // Predicated region
      $region29: #{encoder_forward.3} parent=5 // pred_check
        %p199 = pneg %p198
      $region30: #{encoder_forward.3} parent=5 // pred_check_branch
        %201 = sbr.rel (%p199) target = $region32
      $region31: #{encoder_forward.3} parent=5 // pred_region
        // Predicated region
        $region33: #{encoder_forward.3} parent=31 // pred_check
          %p202 = pneg %p34
        $region34: #{encoder_forward.3} parent=31 // pred_check_branch
          %204 = sbr.rel (%p202) target = $region36
        $region35: #{encoder_forward.3} parent=31 // pred_region
          %s205 = smul.u32 7, %s14
          %p206 = scmp.lt.s32.totalorder %s205, 20
          %s207 = scalar_select %p206, %s205, 20
          %s208 = scalar_lea.vmem %s0, %s207
          %s209 = smul.u32 7, %s14
        $region36: #{encoder_forward.3} parent=31 // pred_fallthru
          _
        // Predicated region
        $region37: #{encoder_forward.3} parent=31 // pred_check
          %p210 = pneg %p60
        $region38: #{encoder_forward.3} parent=31 // pred_check_branch
          %212 = sbr.rel (%p210) target = $region40
        $region39: #{encoder_forward.3} parent=31 // pred_region
          %s213 = smul.u32 112, %s14
          %p214 = scmp.lt.s32.totalorder %s213, 335
          %s215 = scalar_select %p214, %s213, 335
          %s216 = smul.addr %s215, 8
          %s217 = smul.addr %s216, 4
          %s218 = scalar_lea.vmem %s1, %s217
          %s219 = smul.u32 112, %s14
        $region40: #{encoder_forward.3} parent=31 // pred_fallthru
          _
      $region32: #{encoder_forward.3} parent=5 // pred_fallthru
        _
      %p220 = scmp.le.s32.totalorder 1, %s14
      %p221 = scmp.lt.s32.totalorder %s14, 4
      %p222 = pnand %p220, %p221
      %p223 = pneg %p222
      // Predicated region
      $region41: #{encoder_forward.3} parent=5 // pred_check
        _
      $region42: #{encoder_forward.3} parent=5 // pred_check_branch
        %225 = sbr.rel (%p222) target = $region44
      $region43: #{encoder_forward.3} parent=5 // pred_region
        %s226 = ssub.s32 %s14, 1
        %s227 = smul.u32 7, %s19
        %p228 = scmp.lt.s32.totalorder %s227, 20
        %s229 = scalar_select %p228, %s227, 20
        %s230 = scalar_lea.vmem %s0, %s229
        %p231 = pneg %p40
        %p232 = pneg %p37
        %s233 = smul.u32 112, %s19
        %p234 = scmp.lt.s32.totalorder %s233, 335
        %s235 = scalar_select %p234, %s233, 335
        %s236 = smul.addr %s235, 8
        %s237 = smul.addr %s236, 4
        %s238 = scalar_lea.vmem %s1, %s237
        %p239 = pneg %p66
        %p240 = pneg %p63
        %p241 = pneg %p87
        %p242 = pneg %p84
        %p243 = pneg %p108
        %p244 = pneg %p105
        %p245 = pneg %p129
        %p246 = pneg %p126
        %p247 = pneg %p150
        %p248 = pneg %p147
        %p249 = pneg %p171
        %p250 = pneg %p168
        %s251 = smul.u32 7, %s19
        %p252 = scmp.lt.s32.totalorder %s251, 20
        %s253 = scalar_select %p252, %s251, 20
        %s254 = scalar_lea.vmem %s0, %s253
        %s255 = smul.u32 7, %s19
        %s256 = smul.u32 112, %s19
        %p257 = scmp.lt.s32.totalorder %s256, 335
        %s258 = scalar_select %p257, %s256, 335
        %s259 = smul.addr %s258, 8
        %s260 = smul.addr %s259, 4
        %s261 = scalar_lea.vmem %s1, %s260
        %s262 = smul.u32 112, %s19
        %p263 = scmp.eq.s32.totalorder %s19, 0
        // Predicated region
        $region45: #{encoder_forward.3} parent=43 // pred_check
          %p264 = pneg %p263
        $region46: #{encoder_forward.3} parent=43 // pred_check_branch
          %266 = sbr.rel (%p264) target = $region48
        $region47: #{encoder_forward.3} parent=43 // pred_region
          %267 = vst [vmem:[#allocation2] sm:$0xff] 0.0
          %268 = vst [vmem:[#allocation2 + $0x8] sm:$0xff] 0.0
          // Predicated region
          $region49: #{encoder_forward.3} parent=47 // pred_check
            _
          $region50: #{encoder_forward.3} parent=47 // pred_check_branch
            %270 = sbr.rel target = $region52
          $region51: #{encoder_forward.3} parent=47 // pred_region
            %271 = sst [smem:[#allocation9]] [#allocation8]
            %272 = sst [smem:[#allocation10]] [#allocation7]
          $region52: #{encoder_forward.3} parent=47 // pred_fallthru
            _
          %274 = shalt.err (0)
          %s276 = sshll.u32 %s3, 4
          %s277 = int_to_ptr.hbm [resolvable:$true] %s276
          %s278 = sshll.u32 [#allocation3], 4
          %s279 = int_to_ptr.vmem [resolvable:$true] %s278
          %281 = dma.hbm_to_vmem [thread:$0]  %s277, 65536, %s279, [#allocation4]
        $region48: #{encoder_forward.3} parent=43 // pred_fallthru
          _
        %v282 = vld [vmem:[#allocation2] sm:$0xff]
        %v283 = vld [vmem:[#allocation2 + $0x8] sm:$0xff]
        %v284 = vld [vmem:[%s254] sm:$0x7f]
        %v285 = vld [vmem:[%s261] sm:$0xff]
        %v286 = vld [vmem:[%s261 + $0x8] sm:$0xff]
        %v287 = vld [vmem:[%s261 + $0x10] sm:$0xff]
        %v288 = vld [vmem:[%s261 + $0x18] sm:$0xff]
        %v289 = vld [vmem:[%s261 + $0x20] sm:$0xff]
        %v290 = vld [vmem:[%s261 + $0x28] sm:$0xff]
        %v291 = vld [vmem:[%s261 + $0x30] sm:$0xff]
        %v292 = vld [vmem:[%s261 + $0x38] sm:$0xff]
        %v293 = vld [vmem:[%s261 + $0x40] sm:$0xff]
        %v294 = vld [vmem:[%s261 + $0x48] sm:$0xff]
        %v295 = vld [vmem:[%s261 + $0x50] sm:$0xff]
        %v296 = vld [vmem:[%s261 + $0x58] sm:$0xff]
        %v297 = vld [vmem:[%s261 + $0x60] sm:$0xff]
        %v298 = vld [vmem:[%s261 + $0x68] sm:$0xff]
        %v299 = vld [vmem:[%s261 + $0x70] sm:$0xff]
        %v300 = vld [vmem:[%s261 + $0x78] sm:$0xff]
        %v301 = vld [vmem:[%s261 + $0x80] sm:$0xff]
        %v302 = vld [vmem:[%s261 + $0x88] sm:$0xff]
        %v303 = vld [vmem:[%s261 + $0x90] sm:$0xff]
        %v304 = vld [vmem:[%s261 + $0x98] sm:$0xff]
        %v305 = vld [vmem:[%s261 + $0xa0] sm:$0xff]
        %v306 = vld [vmem:[%s261 + $0xa8] sm:$0xff]
        %v307 = vld [vmem:[%s261 + $0xb0] sm:$0xff]
        %v308 = vld [vmem:[%s261 + $0xb8] sm:$0xff]
        %v309 = vld [vmem:[%s261 + $0xc0] sm:$0xff]
        %v310 = vld [vmem:[%s261 + $0xc8] sm:$0xff]
        %v311 = vld [vmem:[%s261 + $0xd0] sm:$0xff]
        %v312 = vld [vmem:[%s261 + $0xd8] sm:$0xff]
        %v313 = vld [vmem:[%s261 + $0xe0] sm:$0xff]
        %v314 = vld [vmem:[%s261 + $0xe8] sm:$0xff]
        %v315 = vld [vmem:[%s261 + $0xf0] sm:$0xff]
        %v316 = vld [vmem:[%s261 + $0xf8] sm:$0xff]
        %v317 = vld [vmem:[%s261 + $0x100] sm:$0xff]
        %v318 = vld [vmem:[%s261 + $0x108] sm:$0xff]
        %v319 = vld [vmem:[%s261 + $0x110] sm:$0xff]
        %v320 = vld [vmem:[%s261 + $0x118] sm:$0xff]
        %v321 = vld [vmem:[%s261 + $0x120] sm:$0xff]
        %v322 = vld [vmem:[%s261 + $0x128] sm:$0xff]
        %v323 = vld [vmem:[%s261 + $0x130] sm:$0xff]
        %v324 = vld [vmem:[%s261 + $0x138] sm:$0xff]
        %v325 = vld [vmem:[%s261 + $0x140] sm:$0xff]
        %v326 = vld [vmem:[%s261 + $0x148] sm:$0xff]
        %v327 = vld [vmem:[%s261 + $0x150] sm:$0xff]
        %v328 = vld [vmem:[%s261 + $0x158] sm:$0xff]
        %v329 = vld [vmem:[%s261 + $0x160] sm:$0xff]
        %v330 = vld [vmem:[%s261 + $0x168] sm:$0xff]
        %v331 = vld [vmem:[%s261 + $0x170] sm:$0xff]
        %v332 = vld [vmem:[%s261 + $0x178] sm:$0xff]
        %v333 = vld [vmem:[%s261 + $0x180] sm:$0xff]
        %v334 = vld [vmem:[%s261 + $0x188] sm:$0xff]
        %v335 = vld [vmem:[%s261 + $0x190] sm:$0xff]
        %v336 = vld [vmem:[%s261 + $0x198] sm:$0xff]
        %v337 = vld [vmem:[%s261 + $0x1a0] sm:$0xff]
        %v338 = vld [vmem:[%s261 + $0x1a8] sm:$0xff]
        %v339 = vld [vmem:[%s261 + $0x1b0] sm:$0xff]
        %v340 = vld [vmem:[%s261 + $0x1b8] sm:$0xff]
        %v341 = vld [vmem:[%s261 + $0x1c0] sm:$0xff]
        %v342 = vld [vmem:[%s261 + $0x1c8] sm:$0xff]
        %v343 = vld [vmem:[%s261 + $0x1d0] sm:$0xff]
        %v344 = vld [vmem:[%s261 + $0x1d8] sm:$0xff]
        %v345 = vld [vmem:[%s261 + $0x1e0] sm:$0xff]
        %v346 = vld [vmem:[%s261 + $0x1e8] sm:$0xff]
        %v347 = vld [vmem:[%s261 + $0x1f0] sm:$0xff]
        %v348 = vld [vmem:[%s261 + $0x1f8] sm:$0xff]
        %v349 = vld [vmem:[%s261 + $0x200] sm:$0xff]
        %v350 = vld [vmem:[%s261 + $0x208] sm:$0xff]
        %v351 = vld [vmem:[%s261 + $0x210] sm:$0xff]
        %v352 = vld [vmem:[%s261 + $0x218] sm:$0xff]
        %v353 = vld [vmem:[%s261 + $0x220] sm:$0xff]
        %v354 = vld [vmem:[%s261 + $0x228] sm:$0xff]
        %v355 = vld [vmem:[%s261 + $0x230] sm:$0xff]
        %v356 = vld [vmem:[%s261 + $0x238] sm:$0xff]
        %v357 = vld [vmem:[%s261 + $0x240] sm:$0xff]
        %v358 = vld [vmem:[%s261 + $0x248] sm:$0xff]
        %v359 = vld [vmem:[%s261 + $0x250] sm:$0xff]
        %v360 = vld [vmem:[%s261 + $0x258] sm:$0xff]
        %v361 = vld [vmem:[%s261 + $0x260] sm:$0xff]
        %v362 = vld [vmem:[%s261 + $0x268] sm:$0xff]
        %v363 = vld [vmem:[%s261 + $0x270] sm:$0xff]
        %v364 = vld [vmem:[%s261 + $0x278] sm:$0xff]
        %v365 = vld [vmem:[%s261 + $0x280] sm:$0xff]
        %v366 = vld [vmem:[%s261 + $0x288] sm:$0xff]
        %v367 = vld [vmem:[%s261 + $0x290] sm:$0xff]
        %v368 = vld [vmem:[%s261 + $0x298] sm:$0xff]
        %v369 = vld [vmem:[%s261 + $0x2a0] sm:$0xff]
        %v370 = vld [vmem:[%s261 + $0x2a8] sm:$0xff]
        %v371 = vld [vmem:[%s261 + $0x2b0] sm:$0xff]
        %v372 = vld [vmem:[%s261 + $0x2b8] sm:$0xff]
        %v373 = vld [vmem:[%s261 + $0x2c0] sm:$0xff]
        %v374 = vld [vmem:[%s261 + $0x2c8] sm:$0xff]
        %v375 = vld [vmem:[%s261 + $0x2d0] sm:$0xff]
        %v376 = vld [vmem:[%s261 + $0x2d8] sm:$0xff]
        %v377 = vld [vmem:[%s261 + $0x2e0] sm:$0xff]
        %v378 = vld [vmem:[%s261 + $0x2e8] sm:$0xff]
        %v379 = vld [vmem:[%s261 + $0x2f0] sm:$0xff]
        %v380 = vld [vmem:[%s261 + $0x2f8] sm:$0xff]
        %v381 = vld [vmem:[%s261 + $0x300] sm:$0xff]
        %v382 = vld [vmem:[%s261 + $0x308] sm:$0xff]
        %v383 = vld [vmem:[%s261 + $0x310] sm:$0xff]
        %v384 = vld [vmem:[%s261 + $0x318] sm:$0xff]
        %v385 = vld [vmem:[%s261 + $0x320] sm:$0xff]
        %v386 = vld [vmem:[%s261 + $0x328] sm:$0xff]
        %v387 = vld [vmem:[%s261 + $0x330] sm:$0xff]
        %v388 = vld [vmem:[%s261 + $0x338] sm:$0xff]
        %v389 = vld [vmem:[%s261 + $0x340] sm:$0xff]
        %v390 = vld [vmem:[%s261 + $0x348] sm:$0xff]
        %v391 = vld [vmem:[%s261 + $0x350] sm:$0xff]
        %v392 = vld [vmem:[%s261 + $0x358] sm:$0xff]
        %v393 = vld [vmem:[%s261 + $0x360] sm:$0xff]
        %v394 = vld [vmem:[%s261 + $0x368] sm:$0xff]
        %v395 = vld [vmem:[%s261 + $0x370] sm:$0xff]
        %v396 = vld [vmem:[%s261 + $0x378] sm:$0xff]
        %v397 = vld [vmem:[%s261 + $0x380] sm:$0xff]
        %v398 = vld [vmem:[%s261 + $0x388] sm:$0xff]
        %v399 = vld [vmem:[%s261 + $0x390] sm:$0xff]
        %v400 = vld [vmem:[%s261 + $0x398] sm:$0xff]
        %v401 = vld [vmem:[%s261 + $0x3a0] sm:$0xff]
        %v402 = vld [vmem:[%s261 + $0x3a8] sm:$0xff]
        %v403 = vld [vmem:[%s261 + $0x3b0] sm:$0xff]
        %v404 = vld [vmem:[%s261 + $0x3b8] sm:$0xff]
        %v405 = vld [vmem:[%s261 + $0x3c0] sm:$0xff]
        %v406 = vld [vmem:[%s261 + $0x3c8] sm:$0xff]
        %v407 = vld [vmem:[%s261 + $0x3d0] sm:$0xff]
        %v408 = vld [vmem:[%s261 + $0x3d8] sm:$0xff]
        %v409 = vld [vmem:[%s261 + $0x3e0] sm:$0xff]
        %v410 = vld [vmem:[%s261 + $0x3e8] sm:$0xff]
        %v411 = vld [vmem:[%s261 + $0x3f0] sm:$0xff]
        %v412 = vld [vmem:[%s261 + $0x3f8] sm:$0xff]
        %v413 = vld [vmem:[%s261 + $0x400] sm:$0xff]
        %v414 = vld [vmem:[%s261 + $0x408] sm:$0xff]
        %v415 = vld [vmem:[%s261 + $0x410] sm:$0xff]
        %v416 = vld [vmem:[%s261 + $0x418] sm:$0xff]
        %v417 = vld [vmem:[%s261 + $0x420] sm:$0xff]
        %v418 = vld [vmem:[%s261 + $0x428] sm:$0xff]
        %v419 = vld [vmem:[%s261 + $0x430] sm:$0xff]
        %v420 = vld [vmem:[%s261 + $0x438] sm:$0xff]
        %v421 = vld [vmem:[%s261 + $0x440] sm:$0xff]
        %v422 = vld [vmem:[%s261 + $0x448] sm:$0xff]
        %v423 = vld [vmem:[%s261 + $0x450] sm:$0xff]
        %v424 = vld [vmem:[%s261 + $0x458] sm:$0xff]
        %v425 = vld [vmem:[%s261 + $0x460] sm:$0xff]
        %v426 = vld [vmem:[%s261 + $0x468] sm:$0xff]
        %v427 = vld [vmem:[%s261 + $0x470] sm:$0xff]
        %v428 = vld [vmem:[%s261 + $0x478] sm:$0xff]
        %v429 = vld [vmem:[%s261 + $0x480] sm:$0xff]
        %v430 = vld [vmem:[%s261 + $0x488] sm:$0xff]
        %v431 = vld [vmem:[%s261 + $0x490] sm:$0xff]
        %v432 = vld [vmem:[%s261 + $0x498] sm:$0xff]
        %v433 = vld [vmem:[%s261 + $0x4a0] sm:$0xff]
        %v434 = vld [vmem:[%s261 + $0x4a8] sm:$0xff]
        %v435 = vld [vmem:[%s261 + $0x4b0] sm:$0xff]
        %v436 = vld [vmem:[%s261 + $0x4b8] sm:$0xff]
        %v437 = vld [vmem:[%s261 + $0x4c0] sm:$0xff]
        %v438 = vld [vmem:[%s261 + $0x4c8] sm:$0xff]
        %v439 = vld [vmem:[%s261 + $0x4d0] sm:$0xff]
        %v440 = vld [vmem:[%s261 + $0x4d8] sm:$0xff]
        %v441 = vld [vmem:[%s261 + $0x4e0] sm:$0xff]
        %v442 = vld [vmem:[%s261 + $0x4e8] sm:$0xff]
        %v443 = vld [vmem:[%s261 + $0x4f0] sm:$0xff]
        %v444 = vld [vmem:[%s261 + $0x4f8] sm:$0xff]
        %v445 = vld [vmem:[%s261 + $0x500] sm:$0xff]
        %v446 = vld [vmem:[%s261 + $0x508] sm:$0xff]
        %v447 = vld [vmem:[%s261 + $0x510] sm:$0xff]
        %v448 = vld [vmem:[%s261 + $0x518] sm:$0xff]
        %v449 = vld [vmem:[%s261 + $0x520] sm:$0xff]
        %v450 = vld [vmem:[%s261 + $0x528] sm:$0xff]
        %v451 = vld [vmem:[%s261 + $0x530] sm:$0xff]
        %v452 = vld [vmem:[%s261 + $0x538] sm:$0xff]
        %v453 = vld [vmem:[%s261 + $0x540] sm:$0xff]
        %v454 = vld [vmem:[%s261 + $0x548] sm:$0xff]
        %v455 = vld [vmem:[%s261 + $0x550] sm:$0xff]
        %v456 = vld [vmem:[%s261 + $0x558] sm:$0xff]
        %v457 = vld [vmem:[%s261 + $0x560] sm:$0xff]
        %v458 = vld [vmem:[%s261 + $0x568] sm:$0xff]
        %v459 = vld [vmem:[%s261 + $0x570] sm:$0xff]
        %v460 = vld [vmem:[%s261 + $0x578] sm:$0xff]
        %v461 = vld [vmem:[%s261 + $0x580] sm:$0xff]
        %v462 = vld [vmem:[%s261 + $0x588] sm:$0xff]
        %v463 = vld [vmem:[%s261 + $0x590] sm:$0xff]
        %v464 = vld [vmem:[%s261 + $0x598] sm:$0xff]
        %v465 = vld [vmem:[%s261 + $0x5a0] sm:$0xff]
        %v466 = vld [vmem:[%s261 + $0x5a8] sm:$0xff]
        %v467 = vld [vmem:[%s261 + $0x5b0] sm:$0xff]
        %v468 = vld [vmem:[%s261 + $0x5b8] sm:$0xff]
        %v469 = vld [vmem:[%s261 + $0x5c0] sm:$0xff]
        %v470 = vld [vmem:[%s261 + $0x5c8] sm:$0xff]
        %v471 = vld [vmem:[%s261 + $0x5d0] sm:$0xff]
        %v472 = vld [vmem:[%s261 + $0x5d8] sm:$0xff]
        %v473 = vld [vmem:[%s261 + $0x5e0] sm:$0xff]
        %v474 = vld [vmem:[%s261 + $0x5e8] sm:$0xff]
        %v475 = vld [vmem:[%s261 + $0x5f0] sm:$0xff]
        %v476 = vld [vmem:[%s261 + $0x5f8] sm:$0xff]
        %v477 = vld [vmem:[%s261 + $0x600] sm:$0xff]
        %v478 = vld [vmem:[%s261 + $0x608] sm:$0xff]
        %v479 = vld [vmem:[%s261 + $0x610] sm:$0xff]
        %v480 = vld [vmem:[%s261 + $0x618] sm:$0xff]
        %v481 = vld [vmem:[%s261 + $0x620] sm:$0xff]
        %v482 = vld [vmem:[%s261 + $0x628] sm:$0xff]
        %v483 = vld [vmem:[%s261 + $0x630] sm:$0xff]
        %v484 = vld [vmem:[%s261 + $0x638] sm:$0xff]
        %v485 = vld [vmem:[%s261 + $0x640] sm:$0xff]
        %v486 = vld [vmem:[%s261 + $0x648] sm:$0xff]
        %v487 = vld [vmem:[%s261 + $0x650] sm:$0xff]
        %v488 = vld [vmem:[%s261 + $0x658] sm:$0xff]
        %v489 = vld [vmem:[%s261 + $0x660] sm:$0xff]
        %v490 = vld [vmem:[%s261 + $0x668] sm:$0xff]
        %v491 = vld [vmem:[%s261 + $0x670] sm:$0xff]
        %v492 = vld [vmem:[%s261 + $0x678] sm:$0xff]
        %v493 = vld [vmem:[%s261 + $0x680] sm:$0xff]
        %v494 = vld [vmem:[%s261 + $0x688] sm:$0xff]
        %v495 = vld [vmem:[%s261 + $0x690] sm:$0xff]
        %v496 = vld [vmem:[%s261 + $0x698] sm:$0xff]
        %v497 = vld [vmem:[%s261 + $0x6a0] sm:$0xff]
        %v498 = vld [vmem:[%s261 + $0x6a8] sm:$0xff]
        %v499 = vld [vmem:[%s261 + $0x6b0] sm:$0xff]
        %v500 = vld [vmem:[%s261 + $0x6b8] sm:$0xff]
        %v501 = vld [vmem:[%s261 + $0x6c0] sm:$0xff]
        %v502 = vld [vmem:[%s261 + $0x6c8] sm:$0xff]
        %v503 = vld [vmem:[%s261 + $0x6d0] sm:$0xff]
        %v504 = vld [vmem:[%s261 + $0x6d8] sm:$0xff]
        %v505 = vld [vmem:[%s261 + $0x6e0] sm:$0xff]
        %v506 = vld [vmem:[%s261 + $0x6e8] sm:$0xff]
        %v507 = vld [vmem:[%s261 + $0x6f0] sm:$0xff]
        %v508 = vld [vmem:[%s261 + $0x6f8] sm:$0xff]
        %v509 = vld [vmem:[%s261 + $0x700] sm:$0xff]
        %v510 = vld [vmem:[%s261 + $0x708] sm:$0xff]
        %v511 = vld [vmem:[%s261 + $0x710] sm:$0xff]
        %v512 = vld [vmem:[%s261 + $0x718] sm:$0xff]
        %v513 = vld [vmem:[%s261 + $0x720] sm:$0xff]
        %v514 = vld [vmem:[%s261 + $0x728] sm:$0xff]
        %v515 = vld [vmem:[%s261 + $0x730] sm:$0xff]
        %v516 = vld [vmem:[%s261 + $0x738] sm:$0xff]
        %v517 = vld [vmem:[%s261 + $0x740] sm:$0xff]
        %v518 = vld [vmem:[%s261 + $0x748] sm:$0xff]
        %v519 = vld [vmem:[%s261 + $0x750] sm:$0xff]
        %v520 = vld [vmem:[%s261 + $0x758] sm:$0xff]
        %v521 = vld [vmem:[%s261 + $0x760] sm:$0xff]
        %v522 = vld [vmem:[%s261 + $0x768] sm:$0xff]
        %v523 = vld [vmem:[%s261 + $0x770] sm:$0xff]
        %v524 = vld [vmem:[%s261 + $0x778] sm:$0xff]
        %v525 = vld [vmem:[%s261 + $0x780] sm:$0xff]
        %v526 = vld [vmem:[%s261 + $0x788] sm:$0xff]
        %v527 = vld [vmem:[%s261 + $0x790] sm:$0xff]
        %v528 = vld [vmem:[%s261 + $0x798] sm:$0xff]
        %v529 = vld [vmem:[%s261 + $0x7a0] sm:$0xff]
        %v530 = vld [vmem:[%s261 + $0x7a8] sm:$0xff]
        %v531 = vld [vmem:[%s261 + $0x7b0] sm:$0xff]
        %v532 = vld [vmem:[%s261 + $0x7b8] sm:$0xff]
        %v533 = vld [vmem:[%s261 + $0x7c0] sm:$0xff]
        %v534 = vld [vmem:[%s261 + $0x7c8] sm:$0xff]
        %v535 = vld [vmem:[%s261 + $0x7d0] sm:$0xff]
        %v536 = vld [vmem:[%s261 + $0x7d8] sm:$0xff]
        %v537 = vld [vmem:[%s261 + $0x7e0] sm:$0xff]
        %v538 = vld [vmem:[%s261 + $0x7e8] sm:$0xff]
        %v539 = vld [vmem:[%s261 + $0x7f0] sm:$0xff]
        %v540 = vld [vmem:[%s261 + $0x7f8] sm:$0xff]
        %v541 = vld [vmem:[%s261 + $0x800] sm:$0xff]
        %v542 = vld [vmem:[%s261 + $0x808] sm:$0xff]
        %v543 = vld [vmem:[%s261 + $0x810] sm:$0xff]
        %v544 = vld [vmem:[%s261 + $0x818] sm:$0xff]
        %v545 = vld [vmem:[%s261 + $0x820] sm:$0xff]
        %v546 = vld [vmem:[%s261 + $0x828] sm:$0xff]
        %v547 = vld [vmem:[%s261 + $0x830] sm:$0xff]
        %v548 = vld [vmem:[%s261 + $0x838] sm:$0xff]
        %v549 = vld [vmem:[%s261 + $0x840] sm:$0xff]
        %v550 = vld [vmem:[%s261 + $0x848] sm:$0xff]
        %v551 = vld [vmem:[%s261 + $0x850] sm:$0xff]
        %v552 = vld [vmem:[%s261 + $0x858] sm:$0xff]
        %v553 = vld [vmem:[%s261 + $0x860] sm:$0xff]
        %v554 = vld [vmem:[%s261 + $0x868] sm:$0xff]
        %v555 = vld [vmem:[%s261 + $0x870] sm:$0xff]
        %v556 = vld [vmem:[%s261 + $0x878] sm:$0xff]
        %v557 = vld [vmem:[%s261 + $0x880] sm:$0xff]
        %v558 = vld [vmem:[%s261 + $0x888] sm:$0xff]
        %v559 = vld [vmem:[%s261 + $0x890] sm:$0xff]
        %v560 = vld [vmem:[%s261 + $0x898] sm:$0xff]
        %v561 = vld [vmem:[%s261 + $0x8a0] sm:$0xff]
        %v562 = vld [vmem:[%s261 + $0x8a8] sm:$0xff]
        %v563 = vld [vmem:[%s261 + $0x8b0] sm:$0xff]
        %v564 = vld [vmem:[%s261 + $0x8b8] sm:$0xff]
        %v565 = vld [vmem:[%s261 + $0x8c0] sm:$0xff]
        %v566 = vld [vmem:[%s261 + $0x8c8] sm:$0xff]
        %v567 = vld [vmem:[%s261 + $0x8d0] sm:$0xff]
        %v568 = vld [vmem:[%s261 + $0x8d8] sm:$0xff]
        %v569 = vld [vmem:[%s261 + $0x8e0] sm:$0xff]
        %v570 = vld [vmem:[%s261 + $0x8e8] sm:$0xff]
        %v571 = vld [vmem:[%s261 + $0x8f0] sm:$0xff]
        %v572 = vld [vmem:[%s261 + $0x8f8] sm:$0xff]
        %v573 = vld [vmem:[%s261 + $0x900] sm:$0xff]
        %v574 = vld [vmem:[%s261 + $0x908] sm:$0xff]
        %v575 = vld [vmem:[%s261 + $0x910] sm:$0xff]
        %v576 = vld [vmem:[%s261 + $0x918] sm:$0xff]
        %v577 = vld [vmem:[%s261 + $0x920] sm:$0xff]
        %v578 = vld [vmem:[%s261 + $0x928] sm:$0xff]
        %v579 = vld [vmem:[%s261 + $0x930] sm:$0xff]
        %v580 = vld [vmem:[%s261 + $0x938] sm:$0xff]
        %v581 = vld [vmem:[%s261 + $0x940] sm:$0xff]
        %v582 = vld [vmem:[%s261 + $0x948] sm:$0xff]
        %v583 = vld [vmem:[%s261 + $0x950] sm:$0xff]
        %v584 = vld [vmem:[%s261 + $0x958] sm:$0xff]
        %v585 = vld [vmem:[%s261 + $0x960] sm:$0xff]
        %v586 = vld [vmem:[%s261 + $0x968] sm:$0xff]
        %v587 = vld [vmem:[%s261 + $0x970] sm:$0xff]
        %v588 = vld [vmem:[%s261 + $0x978] sm:$0xff]
        %v589 = vld [vmem:[%s261 + $0x980] sm:$0xff]
        %v590 = vld [vmem:[%s261 + $0x988] sm:$0xff]
        %v591 = vld [vmem:[%s261 + $0x990] sm:$0xff]
        %v592 = vld [vmem:[%s261 + $0x998] sm:$0xff]
        %v593 = vld [vmem:[%s261 + $0x9a0] sm:$0xff]
        %v594 = vld [vmem:[%s261 + $0x9a8] sm:$0xff]
        %v595 = vld [vmem:[%s261 + $0x9b0] sm:$0xff]
        %v596 = vld [vmem:[%s261 + $0x9b8] sm:$0xff]
        %v597 = vld [vmem:[%s261 + $0x9c0] sm:$0xff]
        %v598 = vld [vmem:[%s261 + $0x9c8] sm:$0xff]
        %v599 = vld [vmem:[%s261 + $0x9d0] sm:$0xff]
        %v600 = vld [vmem:[%s261 + $0x9d8] sm:$0xff]
        %v601 = vld [vmem:[%s261 + $0x9e0] sm:$0xff]
        %v602 = vld [vmem:[%s261 + $0x9e8] sm:$0xff]
        %v603 = vld [vmem:[%s261 + $0x9f0] sm:$0xff]
        %v604 = vld [vmem:[%s261 + $0x9f8] sm:$0xff]
        %v605 = vld [vmem:[%s261 + $0xa00] sm:$0xff]
        %v606 = vld [vmem:[%s261 + $0xa08] sm:$0xff]
        %v607 = vld [vmem:[%s261 + $0xa10] sm:$0xff]
        %v608 = vld [vmem:[%s261 + $0xa18] sm:$0xff]
        %v609 = vld [vmem:[%s261 + $0xa20] sm:$0xff]
        %v610 = vld [vmem:[%s261 + $0xa28] sm:$0xff]
        %v611 = vld [vmem:[%s261 + $0xa30] sm:$0xff]
        %v612 = vld [vmem:[%s261 + $0xa38] sm:$0xff]
        %v613 = vld [vmem:[%s261 + $0xa40] sm:$0xff]
        %v614 = vld [vmem:[%s261 + $0xa48] sm:$0xff]
        %v615 = vld [vmem:[%s261 + $0xa50] sm:$0xff]
        %v616 = vld [vmem:[%s261 + $0xa58] sm:$0xff]
        %v617 = vld [vmem:[%s261 + $0xa60] sm:$0xff]
        %v618 = vld [vmem:[%s261 + $0xa68] sm:$0xff]
        %v619 = vld [vmem:[%s261 + $0xa70] sm:$0xff]
        %v620 = vld [vmem:[%s261 + $0xa78] sm:$0xff]
        %v621 = vld [vmem:[%s261 + $0xa80] sm:$0xff]
        %v622 = vld [vmem:[%s261 + $0xa88] sm:$0xff]
        %v623 = vld [vmem:[%s261 + $0xa90] sm:$0xff]
        %v624 = vld [vmem:[%s261 + $0xa98] sm:$0xff]
        %v625 = vld [vmem:[%s261 + $0xaa0] sm:$0xff]
        %v626 = vld [vmem:[%s261 + $0xaa8] sm:$0xff]
        %v627 = vld [vmem:[%s261 + $0xab0] sm:$0xff]
        %v628 = vld [vmem:[%s261 + $0xab8] sm:$0xff]
        %v629 = vld [vmem:[%s261 + $0xac0] sm:$0xff]
        %v630 = vld [vmem:[%s261 + $0xac8] sm:$0xff]
        %v631 = vld [vmem:[%s261 + $0xad0] sm:$0xff]
        %v632 = vld [vmem:[%s261 + $0xad8] sm:$0xff]
        %v633 = vld [vmem:[%s261 + $0xae0] sm:$0xff]
        %v634 = vld [vmem:[%s261 + $0xae8] sm:$0xff]
        %v635 = vld [vmem:[%s261 + $0xaf0] sm:$0xff]
        %v636 = vld [vmem:[%s261 + $0xaf8] sm:$0xff]
        %v637 = vld [vmem:[%s261 + $0xb00] sm:$0xff]
        %v638 = vld [vmem:[%s261 + $0xb08] sm:$0xff]
        %v639 = vld [vmem:[%s261 + $0xb10] sm:$0xff]
        %v640 = vld [vmem:[%s261 + $0xb18] sm:$0xff]
        %v641 = vld [vmem:[%s261 + $0xb20] sm:$0xff]
        %v642 = vld [vmem:[%s261 + $0xb28] sm:$0xff]
        %v643 = vld [vmem:[%s261 + $0xb30] sm:$0xff]
        %v644 = vld [vmem:[%s261 + $0xb38] sm:$0xff]
        %v645 = vld [vmem:[%s261 + $0xb40] sm:$0xff]
        %v646 = vld [vmem:[%s261 + $0xb48] sm:$0xff]
        %v647 = vld [vmem:[%s261 + $0xb50] sm:$0xff]
        %v648 = vld [vmem:[%s261 + $0xb58] sm:$0xff]
        %v649 = vld [vmem:[%s261 + $0xb60] sm:$0xff]
        %v650 = vld [vmem:[%s261 + $0xb68] sm:$0xff]
        %v651 = vld [vmem:[%s261 + $0xb70] sm:$0xff]
        %v652 = vld [vmem:[%s261 + $0xb78] sm:$0xff]
        %v653 = vld [vmem:[%s261 + $0xb80] sm:$0xff]
        %v654 = vld [vmem:[%s261 + $0xb88] sm:$0xff]
        %v655 = vld [vmem:[%s261 + $0xb90] sm:$0xff]
        %v656 = vld [vmem:[%s261 + $0xb98] sm:$0xff]
        %v657 = vld [vmem:[%s261 + $0xba0] sm:$0xff]
        %v658 = vld [vmem:[%s261 + $0xba8] sm:$0xff]
        %v659 = vld [vmem:[%s261 + $0xbb0] sm:$0xff]
        %v660 = vld [vmem:[%s261 + $0xbb8] sm:$0xff]
        %v661 = vld [vmem:[%s261 + $0xbc0] sm:$0xff]
        %v662 = vld [vmem:[%s261 + $0xbc8] sm:$0xff]
        %v663 = vld [vmem:[%s261 + $0xbd0] sm:$0xff]
        %v664 = vld [vmem:[%s261 + $0xbd8] sm:$0xff]
        %v665 = vld [vmem:[%s261 + $0xbe0] sm:$0xff]
        %v666 = vld [vmem:[%s261 + $0xbe8] sm:$0xff]
        %v667 = vld [vmem:[%s261 + $0xbf0] sm:$0xff]
        %v668 = vld [vmem:[%s261 + $0xbf8] sm:$0xff]
        %v669 = vld [vmem:[%s261 + $0xc00] sm:$0xff]
        %v670 = vld [vmem:[%s261 + $0xc08] sm:$0xff]
        %v671 = vld [vmem:[%s261 + $0xc10] sm:$0xff]
        %v672 = vld [vmem:[%s261 + $0xc18] sm:$0xff]
        %v673 = vld [vmem:[%s261 + $0xc20] sm:$0xff]
        %v674 = vld [vmem:[%s261 + $0xc28] sm:$0xff]
        %v675 = vld [vmem:[%s261 + $0xc30] sm:$0xff]
        %v676 = vld [vmem:[%s261 + $0xc38] sm:$0xff]
        %v677 = vld [vmem:[%s261 + $0xc40] sm:$0xff]
        %v678 = vld [vmem:[%s261 + $0xc48] sm:$0xff]
        %v679 = vld [vmem:[%s261 + $0xc50] sm:$0xff]
        %v680 = vld [vmem:[%s261 + $0xc58] sm:$0xff]
        %v681 = vld [vmem:[%s261 + $0xc60] sm:$0xff]
        %v682 = vld [vmem:[%s261 + $0xc68] sm:$0xff]
        %v683 = vld [vmem:[%s261 + $0xc70] sm:$0xff]
        %v684 = vld [vmem:[%s261 + $0xc78] sm:$0xff]
        %v685 = vld [vmem:[%s261 + $0xc80] sm:$0xff]
        %v686 = vld [vmem:[%s261 + $0xc88] sm:$0xff]
        %v687 = vld [vmem:[%s261 + $0xc90] sm:$0xff]
        %v688 = vld [vmem:[%s261 + $0xc98] sm:$0xff]
        %v689 = vld [vmem:[%s261 + $0xca0] sm:$0xff]
        %v690 = vld [vmem:[%s261 + $0xca8] sm:$0xff]
        %v691 = vld [vmem:[%s261 + $0xcb0] sm:$0xff]
        %v692 = vld [vmem:[%s261 + $0xcb8] sm:$0xff]
        %v693 = vld [vmem:[%s261 + $0xcc0] sm:$0xff]
        %v694 = vld [vmem:[%s261 + $0xcc8] sm:$0xff]
        %v695 = vld [vmem:[%s261 + $0xcd0] sm:$0xff]
        %v696 = vld [vmem:[%s261 + $0xcd8] sm:$0xff]
        %v697 = vld [vmem:[%s261 + $0xce0] sm:$0xff]
        %v698 = vld [vmem:[%s261 + $0xce8] sm:$0xff]
        %v699 = vld [vmem:[%s261 + $0xcf0] sm:$0xff]
        %v700 = vld [vmem:[%s261 + $0xcf8] sm:$0xff]
        %v701 = vld [vmem:[%s261 + $0xd00] sm:$0xff]
        %v702 = vld [vmem:[%s261 + $0xd08] sm:$0xff]
        %v703 = vld [vmem:[%s261 + $0xd10] sm:$0xff]
        %v704 = vld [vmem:[%s261 + $0xd18] sm:$0xff]
        %v705 = vld [vmem:[%s261 + $0xd20] sm:$0xff]
        %v706 = vld [vmem:[%s261 + $0xd28] sm:$0xff]
        %v707 = vld [vmem:[%s261 + $0xd30] sm:$0xff]
        %v708 = vld [vmem:[%s261 + $0xd38] sm:$0xff]
        %v709 = vld [vmem:[%s261 + $0xd40] sm:$0xff]
        %v710 = vld [vmem:[%s261 + $0xd48] sm:$0xff]
        %v711 = vld [vmem:[%s261 + $0xd50] sm:$0xff]
        %v712 = vld [vmem:[%s261 + $0xd58] sm:$0xff]
        %v713 = vld [vmem:[%s261 + $0xd60] sm:$0xff]
        %v714 = vld [vmem:[%s261 + $0xd68] sm:$0xff]
        %v715 = vld [vmem:[%s261 + $0xd70] sm:$0xff]
        %v716 = vld [vmem:[%s261 + $0xd78] sm:$0xff]
        %v717 = vld [vmem:[%s261 + $0xd80] sm:$0xff]
        %v718 = vld [vmem:[%s261 + $0xd88] sm:$0xff]
        %v719 = vld [vmem:[%s261 + $0xd90] sm:$0xff]
        %v720 = vld [vmem:[%s261 + $0xd98] sm:$0xff]
        %v721 = vld [vmem:[%s261 + $0xda0] sm:$0xff]
        %v722 = vld [vmem:[%s261 + $0xda8] sm:$0xff]
        %v723 = vld [vmem:[%s261 + $0xdb0] sm:$0xff]
        %v724 = vld [vmem:[%s261 + $0xdb8] sm:$0xff]
        %v725 = vld [vmem:[%s261 + $0xdc0] sm:$0xff]
        %v726 = vld [vmem:[%s261 + $0xdc8] sm:$0xff]
        %v727 = vld [vmem:[%s261 + $0xdd0] sm:$0xff]
        %v728 = vld [vmem:[%s261 + $0xdd8] sm:$0xff]
        %v729 = vld [vmem:[%s261 + $0xde0] sm:$0xff]
        %v730 = vld [vmem:[%s261 + $0xde8] sm:$0xff]
        %v731 = vld [vmem:[%s261 + $0xdf0] sm:$0xff]
        %v732 = vld [vmem:[%s261 + $0xdf8] sm:$0xff]
        %734 = vst [vmem:[#allocation1] ss:$9 sm:$0xff] %v284
        %v735 = vld [vmem:[#allocation1] sm:$0xff]
        %v736 = vld [vmem:[#allocation1 + $0x9] sm:$0xff]
        %v737 = vld [vmem:[#allocation1 + $0x12] sm:$0xff]
        %v738 = vld [vmem:[#allocation1 + $0x1b] sm:$0xff]
        %v739 = vld [vmem:[#allocation1 + $0x24] sm:$0xff]
        %v740 = vld [vmem:[#allocation1 + $0x2d] sm:$0xff]
        %v741 = vld [vmem:[#allocation1 + $0x36] sm:$0xff]
        %v1197 = vunpack.c.l.b16 %v285
        %v1198 = vunpack.c.h.b16 %v285
        %v1199 = vunpack.c.l.b16 %v286
        %v1200 = vunpack.c.h.b16 %v286
        %v1201 = vunpack.c.l.b16 %v287
        %v1202 = vunpack.c.h.b16 %v287
        %v1203 = vunpack.c.l.b16 %v288
        %v1204 = vunpack.c.h.b16 %v288
        %v1205 = vunpack.c.l.b16 %v289
        %v1206 = vunpack.c.h.b16 %v289
        %v1207 = vunpack.c.l.b16 %v290
        %v1208 = vunpack.c.h.b16 %v290
        %v1209 = vunpack.c.l.b16 %v291
        %v1210 = vunpack.c.h.b16 %v291
        %v1211 = vunpack.c.l.b16 %v292
        %v1212 = vunpack.c.h.b16 %v292
        %v1213 = vunpack.c.l.b16 %v293
        %v1214 = vunpack.c.h.b16 %v293
        %v1215 = vunpack.c.l.b16 %v294
        %v1216 = vunpack.c.h.b16 %v294
        %v1217 = vunpack.c.l.b16 %v295
        %v1218 = vunpack.c.h.b16 %v295
        %v1219 = vunpack.c.l.b16 %v296
        %v1220 = vunpack.c.h.b16 %v296
        %v1221 = vunpack.c.l.b16 %v297
        %v1222 = vunpack.c.h.b16 %v297
        %v1223 = vunpack.c.l.b16 %v298
        %v1224 = vunpack.c.h.b16 %v298
        %v1225 = vunpack.c.l.b16 %v299
        %v1226 = vunpack.c.h.b16 %v299
        %v1227 = vunpack.c.l.b16 %v300
        %v1228 = vunpack.c.h.b16 %v300
        %v1229 = vunpack.c.l.b16 %v301
        %v1230 = vunpack.c.h.b16 %v301
        %v1231 = vunpack.c.l.b16 %v302
        %v1232 = vunpack.c.h.b16 %v302
        %v1233 = vunpack.c.l.b16 %v303
        %v1234 = vunpack.c.h.b16 %v303
        %v1235 = vunpack.c.l.b16 %v304
        %v1236 = vunpack.c.h.b16 %v304
        %v1237 = vunpack.c.l.b16 %v305
        %v1238 = vunpack.c.h.b16 %v305
        %v1239 = vunpack.c.l.b16 %v306
        %v1240 = vunpack.c.h.b16 %v306
        %v1241 = vunpack.c.l.b16 %v307
        %v1242 = vunpack.c.h.b16 %v307
        %v1243 = vunpack.c.l.b16 %v308
        %v1244 = vunpack.c.h.b16 %v308
        %v1245 = vunpack.c.l.b16 %v309
        %v1246 = vunpack.c.h.b16 %v309
        %v1247 = vunpack.c.l.b16 %v310
        %v1248 = vunpack.c.h.b16 %v310
        %v1249 = vunpack.c.l.b16 %v311
        %v1250 = vunpack.c.h.b16 %v311
        %v1251 = vunpack.c.l.b16 %v312
        %v1252 = vunpack.c.h.b16 %v312
        %v1253 = vunpack.c.l.b16 %v313
        %v1254 = vunpack.c.h.b16 %v313
        %v1255 = vunpack.c.l.b16 %v314
        %v1256 = vunpack.c.h.b16 %v314
        %v1257 = vunpack.c.l.b16 %v315
        %v1258 = vunpack.c.h.b16 %v315
        %v1259 = vunpack.c.l.b16 %v316
        %v1260 = vunpack.c.h.b16 %v316
        %v1261 = vunpack.c.l.b16 %v317
        %v1262 = vunpack.c.h.b16 %v317
        %v1263 = vunpack.c.l.b16 %v318
        %v1264 = vunpack.c.h.b16 %v318
        %v1265 = vunpack.c.l.b16 %v319
        %v1266 = vunpack.c.h.b16 %v319
        %v1267 = vunpack.c.l.b16 %v320
        %v1268 = vunpack.c.h.b16 %v320
        %v1269 = vunpack.c.l.b16 %v321
        %v1270 = vunpack.c.h.b16 %v321
        %v1271 = vunpack.c.l.b16 %v322
        %v1272 = vunpack.c.h.b16 %v322
        %v1273 = vunpack.c.l.b16 %v323
        %v1274 = vunpack.c.h.b16 %v323
        %v1275 = vunpack.c.l.b16 %v324
        %v1276 = vunpack.c.h.b16 %v324
        %v1277 = vunpack.c.l.b16 %v325
        %v1278 = vunpack.c.h.b16 %v325
        %v1279 = vunpack.c.l.b16 %v326
        %v1280 = vunpack.c.h.b16 %v326
        %v1281 = vunpack.c.l.b16 %v327
        %v1282 = vunpack.c.h.b16 %v327
        %v1283 = vunpack.c.l.b16 %v328
        %v1284 = vunpack.c.h.b16 %v328
        %v1285 = vunpack.c.l.b16 %v329
        %v1286 = vunpack.c.h.b16 %v329
        %v1287 = vunpack.c.l.b16 %v330
        %v1288 = vunpack.c.h.b16 %v330
        %v1289 = vunpack.c.l.b16 %v331
        %v1290 = vunpack.c.h.b16 %v331
        %v1291 = vunpack.c.l.b16 %v332
        %v1292 = vunpack.c.h.b16 %v332
        %v1293 = vunpack.c.l.b16 %v333
        %v1294 = vunpack.c.h.b16 %v333
        %v1295 = vunpack.c.l.b16 %v334
        %v1296 = vunpack.c.h.b16 %v334
        %v1297 = vunpack.c.l.b16 %v335
        %v1298 = vunpack.c.h.b16 %v335
        %v1299 = vunpack.c.l.b16 %v336
        %v1300 = vunpack.c.h.b16 %v336
        %v1301 = vunpack.c.l.b16 %v337
        %v1302 = vunpack.c.h.b16 %v337
        %v1303 = vunpack.c.l.b16 %v338
        %v1304 = vunpack.c.h.b16 %v338
        %v1305 = vunpack.c.l.b16 %v339
        %v1306 = vunpack.c.h.b16 %v339
        %v1307 = vunpack.c.l.b16 %v340
        %v1308 = vunpack.c.h.b16 %v340
        %v1309 = vunpack.c.l.b16 %v341
        %v1310 = vunpack.c.h.b16 %v341
        %v1311 = vunpack.c.l.b16 %v342
        %v1312 = vunpack.c.h.b16 %v342
        %v1313 = vunpack.c.l.b16 %v343
        %v1314 = vunpack.c.h.b16 %v343
        %v1315 = vunpack.c.l.b16 %v344
        %v1316 = vunpack.c.h.b16 %v344
        %v1317 = vunpack.c.l.b16 %v345
        %v1318 = vunpack.c.h.b16 %v345
        %v1319 = vunpack.c.l.b16 %v346
        %v1320 = vunpack.c.h.b16 %v346
        %v1321 = vunpack.c.l.b16 %v347
        %v1322 = vunpack.c.h.b16 %v347
        %v1323 = vunpack.c.l.b16 %v348
        %v1324 = vunpack.c.h.b16 %v348
        %v1325 = vunpack.c.l.b16 %v349
        %v1326 = vunpack.c.h.b16 %v349
        %v1327 = vunpack.c.l.b16 %v350
        %v1328 = vunpack.c.h.b16 %v350
        %v1329 = vunpack.c.l.b16 %v351
        %v1330 = vunpack.c.h.b16 %v351
        %v1331 = vunpack.c.l.b16 %v352
        %v1332 = vunpack.c.h.b16 %v352
        %v1333 = vunpack.c.l.b16 %v353
        %v1334 = vunpack.c.h.b16 %v353
        %v1335 = vunpack.c.l.b16 %v354
        %v1336 = vunpack.c.h.b16 %v354
        %v1337 = vunpack.c.l.b16 %v355
        %v1338 = vunpack.c.h.b16 %v355
        %v1339 = vunpack.c.l.b16 %v356
        %v1340 = vunpack.c.h.b16 %v356
        %v1341 = vunpack.c.l.b16 %v357
        %v1342 = vunpack.c.h.b16 %v357
        %v1343 = vunpack.c.l.b16 %v358
        %v1344 = vunpack.c.h.b16 %v358
        %v1345 = vunpack.c.l.b16 %v359
        %v1346 = vunpack.c.h.b16 %v359
        %v1347 = vunpack.c.l.b16 %v360
        %v1348 = vunpack.c.h.b16 %v360
        %v1349 = vunpack.c.l.b16 %v361
        %v1350 = vunpack.c.h.b16 %v361
        %v1351 = vunpack.c.l.b16 %v362
        %v1352 = vunpack.c.h.b16 %v362
        %v1353 = vunpack.c.l.b16 %v363
        %v1354 = vunpack.c.h.b16 %v363
        %v1355 = vunpack.c.l.b16 %v364
        %v1356 = vunpack.c.h.b16 %v364
        %v1357 = vunpack.c.l.b16 %v365
        %v1358 = vunpack.c.h.b16 %v365
        %v1359 = vunpack.c.l.b16 %v366
        %v1360 = vunpack.c.h.b16 %v366
        %v1361 = vunpack.c.l.b16 %v367
        %v1362 = vunpack.c.h.b16 %v367
        %v1363 = vunpack.c.l.b16 %v368
        %v1364 = vunpack.c.h.b16 %v368
        %v1365 = vunpack.c.l.b16 %v369
        %v1366 = vunpack.c.h.b16 %v369
        %v1367 = vunpack.c.l.b16 %v370
        %v1368 = vunpack.c.h.b16 %v370
        %v1369 = vunpack.c.l.b16 %v371
        %v1370 = vunpack.c.h.b16 %v371
        %v1371 = vunpack.c.l.b16 %v372
        %v1372 = vunpack.c.h.b16 %v372
        %v1373 = vunpack.c.l.b16 %v373
        %v1374 = vunpack.c.h.b16 %v373
        %v1375 = vunpack.c.l.b16 %v374
        %v1376 = vunpack.c.h.b16 %v374
        %v1377 = vunpack.c.l.b16 %v375
        %v1378 = vunpack.c.h.b16 %v375
        %v1379 = vunpack.c.l.b16 %v376
        %v1380 = vunpack.c.h.b16 %v376
        %v1381 = vunpack.c.l.b16 %v377
        %v1382 = vunpack.c.h.b16 %v377
        %v1383 = vunpack.c.l.b16 %v378
        %v1384 = vunpack.c.h.b16 %v378
        %v1385 = vunpack.c.l.b16 %v379
        %v1386 = vunpack.c.h.b16 %v379
        %v1387 = vunpack.c.l.b16 %v380
        %v1388 = vunpack.c.h.b16 %v380
        %v1389 = vunpack.c.l.b16 %v381
        %v1390 = vunpack.c.h.b16 %v381
        %v1391 = vunpack.c.l.b16 %v382
        %v1392 = vunpack.c.h.b16 %v382
        %v1393 = vunpack.c.l.b16 %v383
        %v1394 = vunpack.c.h.b16 %v383
        %v1395 = vunpack.c.l.b16 %v384
        %v1396 = vunpack.c.h.b16 %v384
        %v1397 = vunpack.c.l.b16 %v385
        %v1398 = vunpack.c.h.b16 %v385
        %v1399 = vunpack.c.l.b16 %v386
        %v1400 = vunpack.c.h.b16 %v386
        %v1401 = vunpack.c.l.b16 %v387
        %v1402 = vunpack.c.h.b16 %v387
        %v1403 = vunpack.c.l.b16 %v388
        %v1404 = vunpack.c.h.b16 %v388
        %v1405 = vunpack.c.l.b16 %v389
        %v1406 = vunpack.c.h.b16 %v389
        %v1407 = vunpack.c.l.b16 %v390
        %v1408 = vunpack.c.h.b16 %v390
        %v1409 = vunpack.c.l.b16 %v391
        %v1410 = vunpack.c.h.b16 %v391
        %v1411 = vunpack.c.l.b16 %v392
        %v1412 = vunpack.c.h.b16 %v392
        %v1413 = vunpack.c.l.b16 %v393
        %v1414 = vunpack.c.h.b16 %v393
        %v1415 = vunpack.c.l.b16 %v394
        %v1416 = vunpack.c.h.b16 %v394
        %v1417 = vunpack.c.l.b16 %v395
        %v1418 = vunpack.c.h.b16 %v395
        %v1419 = vunpack.c.l.b16 %v396
        %v1420 = vunpack.c.h.b16 %v396
        %v1421 = vunpack.c.l.b16 %v397
        %v1422 = vunpack.c.h.b16 %v397
        %v1423 = vunpack.c.l.b16 %v398
        %v1424 = vunpack.c.h.b16 %v398
        %v1425 = vunpack.c.l.b16 %v399
        %v1426 = vunpack.c.h.b16 %v399
        %v1427 = vunpack.c.l.b16 %v400
        %v1428 = vunpack.c.h.b16 %v400
        %v1429 = vunpack.c.l.b16 %v401
        %v1430 = vunpack.c.h.b16 %v401
        %v1431 = vunpack.c.l.b16 %v402
        %v1432 = vunpack.c.h.b16 %v402
        %v1433 = vunpack.c.l.b16 %v403
        %v1434 = vunpack.c.h.b16 %v403
        %v1435 = vunpack.c.l.b16 %v404
        %v1436 = vunpack.c.h.b16 %v404
        %v1437 = vunpack.c.l.b16 %v405
        %v1438 = vunpack.c.h.b16 %v405
        %v1439 = vunpack.c.l.b16 %v406
        %v1440 = vunpack.c.h.b16 %v406
        %v1441 = vunpack.c.l.b16 %v407
        %v1442 = vunpack.c.h.b16 %v407
        %v1443 = vunpack.c.l.b16 %v408
        %v1444 = vunpack.c.h.b16 %v408
        %v1445 = vunpack.c.l.b16 %v409
        %v1446 = vunpack.c.h.b16 %v409
        %v1447 = vunpack.c.l.b16 %v410
        %v1448 = vunpack.c.h.b16 %v410
        %v1449 = vunpack.c.l.b16 %v411
        %v1450 = vunpack.c.h.b16 %v411
        %v1451 = vunpack.c.l.b16 %v412
        %v1452 = vunpack.c.h.b16 %v412
        %v1453 = vunpack.c.l.b16 %v413
        %v1454 = vunpack.c.h.b16 %v413
        %v1455 = vunpack.c.l.b16 %v414
        %v1456 = vunpack.c.h.b16 %v414
        %v1457 = vunpack.c.l.b16 %v415
        %v1458 = vunpack.c.h.b16 %v415
        %v1459 = vunpack.c.l.b16 %v416
        %v1460 = vunpack.c.h.b16 %v416
        %v1461 = vunpack.c.l.b16 %v417
        %v1462 = vunpack.c.h.b16 %v417
        %v1463 = vunpack.c.l.b16 %v418
        %v1464 = vunpack.c.h.b16 %v418
        %v1465 = vunpack.c.l.b16 %v419
        %v1466 = vunpack.c.h.b16 %v419
        %v1467 = vunpack.c.l.b16 %v420
        %v1468 = vunpack.c.h.b16 %v420
        %v1469 = vunpack.c.l.b16 %v421
        %v1470 = vunpack.c.h.b16 %v421
        %v1471 = vunpack.c.l.b16 %v422
        %v1472 = vunpack.c.h.b16 %v422
        %v1473 = vunpack.c.l.b16 %v423
        %v1474 = vunpack.c.h.b16 %v423
        %v1475 = vunpack.c.l.b16 %v424
        %v1476 = vunpack.c.h.b16 %v424
        %v1477 = vunpack.c.l.b16 %v425
        %v1478 = vunpack.c.h.b16 %v425
        %v1479 = vunpack.c.l.b16 %v426
        %v1480 = vunpack.c.h.b16 %v426
        %v1481 = vunpack.c.l.b16 %v427
        %v1482 = vunpack.c.h.b16 %v427
        %v1483 = vunpack.c.l.b16 %v428
        %v1484 = vunpack.c.h.b16 %v428
        %v1485 = vunpack.c.l.b16 %v429
        %v1486 = vunpack.c.h.b16 %v429
        %v1487 = vunpack.c.l.b16 %v430
        %v1488 = vunpack.c.h.b16 %v430
        %v1489 = vunpack.c.l.b16 %v431
        %v1490 = vunpack.c.h.b16 %v431
        %v1491 = vunpack.c.l.b16 %v432
        %v1492 = vunpack.c.h.b16 %v432
        %v1493 = vunpack.c.l.b16 %v433
        %v1494 = vunpack.c.h.b16 %v433
        %v1495 = vunpack.c.l.b16 %v434
        %v1496 = vunpack.c.h.b16 %v434
        %v1497 = vunpack.c.l.b16 %v435
        %v1498 = vunpack.c.h.b16 %v435
        %v1499 = vunpack.c.l.b16 %v436
        %v1500 = vunpack.c.h.b16 %v436
        %v1501 = vunpack.c.l.b16 %v437
        %v1502 = vunpack.c.h.b16 %v437
        %v1503 = vunpack.c.l.b16 %v438
        %v1504 = vunpack.c.h.b16 %v438
        %v1505 = vunpack.c.l.b16 %v439
        %v1506 = vunpack.c.h.b16 %v439
        %v1507 = vunpack.c.l.b16 %v440
        %v1508 = vunpack.c.h.b16 %v440
        %v1509 = vunpack.c.l.b16 %v441
        %v1510 = vunpack.c.h.b16 %v441
        %v1511 = vunpack.c.l.b16 %v442
        %v1512 = vunpack.c.h.b16 %v442
        %v1513 = vunpack.c.l.b16 %v443
        %v1514 = vunpack.c.h.b16 %v443
        %v1515 = vunpack.c.l.b16 %v444
        %v1516 = vunpack.c.h.b16 %v444
        %v1517 = vunpack.c.l.b16 %v445
        %v1518 = vunpack.c.h.b16 %v445
        %v1519 = vunpack.c.l.b16 %v446
        %v1520 = vunpack.c.h.b16 %v446
        %v1521 = vunpack.c.l.b16 %v447
        %v1522 = vunpack.c.h.b16 %v447
        %v1523 = vunpack.c.l.b16 %v448
        %v1524 = vunpack.c.h.b16 %v448
        %v1525 = vunpack.c.l.b16 %v449
        %v1526 = vunpack.c.h.b16 %v449
        %v1527 = vunpack.c.l.b16 %v450
        %v1528 = vunpack.c.h.b16 %v450
        %v1529 = vunpack.c.l.b16 %v451
        %v1530 = vunpack.c.h.b16 %v451
        %v1531 = vunpack.c.l.b16 %v452
        %v1532 = vunpack.c.h.b16 %v452
        %v1533 = vunpack.c.l.b16 %v453
        %v1534 = vunpack.c.h.b16 %v453
        %v1535 = vunpack.c.l.b16 %v454
        %v1536 = vunpack.c.h.b16 %v454
        %v1537 = vunpack.c.l.b16 %v455
        %v1538 = vunpack.c.h.b16 %v455
        %v1539 = vunpack.c.l.b16 %v456
        %v1540 = vunpack.c.h.b16 %v456
        %v1541 = vunpack.c.l.b16 %v457
        %v1542 = vunpack.c.h.b16 %v457
        %v1543 = vunpack.c.l.b16 %v458
        %v1544 = vunpack.c.h.b16 %v458
        %v1545 = vunpack.c.l.b16 %v459
        %v1546 = vunpack.c.h.b16 %v459
        %v1547 = vunpack.c.l.b16 %v460
        %v1548 = vunpack.c.h.b16 %v460
        %v1549 = vunpack.c.l.b16 %v461
        %v1550 = vunpack.c.h.b16 %v461
        %v1551 = vunpack.c.l.b16 %v462
        %v1552 = vunpack.c.h.b16 %v462
        %v1553 = vunpack.c.l.b16 %v463
        %v1554 = vunpack.c.h.b16 %v463
        %v1555 = vunpack.c.l.b16 %v464
        %v1556 = vunpack.c.h.b16 %v464
        %v1557 = vunpack.c.l.b16 %v465
        %v1558 = vunpack.c.h.b16 %v465
        %v1559 = vunpack.c.l.b16 %v466
        %v1560 = vunpack.c.h.b16 %v466
        %v1561 = vunpack.c.l.b16 %v467
        %v1562 = vunpack.c.h.b16 %v467
        %v1563 = vunpack.c.l.b16 %v468
        %v1564 = vunpack.c.h.b16 %v468
        %v1565 = vunpack.c.l.b16 %v469
        %v1566 = vunpack.c.h.b16 %v469
        %v1567 = vunpack.c.l.b16 %v470
        %v1568 = vunpack.c.h.b16 %v470
        %v1569 = vunpack.c.l.b16 %v471
        %v1570 = vunpack.c.h.b16 %v471
        %v1571 = vunpack.c.l.b16 %v472
        %v1572 = vunpack.c.h.b16 %v472
        %v1573 = vunpack.c.l.b16 %v473
        %v1574 = vunpack.c.h.b16 %v473
        %v1575 = vunpack.c.l.b16 %v474
        %v1576 = vunpack.c.h.b16 %v474
        %v1577 = vunpack.c.l.b16 %v475
        %v1578 = vunpack.c.h.b16 %v475
        %v1579 = vunpack.c.l.b16 %v476
        %v1580 = vunpack.c.h.b16 %v476
        %v1581 = vunpack.c.l.b16 %v477
        %v1582 = vunpack.c.h.b16 %v477
        %v1583 = vunpack.c.l.b16 %v478
        %v1584 = vunpack.c.h.b16 %v478
        %v1585 = vunpack.c.l.b16 %v479
        %v1586 = vunpack.c.h.b16 %v479
        %v1587 = vunpack.c.l.b16 %v480
        %v1588 = vunpack.c.h.b16 %v480
        %v1589 = vunpack.c.l.b16 %v481
        %v1590 = vunpack.c.h.b16 %v481
        %v1591 = vunpack.c.l.b16 %v482
        %v1592 = vunpack.c.h.b16 %v482
        %v1593 = vunpack.c.l.b16 %v483
        %v1594 = vunpack.c.h.b16 %v483
        %v1595 = vunpack.c.l.b16 %v484
        %v1596 = vunpack.c.h.b16 %v484
        %v1597 = vunpack.c.l.b16 %v485
        %v1598 = vunpack.c.h.b16 %v485
        %v1599 = vunpack.c.l.b16 %v486
        %v1600 = vunpack.c.h.b16 %v486
        %v1601 = vunpack.c.l.b16 %v487
        %v1602 = vunpack.c.h.b16 %v487
        %v1603 = vunpack.c.l.b16 %v488
        %v1604 = vunpack.c.h.b16 %v488
        %v1605 = vunpack.c.l.b16 %v489
        %v1606 = vunpack.c.h.b16 %v489
        %v1607 = vunpack.c.l.b16 %v490
        %v1608 = vunpack.c.h.b16 %v490
        %v1609 = vunpack.c.l.b16 %v491
        %v1610 = vunpack.c.h.b16 %v491
        %v1611 = vunpack.c.l.b16 %v492
        %v1612 = vunpack.c.h.b16 %v492
        %v1613 = vunpack.c.l.b16 %v493
        %v1614 = vunpack.c.h.b16 %v493
        %v1615 = vunpack.c.l.b16 %v494
        %v1616 = vunpack.c.h.b16 %v494
        %v1617 = vunpack.c.l.b16 %v495
        %v1618 = vunpack.c.h.b16 %v495
        %v1619 = vunpack.c.l.b16 %v496
        %v1620 = vunpack.c.h.b16 %v496
        %v1621 = vunpack.c.l.b16 %v497
        %v1622 = vunpack.c.h.b16 %v497
        %v1623 = vunpack.c.l.b16 %v498
        %v1624 = vunpack.c.h.b16 %v498
        %v1625 = vunpack.c.l.b16 %v499
        %v1626 = vunpack.c.h.b16 %v499
        %v1627 = vunpack.c.l.b16 %v500
        %v1628 = vunpack.c.h.b16 %v500
        %v1629 = vunpack.c.l.b16 %v501
        %v1630 = vunpack.c.h.b16 %v501
        %v1631 = vunpack.c.l.b16 %v502
        %v1632 = vunpack.c.h.b16 %v502
        %v1633 = vunpack.c.l.b16 %v503
        %v1634 = vunpack.c.h.b16 %v503
        %v1635 = vunpack.c.l.b16 %v504
        %v1636 = vunpack.c.h.b16 %v504
        %v1637 = vunpack.c.l.b16 %v505
        %v1638 = vunpack.c.h.b16 %v505
        %v1639 = vunpack.c.l.b16 %v506
        %v1640 = vunpack.c.h.b16 %v506
        %v1641 = vunpack.c.l.b16 %v507
        %v1642 = vunpack.c.h.b16 %v507
        %v1643 = vunpack.c.l.b16 %v508
        %v1644 = vunpack.c.h.b16 %v508
        %v1645 = vunpack.c.l.b16 %v509
        %v1646 = vunpack.c.h.b16 %v509
        %v1647 = vunpack.c.l.b16 %v510
        %v1648 = vunpack.c.h.b16 %v510
        %v1649 = vunpack.c.l.b16 %v511
        %v1650 = vunpack.c.h.b16 %v511
        %v1651 = vunpack.c.l.b16 %v512
        %v1652 = vunpack.c.h.b16 %v512
        %v1653 = vunpack.c.l.b16 %v513
        %v1654 = vunpack.c.h.b16 %v513
        %v1655 = vunpack.c.l.b16 %v514
        %v1656 = vunpack.c.h.b16 %v514
        %v1657 = vunpack.c.l.b16 %v515
        %v1658 = vunpack.c.h.b16 %v515
        %v1659 = vunpack.c.l.b16 %v516
        %v1660 = vunpack.c.h.b16 %v516
        %v1661 = vunpack.c.l.b16 %v517
        %v1662 = vunpack.c.h.b16 %v517
        %v1663 = vunpack.c.l.b16 %v518
        %v1664 = vunpack.c.h.b16 %v518
        %v1665 = vunpack.c.l.b16 %v519
        %v1666 = vunpack.c.h.b16 %v519
        %v1667 = vunpack.c.l.b16 %v520
        %v1668 = vunpack.c.h.b16 %v520
        %v1669 = vunpack.c.l.b16 %v521
        %v1670 = vunpack.c.h.b16 %v521
        %v1671 = vunpack.c.l.b16 %v522
        %v1672 = vunpack.c.h.b16 %v522
        %v1673 = vunpack.c.l.b16 %v523
        %v1674 = vunpack.c.h.b16 %v523
        %v1675 = vunpack.c.l.b16 %v524
        %v1676 = vunpack.c.h.b16 %v524
        %v1677 = vunpack.c.l.b16 %v525
        %v1678 = vunpack.c.h.b16 %v525
        %v1679 = vunpack.c.l.b16 %v526
        %v1680 = vunpack.c.h.b16 %v526
        %v1681 = vunpack.c.l.b16 %v527
        %v1682 = vunpack.c.h.b16 %v527
        %v1683 = vunpack.c.l.b16 %v528
        %v1684 = vunpack.c.h.b16 %v528
        %v1685 = vunpack.c.l.b16 %v529
        %v1686 = vunpack.c.h.b16 %v529
        %v1687 = vunpack.c.l.b16 %v530
        %v1688 = vunpack.c.h.b16 %v530
        %v1689 = vunpack.c.l.b16 %v531
        %v1690 = vunpack.c.h.b16 %v531
        %v1691 = vunpack.c.l.b16 %v532
        %v1692 = vunpack.c.h.b16 %v532
        %v1693 = vunpack.c.l.b16 %v533
        %v1694 = vunpack.c.h.b16 %v533
        %v1695 = vunpack.c.l.b16 %v534
        %v1696 = vunpack.c.h.b16 %v534
        %v1697 = vunpack.c.l.b16 %v535
        %v1698 = vunpack.c.h.b16 %v535
        %v1699 = vunpack.c.l.b16 %v536
        %v1700 = vunpack.c.h.b16 %v536
        %v1701 = vunpack.c.l.b16 %v537
        %v1702 = vunpack.c.h.b16 %v537
        %v1703 = vunpack.c.l.b16 %v538
        %v1704 = vunpack.c.h.b16 %v538
        %v1705 = vunpack.c.l.b16 %v539
        %v1706 = vunpack.c.h.b16 %v539
        %v1707 = vunpack.c.l.b16 %v540
        %v1708 = vunpack.c.h.b16 %v540
        %v1709 = vunpack.c.l.b16 %v541
        %v1710 = vunpack.c.h.b16 %v541
        %v1711 = vunpack.c.l.b16 %v542
        %v1712 = vunpack.c.h.b16 %v542
        %v1713 = vunpack.c.l.b16 %v543
        %v1714 = vunpack.c.h.b16 %v543
        %v1715 = vunpack.c.l.b16 %v544
        %v1716 = vunpack.c.h.b16 %v544
        %v1717 = vunpack.c.l.b16 %v545
        %v1718 = vunpack.c.h.b16 %v545
        %v1719 = vunpack.c.l.b16 %v546
        %v1720 = vunpack.c.h.b16 %v546
        %v1721 = vunpack.c.l.b16 %v547
        %v1722 = vunpack.c.h.b16 %v547
        %v1723 = vunpack.c.l.b16 %v548
        %v1724 = vunpack.c.h.b16 %v548
        %v1725 = vunpack.c.l.b16 %v549
        %v1726 = vunpack.c.h.b16 %v549
        %v1727 = vunpack.c.l.b16 %v550
        %v1728 = vunpack.c.h.b16 %v550
        %v1729 = vunpack.c.l.b16 %v551
        %v1730 = vunpack.c.h.b16 %v551
        %v1731 = vunpack.c.l.b16 %v552
        %v1732 = vunpack.c.h.b16 %v552
        %v1733 = vunpack.c.l.b16 %v553
        %v1734 = vunpack.c.h.b16 %v553
        %v1735 = vunpack.c.l.b16 %v554
        %v1736 = vunpack.c.h.b16 %v554
        %v1737 = vunpack.c.l.b16 %v555
        %v1738 = vunpack.c.h.b16 %v555
        %v1739 = vunpack.c.l.b16 %v556
        %v1740 = vunpack.c.h.b16 %v556
        %v1741 = vunpack.c.l.b16 %v557
        %v1742 = vunpack.c.h.b16 %v557
        %v1743 = vunpack.c.l.b16 %v558
        %v1744 = vunpack.c.h.b16 %v558
        %v1745 = vunpack.c.l.b16 %v559
        %v1746 = vunpack.c.h.b16 %v559
        %v1747 = vunpack.c.l.b16 %v560
        %v1748 = vunpack.c.h.b16 %v560
        %v1749 = vunpack.c.l.b16 %v561
        %v1750 = vunpack.c.h.b16 %v561
        %v1751 = vunpack.c.l.b16 %v562
        %v1752 = vunpack.c.h.b16 %v562
        %v1753 = vunpack.c.l.b16 %v563
        %v1754 = vunpack.c.h.b16 %v563
        %v1755 = vunpack.c.l.b16 %v564
        %v1756 = vunpack.c.h.b16 %v564
        %v1757 = vunpack.c.l.b16 %v565
        %v1758 = vunpack.c.h.b16 %v565
        %v1759 = vunpack.c.l.b16 %v566
        %v1760 = vunpack.c.h.b16 %v566
        %v1761 = vunpack.c.l.b16 %v567
        %v1762 = vunpack.c.h.b16 %v567
        %v1763 = vunpack.c.l.b16 %v568
        %v1764 = vunpack.c.h.b16 %v568
        %v1765 = vunpack.c.l.b16 %v569
        %v1766 = vunpack.c.h.b16 %v569
        %v1767 = vunpack.c.l.b16 %v570
        %v1768 = vunpack.c.h.b16 %v570
        %v1769 = vunpack.c.l.b16 %v571
        %v1770 = vunpack.c.h.b16 %v571
        %v1771 = vunpack.c.l.b16 %v572
        %v1772 = vunpack.c.h.b16 %v572
        %v1773 = vunpack.c.l.b16 %v573
        %v1774 = vunpack.c.h.b16 %v573
        %v1775 = vunpack.c.l.b16 %v574
        %v1776 = vunpack.c.h.b16 %v574
        %v1777 = vunpack.c.l.b16 %v575
        %v1778 = vunpack.c.h.b16 %v575
        %v1779 = vunpack.c.l.b16 %v576
        %v1780 = vunpack.c.h.b16 %v576
        %v1781 = vunpack.c.l.b16 %v577
        %v1782 = vunpack.c.h.b16 %v577
        %v1783 = vunpack.c.l.b16 %v578
        %v1784 = vunpack.c.h.b16 %v578
        %v1785 = vunpack.c.l.b16 %v579
        %v1786 = vunpack.c.h.b16 %v579
        %v1787 = vunpack.c.l.b16 %v580
        %v1788 = vunpack.c.h.b16 %v580
        %v1789 = vunpack.c.l.b16 %v581
        %v1790 = vunpack.c.h.b16 %v581
        %v1791 = vunpack.c.l.b16 %v582
        %v1792 = vunpack.c.h.b16 %v582
        %v1793 = vunpack.c.l.b16 %v583
        %v1794 = vunpack.c.h.b16 %v583
        %v1795 = vunpack.c.l.b16 %v584
        %v1796 = vunpack.c.h.b16 %v584
        %v1797 = vunpack.c.l.b16 %v585
        %v1798 = vunpack.c.h.b16 %v585
        %v1799 = vunpack.c.l.b16 %v586
        %v1800 = vunpack.c.h.b16 %v586
        %v1801 = vunpack.c.l.b16 %v587
        %v1802 = vunpack.c.h.b16 %v587
        %v1803 = vunpack.c.l.b16 %v588
        %v1804 = vunpack.c.h.b16 %v588
        %v1805 = vunpack.c.l.b16 %v589
        %v1806 = vunpack.c.h.b16 %v589
        %v1807 = vunpack.c.l.b16 %v590
        %v1808 = vunpack.c.h.b16 %v590
        %v1809 = vunpack.c.l.b16 %v591
        %v1810 = vunpack.c.h.b16 %v591
        %v1811 = vunpack.c.l.b16 %v592
        %v1812 = vunpack.c.h.b16 %v592
        %v1813 = vunpack.c.l.b16 %v593
        %v1814 = vunpack.c.h.b16 %v593
        %v1815 = vunpack.c.l.b16 %v594
        %v1816 = vunpack.c.h.b16 %v594
        %v1817 = vunpack.c.l.b16 %v595
        %v1818 = vunpack.c.h.b16 %v595
        %v1819 = vunpack.c.l.b16 %v596
        %v1820 = vunpack.c.h.b16 %v596
        %v1821 = vunpack.c.l.b16 %v597
        %v1822 = vunpack.c.h.b16 %v597
        %v1823 = vunpack.c.l.b16 %v598
        %v1824 = vunpack.c.h.b16 %v598
        %v1825 = vunpack.c.l.b16 %v599
        %v1826 = vunpack.c.h.b16 %v599
        %v1827 = vunpack.c.l.b16 %v600
        %v1828 = vunpack.c.h.b16 %v600
        %v1829 = vunpack.c.l.b16 %v601
        %v1830 = vunpack.c.h.b16 %v601
        %v1831 = vunpack.c.l.b16 %v602
        %v1832 = vunpack.c.h.b16 %v602
        %v1833 = vunpack.c.l.b16 %v603
        %v1834 = vunpack.c.h.b16 %v603
        %v1835 = vunpack.c.l.b16 %v604
        %v1836 = vunpack.c.h.b16 %v604
        %v1837 = vunpack.c.l.b16 %v605
        %v1838 = vunpack.c.h.b16 %v605
        %v1839 = vunpack.c.l.b16 %v606
        %v1840 = vunpack.c.h.b16 %v606
        %v1841 = vunpack.c.l.b16 %v607
        %v1842 = vunpack.c.h.b16 %v607
        %v1843 = vunpack.c.l.b16 %v608
        %v1844 = vunpack.c.h.b16 %v608
        %v1845 = vunpack.c.l.b16 %v609
        %v1846 = vunpack.c.h.b16 %v609
        %v1847 = vunpack.c.l.b16 %v610
        %v1848 = vunpack.c.h.b16 %v610
        %v1849 = vunpack.c.l.b16 %v611
        %v1850 = vunpack.c.h.b16 %v611
        %v1851 = vunpack.c.l.b16 %v612
        %v1852 = vunpack.c.h.b16 %v612
        %v1853 = vunpack.c.l.b16 %v613
        %v1854 = vunpack.c.h.b16 %v613
        %v1855 = vunpack.c.l.b16 %v614
        %v1856 = vunpack.c.h.b16 %v614
        %v1857 = vunpack.c.l.b16 %v615
        %v1858 = vunpack.c.h.b16 %v615
        %v1859 = vunpack.c.l.b16 %v616
        %v1860 = vunpack.c.h.b16 %v616
        %v1861 = vunpack.c.l.b16 %v617
        %v1862 = vunpack.c.h.b16 %v617
        %v1863 = vunpack.c.l.b16 %v618
        %v1864 = vunpack.c.h.b16 %v618
        %v1865 = vunpack.c.l.b16 %v619
        %v1866 = vunpack.c.h.b16 %v619
        %v1867 = vunpack.c.l.b16 %v620
        %v1868 = vunpack.c.h.b16 %v620
        %v1869 = vunpack.c.l.b16 %v621
        %v1870 = vunpack.c.h.b16 %v621
        %v1871 = vunpack.c.l.b16 %v622
        %v1872 = vunpack.c.h.b16 %v622
        %v1873 = vunpack.c.l.b16 %v623
        %v1874 = vunpack.c.h.b16 %v623
        %v1875 = vunpack.c.l.b16 %v624
        %v1876 = vunpack.c.h.b16 %v624
        %v1877 = vunpack.c.l.b16 %v625
        %v1878 = vunpack.c.h.b16 %v625
        %v1879 = vunpack.c.l.b16 %v626
        %v1880 = vunpack.c.h.b16 %v626
        %v1881 = vunpack.c.l.b16 %v627
        %v1882 = vunpack.c.h.b16 %v627
        %v1883 = vunpack.c.l.b16 %v628
        %v1884 = vunpack.c.h.b16 %v628
        %v1885 = vunpack.c.l.b16 %v629
        %v1886 = vunpack.c.h.b16 %v629
        %v1887 = vunpack.c.l.b16 %v630
        %v1888 = vunpack.c.h.b16 %v630
        %v1889 = vunpack.c.l.b16 %v631
        %v1890 = vunpack.c.h.b16 %v631
        %v1891 = vunpack.c.l.b16 %v632
        %v1892 = vunpack.c.h.b16 %v632
        %v1893 = vunpack.c.l.b16 %v633
        %v1894 = vunpack.c.h.b16 %v633
        %v1895 = vunpack.c.l.b16 %v634
        %v1896 = vunpack.c.h.b16 %v634
        %v1897 = vunpack.c.l.b16 %v635
        %v1898 = vunpack.c.h.b16 %v635
        %v1899 = vunpack.c.l.b16 %v636
        %v1900 = vunpack.c.h.b16 %v636
        %v1901 = vunpack.c.l.b16 %v637
        %v1902 = vunpack.c.h.b16 %v637
        %v1903 = vunpack.c.l.b16 %v638
        %v1904 = vunpack.c.h.b16 %v638
        %v1905 = vunpack.c.l.b16 %v639
        %v1906 = vunpack.c.h.b16 %v639
        %v1907 = vunpack.c.l.b16 %v640
        %v1908 = vunpack.c.h.b16 %v640
        %v1909 = vunpack.c.l.b16 %v641
        %v1910 = vunpack.c.h.b16 %v641
        %v1911 = vunpack.c.l.b16 %v642
        %v1912 = vunpack.c.h.b16 %v642
        %v1913 = vunpack.c.l.b16 %v643
        %v1914 = vunpack.c.h.b16 %v643
        %v1915 = vunpack.c.l.b16 %v644
        %v1916 = vunpack.c.h.b16 %v644
        %v1917 = vunpack.c.l.b16 %v645
        %v1918 = vunpack.c.h.b16 %v645
        %v1919 = vunpack.c.l.b16 %v646
        %v1920 = vunpack.c.h.b16 %v646
        %v1921 = vunpack.c.l.b16 %v647
        %v1922 = vunpack.c.h.b16 %v647
        %v1923 = vunpack.c.l.b16 %v648
        %v1924 = vunpack.c.h.b16 %v648
        %v1925 = vunpack.c.l.b16 %v649
        %v1926 = vunpack.c.h.b16 %v649
        %v1927 = vunpack.c.l.b16 %v650
        %v1928 = vunpack.c.h.b16 %v650
        %v1929 = vunpack.c.l.b16 %v651
        %v1930 = vunpack.c.h.b16 %v651
        %v1931 = vunpack.c.l.b16 %v652
        %v1932 = vunpack.c.h.b16 %v652
        %v1933 = vunpack.c.l.b16 %v653
        %v1934 = vunpack.c.h.b16 %v653
        %v1935 = vunpack.c.l.b16 %v654
        %v1936 = vunpack.c.h.b16 %v654
        %v1937 = vunpack.c.l.b16 %v655
        %v1938 = vunpack.c.h.b16 %v655
        %v1939 = vunpack.c.l.b16 %v656
        %v1940 = vunpack.c.h.b16 %v656
        %v1941 = vunpack.c.l.b16 %v657
        %v1942 = vunpack.c.h.b16 %v657
        %v1943 = vunpack.c.l.b16 %v658
        %v1944 = vunpack.c.h.b16 %v658
        %v1945 = vunpack.c.l.b16 %v659
        %v1946 = vunpack.c.h.b16 %v659
        %v1947 = vunpack.c.l.b16 %v660
        %v1948 = vunpack.c.h.b16 %v660
        %v1949 = vunpack.c.l.b16 %v661
        %v1950 = vunpack.c.h.b16 %v661
        %v1951 = vunpack.c.l.b16 %v662
        %v1952 = vunpack.c.h.b16 %v662
        %v1953 = vunpack.c.l.b16 %v663
        %v1954 = vunpack.c.h.b16 %v663
        %v1955 = vunpack.c.l.b16 %v664
        %v1956 = vunpack.c.h.b16 %v664
        %v1957 = vunpack.c.l.b16 %v665
        %v1958 = vunpack.c.h.b16 %v665
        %v1959 = vunpack.c.l.b16 %v666
        %v1960 = vunpack.c.h.b16 %v666
        %v1961 = vunpack.c.l.b16 %v667
        %v1962 = vunpack.c.h.b16 %v667
        %v1963 = vunpack.c.l.b16 %v668
        %v1964 = vunpack.c.h.b16 %v668
        %v1965 = vunpack.c.l.b16 %v669
        %v1966 = vunpack.c.h.b16 %v669
        %v1967 = vunpack.c.l.b16 %v670
        %v1968 = vunpack.c.h.b16 %v670
        %v1969 = vunpack.c.l.b16 %v671
        %v1970 = vunpack.c.h.b16 %v671
        %v1971 = vunpack.c.l.b16 %v672
        %v1972 = vunpack.c.h.b16 %v672
        %v1973 = vunpack.c.l.b16 %v673
        %v1974 = vunpack.c.h.b16 %v673
        %v1975 = vunpack.c.l.b16 %v674
        %v1976 = vunpack.c.h.b16 %v674
        %v1977 = vunpack.c.l.b16 %v675
        %v1978 = vunpack.c.h.b16 %v675
        %v1979 = vunpack.c.l.b16 %v676
        %v1980 = vunpack.c.h.b16 %v676
        %v1981 = vunpack.c.l.b16 %v677
        %v1982 = vunpack.c.h.b16 %v677
        %v1983 = vunpack.c.l.b16 %v678
        %v1984 = vunpack.c.h.b16 %v678
        %v1985 = vunpack.c.l.b16 %v679
        %v1986 = vunpack.c.h.b16 %v679
        %v1987 = vunpack.c.l.b16 %v680
        %v1988 = vunpack.c.h.b16 %v680
        %v1989 = vunpack.c.l.b16 %v681
        %v1990 = vunpack.c.h.b16 %v681
        %v1991 = vunpack.c.l.b16 %v682
        %v1992 = vunpack.c.h.b16 %v682
        %v1993 = vunpack.c.l.b16 %v683
        %v1994 = vunpack.c.h.b16 %v683
        %v1995 = vunpack.c.l.b16 %v684
        %v1996 = vunpack.c.h.b16 %v684
        %v1997 = vunpack.c.l.b16 %v685
        %v1998 = vunpack.c.h.b16 %v685
        %v1999 = vunpack.c.l.b16 %v686
        %v2000 = vunpack.c.h.b16 %v686
        %v2001 = vunpack.c.l.b16 %v687
        %v2002 = vunpack.c.h.b16 %v687
        %v2003 = vunpack.c.l.b16 %v688
        %v2004 = vunpack.c.h.b16 %v688
        %v2005 = vunpack.c.l.b16 %v689
        %v2006 = vunpack.c.h.b16 %v689
        %v2007 = vunpack.c.l.b16 %v690
        %v2008 = vunpack.c.h.b16 %v690
        %v2009 = vunpack.c.l.b16 %v691
        %v2010 = vunpack.c.h.b16 %v691
        %v2011 = vunpack.c.l.b16 %v692
        %v2012 = vunpack.c.h.b16 %v692
        %v2013 = vunpack.c.l.b16 %v693
        %v2014 = vunpack.c.h.b16 %v693
        %v2015 = vunpack.c.l.b16 %v694
        %v2016 = vunpack.c.h.b16 %v694
        %v2017 = vunpack.c.l.b16 %v695
        %v2018 = vunpack.c.h.b16 %v695
        %v2019 = vunpack.c.l.b16 %v696
        %v2020 = vunpack.c.h.b16 %v696
        %v2021 = vunpack.c.l.b16 %v697
        %v2022 = vunpack.c.h.b16 %v697
        %v2023 = vunpack.c.l.b16 %v698
        %v2024 = vunpack.c.h.b16 %v698
        %v2025 = vunpack.c.l.b16 %v699
        %v2026 = vunpack.c.h.b16 %v699
        %v2027 = vunpack.c.l.b16 %v700
        %v2028 = vunpack.c.h.b16 %v700
        %v2029 = vunpack.c.l.b16 %v701
        %v2030 = vunpack.c.h.b16 %v701
        %v2031 = vunpack.c.l.b16 %v702
        %v2032 = vunpack.c.h.b16 %v702
        %v2033 = vunpack.c.l.b16 %v703
        %v2034 = vunpack.c.h.b16 %v703
        %v2035 = vunpack.c.l.b16 %v704
        %v2036 = vunpack.c.h.b16 %v704
        %v2037 = vunpack.c.l.b16 %v705
        %v2038 = vunpack.c.h.b16 %v705
        %v2039 = vunpack.c.l.b16 %v706
        %v2040 = vunpack.c.h.b16 %v706
        %v2041 = vunpack.c.l.b16 %v707
        %v2042 = vunpack.c.h.b16 %v707
        %v2043 = vunpack.c.l.b16 %v708
        %v2044 = vunpack.c.h.b16 %v708
        %v2045 = vunpack.c.l.b16 %v709
        %v2046 = vunpack.c.h.b16 %v709
        %v2047 = vunpack.c.l.b16 %v710
        %v2048 = vunpack.c.h.b16 %v710
        %v2049 = vunpack.c.l.b16 %v711
        %v2050 = vunpack.c.h.b16 %v711
        %v2051 = vunpack.c.l.b16 %v712
        %v2052 = vunpack.c.h.b16 %v712
        %v2053 = vunpack.c.l.b16 %v713
        %v2054 = vunpack.c.h.b16 %v713
        %v2055 = vunpack.c.l.b16 %v714
        %v2056 = vunpack.c.h.b16 %v714
        %v2057 = vunpack.c.l.b16 %v715
        %v2058 = vunpack.c.h.b16 %v715
        %v2059 = vunpack.c.l.b16 %v716
        %v2060 = vunpack.c.h.b16 %v716
        %v2061 = vunpack.c.l.b16 %v717
        %v2062 = vunpack.c.h.b16 %v717
        %v2063 = vunpack.c.l.b16 %v718
        %v2064 = vunpack.c.h.b16 %v718
        %v2065 = vunpack.c.l.b16 %v719
        %v2066 = vunpack.c.h.b16 %v719
        %v2067 = vunpack.c.l.b16 %v720
        %v2068 = vunpack.c.h.b16 %v720
        %v2069 = vunpack.c.l.b16 %v721
        %v2070 = vunpack.c.h.b16 %v721
        %v2071 = vunpack.c.l.b16 %v722
        %v2072 = vunpack.c.h.b16 %v722
        %v2073 = vunpack.c.l.b16 %v723
        %v2074 = vunpack.c.h.b16 %v723
        %v2075 = vunpack.c.l.b16 %v724
        %v2076 = vunpack.c.h.b16 %v724
        %v2077 = vunpack.c.l.b16 %v725
        %v2078 = vunpack.c.h.b16 %v725
        %v2079 = vunpack.c.l.b16 %v726
        %v2080 = vunpack.c.h.b16 %v726
        %v2081 = vunpack.c.l.b16 %v727
        %v2082 = vunpack.c.h.b16 %v727
        %v2083 = vunpack.c.l.b16 %v728
        %v2084 = vunpack.c.h.b16 %v728
        %v2085 = vunpack.c.l.b16 %v729
        %v2086 = vunpack.c.h.b16 %v729
        %v2087 = vunpack.c.l.b16 %v730
        %v2088 = vunpack.c.h.b16 %v730
        %v2089 = vunpack.c.l.b16 %v731
        %v2090 = vunpack.c.h.b16 %v731
        %v2091 = vunpack.c.l.b16 %v732
        %v2092 = vunpack.c.h.b16 %v732
        %v2093 = vpack.c.b16 %v1205, %v1197
        %v2094 = vpack.c.b16 %v1206, %v1198
        %v2095 = vpack.c.b16 %v1207, %v1199
        %v2096 = vpack.c.b16 %v1208, %v1200
        %v2097 = vpack.c.b16 %v1209, %v1201
        %v2098 = vpack.c.b16 %v1210, %v1202
        %v2099 = vpack.c.b16 %v1211, %v1203
        %v2100 = vpack.c.b16 %v1212, %v1204
        %v2101 = vpack.c.b16 %v1221, %v1213
        %v2102 = vpack.c.b16 %v1222, %v1214
        %v2103 = vpack.c.b16 %v1223, %v1215
        %v2104 = vpack.c.b16 %v1224, %v1216
        %v2105 = vpack.c.b16 %v1225, %v1217
        %v2106 = vpack.c.b16 %v1226, %v1218
        %v2107 = vpack.c.b16 %v1227, %v1219
        %v2108 = vpack.c.b16 %v1228, %v1220
        %v2109 = vpack.c.b16 %v1237, %v1229
        %v2110 = vpack.c.b16 %v1238, %v1230
        %v2111 = vpack.c.b16 %v1239, %v1231
        %v2112 = vpack.c.b16 %v1240, %v1232
        %v2113 = vpack.c.b16 %v1241, %v1233
        %v2114 = vpack.c.b16 %v1242, %v1234
        %v2115 = vpack.c.b16 %v1243, %v1235
        %v2116 = vpack.c.b16 %v1244, %v1236
        %v2117 = vpack.c.b16 %v1253, %v1245
        %v2118 = vpack.c.b16 %v1254, %v1246
        %v2119 = vpack.c.b16 %v1255, %v1247
        %v2120 = vpack.c.b16 %v1256, %v1248
        %v2121 = vpack.c.b16 %v1257, %v1249
        %v2122 = vpack.c.b16 %v1258, %v1250
        %v2123 = vpack.c.b16 %v1259, %v1251
        %v2124 = vpack.c.b16 %v1260, %v1252
        %v2125 = vpack.c.b16 %v1269, %v1261
        %v2126 = vpack.c.b16 %v1270, %v1262
        %v2127 = vpack.c.b16 %v1271, %v1263
        %v2128 = vpack.c.b16 %v1272, %v1264
        %v2129 = vpack.c.b16 %v1273, %v1265
        %v2130 = vpack.c.b16 %v1274, %v1266
        %v2131 = vpack.c.b16 %v1275, %v1267
        %v2132 = vpack.c.b16 %v1276, %v1268
        %v2133 = vpack.c.b16 %v1285, %v1277
        %v2134 = vpack.c.b16 %v1286, %v1278
        %v2135 = vpack.c.b16 %v1287, %v1279
        %v2136 = vpack.c.b16 %v1288, %v1280
        %v2137 = vpack.c.b16 %v1289, %v1281
        %v2138 = vpack.c.b16 %v1290, %v1282
        %v2139 = vpack.c.b16 %v1291, %v1283
        %v2140 = vpack.c.b16 %v1292, %v1284
        %v2141 = vpack.c.b16 %v1301, %v1293
        %v2142 = vpack.c.b16 %v1302, %v1294
        %v2143 = vpack.c.b16 %v1303, %v1295
        %v2144 = vpack.c.b16 %v1304, %v1296
        %v2145 = vpack.c.b16 %v1305, %v1297
        %v2146 = vpack.c.b16 %v1306, %v1298
        %v2147 = vpack.c.b16 %v1307, %v1299
        %v2148 = vpack.c.b16 %v1308, %v1300
        %v2149 = vpack.c.b16 %v1317, %v1309
        %v2150 = vpack.c.b16 %v1318, %v1310
        %v2151 = vpack.c.b16 %v1319, %v1311
        %v2152 = vpack.c.b16 %v1320, %v1312
        %v2153 = vpack.c.b16 %v1321, %v1313
        %v2154 = vpack.c.b16 %v1322, %v1314
        %v2155 = vpack.c.b16 %v1323, %v1315
        %v2156 = vpack.c.b16 %v1324, %v1316
        %v2157 = vpack.c.b16 %v1333, %v1325
        %v2158 = vpack.c.b16 %v1334, %v1326
        %v2159 = vpack.c.b16 %v1335, %v1327
        %v2160 = vpack.c.b16 %v1336, %v1328
        %v2161 = vpack.c.b16 %v1337, %v1329
        %v2162 = vpack.c.b16 %v1338, %v1330
        %v2163 = vpack.c.b16 %v1339, %v1331
        %v2164 = vpack.c.b16 %v1340, %v1332
        %v2165 = vpack.c.b16 %v1349, %v1341
        %v2166 = vpack.c.b16 %v1350, %v1342
        %v2167 = vpack.c.b16 %v1351, %v1343
        %v2168 = vpack.c.b16 %v1352, %v1344
        %v2169 = vpack.c.b16 %v1353, %v1345
        %v2170 = vpack.c.b16 %v1354, %v1346
        %v2171 = vpack.c.b16 %v1355, %v1347
        %v2172 = vpack.c.b16 %v1356, %v1348
        %v2173 = vpack.c.b16 %v1365, %v1357
        %v2174 = vpack.c.b16 %v1366, %v1358
        %v2175 = vpack.c.b16 %v1367, %v1359
        %v2176 = vpack.c.b16 %v1368, %v1360
        %v2177 = vpack.c.b16 %v1369, %v1361
        %v2178 = vpack.c.b16 %v1370, %v1362
        %v2179 = vpack.c.b16 %v1371, %v1363
        %v2180 = vpack.c.b16 %v1372, %v1364
        %v2181 = vpack.c.b16 %v1381, %v1373
        %v2182 = vpack.c.b16 %v1382, %v1374
        %v2183 = vpack.c.b16 %v1383, %v1375
        %v2184 = vpack.c.b16 %v1384, %v1376
        %v2185 = vpack.c.b16 %v1385, %v1377
        %v2186 = vpack.c.b16 %v1386, %v1378
        %v2187 = vpack.c.b16 %v1387, %v1379
        %v2188 = vpack.c.b16 %v1388, %v1380
        %v2189 = vpack.c.b16 %v1397, %v1389
        %v2190 = vpack.c.b16 %v1398, %v1390
        %v2191 = vpack.c.b16 %v1399, %v1391
        %v2192 = vpack.c.b16 %v1400, %v1392
        %v2193 = vpack.c.b16 %v1401, %v1393
        %v2194 = vpack.c.b16 %v1402, %v1394
        %v2195 = vpack.c.b16 %v1403, %v1395
        %v2196 = vpack.c.b16 %v1404, %v1396
        %v2197 = vpack.c.b16 %v1413, %v1405
        %v2198 = vpack.c.b16 %v1414, %v1406
        %v2199 = vpack.c.b16 %v1415, %v1407
        %v2200 = vpack.c.b16 %v1416, %v1408
        %v2201 = vpack.c.b16 %v1417, %v1409
        %v2202 = vpack.c.b16 %v1418, %v1410
        %v2203 = vpack.c.b16 %v1419, %v1411
        %v2204 = vpack.c.b16 %v1420, %v1412
        %v2205 = vpack.c.b16 %v1429, %v1421
        %v2206 = vpack.c.b16 %v1430, %v1422
        %v2207 = vpack.c.b16 %v1431, %v1423
        %v2208 = vpack.c.b16 %v1432, %v1424
        %v2209 = vpack.c.b16 %v1433, %v1425
        %v2210 = vpack.c.b16 %v1434, %v1426
        %v2211 = vpack.c.b16 %v1435, %v1427
        %v2212 = vpack.c.b16 %v1436, %v1428
        %v2213 = vpack.c.b16 %v1445, %v1437
        %v2214 = vpack.c.b16 %v1446, %v1438
        %v2215 = vpack.c.b16 %v1447, %v1439
        %v2216 = vpack.c.b16 %v1448, %v1440
        %v2217 = vpack.c.b16 %v1449, %v1441
        %v2218 = vpack.c.b16 %v1450, %v1442
        %v2219 = vpack.c.b16 %v1451, %v1443
        %v2220 = vpack.c.b16 %v1452, %v1444
        %v2221 = vpack.c.b16 %v1461, %v1453
        %v2222 = vpack.c.b16 %v1462, %v1454
        %v2223 = vpack.c.b16 %v1463, %v1455
        %v2224 = vpack.c.b16 %v1464, %v1456
        %v2225 = vpack.c.b16 %v1465, %v1457
        %v2226 = vpack.c.b16 %v1466, %v1458
        %v2227 = vpack.c.b16 %v1467, %v1459
        %v2228 = vpack.c.b16 %v1468, %v1460
        %v2229 = vpack.c.b16 %v1477, %v1469
        %v2230 = vpack.c.b16 %v1478, %v1470
        %v2231 = vpack.c.b16 %v1479, %v1471
        %v2232 = vpack.c.b16 %v1480, %v1472
        %v2233 = vpack.c.b16 %v1481, %v1473
        %v2234 = vpack.c.b16 %v1482, %v1474
        %v2235 = vpack.c.b16 %v1483, %v1475
        %v2236 = vpack.c.b16 %v1484, %v1476
        %v2237 = vpack.c.b16 %v1493, %v1485
        %v2238 = vpack.c.b16 %v1494, %v1486
        %v2239 = vpack.c.b16 %v1495, %v1487
        %v2240 = vpack.c.b16 %v1496, %v1488
        %v2241 = vpack.c.b16 %v1497, %v1489
        %v2242 = vpack.c.b16 %v1498, %v1490
        %v2243 = vpack.c.b16 %v1499, %v1491
        %v2244 = vpack.c.b16 %v1500, %v1492
        %v2245 = vpack.c.b16 %v1509, %v1501
        %v2246 = vpack.c.b16 %v1510, %v1502
        %v2247 = vpack.c.b16 %v1511, %v1503
        %v2248 = vpack.c.b16 %v1512, %v1504
        %v2249 = vpack.c.b16 %v1513, %v1505
        %v2250 = vpack.c.b16 %v1514, %v1506
        %v2251 = vpack.c.b16 %v1515, %v1507
        %v2252 = vpack.c.b16 %v1516, %v1508
        %v2253 = vpack.c.b16 %v1525, %v1517
        %v2254 = vpack.c.b16 %v1526, %v1518
        %v2255 = vpack.c.b16 %v1527, %v1519
        %v2256 = vpack.c.b16 %v1528, %v1520
        %v2257 = vpack.c.b16 %v1529, %v1521
        %v2258 = vpack.c.b16 %v1530, %v1522
        %v2259 = vpack.c.b16 %v1531, %v1523
        %v2260 = vpack.c.b16 %v1532, %v1524
        %v2261 = vpack.c.b16 %v1541, %v1533
        %v2262 = vpack.c.b16 %v1542, %v1534
        %v2263 = vpack.c.b16 %v1543, %v1535
        %v2264 = vpack.c.b16 %v1544, %v1536
        %v2265 = vpack.c.b16 %v1545, %v1537
        %v2266 = vpack.c.b16 %v1546, %v1538
        %v2267 = vpack.c.b16 %v1547, %v1539
        %v2268 = vpack.c.b16 %v1548, %v1540
        %v2269 = vpack.c.b16 %v1557, %v1549
        %v2270 = vpack.c.b16 %v1558, %v1550
        %v2271 = vpack.c.b16 %v1559, %v1551
        %v2272 = vpack.c.b16 %v1560, %v1552
        %v2273 = vpack.c.b16 %v1561, %v1553
        %v2274 = vpack.c.b16 %v1562, %v1554
        %v2275 = vpack.c.b16 %v1563, %v1555
        %v2276 = vpack.c.b16 %v1564, %v1556
        %v2277 = vpack.c.b16 %v1573, %v1565
        %v2278 = vpack.c.b16 %v1574, %v1566
        %v2279 = vpack.c.b16 %v1575, %v1567
        %v2280 = vpack.c.b16 %v1576, %v1568
        %v2281 = vpack.c.b16 %v1577, %v1569
        %v2282 = vpack.c.b16 %v1578, %v1570
        %v2283 = vpack.c.b16 %v1579, %v1571
        %v2284 = vpack.c.b16 %v1580, %v1572
        %v2285 = vpack.c.b16 %v1589, %v1581
        %v2286 = vpack.c.b16 %v1590, %v1582
        %v2287 = vpack.c.b16 %v1591, %v1583
        %v2288 = vpack.c.b16 %v1592, %v1584
        %v2289 = vpack.c.b16 %v1593, %v1585
        %v2290 = vpack.c.b16 %v1594, %v1586
        %v2291 = vpack.c.b16 %v1595, %v1587
        %v2292 = vpack.c.b16 %v1596, %v1588
        %v2293 = vpack.c.b16 %v1605, %v1597
        %v2294 = vpack.c.b16 %v1606, %v1598
        %v2295 = vpack.c.b16 %v1607, %v1599
        %v2296 = vpack.c.b16 %v1608, %v1600
        %v2297 = vpack.c.b16 %v1609, %v1601
        %v2298 = vpack.c.b16 %v1610, %v1602
        %v2299 = vpack.c.b16 %v1611, %v1603
        %v2300 = vpack.c.b16 %v1612, %v1604
        %v2301 = vpack.c.b16 %v1621, %v1613
        %v2302 = vpack.c.b16 %v1622, %v1614
        %v2303 = vpack.c.b16 %v1623, %v1615
        %v2304 = vpack.c.b16 %v1624, %v1616
        %v2305 = vpack.c.b16 %v1625, %v1617
        %v2306 = vpack.c.b16 %v1626, %v1618
        %v2307 = vpack.c.b16 %v1627, %v1619
        %v2308 = vpack.c.b16 %v1628, %v1620
        %v2309 = vpack.c.b16 %v1637, %v1629
        %v2310 = vpack.c.b16 %v1638, %v1630
        %v2311 = vpack.c.b16 %v1639, %v1631
        %v2312 = vpack.c.b16 %v1640, %v1632
        %v2313 = vpack.c.b16 %v1641, %v1633
        %v2314 = vpack.c.b16 %v1642, %v1634
        %v2315 = vpack.c.b16 %v1643, %v1635
        %v2316 = vpack.c.b16 %v1644, %v1636
        %v2317 = vpack.c.b16 %v1653, %v1645
        %v2318 = vpack.c.b16 %v1654, %v1646
        %v2319 = vpack.c.b16 %v1655, %v1647
        %v2320 = vpack.c.b16 %v1656, %v1648
        %v2321 = vpack.c.b16 %v1657, %v1649
        %v2322 = vpack.c.b16 %v1658, %v1650
        %v2323 = vpack.c.b16 %v1659, %v1651
        %v2324 = vpack.c.b16 %v1660, %v1652
        %v2325 = vpack.c.b16 %v1669, %v1661
        %v2326 = vpack.c.b16 %v1670, %v1662
        %v2327 = vpack.c.b16 %v1671, %v1663
        %v2328 = vpack.c.b16 %v1672, %v1664
        %v2329 = vpack.c.b16 %v1673, %v1665
        %v2330 = vpack.c.b16 %v1674, %v1666
        %v2331 = vpack.c.b16 %v1675, %v1667
        %v2332 = vpack.c.b16 %v1676, %v1668
        %v2333 = vpack.c.b16 %v1685, %v1677
        %v2334 = vpack.c.b16 %v1686, %v1678
        %v2335 = vpack.c.b16 %v1687, %v1679
        %v2336 = vpack.c.b16 %v1688, %v1680
        %v2337 = vpack.c.b16 %v1689, %v1681
        %v2338 = vpack.c.b16 %v1690, %v1682
        %v2339 = vpack.c.b16 %v1691, %v1683
        %v2340 = vpack.c.b16 %v1692, %v1684
        %v2341 = vpack.c.b16 %v1701, %v1693
        %v2342 = vpack.c.b16 %v1702, %v1694
        %v2343 = vpack.c.b16 %v1703, %v1695
        %v2344 = vpack.c.b16 %v1704, %v1696
        %v2345 = vpack.c.b16 %v1705, %v1697
        %v2346 = vpack.c.b16 %v1706, %v1698
        %v2347 = vpack.c.b16 %v1707, %v1699
        %v2348 = vpack.c.b16 %v1708, %v1700
        %v2349 = vpack.c.b16 %v1717, %v1709
        %v2350 = vpack.c.b16 %v1718, %v1710
        %v2351 = vpack.c.b16 %v1719, %v1711
        %v2352 = vpack.c.b16 %v1720, %v1712
        %v2353 = vpack.c.b16 %v1721, %v1713
        %v2354 = vpack.c.b16 %v1722, %v1714
        %v2355 = vpack.c.b16 %v1723, %v1715
        %v2356 = vpack.c.b16 %v1724, %v1716
        %v2357 = vpack.c.b16 %v1733, %v1725
        %v2358 = vpack.c.b16 %v1734, %v1726
        %v2359 = vpack.c.b16 %v1735, %v1727
        %v2360 = vpack.c.b16 %v1736, %v1728
        %v2361 = vpack.c.b16 %v1737, %v1729
        %v2362 = vpack.c.b16 %v1738, %v1730
        %v2363 = vpack.c.b16 %v1739, %v1731
        %v2364 = vpack.c.b16 %v1740, %v1732
        %v2365 = vpack.c.b16 %v1749, %v1741
        %v2366 = vpack.c.b16 %v1750, %v1742
        %v2367 = vpack.c.b16 %v1751, %v1743
        %v2368 = vpack.c.b16 %v1752, %v1744
        %v2369 = vpack.c.b16 %v1753, %v1745
        %v2370 = vpack.c.b16 %v1754, %v1746
        %v2371 = vpack.c.b16 %v1755, %v1747
        %v2372 = vpack.c.b16 %v1756, %v1748
        %v2373 = vpack.c.b16 %v1765, %v1757
        %v2374 = vpack.c.b16 %v1766, %v1758
        %v2375 = vpack.c.b16 %v1767, %v1759
        %v2376 = vpack.c.b16 %v1768, %v1760
        %v2377 = vpack.c.b16 %v1769, %v1761
        %v2378 = vpack.c.b16 %v1770, %v1762
        %v2379 = vpack.c.b16 %v1771, %v1763
        %v2380 = vpack.c.b16 %v1772, %v1764
        %v2381 = vpack.c.b16 %v1781, %v1773
        %v2382 = vpack.c.b16 %v1782, %v1774
        %v2383 = vpack.c.b16 %v1783, %v1775
        %v2384 = vpack.c.b16 %v1784, %v1776
        %v2385 = vpack.c.b16 %v1785, %v1777
        %v2386 = vpack.c.b16 %v1786, %v1778
        %v2387 = vpack.c.b16 %v1787, %v1779
        %v2388 = vpack.c.b16 %v1788, %v1780
        %v2389 = vpack.c.b16 %v1797, %v1789
        %v2390 = vpack.c.b16 %v1798, %v1790
        %v2391 = vpack.c.b16 %v1799, %v1791
        %v2392 = vpack.c.b16 %v1800, %v1792
        %v2393 = vpack.c.b16 %v1801, %v1793
        %v2394 = vpack.c.b16 %v1802, %v1794
        %v2395 = vpack.c.b16 %v1803, %v1795
        %v2396 = vpack.c.b16 %v1804, %v1796
        %v2397 = vpack.c.b16 %v1813, %v1805
        %v2398 = vpack.c.b16 %v1814, %v1806
        %v2399 = vpack.c.b16 %v1815, %v1807
        %v2400 = vpack.c.b16 %v1816, %v1808
        %v2401 = vpack.c.b16 %v1817, %v1809
        %v2402 = vpack.c.b16 %v1818, %v1810
        %v2403 = vpack.c.b16 %v1819, %v1811
        %v2404 = vpack.c.b16 %v1820, %v1812
        %v2405 = vpack.c.b16 %v1829, %v1821
        %v2406 = vpack.c.b16 %v1830, %v1822
        %v2407 = vpack.c.b16 %v1831, %v1823
        %v2408 = vpack.c.b16 %v1832, %v1824
        %v2409 = vpack.c.b16 %v1833, %v1825
        %v2410 = vpack.c.b16 %v1834, %v1826
        %v2411 = vpack.c.b16 %v1835, %v1827
        %v2412 = vpack.c.b16 %v1836, %v1828
        %v2413 = vpack.c.b16 %v1845, %v1837
        %v2414 = vpack.c.b16 %v1846, %v1838
        %v2415 = vpack.c.b16 %v1847, %v1839
        %v2416 = vpack.c.b16 %v1848, %v1840
        %v2417 = vpack.c.b16 %v1849, %v1841
        %v2418 = vpack.c.b16 %v1850, %v1842
        %v2419 = vpack.c.b16 %v1851, %v1843
        %v2420 = vpack.c.b16 %v1852, %v1844
        %v2421 = vpack.c.b16 %v1861, %v1853
        %v2422 = vpack.c.b16 %v1862, %v1854
        %v2423 = vpack.c.b16 %v1863, %v1855
        %v2424 = vpack.c.b16 %v1864, %v1856
        %v2425 = vpack.c.b16 %v1865, %v1857
        %v2426 = vpack.c.b16 %v1866, %v1858
        %v2427 = vpack.c.b16 %v1867, %v1859
        %v2428 = vpack.c.b16 %v1868, %v1860
        %v2429 = vpack.c.b16 %v1877, %v1869
        %v2430 = vpack.c.b16 %v1878, %v1870
        %v2431 = vpack.c.b16 %v1879, %v1871
        %v2432 = vpack.c.b16 %v1880, %v1872
        %v2433 = vpack.c.b16 %v1881, %v1873
        %v2434 = vpack.c.b16 %v1882, %v1874
        %v2435 = vpack.c.b16 %v1883, %v1875
        %v2436 = vpack.c.b16 %v1884, %v1876
        %v2437 = vpack.c.b16 %v1893, %v1885
        %v2438 = vpack.c.b16 %v1894, %v1886
        %v2439 = vpack.c.b16 %v1895, %v1887
        %v2440 = vpack.c.b16 %v1896, %v1888
        %v2441 = vpack.c.b16 %v1897, %v1889
        %v2442 = vpack.c.b16 %v1898, %v1890
        %v2443 = vpack.c.b16 %v1899, %v1891
        %v2444 = vpack.c.b16 %v1900, %v1892
        %v2445 = vpack.c.b16 %v1909, %v1901
        %v2446 = vpack.c.b16 %v1910, %v1902
        %v2447 = vpack.c.b16 %v1911, %v1903
        %v2448 = vpack.c.b16 %v1912, %v1904
        %v2449 = vpack.c.b16 %v1913, %v1905
        %v2450 = vpack.c.b16 %v1914, %v1906
        %v2451 = vpack.c.b16 %v1915, %v1907
        %v2452 = vpack.c.b16 %v1916, %v1908
        %v2453 = vpack.c.b16 %v1925, %v1917
        %v2454 = vpack.c.b16 %v1926, %v1918
        %v2455 = vpack.c.b16 %v1927, %v1919
        %v2456 = vpack.c.b16 %v1928, %v1920
        %v2457 = vpack.c.b16 %v1929, %v1921
        %v2458 = vpack.c.b16 %v1930, %v1922
        %v2459 = vpack.c.b16 %v1931, %v1923
        %v2460 = vpack.c.b16 %v1932, %v1924
        %v2461 = vpack.c.b16 %v1941, %v1933
        %v2462 = vpack.c.b16 %v1942, %v1934
        %v2463 = vpack.c.b16 %v1943, %v1935
        %v2464 = vpack.c.b16 %v1944, %v1936
        %v2465 = vpack.c.b16 %v1945, %v1937
        %v2466 = vpack.c.b16 %v1946, %v1938
        %v2467 = vpack.c.b16 %v1947, %v1939
        %v2468 = vpack.c.b16 %v1948, %v1940
        %v2469 = vpack.c.b16 %v1957, %v1949
        %v2470 = vpack.c.b16 %v1958, %v1950
        %v2471 = vpack.c.b16 %v1959, %v1951
        %v2472 = vpack.c.b16 %v1960, %v1952
        %v2473 = vpack.c.b16 %v1961, %v1953
        %v2474 = vpack.c.b16 %v1962, %v1954
        %v2475 = vpack.c.b16 %v1963, %v1955
        %v2476 = vpack.c.b16 %v1964, %v1956
        %v2477 = vpack.c.b16 %v1973, %v1965
        %v2478 = vpack.c.b16 %v1974, %v1966
        %v2479 = vpack.c.b16 %v1975, %v1967
        %v2480 = vpack.c.b16 %v1976, %v1968
        %v2481 = vpack.c.b16 %v1977, %v1969
        %v2482 = vpack.c.b16 %v1978, %v1970
        %v2483 = vpack.c.b16 %v1979, %v1971
        %v2484 = vpack.c.b16 %v1980, %v1972
        %v2485 = vpack.c.b16 %v1989, %v1981
        %v2486 = vpack.c.b16 %v1990, %v1982
        %v2487 = vpack.c.b16 %v1991, %v1983
        %v2488 = vpack.c.b16 %v1992, %v1984
        %v2489 = vpack.c.b16 %v1993, %v1985
        %v2490 = vpack.c.b16 %v1994, %v1986
        %v2491 = vpack.c.b16 %v1995, %v1987
        %v2492 = vpack.c.b16 %v1996, %v1988
        %v2493 = vpack.c.b16 %v2005, %v1997
        %v2494 = vpack.c.b16 %v2006, %v1998
        %v2495 = vpack.c.b16 %v2007, %v1999
        %v2496 = vpack.c.b16 %v2008, %v2000
        %v2497 = vpack.c.b16 %v2009, %v2001
        %v2498 = vpack.c.b16 %v2010, %v2002
        %v2499 = vpack.c.b16 %v2011, %v2003
        %v2500 = vpack.c.b16 %v2012, %v2004
        %v2501 = vpack.c.b16 %v2021, %v2013
        %v2502 = vpack.c.b16 %v2022, %v2014
        %v2503 = vpack.c.b16 %v2023, %v2015
        %v2504 = vpack.c.b16 %v2024, %v2016
        %v2505 = vpack.c.b16 %v2025, %v2017
        %v2506 = vpack.c.b16 %v2026, %v2018
        %v2507 = vpack.c.b16 %v2027, %v2019
        %v2508 = vpack.c.b16 %v2028, %v2020
        %v2509 = vpack.c.b16 %v2037, %v2029
        %v2510 = vpack.c.b16 %v2038, %v2030
        %v2511 = vpack.c.b16 %v2039, %v2031
        %v2512 = vpack.c.b16 %v2040, %v2032
        %v2513 = vpack.c.b16 %v2041, %v2033
        %v2514 = vpack.c.b16 %v2042, %v2034
        %v2515 = vpack.c.b16 %v2043, %v2035
        %v2516 = vpack.c.b16 %v2044, %v2036
        %v2517 = vpack.c.b16 %v2053, %v2045
        %v2518 = vpack.c.b16 %v2054, %v2046
        %v2519 = vpack.c.b16 %v2055, %v2047
        %v2520 = vpack.c.b16 %v2056, %v2048
        %v2521 = vpack.c.b16 %v2057, %v2049
        %v2522 = vpack.c.b16 %v2058, %v2050
        %v2523 = vpack.c.b16 %v2059, %v2051
        %v2524 = vpack.c.b16 %v2060, %v2052
        %v2525 = vpack.c.b16 %v2069, %v2061
        %v2526 = vpack.c.b16 %v2070, %v2062
        %v2527 = vpack.c.b16 %v2071, %v2063
        %v2528 = vpack.c.b16 %v2072, %v2064
        %v2529 = vpack.c.b16 %v2073, %v2065
        %v2530 = vpack.c.b16 %v2074, %v2066
        %v2531 = vpack.c.b16 %v2075, %v2067
        %v2532 = vpack.c.b16 %v2076, %v2068
        %v2533 = vpack.c.b16 %v2085, %v2077
        %v2534 = vpack.c.b16 %v2086, %v2078
        %v2535 = vpack.c.b16 %v2087, %v2079
        %v2536 = vpack.c.b16 %v2088, %v2080
        %v2537 = vpack.c.b16 %v2089, %v2081
        %v2538 = vpack.c.b16 %v2090, %v2082
        %v2539 = vpack.c.b16 %v2091, %v2083
        %v2540 = vpack.c.b16 %v2092, %v2084
        %2989 = vmatpush.bf16.msra.mxu0 %v2149
        %2990 = vmatpush.bf16.msra.mxu0 %v2141
        %2991 = vmatpush.bf16.msra.mxu0 %v2133
        %2992 = vmatpush.bf16.msra.mxu0 %v2125
        %2993 = vmatpush.bf16.msra.mxu0 %v2117
        %2994 = vmatpush.bf16.msra.mxu0 %v2109
        %2995 = vmatpush.bf16.msra.mxu0 %v2101
        %2996 = vmatpush.bf16.msra.mxu0 %v2093
        %2997 = vmatmul.bf16.gmra.mxu0 %v735
        %v2998 = vpop.f32.mrf.mxu0
        %v2999 = vadd.f32 0.0, %v2998
        %v3000 = vpop.f32.mrf.mxu0
        %3001 = vdwg.mxu0
        %3002 = vmatpush.bf16.msra.mxu0 %v2213
        %3003 = vmatpush.bf16.msra.mxu0 %v2205
        %3004 = vmatpush.bf16.msra.mxu0 %v2197
        %3005 = vmatpush.bf16.msra.mxu0 %v2189
        %3006 = vmatpush.bf16.msra.mxu0 %v2181
        %3007 = vmatpush.bf16.msra.mxu0 %v2173
        %3008 = vmatpush.bf16.msra.mxu0 %v2165
        %3009 = vmatpush.bf16.msra.mxu0 %v2157
        %3010 = vmatmul.bf16.gmra.mxu0 %v736
        %v3011 = vpop.f32.mrf.mxu0
        %v3012 = vadd.f32 %v2999, %v3011
        %v3013 = vpop.f32.mrf.mxu0
        %3014 = vdwg.mxu0
        %3015 = vmatpush.bf16.msra.mxu0 %v2277
        %3016 = vmatpush.bf16.msra.mxu0 %v2269
        %3017 = vmatpush.bf16.msra.mxu0 %v2261
        %3018 = vmatpush.bf16.msra.mxu0 %v2253
        %3019 = vmatpush.bf16.msra.mxu0 %v2245
        %3020 = vmatpush.bf16.msra.mxu0 %v2237
        %3021 = vmatpush.bf16.msra.mxu0 %v2229
        %3022 = vmatpush.bf16.msra.mxu0 %v2221
        %3023 = vmatmul.bf16.gmra.mxu0 %v737
        %v3024 = vpop.f32.mrf.mxu0
        %v3025 = vadd.f32 %v3012, %v3024
        %v3026 = vpop.f32.mrf.mxu0
        %3027 = vdwg.mxu0
        %3028 = vmatpush.bf16.msra.mxu0 %v2341
        %3029 = vmatpush.bf16.msra.mxu0 %v2333
        %3030 = vmatpush.bf16.msra.mxu0 %v2325
        %3031 = vmatpush.bf16.msra.mxu0 %v2317
        %3032 = vmatpush.bf16.msra.mxu0 %v2309
        %3033 = vmatpush.bf16.msra.mxu0 %v2301
        %3034 = vmatpush.bf16.msra.mxu0 %v2293
        %3035 = vmatpush.bf16.msra.mxu0 %v2285
        %3036 = vmatmul.bf16.gmra.mxu0 %v738
        %v3037 = vpop.f32.mrf.mxu0
        %v3038 = vadd.f32 %v3025, %v3037
        %v3039 = vpop.f32.mrf.mxu0
        %3040 = vdwg.mxu0
        %3041 = vmatpush.bf16.msra.mxu0 %v2405
        %3042 = vmatpush.bf16.msra.mxu0 %v2397
        %3043 = vmatpush.bf16.msra.mxu0 %v2389
        %3044 = vmatpush.bf16.msra.mxu0 %v2381
        %3045 = vmatpush.bf16.msra.mxu0 %v2373
        %3046 = vmatpush.bf16.msra.mxu0 %v2365
        %3047 = vmatpush.bf16.msra.mxu0 %v2357
        %3048 = vmatpush.bf16.msra.mxu0 %v2349
        %3049 = vmatmul.bf16.gmra.mxu0 %v739
        %v3050 = vpop.f32.mrf.mxu0
        %v3051 = vadd.f32 %v3038, %v3050
        %v3052 = vpop.f32.mrf.mxu0
        %3053 = vdwg.mxu0
        %3054 = vmatpush.bf16.msra.mxu0 %v2469
        %3055 = vmatpush.bf16.msra.mxu0 %v2461
        %3056 = vmatpush.bf16.msra.mxu0 %v2453
        %3057 = vmatpush.bf16.msra.mxu0 %v2445
        %3058 = vmatpush.bf16.msra.mxu0 %v2437
        %3059 = vmatpush.bf16.msra.mxu0 %v2429
        %3060 = vmatpush.bf16.msra.mxu0 %v2421
        %3061 = vmatpush.bf16.msra.mxu0 %v2413
        %3062 = vmatmul.bf16.gmra.mxu0 %v740
        %v3063 = vpop.f32.mrf.mxu0
        %v3064 = vadd.f32 %v3051, %v3063
        %v3065 = vpop.f32.mrf.mxu0
        %3066 = vdwg.mxu0
        %3067 = vmatpush.bf16.msra.mxu0 %v2533
        %3068 = vmatpush.bf16.msra.mxu0 %v2525
        %3069 = vmatpush.bf16.msra.mxu0 %v2517
        %3070 = vmatpush.bf16.msra.mxu0 %v2509
        %3071 = vmatpush.bf16.msra.mxu0 %v2501
        %3072 = vmatpush.bf16.msra.mxu0 %v2493
        %3073 = vmatpush.bf16.msra.mxu0 %v2485
        %3074 = vmatpush.bf16.msra.mxu0 %v2477
        %3075 = vmatmul.bf16.gmra.mxu0 %v741
        %v3076 = vpop.f32.mrf.mxu0
        %v3077 = vadd.f32 %v3064, %v3076
        %v3078 = vpop.f32.mrf.mxu0
        %3079 = vdwg.mxu0
        %3080 = vmatpush.bf16.msra.mxu0 %v2150
        %3081 = vmatpush.bf16.msra.mxu0 %v2142
        %3082 = vmatpush.bf16.msra.mxu0 %v2134
        %3083 = vmatpush.bf16.msra.mxu0 %v2126
        %3084 = vmatpush.bf16.msra.mxu0 %v2118
        %3085 = vmatpush.bf16.msra.mxu0 %v2110
        %3086 = vmatpush.bf16.msra.mxu0 %v2102
        %3087 = vmatpush.bf16.msra.mxu0 %v2094
        %3088 = vmatmul.bf16.gmra.mxu0 %v735
        %v3089 = vpop.f32.mrf.mxu0
        %v3090 = vadd.f32 0.0, %v3089
        %v3091 = vpop.f32.mrf.mxu0
        %3092 = vdwg.mxu0
        %3093 = vmatpush.bf16.msra.mxu0 %v2214
        %3094 = vmatpush.bf16.msra.mxu0 %v2206
        %3095 = vmatpush.bf16.msra.mxu0 %v2198
        %3096 = vmatpush.bf16.msra.mxu0 %v2190
        %3097 = vmatpush.bf16.msra.mxu0 %v2182
        %3098 = vmatpush.bf16.msra.mxu0 %v2174
        %3099 = vmatpush.bf16.msra.mxu0 %v2166
        %3100 = vmatpush.bf16.msra.mxu0 %v2158
        %3101 = vmatmul.bf16.gmra.mxu0 %v736
        %v3102 = vpop.f32.mrf.mxu0
        %v3103 = vadd.f32 %v3090, %v3102
        %v3104 = vpop.f32.mrf.mxu0
        %3105 = vdwg.mxu0
        %3106 = vmatpush.bf16.msra.mxu0 %v2278
        %3107 = vmatpush.bf16.msra.mxu0 %v2270
        %3108 = vmatpush.bf16.msra.mxu0 %v2262
        %3109 = vmatpush.bf16.msra.mxu0 %v2254
        %3110 = vmatpush.bf16.msra.mxu0 %v2246
        %3111 = vmatpush.bf16.msra.mxu0 %v2238
        %3112 = vmatpush.bf16.msra.mxu0 %v2230
        %3113 = vmatpush.bf16.msra.mxu0 %v2222
        %3114 = vmatmul.bf16.gmra.mxu0 %v737
        %v3115 = vpop.f32.mrf.mxu0
        %v3116 = vadd.f32 %v3103, %v3115
        %v3117 = vpop.f32.mrf.mxu0
        %3118 = vdwg.mxu0
        %3119 = vmatpush.bf16.msra.mxu0 %v2342
        %3120 = vmatpush.bf16.msra.mxu0 %v2334
        %3121 = vmatpush.bf16.msra.mxu0 %v2326
        %3122 = vmatpush.bf16.msra.mxu0 %v2318
        %3123 = vmatpush.bf16.msra.mxu0 %v2310
        %3124 = vmatpush.bf16.msra.mxu0 %v2302
        %3125 = vmatpush.bf16.msra.mxu0 %v2294
        %3126 = vmatpush.bf16.msra.mxu0 %v2286
        %3127 = vmatmul.bf16.gmra.mxu0 %v738
        %v3128 = vpop.f32.mrf.mxu0
        %v3129 = vadd.f32 %v3116, %v3128
        %v3130 = vpop.f32.mrf.mxu0
        %3131 = vdwg.mxu0
        %3132 = vmatpush.bf16.msra.mxu0 %v2406
        %3133 = vmatpush.bf16.msra.mxu0 %v2398
        %3134 = vmatpush.bf16.msra.mxu0 %v2390
        %3135 = vmatpush.bf16.msra.mxu0 %v2382
        %3136 = vmatpush.bf16.msra.mxu0 %v2374
        %3137 = vmatpush.bf16.msra.mxu0 %v2366
        %3138 = vmatpush.bf16.msra.mxu0 %v2358
        %3139 = vmatpush.bf16.msra.mxu0 %v2350
        %3140 = vmatmul.bf16.gmra.mxu0 %v739
        %v3141 = vpop.f32.mrf.mxu0
        %v3142 = vadd.f32 %v3129, %v3141
        %v3143 = vpop.f32.mrf.mxu0
        %3144 = vdwg.mxu0
        %3145 = vmatpush.bf16.msra.mxu0 %v2470
        %3146 = vmatpush.bf16.msra.mxu0 %v2462
        %3147 = vmatpush.bf16.msra.mxu0 %v2454
        %3148 = vmatpush.bf16.msra.mxu0 %v2446
        %3149 = vmatpush.bf16.msra.mxu0 %v2438
        %3150 = vmatpush.bf16.msra.mxu0 %v2430
        %3151 = vmatpush.bf16.msra.mxu0 %v2422
        %3152 = vmatpush.bf16.msra.mxu0 %v2414
        %3153 = vmatmul.bf16.gmra.mxu0 %v740
        %v3154 = vpop.f32.mrf.mxu0
        %v3155 = vadd.f32 %v3142, %v3154
        %v3156 = vpop.f32.mrf.mxu0
        %3157 = vdwg.mxu0
        %3158 = vmatpush.bf16.msra.mxu0 %v2534
        %3159 = vmatpush.bf16.msra.mxu0 %v2526
        %3160 = vmatpush.bf16.msra.mxu0 %v2518
        %3161 = vmatpush.bf16.msra.mxu0 %v2510
        %3162 = vmatpush.bf16.msra.mxu0 %v2502
        %3163 = vmatpush.bf16.msra.mxu0 %v2494
        %3164 = vmatpush.bf16.msra.mxu0 %v2486
        %3165 = vmatpush.bf16.msra.mxu0 %v2478
        %3166 = vmatmul.bf16.gmra.mxu0 %v741
        %v3167 = vpop.f32.mrf.mxu0
        %v3168 = vadd.f32 %v3155, %v3167
        %v3169 = vpop.f32.mrf.mxu0
        %3170 = vdwg.mxu0
        %3171 = vmatpush.bf16.msra.mxu0 %v2151
        %3172 = vmatpush.bf16.msra.mxu0 %v2143
        %3173 = vmatpush.bf16.msra.mxu0 %v2135
        %3174 = vmatpush.bf16.msra.mxu0 %v2127
        %3175 = vmatpush.bf16.msra.mxu0 %v2119
        %3176 = vmatpush.bf16.msra.mxu0 %v2111
        %3177 = vmatpush.bf16.msra.mxu0 %v2103
        %3178 = vmatpush.bf16.msra.mxu0 %v2095
        %3179 = vmatmul.bf16.gmra.mxu0 %v735
        %v3180 = vpop.f32.mrf.mxu0
        %v3181 = vadd.f32 0.0, %v3180
        %v3182 = vpop.f32.mrf.mxu0
        %3183 = vdwg.mxu0
        %3184 = vmatpush.bf16.msra.mxu0 %v2215
        %3185 = vmatpush.bf16.msra.mxu0 %v2207
        %3186 = vmatpush.bf16.msra.mxu0 %v2199
        %3187 = vmatpush.bf16.msra.mxu0 %v2191
        %3188 = vmatpush.bf16.msra.mxu0 %v2183
        %3189 = vmatpush.bf16.msra.mxu0 %v2175
        %3190 = vmatpush.bf16.msra.mxu0 %v2167
        %3191 = vmatpush.bf16.msra.mxu0 %v2159
        %3192 = vmatmul.bf16.gmra.mxu0 %v736
        %v3193 = vpop.f32.mrf.mxu0
        %v3194 = vadd.f32 %v3181, %v3193
        %v3195 = vpop.f32.mrf.mxu0
        %3196 = vdwg.mxu0
        %3197 = vmatpush.bf16.msra.mxu0 %v2279
        %3198 = vmatpush.bf16.msra.mxu0 %v2271
        %3199 = vmatpush.bf16.msra.mxu0 %v2263
        %3200 = vmatpush.bf16.msra.mxu0 %v2255
        %3201 = vmatpush.bf16.msra.mxu0 %v2247
        %3202 = vmatpush.bf16.msra.mxu0 %v2239
        %3203 = vmatpush.bf16.msra.mxu0 %v2231
        %3204 = vmatpush.bf16.msra.mxu0 %v2223
        %3205 = vmatmul.bf16.gmra.mxu0 %v737
        %v3206 = vpop.f32.mrf.mxu0
        %v3207 = vadd.f32 %v3194, %v3206
        %v3208 = vpop.f32.mrf.mxu0
        %3209 = vdwg.mxu0
        %3210 = vmatpush.bf16.msra.mxu0 %v2343
        %3211 = vmatpush.bf16.msra.mxu0 %v2335
        %3212 = vmatpush.bf16.msra.mxu0 %v2327
        %3213 = vmatpush.bf16.msra.mxu0 %v2319
        %3214 = vmatpush.bf16.msra.mxu0 %v2311
        %3215 = vmatpush.bf16.msra.mxu0 %v2303
        %3216 = vmatpush.bf16.msra.mxu0 %v2295
        %3217 = vmatpush.bf16.msra.mxu0 %v2287
        %3218 = vmatmul.bf16.gmra.mxu0 %v738
        %v3219 = vpop.f32.mrf.mxu0
        %v3220 = vadd.f32 %v3207, %v3219
        %v3221 = vpop.f32.mrf.mxu0
        %3222 = vdwg.mxu0
        %3223 = vmatpush.bf16.msra.mxu0 %v2407
        %3224 = vmatpush.bf16.msra.mxu0 %v2399
        %3225 = vmatpush.bf16.msra.mxu0 %v2391
        %3226 = vmatpush.bf16.msra.mxu0 %v2383
        %3227 = vmatpush.bf16.msra.mxu0 %v2375
        %3228 = vmatpush.bf16.msra.mxu0 %v2367
        %3229 = vmatpush.bf16.msra.mxu0 %v2359
        %3230 = vmatpush.bf16.msra.mxu0 %v2351
        %3231 = vmatmul.bf16.gmra.mxu0 %v739
        %v3232 = vpop.f32.mrf.mxu0
        %v3233 = vadd.f32 %v3220, %v3232
        %v3234 = vpop.f32.mrf.mxu0
        %3235 = vdwg.mxu0
        %3236 = vmatpush.bf16.msra.mxu0 %v2471
        %3237 = vmatpush.bf16.msra.mxu0 %v2463
        %3238 = vmatpush.bf16.msra.mxu0 %v2455
        %3239 = vmatpush.bf16.msra.mxu0 %v2447
        %3240 = vmatpush.bf16.msra.mxu0 %v2439
        %3241 = vmatpush.bf16.msra.mxu0 %v2431
        %3242 = vmatpush.bf16.msra.mxu0 %v2423
        %3243 = vmatpush.bf16.msra.mxu0 %v2415
        %3244 = vmatmul.bf16.gmra.mxu0 %v740
        %v3245 = vpop.f32.mrf.mxu0
        %v3246 = vadd.f32 %v3233, %v3245
        %v3247 = vpop.f32.mrf.mxu0
        %3248 = vdwg.mxu0
        %3249 = vmatpush.bf16.msra.mxu0 %v2535
        %3250 = vmatpush.bf16.msra.mxu0 %v2527
        %3251 = vmatpush.bf16.msra.mxu0 %v2519
        %3252 = vmatpush.bf16.msra.mxu0 %v2511
        %3253 = vmatpush.bf16.msra.mxu0 %v2503
        %3254 = vmatpush.bf16.msra.mxu0 %v2495
        %3255 = vmatpush.bf16.msra.mxu0 %v2487
        %3256 = vmatpush.bf16.msra.mxu0 %v2479
        %3257 = vmatmul.bf16.gmra.mxu0 %v741
        %v3258 = vpop.f32.mrf.mxu0
        %v3259 = vadd.f32 %v3246, %v3258
        %v3260 = vpop.f32.mrf.mxu0
        %3261 = vdwg.mxu0
        %3262 = vmatpush.bf16.msra.mxu0 %v2152
        %3263 = vmatpush.bf16.msra.mxu0 %v2144
        %3264 = vmatpush.bf16.msra.mxu0 %v2136
        %3265 = vmatpush.bf16.msra.mxu0 %v2128
        %3266 = vmatpush.bf16.msra.mxu0 %v2120
        %3267 = vmatpush.bf16.msra.mxu0 %v2112
        %3268 = vmatpush.bf16.msra.mxu0 %v2104
        %3269 = vmatpush.bf16.msra.mxu0 %v2096
        %3270 = vmatmul.bf16.gmra.mxu0 %v735
        %v3271 = vpop.f32.mrf.mxu0
        %v3272 = vadd.f32 0.0, %v3271
        %v3273 = vpop.f32.mrf.mxu0
        %3274 = vdwg.mxu0
        %3275 = vmatpush.bf16.msra.mxu0 %v2216
        %3276 = vmatpush.bf16.msra.mxu0 %v2208
        %3277 = vmatpush.bf16.msra.mxu0 %v2200
        %3278 = vmatpush.bf16.msra.mxu0 %v2192
        %3279 = vmatpush.bf16.msra.mxu0 %v2184
        %3280 = vmatpush.bf16.msra.mxu0 %v2176
        %3281 = vmatpush.bf16.msra.mxu0 %v2168
        %3282 = vmatpush.bf16.msra.mxu0 %v2160
        %3283 = vmatmul.bf16.gmra.mxu0 %v736
        %v3284 = vpop.f32.mrf.mxu0
        %v3285 = vadd.f32 %v3272, %v3284
        %v3286 = vpop.f32.mrf.mxu0
        %3287 = vdwg.mxu0
        %3288 = vmatpush.bf16.msra.mxu0 %v2280
        %3289 = vmatpush.bf16.msra.mxu0 %v2272
        %3290 = vmatpush.bf16.msra.mxu0 %v2264
        %3291 = vmatpush.bf16.msra.mxu0 %v2256
        %3292 = vmatpush.bf16.msra.mxu0 %v2248
        %3293 = vmatpush.bf16.msra.mxu0 %v2240
        %3294 = vmatpush.bf16.msra.mxu0 %v2232
        %3295 = vmatpush.bf16.msra.mxu0 %v2224
        %3296 = vmatmul.bf16.gmra.mxu0 %v737
        %v3297 = vpop.f32.mrf.mxu0
        %v3298 = vadd.f32 %v3285, %v3297
        %v3299 = vpop.f32.mrf.mxu0
        %3300 = vdwg.mxu0
        %3301 = vmatpush.bf16.msra.mxu0 %v2344
        %3302 = vmatpush.bf16.msra.mxu0 %v2336
        %3303 = vmatpush.bf16.msra.mxu0 %v2328
        %3304 = vmatpush.bf16.msra.mxu0 %v2320
        %3305 = vmatpush.bf16.msra.mxu0 %v2312
        %3306 = vmatpush.bf16.msra.mxu0 %v2304
        %3307 = vmatpush.bf16.msra.mxu0 %v2296
        %3308 = vmatpush.bf16.msra.mxu0 %v2288
        %3309 = vmatmul.bf16.gmra.mxu0 %v738
        %v3310 = vpop.f32.mrf.mxu0
        %v3311 = vadd.f32 %v3298, %v3310
        %v3312 = vpop.f32.mrf.mxu0
        %3313 = vdwg.mxu0
        %3314 = vmatpush.bf16.msra.mxu0 %v2408
        %3315 = vmatpush.bf16.msra.mxu0 %v2400
        %3316 = vmatpush.bf16.msra.mxu0 %v2392
        %3317 = vmatpush.bf16.msra.mxu0 %v2384
        %3318 = vmatpush.bf16.msra.mxu0 %v2376
        %3319 = vmatpush.bf16.msra.mxu0 %v2368
        %3320 = vmatpush.bf16.msra.mxu0 %v2360
        %3321 = vmatpush.bf16.msra.mxu0 %v2352
        %3322 = vmatmul.bf16.gmra.mxu0 %v739
        %v3323 = vpop.f32.mrf.mxu0
        %v3324 = vadd.f32 %v3311, %v3323
        %v3325 = vpop.f32.mrf.mxu0
        %3326 = vdwg.mxu0
        %3327 = vmatpush.bf16.msra.mxu0 %v2472
        %3328 = vmatpush.bf16.msra.mxu0 %v2464
        %3329 = vmatpush.bf16.msra.mxu0 %v2456
        %3330 = vmatpush.bf16.msra.mxu0 %v2448
        %3331 = vmatpush.bf16.msra.mxu0 %v2440
        %3332 = vmatpush.bf16.msra.mxu0 %v2432
        %3333 = vmatpush.bf16.msra.mxu0 %v2424
        %3334 = vmatpush.bf16.msra.mxu0 %v2416
        %3335 = vmatmul.bf16.gmra.mxu0 %v740
        %v3336 = vpop.f32.mrf.mxu0
        %v3337 = vadd.f32 %v3324, %v3336
        %v3338 = vpop.f32.mrf.mxu0
        %3339 = vdwg.mxu0
        %3340 = vmatpush.bf16.msra.mxu0 %v2536
        %3341 = vmatpush.bf16.msra.mxu0 %v2528
        %3342 = vmatpush.bf16.msra.mxu0 %v2520
        %3343 = vmatpush.bf16.msra.mxu0 %v2512
        %3344 = vmatpush.bf16.msra.mxu0 %v2504
        %3345 = vmatpush.bf16.msra.mxu0 %v2496
        %3346 = vmatpush.bf16.msra.mxu0 %v2488
        %3347 = vmatpush.bf16.msra.mxu0 %v2480
        %3348 = vmatmul.bf16.gmra.mxu0 %v741
        %v3349 = vpop.f32.mrf.mxu0
        %v3350 = vadd.f32 %v3337, %v3349
        %v3351 = vpop.f32.mrf.mxu0
        %3352 = vdwg.mxu0
        %3353 = vmatpush.bf16.msra.mxu0 %v2153
        %3354 = vmatpush.bf16.msra.mxu0 %v2145
        %3355 = vmatpush.bf16.msra.mxu0 %v2137
        %3356 = vmatpush.bf16.msra.mxu0 %v2129
        %3357 = vmatpush.bf16.msra.mxu0 %v2121
        %3358 = vmatpush.bf16.msra.mxu0 %v2113
        %3359 = vmatpush.bf16.msra.mxu0 %v2105
        %3360 = vmatpush.bf16.msra.mxu0 %v2097
        %3361 = vmatmul.bf16.gmra.mxu0 %v735
        %v3362 = vpop.f32.mrf.mxu0
        %v3363 = vadd.f32 0.0, %v3362
        %v3364 = vpop.f32.mrf.mxu0
        %3365 = vdwg.mxu0
        %3366 = vmatpush.bf16.msra.mxu0 %v2217
        %3367 = vmatpush.bf16.msra.mxu0 %v2209
        %3368 = vmatpush.bf16.msra.mxu0 %v2201
        %3369 = vmatpush.bf16.msra.mxu0 %v2193
        %3370 = vmatpush.bf16.msra.mxu0 %v2185
        %3371 = vmatpush.bf16.msra.mxu0 %v2177
        %3372 = vmatpush.bf16.msra.mxu0 %v2169
        %3373 = vmatpush.bf16.msra.mxu0 %v2161
        %3374 = vmatmul.bf16.gmra.mxu0 %v736
        %v3375 = vpop.f32.mrf.mxu0
        %v3376 = vadd.f32 %v3363, %v3375
        %v3377 = vpop.f32.mrf.mxu0
        %3378 = vdwg.mxu0
        %3379 = vmatpush.bf16.msra.mxu0 %v2281
        %3380 = vmatpush.bf16.msra.mxu0 %v2273
        %3381 = vmatpush.bf16.msra.mxu0 %v2265
        %3382 = vmatpush.bf16.msra.mxu0 %v2257
        %3383 = vmatpush.bf16.msra.mxu0 %v2249
        %3384 = vmatpush.bf16.msra.mxu0 %v2241
        %3385 = vmatpush.bf16.msra.mxu0 %v2233
        %3386 = vmatpush.bf16.msra.mxu0 %v2225
        %3387 = vmatmul.bf16.gmra.mxu0 %v737
        %v3388 = vpop.f32.mrf.mxu0
        %v3389 = vadd.f32 %v3376, %v3388
        %v3390 = vpop.f32.mrf.mxu0
        %3391 = vdwg.mxu0
        %3392 = vmatpush.bf16.msra.mxu0 %v2345
        %3393 = vmatpush.bf16.msra.mxu0 %v2337
        %3394 = vmatpush.bf16.msra.mxu0 %v2329
        %3395 = vmatpush.bf16.msra.mxu0 %v2321
        %3396 = vmatpush.bf16.msra.mxu0 %v2313
        %3397 = vmatpush.bf16.msra.mxu0 %v2305
        %3398 = vmatpush.bf16.msra.mxu0 %v2297
        %3399 = vmatpush.bf16.msra.mxu0 %v2289
        %3400 = vmatmul.bf16.gmra.mxu0 %v738
        %v3401 = vpop.f32.mrf.mxu0
        %v3402 = vadd.f32 %v3389, %v3401
        %v3403 = vpop.f32.mrf.mxu0
        %3404 = vdwg.mxu0
        %3405 = vmatpush.bf16.msra.mxu0 %v2409
        %3406 = vmatpush.bf16.msra.mxu0 %v2401
        %3407 = vmatpush.bf16.msra.mxu0 %v2393
        %3408 = vmatpush.bf16.msra.mxu0 %v2385
        %3409 = vmatpush.bf16.msra.mxu0 %v2377
        %3410 = vmatpush.bf16.msra.mxu0 %v2369
        %3411 = vmatpush.bf16.msra.mxu0 %v2361
        %3412 = vmatpush.bf16.msra.mxu0 %v2353
        %3413 = vmatmul.bf16.gmra.mxu0 %v739
        %v3414 = vpop.f32.mrf.mxu0
        %v3415 = vadd.f32 %v3402, %v3414
        %v3416 = vpop.f32.mrf.mxu0
        %3417 = vdwg.mxu0
        %3418 = vmatpush.bf16.msra.mxu0 %v2473
        %3419 = vmatpush.bf16.msra.mxu0 %v2465
        %3420 = vmatpush.bf16.msra.mxu0 %v2457
        %3421 = vmatpush.bf16.msra.mxu0 %v2449
        %3422 = vmatpush.bf16.msra.mxu0 %v2441
        %3423 = vmatpush.bf16.msra.mxu0 %v2433
        %3424 = vmatpush.bf16.msra.mxu0 %v2425
        %3425 = vmatpush.bf16.msra.mxu0 %v2417
        %3426 = vmatmul.bf16.gmra.mxu0 %v740
        %v3427 = vpop.f32.mrf.mxu0
        %v3428 = vadd.f32 %v3415, %v3427
        %v3429 = vpop.f32.mrf.mxu0
        %3430 = vdwg.mxu0
        %3431 = vmatpush.bf16.msra.mxu0 %v2537
        %3432 = vmatpush.bf16.msra.mxu0 %v2529
        %3433 = vmatpush.bf16.msra.mxu0 %v2521
        %3434 = vmatpush.bf16.msra.mxu0 %v2513
        %3435 = vmatpush.bf16.msra.mxu0 %v2505
        %3436 = vmatpush.bf16.msra.mxu0 %v2497
        %3437 = vmatpush.bf16.msra.mxu0 %v2489
        %3438 = vmatpush.bf16.msra.mxu0 %v2481
        %3439 = vmatmul.bf16.gmra.mxu0 %v741
        %v3440 = vpop.f32.mrf.mxu0
        %v3441 = vadd.f32 %v3428, %v3440
        %v3442 = vpop.f32.mrf.mxu0
        %3443 = vdwg.mxu0
        %3444 = vmatpush.bf16.msra.mxu0 %v2154
        %3445 = vmatpush.bf16.msra.mxu0 %v2146
        %3446 = vmatpush.bf16.msra.mxu0 %v2138
        %3447 = vmatpush.bf16.msra.mxu0 %v2130
        %3448 = vmatpush.bf16.msra.mxu0 %v2122
        %3449 = vmatpush.bf16.msra.mxu0 %v2114
        %3450 = vmatpush.bf16.msra.mxu0 %v2106
        %3451 = vmatpush.bf16.msra.mxu0 %v2098
        %3452 = vmatmul.bf16.gmra.mxu0 %v735
        %v3453 = vpop.f32.mrf.mxu0
        %v3454 = vadd.f32 0.0, %v3453
        %v3455 = vpop.f32.mrf.mxu0
        %3456 = vdwg.mxu0
        %3457 = vmatpush.bf16.msra.mxu0 %v2218
        %3458 = vmatpush.bf16.msra.mxu0 %v2210
        %3459 = vmatpush.bf16.msra.mxu0 %v2202
        %3460 = vmatpush.bf16.msra.mxu0 %v2194
        %3461 = vmatpush.bf16.msra.mxu0 %v2186
        %3462 = vmatpush.bf16.msra.mxu0 %v2178
        %3463 = vmatpush.bf16.msra.mxu0 %v2170
        %3464 = vmatpush.bf16.msra.mxu0 %v2162
        %3465 = vmatmul.bf16.gmra.mxu0 %v736
        %v3466 = vpop.f32.mrf.mxu0
        %v3467 = vadd.f32 %v3454, %v3466
        %v3468 = vpop.f32.mrf.mxu0
        %3469 = vdwg.mxu0
        %3470 = vmatpush.bf16.msra.mxu0 %v2282
        %3471 = vmatpush.bf16.msra.mxu0 %v2274
        %3472 = vmatpush.bf16.msra.mxu0 %v2266
        %3473 = vmatpush.bf16.msra.mxu0 %v2258
        %3474 = vmatpush.bf16.msra.mxu0 %v2250
        %3475 = vmatpush.bf16.msra.mxu0 %v2242
        %3476 = vmatpush.bf16.msra.mxu0 %v2234
        %3477 = vmatpush.bf16.msra.mxu0 %v2226
        %3478 = vmatmul.bf16.gmra.mxu0 %v737
        %v3479 = vpop.f32.mrf.mxu0
        %v3480 = vadd.f32 %v3467, %v3479
        %v3481 = vpop.f32.mrf.mxu0
        %3482 = vdwg.mxu0
        %3483 = vmatpush.bf16.msra.mxu0 %v2346
        %3484 = vmatpush.bf16.msra.mxu0 %v2338
        %3485 = vmatpush.bf16.msra.mxu0 %v2330
        %3486 = vmatpush.bf16.msra.mxu0 %v2322
        %3487 = vmatpush.bf16.msra.mxu0 %v2314
        %3488 = vmatpush.bf16.msra.mxu0 %v2306
        %3489 = vmatpush.bf16.msra.mxu0 %v2298
        %3490 = vmatpush.bf16.msra.mxu0 %v2290
        %3491 = vmatmul.bf16.gmra.mxu0 %v738
        %v3492 = vpop.f32.mrf.mxu0
        %v3493 = vadd.f32 %v3480, %v3492
        %v3494 = vpop.f32.mrf.mxu0
        %3495 = vdwg.mxu0
        %3496 = vmatpush.bf16.msra.mxu0 %v2410
        %3497 = vmatpush.bf16.msra.mxu0 %v2402
        %3498 = vmatpush.bf16.msra.mxu0 %v2394
        %3499 = vmatpush.bf16.msra.mxu0 %v2386
        %3500 = vmatpush.bf16.msra.mxu0 %v2378
        %3501 = vmatpush.bf16.msra.mxu0 %v2370
        %3502 = vmatpush.bf16.msra.mxu0 %v2362
        %3503 = vmatpush.bf16.msra.mxu0 %v2354
        %3504 = vmatmul.bf16.gmra.mxu0 %v739
        %v3505 = vpop.f32.mrf.mxu0
        %v3506 = vadd.f32 %v3493, %v3505
        %v3507 = vpop.f32.mrf.mxu0
        %3508 = vdwg.mxu0
        %3509 = vmatpush.bf16.msra.mxu0 %v2474
        %3510 = vmatpush.bf16.msra.mxu0 %v2466
        %3511 = vmatpush.bf16.msra.mxu0 %v2458
        %3512 = vmatpush.bf16.msra.mxu0 %v2450
        %3513 = vmatpush.bf16.msra.mxu0 %v2442
        %3514 = vmatpush.bf16.msra.mxu0 %v2434
        %3515 = vmatpush.bf16.msra.mxu0 %v2426
        %3516 = vmatpush.bf16.msra.mxu0 %v2418
        %3517 = vmatmul.bf16.gmra.mxu0 %v740
        %v3518 = vpop.f32.mrf.mxu0
        %v3519 = vadd.f32 %v3506, %v3518
        %v3520 = vpop.f32.mrf.mxu0
        %3521 = vdwg.mxu0
        %3522 = vmatpush.bf16.msra.mxu0 %v2538
        %3523 = vmatpush.bf16.msra.mxu0 %v2530
        %3524 = vmatpush.bf16.msra.mxu0 %v2522
        %3525 = vmatpush.bf16.msra.mxu0 %v2514
        %3526 = vmatpush.bf16.msra.mxu0 %v2506
        %3527 = vmatpush.bf16.msra.mxu0 %v2498
        %3528 = vmatpush.bf16.msra.mxu0 %v2490
        %3529 = vmatpush.bf16.msra.mxu0 %v2482
        %3530 = vmatmul.bf16.gmra.mxu0 %v741
        %v3531 = vpop.f32.mrf.mxu0
        %v3532 = vadd.f32 %v3519, %v3531
        %v3533 = vpop.f32.mrf.mxu0
        %3534 = vdwg.mxu0
        %3535 = vmatpush.bf16.msra.mxu0 %v2155
        %3536 = vmatpush.bf16.msra.mxu0 %v2147
        %3537 = vmatpush.bf16.msra.mxu0 %v2139
        %3538 = vmatpush.bf16.msra.mxu0 %v2131
        %3539 = vmatpush.bf16.msra.mxu0 %v2123
        %3540 = vmatpush.bf16.msra.mxu0 %v2115
        %3541 = vmatpush.bf16.msra.mxu0 %v2107
        %3542 = vmatpush.bf16.msra.mxu0 %v2099
        %3543 = vmatmul.bf16.gmra.mxu0 %v735
        %v3544 = vpop.f32.mrf.mxu0
        %v3545 = vadd.f32 0.0, %v3544
        %v3546 = vpop.f32.mrf.mxu0
        %3547 = vdwg.mxu0
        %3548 = vmatpush.bf16.msra.mxu0 %v2219
        %3549 = vmatpush.bf16.msra.mxu0 %v2211
        %3550 = vmatpush.bf16.msra.mxu0 %v2203
        %3551 = vmatpush.bf16.msra.mxu0 %v2195
        %3552 = vmatpush.bf16.msra.mxu0 %v2187
        %3553 = vmatpush.bf16.msra.mxu0 %v2179
        %3554 = vmatpush.bf16.msra.mxu0 %v2171
        %3555 = vmatpush.bf16.msra.mxu0 %v2163
        %3556 = vmatmul.bf16.gmra.mxu0 %v736
        %v3557 = vpop.f32.mrf.mxu0
        %v3558 = vadd.f32 %v3545, %v3557
        %v3559 = vpop.f32.mrf.mxu0
        %3560 = vdwg.mxu0
        %3561 = vmatpush.bf16.msra.mxu0 %v2283
        %3562 = vmatpush.bf16.msra.mxu0 %v2275
        %3563 = vmatpush.bf16.msra.mxu0 %v2267
        %3564 = vmatpush.bf16.msra.mxu0 %v2259
        %3565 = vmatpush.bf16.msra.mxu0 %v2251
        %3566 = vmatpush.bf16.msra.mxu0 %v2243
        %3567 = vmatpush.bf16.msra.mxu0 %v2235
        %3568 = vmatpush.bf16.msra.mxu0 %v2227
        %3569 = vmatmul.bf16.gmra.mxu0 %v737
        %v3570 = vpop.f32.mrf.mxu0
        %v3571 = vadd.f32 %v3558, %v3570
        %v3572 = vpop.f32.mrf.mxu0
        %3573 = vdwg.mxu0
        %3574 = vmatpush.bf16.msra.mxu0 %v2347
        %3575 = vmatpush.bf16.msra.mxu0 %v2339
        %3576 = vmatpush.bf16.msra.mxu0 %v2331
        %3577 = vmatpush.bf16.msra.mxu0 %v2323
        %3578 = vmatpush.bf16.msra.mxu0 %v2315
        %3579 = vmatpush.bf16.msra.mxu0 %v2307
        %3580 = vmatpush.bf16.msra.mxu0 %v2299
        %3581 = vmatpush.bf16.msra.mxu0 %v2291
        %3582 = vmatmul.bf16.gmra.mxu0 %v738
        %v3583 = vpop.f32.mrf.mxu0
        %v3584 = vadd.f32 %v3571, %v3583
        %v3585 = vpop.f32.mrf.mxu0
        %3586 = vdwg.mxu0
        %3587 = vmatpush.bf16.msra.mxu0 %v2411
        %3588 = vmatpush.bf16.msra.mxu0 %v2403
        %3589 = vmatpush.bf16.msra.mxu0 %v2395
        %3590 = vmatpush.bf16.msra.mxu0 %v2387
        %3591 = vmatpush.bf16.msra.mxu0 %v2379
        %3592 = vmatpush.bf16.msra.mxu0 %v2371
        %3593 = vmatpush.bf16.msra.mxu0 %v2363
        %3594 = vmatpush.bf16.msra.mxu0 %v2355
        %3595 = vmatmul.bf16.gmra.mxu0 %v739
        %v3596 = vpop.f32.mrf.mxu0
        %v3597 = vadd.f32 %v3584, %v3596
        %v3598 = vpop.f32.mrf.mxu0
        %3599 = vdwg.mxu0
        %3600 = vmatpush.bf16.msra.mxu0 %v2475
        %3601 = vmatpush.bf16.msra.mxu0 %v2467
        %3602 = vmatpush.bf16.msra.mxu0 %v2459
        %3603 = vmatpush.bf16.msra.mxu0 %v2451
        %3604 = vmatpush.bf16.msra.mxu0 %v2443
        %3605 = vmatpush.bf16.msra.mxu0 %v2435
        %3606 = vmatpush.bf16.msra.mxu0 %v2427
        %3607 = vmatpush.bf16.msra.mxu0 %v2419
        %3608 = vmatmul.bf16.gmra.mxu0 %v740
        %v3609 = vpop.f32.mrf.mxu0
        %v3610 = vadd.f32 %v3597, %v3609
        %v3611 = vpop.f32.mrf.mxu0
        %3612 = vdwg.mxu0
        %3613 = vmatpush.bf16.msra.mxu0 %v2539
        %3614 = vmatpush.bf16.msra.mxu0 %v2531
        %3615 = vmatpush.bf16.msra.mxu0 %v2523
        %3616 = vmatpush.bf16.msra.mxu0 %v2515
        %3617 = vmatpush.bf16.msra.mxu0 %v2507
        %3618 = vmatpush.bf16.msra.mxu0 %v2499
        %3619 = vmatpush.bf16.msra.mxu0 %v2491
        %3620 = vmatpush.bf16.msra.mxu0 %v2483
        %3621 = vmatmul.bf16.gmra.mxu0 %v741
        %v3622 = vpop.f32.mrf.mxu0
        %v3623 = vadd.f32 %v3610, %v3622
        %v3624 = vpop.f32.mrf.mxu0
        %3625 = vdwg.mxu0
        %3626 = vmatpush.bf16.msra.mxu0 %v2156
        %3627 = vmatpush.bf16.msra.mxu0 %v2148
        %3628 = vmatpush.bf16.msra.mxu0 %v2140
        %3629 = vmatpush.bf16.msra.mxu0 %v2132
        %3630 = vmatpush.bf16.msra.mxu0 %v2124
        %3631 = vmatpush.bf16.msra.mxu0 %v2116
        %3632 = vmatpush.bf16.msra.mxu0 %v2108
        %3633 = vmatpush.bf16.msra.mxu0 %v2100
        %3634 = vmatmul.bf16.gmra.mxu0 %v735
        %v3635 = vpop.f32.mrf.mxu0
        %v3636 = vadd.f32 0.0, %v3635
        %v3637 = vpop.f32.mrf.mxu0
        %3638 = vdwg.mxu0
        %3639 = vmatpush.bf16.msra.mxu0 %v2220
        %3640 = vmatpush.bf16.msra.mxu0 %v2212
        %3641 = vmatpush.bf16.msra.mxu0 %v2204
        %3642 = vmatpush.bf16.msra.mxu0 %v2196
        %3643 = vmatpush.bf16.msra.mxu0 %v2188
        %3644 = vmatpush.bf16.msra.mxu0 %v2180
        %3645 = vmatpush.bf16.msra.mxu0 %v2172
        %3646 = vmatpush.bf16.msra.mxu0 %v2164
        %3647 = vmatmul.bf16.gmra.mxu0 %v736
        %v3648 = vpop.f32.mrf.mxu0
        %v3649 = vadd.f32 %v3636, %v3648
        %v3650 = vpop.f32.mrf.mxu0
        %3651 = vdwg.mxu0
        %3652 = vmatpush.bf16.msra.mxu0 %v2284
        %3653 = vmatpush.bf16.msra.mxu0 %v2276
        %3654 = vmatpush.bf16.msra.mxu0 %v2268
        %3655 = vmatpush.bf16.msra.mxu0 %v2260
        %3656 = vmatpush.bf16.msra.mxu0 %v2252
        %3657 = vmatpush.bf16.msra.mxu0 %v2244
        %3658 = vmatpush.bf16.msra.mxu0 %v2236
        %3659 = vmatpush.bf16.msra.mxu0 %v2228
        %3660 = vmatmul.bf16.gmra.mxu0 %v737
        %v3661 = vpop.f32.mrf.mxu0
        %v3662 = vadd.f32 %v3649, %v3661
        %v3663 = vpop.f32.mrf.mxu0
        %3664 = vdwg.mxu0
        %3665 = vmatpush.bf16.msra.mxu0 %v2348
        %3666 = vmatpush.bf16.msra.mxu0 %v2340
        %3667 = vmatpush.bf16.msra.mxu0 %v2332
        %3668 = vmatpush.bf16.msra.mxu0 %v2324
        %3669 = vmatpush.bf16.msra.mxu0 %v2316
        %3670 = vmatpush.bf16.msra.mxu0 %v2308
        %3671 = vmatpush.bf16.msra.mxu0 %v2300
        %3672 = vmatpush.bf16.msra.mxu0 %v2292
        %3673 = vmatmul.bf16.gmra.mxu0 %v738
        %v3674 = vpop.f32.mrf.mxu0
        %v3675 = vadd.f32 %v3662, %v3674
        %v3676 = vpop.f32.mrf.mxu0
        %3677 = vdwg.mxu0
        %3678 = vmatpush.bf16.msra.mxu0 %v2412
        %3679 = vmatpush.bf16.msra.mxu0 %v2404
        %3680 = vmatpush.bf16.msra.mxu0 %v2396
        %3681 = vmatpush.bf16.msra.mxu0 %v2388
        %3682 = vmatpush.bf16.msra.mxu0 %v2380
        %3683 = vmatpush.bf16.msra.mxu0 %v2372
        %3684 = vmatpush.bf16.msra.mxu0 %v2364
        %3685 = vmatpush.bf16.msra.mxu0 %v2356
        %3686 = vmatmul.bf16.gmra.mxu0 %v739
        %v3687 = vpop.f32.mrf.mxu0
        %v3688 = vadd.f32 %v3675, %v3687
        %v3689 = vpop.f32.mrf.mxu0
        %3690 = vdwg.mxu0
        %3691 = vmatpush.bf16.msra.mxu0 %v2476
        %3692 = vmatpush.bf16.msra.mxu0 %v2468
        %3693 = vmatpush.bf16.msra.mxu0 %v2460
        %3694 = vmatpush.bf16.msra.mxu0 %v2452
        %3695 = vmatpush.bf16.msra.mxu0 %v2444
        %3696 = vmatpush.bf16.msra.mxu0 %v2436
        %3697 = vmatpush.bf16.msra.mxu0 %v2428
        %3698 = vmatpush.bf16.msra.mxu0 %v2420
        %3699 = vmatmul.bf16.gmra.mxu0 %v740
        %v3700 = vpop.f32.mrf.mxu0
        %v3701 = vadd.f32 %v3688, %v3700
        %v3702 = vpop.f32.mrf.mxu0
        %3703 = vdwg.mxu0
        %3704 = vmatpush.bf16.msra.mxu0 %v2540
        %3705 = vmatpush.bf16.msra.mxu0 %v2532
        %3706 = vmatpush.bf16.msra.mxu0 %v2524
        %3707 = vmatpush.bf16.msra.mxu0 %v2516
        %3708 = vmatpush.bf16.msra.mxu0 %v2508
        %3709 = vmatpush.bf16.msra.mxu0 %v2500
        %3710 = vmatpush.bf16.msra.mxu0 %v2492
        %3711 = vmatpush.bf16.msra.mxu0 %v2484
        %3712 = vmatmul.bf16.gmra.mxu0 %v741
        %v3713 = vpop.f32.mrf.mxu0
        %v3714 = vadd.f32 %v3701, %v3713
        %v3715 = vpop.f32.mrf.mxu0
        %3716 = vdwg.mxu0
        %v3725 = vrot.slane %v3168, 6
        %v3726 = vrot.slane %v3259, 4
        %v3727 = vrot.slane %v3350, 2
        %v3728 = vrot.slane %v3532, 6
        %v3729 = vrot.slane %v3623, 4
        %v3730 = vrot.slane %v3714, 2
        %vm3731 = vcmask 1041408
        %v3732 = vsel %vm3731, %v3077, %v3725
        %vm3733 = vcmask 1045508
        %v3734 = vsel %vm3733, %v3726, %v3727
        %vm3735 = vcmask 1043456
        %v3736 = vsel %vm3735, %v3732, %v3734
        %v3737 = vsel %vm3731, %v3441, %v3728
        %v3738 = vsel %vm3733, %v3729, %v3730
        %v3739 = vsel %vm3735, %v3737, %v3738
        %v3742 = vadd.f32 %v282, %v3736
        %v3743 = vadd.f32 %v283, %v3739
        %3744 = vst [vmem:[#allocation2] sm:$0xff] %v3742
        %3745 = vst [vmem:[#allocation2 + $0x8] sm:$0xff] %v3743
        %p3746 = scmp.eq.s32.totalorder %s19, 2
        // Predicated region
        $region53: #{encoder_forward.3} parent=43 // pred_check
          %p3747 = pneg %p3746
        $region54: #{encoder_forward.3} parent=43 // pred_check_branch
          %3749 = sbr.rel (%p3747) target = $region56
        $region55: #{encoder_forward.3} parent=43 // pred_region
          %s3750 = smul.u32 4, 128
          %s3751 = smul.u32 %s3750, 8
          %s3752 = sshll.u32 %s3751, 4
          %3753 = dma.done [#allocation4], %s3752
          %v3754 = vld [vmem:[#allocation2] sm:$0xff]
          %v3755 = vld [vmem:[#allocation2 + $0x8] sm:$0xff]
          %v3756 = vld [vmem:[%s2] sm:$0xff]
          %v3758 = vperm.slane %v3756, 0
          %v3759 = vperm.slane %v3756, 1
          %v3760 = vperm.slane %v3756, 2
          %v3761 = vperm.slane %v3756, 3
          %v3762 = vperm.slane %v3756, 4
          %v3763 = vperm.slane %v3756, 5
          %v3764 = vperm.slane %v3756, 6
          %v3765 = vperm.slane %v3756, 7
          %v3766 = vrot.slane %v3759, 6
          %v3767 = vrot.slane %v3760, 4
          %v3768 = vrot.slane %v3761, 2
          %v3769 = vrot.slane %v3763, 6
          %v3770 = vrot.slane %v3764, 4
          %v3771 = vrot.slane %v3765, 2
          %v3772 = vsel %vm3731, %v3758, %v3766
          %v3773 = vsel %vm3733, %v3767, %v3768
          %v3774 = vsel %vm3735, %v3772, %v3773
          %v3775 = vsel %vm3731, %v3762, %v3769
          %v3776 = vsel %vm3733, %v3770, %v3771
          %v3777 = vsel %vm3735, %v3775, %v3776
          %v3780 = vadd.f32 %v3754, %v3774
          %v3781 = vadd.f32 %v3755, %v3777
          %v3782 = vmul.f32 %v3780, 0.5
          %v3783 = vmul.f32 %v3781, 0.5
          %v3784 = vmul.f32 %v3780, 0.70710677
          %v3785 = vmul.f32 %v3781, 0.70710677
          %v3786 = vmul.f32 %v3784, %v3784
          %v3787 = vmin.f32 16.0, %v3786
          %v3788 = vmul.f32 %v3787, 2.1237322e-06
          %v3789 = vadd.f32 %v3788, 0.00028619796
          %v3790 = vmul.f32 %v3787, %v3789
          %v3791 = vadd.f32 %v3790, 0.0036580483
          %v3792 = vmul.f32 %v3787, %v3791
          %v3793 = vadd.f32 %v3792, 0.05243302
          %v3794 = vmul.f32 %v3787, %v3793
          %v3795 = vadd.f32 %v3794, 0.18741608
          %v3796 = vmul.f32 %v3787, %v3795
          %v3797 = vadd.f32 %v3796, 1.1283791
          %v3798 = vmul.f32 %v3784, %v3797
          %v3799 = vmul.f32 %v3787, 3.8918573e-05
          %v3800 = vadd.f32 %v3799, 0.001143296
          %v3801 = vmul.f32 %v3787, %v3800
          %v3802 = vadd.f32 %v3801, 0.014752088
          %v3803 = vmul.f32 %v3787, %v3802
          %v3804 = vadd.f32 %v3803, 0.112945676
          %v3805 = vmul.f32 %v3787, %v3804
          %v3806 = vadd.f32 %v3805, 0.4994258
          %v3807 = vmul.f32 %v3787, %v3806
          %v3808 = vadd.f32 %v3807, 1.0
          %v3809 = vrcp.pop %v3808
          %v3810 = vmul.f32 %v3808, %v3809
          %v3811 = vsub.f32 1.0, %v3810
          %v3812 = vmul.f32 %v3809, %v3811
          %v3813 = vadd.f32 %v3809, %v3812
          %vm3814 = vweird.f32 %v3808
          %vm3815 = vweird.f32 %v3809
          %vm3816 = vmor %vm3814, %vm3815
          %v3817 = vsel %vm3816, %v3809, %v3813
          %v3818 = vand.u32 2147483647, %v3808
          %vm3819 = vcmp.eq.f32.partialorder %v3818, 8.507059e+37
          %v3820 = vand.u32 %v3808, 2147483648
          %v3821 = vor.u32 1.1754944e-38, %v3820
          %v3822 = vsel %vm3819, %v3821, %v3817
          %v3823 = vmul.f32 %v3798, %v3822
          %v3824 = vmin.f32 %v3823, 1.0
          %v3825 = vmax.f32 %v3824, -1.0
          %v3826 = vmul.f32 %v3785, %v3785
          %v3827 = vmin.f32 16.0, %v3826
          %v3828 = vmul.f32 %v3827, 2.1237322e-06
          %v3829 = vadd.f32 %v3828, 0.00028619796
          %v3830 = vmul.f32 %v3827, %v3829
          %v3831 = vadd.f32 %v3830, 0.0036580483
          %v3832 = vmul.f32 %v3827, %v3831
          %v3833 = vadd.f32 %v3832, 0.05243302
          %v3834 = vmul.f32 %v3827, %v3833
          %v3835 = vadd.f32 %v3834, 0.18741608
          %v3836 = vmul.f32 %v3827, %v3835
          %v3837 = vadd.f32 %v3836, 1.1283791
          %v3838 = vmul.f32 %v3785, %v3837
          %v3839 = vmul.f32 %v3827, 3.8918573e-05
          %v3840 = vadd.f32 %v3839, 0.001143296
          %v3841 = vmul.f32 %v3827, %v3840
          %v3842 = vadd.f32 %v3841, 0.014752088
          %v3843 = vmul.f32 %v3827, %v3842
          %v3844 = vadd.f32 %v3843, 0.112945676
          %v3845 = vmul.f32 %v3827, %v3844
          %v3846 = vadd.f32 %v3845, 0.4994258
          %v3847 = vmul.f32 %v3827, %v3846
          %v3848 = vadd.f32 %v3847, 1.0
          %v3849 = vrcp.pop %v3848
          %v3850 = vmul.f32 %v3848, %v3849
          %v3851 = vsub.f32 1.0, %v3850
          %v3852 = vmul.f32 %v3849, %v3851
          %v3853 = vadd.f32 %v3849, %v3852
          %vm3854 = vweird.f32 %v3848
          %vm3855 = vweird.f32 %v3849
          %vm3856 = vmor %vm3854, %vm3855
          %v3857 = vsel %vm3856, %v3849, %v3853
          %v3858 = vand.u32 2147483647, %v3848
          %vm3859 = vcmp.eq.f32.partialorder %v3858, 8.507059e+37
          %v3860 = vand.u32 %v3848, 2147483648
          %v3861 = vor.u32 1.1754944e-38, %v3860
          %v3862 = vsel %vm3859, %v3861, %v3857
          %v3863 = vmul.f32 %v3838, %v3862
          %v3864 = vmin.f32 %v3863, 1.0
          %v3865 = vmax.f32 %v3864, -1.0
          %v3866 = vadd.f32 %v3825, 1.0
          %v3867 = vadd.f32 %v3865, 1.0
          %v3868 = vmul.f32 %v3782, %v3866
          %v3869 = vmul.f32 %v3783, %v3867
          %3872 = vst [vmem:[#allocation1] ss:$4 sm:$0xff] %v3868
          %s3873 = scalar_lea.vmem [#allocation1], 32
          %3874 = vst [vmem:[%s3873] ss:$4 sm:$0xff] %v3869
          %v3875 = vld.sshfl [vmem:[#allocation1] sm:$0xff pattern:$0x73625140]
          %v3876 = vld.sshfl [vmem:[#allocation1 + $0x8] sm:$0xff pattern:$0x73625140]
          %v3877 = vld.sshfl [vmem:[#allocation1 + $0x10] sm:$0xff pattern:$0x73625140]
          %v3878 = vld.sshfl [vmem:[#allocation1 + $0x18] sm:$0xff pattern:$0x73625140]
          %v3879 = vld.sshfl [vmem:[#allocation1 + $0x20] sm:$0xff pattern:$0x73625140]
          %v3880 = vld.sshfl [vmem:[#allocation1 + $0x28] sm:$0xff pattern:$0x73625140]
          %v3881 = vld.sshfl [vmem:[#allocation1 + $0x30] sm:$0xff pattern:$0x73625140]
          %v3882 = vld.sshfl [vmem:[#allocation1 + $0x38] sm:$0xff pattern:$0x73625140]
          %v3891 = vpack.c.bf16 %v3875, %v3875
          %v3892 = vpack.c.bf16 %v3876, %v3876
          %v3893 = vpack.c.bf16 %v3877, %v3877
          %v3894 = vpack.c.bf16 %v3878, %v3878
          %v3895 = vpack.c.bf16 %v3879, %v3879
          %v3896 = vpack.c.bf16 %v3880, %v3880
          %v3897 = vpack.c.bf16 %v3881, %v3881
          %v3898 = vpack.c.bf16 %v3882, %v3882
          %v3899 = vld [vmem:[#allocation3] sm:$0xff]
          %v3900 = vld [vmem:[#allocation3 + $0x8] sm:$0xff]
          %v3901 = vld [vmem:[#allocation3 + $0x10] sm:$0xff]
          %v3902 = vld [vmem:[#allocation3 + $0x18] sm:$0xff]
          %v3903 = vld [vmem:[#allocation3 + $0x20] sm:$0xff]
          %v3904 = vld [vmem:[#allocation3 + $0x28] sm:$0xff]
          %v3905 = vld [vmem:[#allocation3 + $0x30] sm:$0xff]
          %v3906 = vld [vmem:[#allocation3 + $0x38] sm:$0xff]
          %v3907 = vld [vmem:[#allocation3 + $0x40] sm:$0xff]
          %v3908 = vld [vmem:[#allocation3 + $0x48] sm:$0xff]
          %v3909 = vld [vmem:[#allocation3 + $0x50] sm:$0xff]
          %v3910 = vld [vmem:[#allocation3 + $0x58] sm:$0xff]
          %v3911 = vld [vmem:[#allocation3 + $0x60] sm:$0xff]
          %v3912 = vld [vmem:[#allocation3 + $0x68] sm:$0xff]
          %v3913 = vld [vmem:[#allocation3 + $0x70] sm:$0xff]
          %v3914 = vld [vmem:[#allocation3 + $0x78] sm:$0xff]
          %v3915 = vld [vmem:[#allocation3 + $0x80] sm:$0xff]
          %v3916 = vld [vmem:[#allocation3 + $0x88] sm:$0xff]
          %v3917 = vld [vmem:[#allocation3 + $0x90] sm:$0xff]
          %v3918 = vld [vmem:[#allocation3 + $0x98] sm:$0xff]
          %v3919 = vld [vmem:[#allocation3 + $0xa0] sm:$0xff]
          %v3920 = vld [vmem:[#allocation3 + $0xa8] sm:$0xff]
          %v3921 = vld [vmem:[#allocation3 + $0xb0] sm:$0xff]
          %v3922 = vld [vmem:[#allocation3 + $0xb8] sm:$0xff]
          %v3923 = vld [vmem:[#allocation3 + $0xc0] sm:$0xff]
          %v3924 = vld [vmem:[#allocation3 + $0xc8] sm:$0xff]
          %v3925 = vld [vmem:[#allocation3 + $0xd0] sm:$0xff]
          %v3926 = vld [vmem:[#allocation3 + $0xd8] sm:$0xff]
          %v3927 = vld [vmem:[#allocation3 + $0xe0] sm:$0xff]
          %v3928 = vld [vmem:[#allocation3 + $0xe8] sm:$0xff]
          %v3929 = vld [vmem:[#allocation3 + $0xf0] sm:$0xff]
          %v3930 = vld [vmem:[#allocation3 + $0xf8] sm:$0xff]
          %v3931 = vld [vmem:[#allocation3 + $0x100] sm:$0xff]
          %v3932 = vld [vmem:[#allocation3 + $0x108] sm:$0xff]
          %v3933 = vld [vmem:[#allocation3 + $0x110] sm:$0xff]
          %v3934 = vld [vmem:[#allocation3 + $0x118] sm:$0xff]
          %v3935 = vld [vmem:[#allocation3 + $0x120] sm:$0xff]
          %v3936 = vld [vmem:[#allocation3 + $0x128] sm:$0xff]
          %v3937 = vld [vmem:[#allocation3 + $0x130] sm:$0xff]
          %v3938 = vld [vmem:[#allocation3 + $0x138] sm:$0xff]
          %v3939 = vld [vmem:[#allocation3 + $0x140] sm:$0xff]
          %v3940 = vld [vmem:[#allocation3 + $0x148] sm:$0xff]
          %v3941 = vld [vmem:[#allocation3 + $0x150] sm:$0xff]
          %v3942 = vld [vmem:[#allocation3 + $0x158] sm:$0xff]
          %v3943 = vld [vmem:[#allocation3 + $0x160] sm:$0xff]
          %v3944 = vld [vmem:[#allocation3 + $0x168] sm:$0xff]
          %v3945 = vld [vmem:[#allocation3 + $0x170] sm:$0xff]
          %v3946 = vld [vmem:[#allocation3 + $0x178] sm:$0xff]
          %v3947 = vld [vmem:[#allocation3 + $0x180] sm:$0xff]
          %v3948 = vld [vmem:[#allocation3 + $0x188] sm:$0xff]
          %v3949 = vld [vmem:[#allocation3 + $0x190] sm:$0xff]
          %v3950 = vld [vmem:[#allocation3 + $0x198] sm:$0xff]
          %v3951 = vld [vmem:[#allocation3 + $0x1a0] sm:$0xff]
          %v3952 = vld [vmem:[#allocation3 + $0x1a8] sm:$0xff]
          %v3953 = vld [vmem:[#allocation3 + $0x1b0] sm:$0xff]
          %v3954 = vld [vmem:[#allocation3 + $0x1b8] sm:$0xff]
          %v3955 = vld [vmem:[#allocation3 + $0x1c0] sm:$0xff]
          %v3956 = vld [vmem:[#allocation3 + $0x1c8] sm:$0xff]
          %v3957 = vld [vmem:[#allocation3 + $0x1d0] sm:$0xff]
          %v3958 = vld [vmem:[#allocation3 + $0x1d8] sm:$0xff]
          %v3959 = vld [vmem:[#allocation3 + $0x1e0] sm:$0xff]
          %v3960 = vld [vmem:[#allocation3 + $0x1e8] sm:$0xff]
          %v3961 = vld [vmem:[#allocation3 + $0x1f0] sm:$0xff]
          %v3962 = vld [vmem:[#allocation3 + $0x1f8] sm:$0xff]
          %v3963 = vld [vmem:[#allocation3 + $0x200] sm:$0xff]
          %v3964 = vld [vmem:[#allocation3 + $0x208] sm:$0xff]
          %v3965 = vld [vmem:[#allocation3 + $0x210] sm:$0xff]
          %v3966 = vld [vmem:[#allocation3 + $0x218] sm:$0xff]
          %v3967 = vld [vmem:[#allocation3 + $0x220] sm:$0xff]
          %v3968 = vld [vmem:[#allocation3 + $0x228] sm:$0xff]
          %v3969 = vld [vmem:[#allocation3 + $0x230] sm:$0xff]
          %v3970 = vld [vmem:[#allocation3 + $0x238] sm:$0xff]
          %v3971 = vld [vmem:[#allocation3 + $0x240] sm:$0xff]
          %v3972 = vld [vmem:[#allocation3 + $0x248] sm:$0xff]
          %v3973 = vld [vmem:[#allocation3 + $0x250] sm:$0xff]
          %v3974 = vld [vmem:[#allocation3 + $0x258] sm:$0xff]
          %v3975 = vld [vmem:[#allocation3 + $0x260] sm:$0xff]
          %v3976 = vld [vmem:[#allocation3 + $0x268] sm:$0xff]
          %v3977 = vld [vmem:[#allocation3 + $0x270] sm:$0xff]
          %v3978 = vld [vmem:[#allocation3 + $0x278] sm:$0xff]
          %v3979 = vld [vmem:[#allocation3 + $0x280] sm:$0xff]
          %v3980 = vld [vmem:[#allocation3 + $0x288] sm:$0xff]
          %v3981 = vld [vmem:[#allocation3 + $0x290] sm:$0xff]
          %v3982 = vld [vmem:[#allocation3 + $0x298] sm:$0xff]
          %v3983 = vld [vmem:[#allocation3 + $0x2a0] sm:$0xff]
          %v3984 = vld [vmem:[#allocation3 + $0x2a8] sm:$0xff]
          %v3985 = vld [vmem:[#allocation3 + $0x2b0] sm:$0xff]
          %v3986 = vld [vmem:[#allocation3 + $0x2b8] sm:$0xff]
          %v3987 = vld [vmem:[#allocation3 + $0x2c0] sm:$0xff]
          %v3988 = vld [vmem:[#allocation3 + $0x2c8] sm:$0xff]
          %v3989 = vld [vmem:[#allocation3 + $0x2d0] sm:$0xff]
          %v3990 = vld [vmem:[#allocation3 + $0x2d8] sm:$0xff]
          %v3991 = vld [vmem:[#allocation3 + $0x2e0] sm:$0xff]
          %v3992 = vld [vmem:[#allocation3 + $0x2e8] sm:$0xff]
          %v3993 = vld [vmem:[#allocation3 + $0x2f0] sm:$0xff]
          %v3994 = vld [vmem:[#allocation3 + $0x2f8] sm:$0xff]
          %v3995 = vld [vmem:[#allocation3 + $0x300] sm:$0xff]
          %v3996 = vld [vmem:[#allocation3 + $0x308] sm:$0xff]
          %v3997 = vld [vmem:[#allocation3 + $0x310] sm:$0xff]
          %v3998 = vld [vmem:[#allocation3 + $0x318] sm:$0xff]
          %v3999 = vld [vmem:[#allocation3 + $0x320] sm:$0xff]
          %v4000 = vld [vmem:[#allocation3 + $0x328] sm:$0xff]
          %v4001 = vld [vmem:[#allocation3 + $0x330] sm:$0xff]
          %v4002 = vld [vmem:[#allocation3 + $0x338] sm:$0xff]
          %v4003 = vld [vmem:[#allocation3 + $0x340] sm:$0xff]
          %v4004 = vld [vmem:[#allocation3 + $0x348] sm:$0xff]
          %v4005 = vld [vmem:[#allocation3 + $0x350] sm:$0xff]
          %v4006 = vld [vmem:[#allocation3 + $0x358] sm:$0xff]
          %v4007 = vld [vmem:[#allocation3 + $0x360] sm:$0xff]
          %v4008 = vld [vmem:[#allocation3 + $0x368] sm:$0xff]
          %v4009 = vld [vmem:[#allocation3 + $0x370] sm:$0xff]
          %v4010 = vld [vmem:[#allocation3 + $0x378] sm:$0xff]
          %v4011 = vld [vmem:[#allocation3 + $0x380] sm:$0xff]
          %v4012 = vld [vmem:[#allocation3 + $0x388] sm:$0xff]
          %v4013 = vld [vmem:[#allocation3 + $0x390] sm:$0xff]
          %v4014 = vld [vmem:[#allocation3 + $0x398] sm:$0xff]
          %v4015 = vld [vmem:[#allocation3 + $0x3a0] sm:$0xff]
          %v4016 = vld [vmem:[#allocation3 + $0x3a8] sm:$0xff]
          %v4017 = vld [vmem:[#allocation3 + $0x3b0] sm:$0xff]
          %v4018 = vld [vmem:[#allocation3 + $0x3b8] sm:$0xff]
          %v4019 = vld [vmem:[#allocation3 + $0x3c0] sm:$0xff]
          %v4020 = vld [vmem:[#allocation3 + $0x3c8] sm:$0xff]
          %v4021 = vld [vmem:[#allocation3 + $0x3d0] sm:$0xff]
          %v4022 = vld [vmem:[#allocation3 + $0x3d8] sm:$0xff]
          %v4023 = vld [vmem:[#allocation3 + $0x3e0] sm:$0xff]
          %v4024 = vld [vmem:[#allocation3 + $0x3e8] sm:$0xff]
          %v4025 = vld [vmem:[#allocation3 + $0x3f0] sm:$0xff]
          %v4026 = vld [vmem:[#allocation3 + $0x3f8] sm:$0xff]
          %v4027 = vld [vmem:[#allocation3 + $0x400] sm:$0xff]
          %v4028 = vld [vmem:[#allocation3 + $0x408] sm:$0xff]
          %v4029 = vld [vmem:[#allocation3 + $0x410] sm:$0xff]
          %v4030 = vld [vmem:[#allocation3 + $0x418] sm:$0xff]
          %v4031 = vld [vmem:[#allocation3 + $0x420] sm:$0xff]
          %v4032 = vld [vmem:[#allocation3 + $0x428] sm:$0xff]
          %v4033 = vld [vmem:[#allocation3 + $0x430] sm:$0xff]
          %v4034 = vld [vmem:[#allocation3 + $0x438] sm:$0xff]
          %v4035 = vld [vmem:[#allocation3 + $0x440] sm:$0xff]
          %v4036 = vld [vmem:[#allocation3 + $0x448] sm:$0xff]
          %v4037 = vld [vmem:[#allocation3 + $0x450] sm:$0xff]
          %v4038 = vld [vmem:[#allocation3 + $0x458] sm:$0xff]
          %v4039 = vld [vmem:[#allocation3 + $0x460] sm:$0xff]
          %v4040 = vld [vmem:[#allocation3 + $0x468] sm:$0xff]
          %v4041 = vld [vmem:[#allocation3 + $0x470] sm:$0xff]
          %v4042 = vld [vmem:[#allocation3 + $0x478] sm:$0xff]
          %v4043 = vld [vmem:[#allocation3 + $0x480] sm:$0xff]
          %v4044 = vld [vmem:[#allocation3 + $0x488] sm:$0xff]
          %v4045 = vld [vmem:[#allocation3 + $0x490] sm:$0xff]
          %v4046 = vld [vmem:[#allocation3 + $0x498] sm:$0xff]
          %v4047 = vld [vmem:[#allocation3 + $0x4a0] sm:$0xff]
          %v4048 = vld [vmem:[#allocation3 + $0x4a8] sm:$0xff]
          %v4049 = vld [vmem:[#allocation3 + $0x4b0] sm:$0xff]
          %v4050 = vld [vmem:[#allocation3 + $0x4b8] sm:$0xff]
          %v4051 = vld [vmem:[#allocation3 + $0x4c0] sm:$0xff]
          %v4052 = vld [vmem:[#allocation3 + $0x4c8] sm:$0xff]
          %v4053 = vld [vmem:[#allocation3 + $0x4d0] sm:$0xff]
          %v4054 = vld [vmem:[#allocation3 + $0x4d8] sm:$0xff]
          %v4055 = vld [vmem:[#allocation3 + $0x4e0] sm:$0xff]
          %v4056 = vld [vmem:[#allocation3 + $0x4e8] sm:$0xff]
          %v4057 = vld [vmem:[#allocation3 + $0x4f0] sm:$0xff]
          %v4058 = vld [vmem:[#allocation3 + $0x4f8] sm:$0xff]
          %v4059 = vld [vmem:[#allocation3 + $0x500] sm:$0xff]
          %v4060 = vld [vmem:[#allocation3 + $0x508] sm:$0xff]
          %v4061 = vld [vmem:[#allocation3 + $0x510] sm:$0xff]
          %v4062 = vld [vmem:[#allocation3 + $0x518] sm:$0xff]
          %v4063 = vld [vmem:[#allocation3 + $0x520] sm:$0xff]
          %v4064 = vld [vmem:[#allocation3 + $0x528] sm:$0xff]
          %v4065 = vld [vmem:[#allocation3 + $0x530] sm:$0xff]
          %v4066 = vld [vmem:[#allocation3 + $0x538] sm:$0xff]
          %v4067 = vld [vmem:[#allocation3 + $0x540] sm:$0xff]
          %v4068 = vld [vmem:[#allocation3 + $0x548] sm:$0xff]
          %v4069 = vld [vmem:[#allocation3 + $0x550] sm:$0xff]
          %v4070 = vld [vmem:[#allocation3 + $0x558] sm:$0xff]
          %v4071 = vld [vmem:[#allocation3 + $0x560] sm:$0xff]
          %v4072 = vld [vmem:[#allocation3 + $0x568] sm:$0xff]
          %v4073 = vld [vmem:[#allocation3 + $0x570] sm:$0xff]
          %v4074 = vld [vmem:[#allocation3 + $0x578] sm:$0xff]
          %v4075 = vld [vmem:[#allocation3 + $0x580] sm:$0xff]
          %v4076 = vld [vmem:[#allocation3 + $0x588] sm:$0xff]
          %v4077 = vld [vmem:[#allocation3 + $0x590] sm:$0xff]
          %v4078 = vld [vmem:[#allocation3 + $0x598] sm:$0xff]
          %v4079 = vld [vmem:[#allocation3 + $0x5a0] sm:$0xff]
          %v4080 = vld [vmem:[#allocation3 + $0x5a8] sm:$0xff]
          %v4081 = vld [vmem:[#allocation3 + $0x5b0] sm:$0xff]
          %v4082 = vld [vmem:[#allocation3 + $0x5b8] sm:$0xff]
          %v4083 = vld [vmem:[#allocation3 + $0x5c0] sm:$0xff]
          %v4084 = vld [vmem:[#allocation3 + $0x5c8] sm:$0xff]
          %v4085 = vld [vmem:[#allocation3 + $0x5d0] sm:$0xff]
          %v4086 = vld [vmem:[#allocation3 + $0x5d8] sm:$0xff]
          %v4087 = vld [vmem:[#allocation3 + $0x5e0] sm:$0xff]
          %v4088 = vld [vmem:[#allocation3 + $0x5e8] sm:$0xff]
          %v4089 = vld [vmem:[#allocation3 + $0x5f0] sm:$0xff]
          %v4090 = vld [vmem:[#allocation3 + $0x5f8] sm:$0xff]
          %v4091 = vld [vmem:[#allocation3 + $0x600] sm:$0xff]
          %v4092 = vld [vmem:[#allocation3 + $0x608] sm:$0xff]
          %v4093 = vld [vmem:[#allocation3 + $0x610] sm:$0xff]
          %v4094 = vld [vmem:[#allocation3 + $0x618] sm:$0xff]
          %v4095 = vld [vmem:[#allocation3 + $0x620] sm:$0xff]
          %v4096 = vld [vmem:[#allocation3 + $0x628] sm:$0xff]
          %v4097 = vld [vmem:[#allocation3 + $0x630] sm:$0xff]
          %v4098 = vld [vmem:[#allocation3 + $0x638] sm:$0xff]
          %v4099 = vld [vmem:[#allocation3 + $0x640] sm:$0xff]
          %v4100 = vld [vmem:[#allocation3 + $0x648] sm:$0xff]
          %v4101 = vld [vmem:[#allocation3 + $0x650] sm:$0xff]
          %v4102 = vld [vmem:[#allocation3 + $0x658] sm:$0xff]
          %v4103 = vld [vmem:[#allocation3 + $0x660] sm:$0xff]
          %v4104 = vld [vmem:[#allocation3 + $0x668] sm:$0xff]
          %v4105 = vld [vmem:[#allocation3 + $0x670] sm:$0xff]
          %v4106 = vld [vmem:[#allocation3 + $0x678] sm:$0xff]
          %v4107 = vld [vmem:[#allocation3 + $0x680] sm:$0xff]
          %v4108 = vld [vmem:[#allocation3 + $0x688] sm:$0xff]
          %v4109 = vld [vmem:[#allocation3 + $0x690] sm:$0xff]
          %v4110 = vld [vmem:[#allocation3 + $0x698] sm:$0xff]
          %v4111 = vld [vmem:[#allocation3 + $0x6a0] sm:$0xff]
          %v4112 = vld [vmem:[#allocation3 + $0x6a8] sm:$0xff]
          %v4113 = vld [vmem:[#allocation3 + $0x6b0] sm:$0xff]
          %v4114 = vld [vmem:[#allocation3 + $0x6b8] sm:$0xff]
          %v4115 = vld [vmem:[#allocation3 + $0x6c0] sm:$0xff]
          %v4116 = vld [vmem:[#allocation3 + $0x6c8] sm:$0xff]
          %v4117 = vld [vmem:[#allocation3 + $0x6d0] sm:$0xff]
          %v4118 = vld [vmem:[#allocation3 + $0x6d8] sm:$0xff]
          %v4119 = vld [vmem:[#allocation3 + $0x6e0] sm:$0xff]
          %v4120 = vld [vmem:[#allocation3 + $0x6e8] sm:$0xff]
          %v4121 = vld [vmem:[#allocation3 + $0x6f0] sm:$0xff]
          %v4122 = vld [vmem:[#allocation3 + $0x6f8] sm:$0xff]
          %v4123 = vld [vmem:[#allocation3 + $0x700] sm:$0xff]
          %v4124 = vld [vmem:[#allocation3 + $0x708] sm:$0xff]
          %v4125 = vld [vmem:[#allocation3 + $0x710] sm:$0xff]
          %v4126 = vld [vmem:[#allocation3 + $0x718] sm:$0xff]
          %v4127 = vld [vmem:[#allocation3 + $0x720] sm:$0xff]
          %v4128 = vld [vmem:[#allocation3 + $0x728] sm:$0xff]
          %v4129 = vld [vmem:[#allocation3 + $0x730] sm:$0xff]
          %v4130 = vld [vmem:[#allocation3 + $0x738] sm:$0xff]
          %v4131 = vld [vmem:[#allocation3 + $0x740] sm:$0xff]
          %v4132 = vld [vmem:[#allocation3 + $0x748] sm:$0xff]
          %v4133 = vld [vmem:[#allocation3 + $0x750] sm:$0xff]
          %v4134 = vld [vmem:[#allocation3 + $0x758] sm:$0xff]
          %v4135 = vld [vmem:[#allocation3 + $0x760] sm:$0xff]
          %v4136 = vld [vmem:[#allocation3 + $0x768] sm:$0xff]
          %v4137 = vld [vmem:[#allocation3 + $0x770] sm:$0xff]
          %v4138 = vld [vmem:[#allocation3 + $0x778] sm:$0xff]
          %v4139 = vld [vmem:[#allocation3 + $0x780] sm:$0xff]
          %v4140 = vld [vmem:[#allocation3 + $0x788] sm:$0xff]
          %v4141 = vld [vmem:[#allocation3 + $0x790] sm:$0xff]
          %v4142 = vld [vmem:[#allocation3 + $0x798] sm:$0xff]
          %v4143 = vld [vmem:[#allocation3 + $0x7a0] sm:$0xff]
          %v4144 = vld [vmem:[#allocation3 + $0x7a8] sm:$0xff]
          %v4145 = vld [vmem:[#allocation3 + $0x7b0] sm:$0xff]
          %v4146 = vld [vmem:[#allocation3 + $0x7b8] sm:$0xff]
          %v4147 = vld [vmem:[#allocation3 + $0x7c0] sm:$0xff]
          %v4148 = vld [vmem:[#allocation3 + $0x7c8] sm:$0xff]
          %v4149 = vld [vmem:[#allocation3 + $0x7d0] sm:$0xff]
          %v4150 = vld [vmem:[#allocation3 + $0x7d8] sm:$0xff]
          %v4151 = vld [vmem:[#allocation3 + $0x7e0] sm:$0xff]
          %v4152 = vld [vmem:[#allocation3 + $0x7e8] sm:$0xff]
          %v4153 = vld [vmem:[#allocation3 + $0x7f0] sm:$0xff]
          %v4154 = vld [vmem:[#allocation3 + $0x7f8] sm:$0xff]
          %v4155 = vld [vmem:[#allocation3 + $0x800] sm:$0xff]
          %v4156 = vld [vmem:[#allocation3 + $0x808] sm:$0xff]
          %v4157 = vld [vmem:[#allocation3 + $0x810] sm:$0xff]
          %v4158 = vld [vmem:[#allocation3 + $0x818] sm:$0xff]
          %v4159 = vld [vmem:[#allocation3 + $0x820] sm:$0xff]
          %v4160 = vld [vmem:[#allocation3 + $0x828] sm:$0xff]
          %v4161 = vld [vmem:[#allocation3 + $0x830] sm:$0xff]
          %v4162 = vld [vmem:[#allocation3 + $0x838] sm:$0xff]
          %v4163 = vld [vmem:[#allocation3 + $0x840] sm:$0xff]
          %v4164 = vld [vmem:[#allocation3 + $0x848] sm:$0xff]
          %v4165 = vld [vmem:[#allocation3 + $0x850] sm:$0xff]
          %v4166 = vld [vmem:[#allocation3 + $0x858] sm:$0xff]
          %v4167 = vld [vmem:[#allocation3 + $0x860] sm:$0xff]
          %v4168 = vld [vmem:[#allocation3 + $0x868] sm:$0xff]
          %v4169 = vld [vmem:[#allocation3 + $0x870] sm:$0xff]
          %v4170 = vld [vmem:[#allocation3 + $0x878] sm:$0xff]
          %v4171 = vld [vmem:[#allocation3 + $0x880] sm:$0xff]
          %v4172 = vld [vmem:[#allocation3 + $0x888] sm:$0xff]
          %v4173 = vld [vmem:[#allocation3 + $0x890] sm:$0xff]
          %v4174 = vld [vmem:[#allocation3 + $0x898] sm:$0xff]
          %v4175 = vld [vmem:[#allocation3 + $0x8a0] sm:$0xff]
          %v4176 = vld [vmem:[#allocation3 + $0x8a8] sm:$0xff]
          %v4177 = vld [vmem:[#allocation3 + $0x8b0] sm:$0xff]
          %v4178 = vld [vmem:[#allocation3 + $0x8b8] sm:$0xff]
          %v4179 = vld [vmem:[#allocation3 + $0x8c0] sm:$0xff]
          %v4180 = vld [vmem:[#allocation3 + $0x8c8] sm:$0xff]
          %v4181 = vld [vmem:[#allocation3 + $0x8d0] sm:$0xff]
          %v4182 = vld [vmem:[#allocation3 + $0x8d8] sm:$0xff]
          %v4183 = vld [vmem:[#allocation3 + $0x8e0] sm:$0xff]
          %v4184 = vld [vmem:[#allocation3 + $0x8e8] sm:$0xff]
          %v4185 = vld [vmem:[#allocation3 + $0x8f0] sm:$0xff]
          %v4186 = vld [vmem:[#allocation3 + $0x8f8] sm:$0xff]
          %v4187 = vld [vmem:[#allocation3 + $0x900] sm:$0xff]
          %v4188 = vld [vmem:[#allocation3 + $0x908] sm:$0xff]
          %v4189 = vld [vmem:[#allocation3 + $0x910] sm:$0xff]
          %v4190 = vld [vmem:[#allocation3 + $0x918] sm:$0xff]
          %v4191 = vld [vmem:[#allocation3 + $0x920] sm:$0xff]
          %v4192 = vld [vmem:[#allocation3 + $0x928] sm:$0xff]
          %v4193 = vld [vmem:[#allocation3 + $0x930] sm:$0xff]
          %v4194 = vld [vmem:[#allocation3 + $0x938] sm:$0xff]
          %v4195 = vld [vmem:[#allocation3 + $0x940] sm:$0xff]
          %v4196 = vld [vmem:[#allocation3 + $0x948] sm:$0xff]
          %v4197 = vld [vmem:[#allocation3 + $0x950] sm:$0xff]
          %v4198 = vld [vmem:[#allocation3 + $0x958] sm:$0xff]
          %v4199 = vld [vmem:[#allocation3 + $0x960] sm:$0xff]
          %v4200 = vld [vmem:[#allocation3 + $0x968] sm:$0xff]
          %v4201 = vld [vmem:[#allocation3 + $0x970] sm:$0xff]
          %v4202 = vld [vmem:[#allocation3 + $0x978] sm:$0xff]
          %v4203 = vld [vmem:[#allocation3 + $0x980] sm:$0xff]
          %v4204 = vld [vmem:[#allocation3 + $0x988] sm:$0xff]
          %v4205 = vld [vmem:[#allocation3 + $0x990] sm:$0xff]
          %v4206 = vld [vmem:[#allocation3 + $0x998] sm:$0xff]
          %v4207 = vld [vmem:[#allocation3 + $0x9a0] sm:$0xff]
          %v4208 = vld [vmem:[#allocation3 + $0x9a8] sm:$0xff]
          %v4209 = vld [vmem:[#allocation3 + $0x9b0] sm:$0xff]
          %v4210 = vld [vmem:[#allocation3 + $0x9b8] sm:$0xff]
          %v4211 = vld [vmem:[#allocation3 + $0x9c0] sm:$0xff]
          %v4212 = vld [vmem:[#allocation3 + $0x9c8] sm:$0xff]
          %v4213 = vld [vmem:[#allocation3 + $0x9d0] sm:$0xff]
          %v4214 = vld [vmem:[#allocation3 + $0x9d8] sm:$0xff]
          %v4215 = vld [vmem:[#allocation3 + $0x9e0] sm:$0xff]
          %v4216 = vld [vmem:[#allocation3 + $0x9e8] sm:$0xff]
          %v4217 = vld [vmem:[#allocation3 + $0x9f0] sm:$0xff]
          %v4218 = vld [vmem:[#allocation3 + $0x9f8] sm:$0xff]
          %v4219 = vld [vmem:[#allocation3 + $0xa00] sm:$0xff]
          %v4220 = vld [vmem:[#allocation3 + $0xa08] sm:$0xff]
          %v4221 = vld [vmem:[#allocation3 + $0xa10] sm:$0xff]
          %v4222 = vld [vmem:[#allocation3 + $0xa18] sm:$0xff]
          %v4223 = vld [vmem:[#allocation3 + $0xa20] sm:$0xff]
          %v4224 = vld [vmem:[#allocation3 + $0xa28] sm:$0xff]
          %v4225 = vld [vmem:[#allocation3 + $0xa30] sm:$0xff]
          %v4226 = vld [vmem:[#allocation3 + $0xa38] sm:$0xff]
          %v4227 = vld [vmem:[#allocation3 + $0xa40] sm:$0xff]
          %v4228 = vld [vmem:[#allocation3 + $0xa48] sm:$0xff]
          %v4229 = vld [vmem:[#allocation3 + $0xa50] sm:$0xff]
          %v4230 = vld [vmem:[#allocation3 + $0xa58] sm:$0xff]
          %v4231 = vld [vmem:[#allocation3 + $0xa60] sm:$0xff]
          %v4232 = vld [vmem:[#allocation3 + $0xa68] sm:$0xff]
          %v4233 = vld [vmem:[#allocation3 + $0xa70] sm:$0xff]
          %v4234 = vld [vmem:[#allocation3 + $0xa78] sm:$0xff]
          %v4235 = vld [vmem:[#allocation3 + $0xa80] sm:$0xff]
          %v4236 = vld [vmem:[#allocation3 + $0xa88] sm:$0xff]
          %v4237 = vld [vmem:[#allocation3 + $0xa90] sm:$0xff]
          %v4238 = vld [vmem:[#allocation3 + $0xa98] sm:$0xff]
          %v4239 = vld [vmem:[#allocation3 + $0xaa0] sm:$0xff]
          %v4240 = vld [vmem:[#allocation3 + $0xaa8] sm:$0xff]
          %v4241 = vld [vmem:[#allocation3 + $0xab0] sm:$0xff]
          %v4242 = vld [vmem:[#allocation3 + $0xab8] sm:$0xff]
          %v4243 = vld [vmem:[#allocation3 + $0xac0] sm:$0xff]
          %v4244 = vld [vmem:[#allocation3 + $0xac8] sm:$0xff]
          %v4245 = vld [vmem:[#allocation3 + $0xad0] sm:$0xff]
          %v4246 = vld [vmem:[#allocation3 + $0xad8] sm:$0xff]
          %v4247 = vld [vmem:[#allocation3 + $0xae0] sm:$0xff]
          %v4248 = vld [vmem:[#allocation3 + $0xae8] sm:$0xff]
          %v4249 = vld [vmem:[#allocation3 + $0xaf0] sm:$0xff]
          %v4250 = vld [vmem:[#allocation3 + $0xaf8] sm:$0xff]
          %v4251 = vld [vmem:[#allocation3 + $0xb00] sm:$0xff]
          %v4252 = vld [vmem:[#allocation3 + $0xb08] sm:$0xff]
          %v4253 = vld [vmem:[#allocation3 + $0xb10] sm:$0xff]
          %v4254 = vld [vmem:[#allocation3 + $0xb18] sm:$0xff]
          %v4255 = vld [vmem:[#allocation3 + $0xb20] sm:$0xff]
          %v4256 = vld [vmem:[#allocation3 + $0xb28] sm:$0xff]
          %v4257 = vld [vmem:[#allocation3 + $0xb30] sm:$0xff]
          %v4258 = vld [vmem:[#allocation3 + $0xb38] sm:$0xff]
          %v4259 = vld [vmem:[#allocation3 + $0xb40] sm:$0xff]
          %v4260 = vld [vmem:[#allocation3 + $0xb48] sm:$0xff]
          %v4261 = vld [vmem:[#allocation3 + $0xb50] sm:$0xff]
          %v4262 = vld [vmem:[#allocation3 + $0xb58] sm:$0xff]
          %v4263 = vld [vmem:[#allocation3 + $0xb60] sm:$0xff]
          %v4264 = vld [vmem:[#allocation3 + $0xb68] sm:$0xff]
          %v4265 = vld [vmem:[#allocation3 + $0xb70] sm:$0xff]
          %v4266 = vld [vmem:[#allocation3 + $0xb78] sm:$0xff]
          %v4267 = vld [vmem:[#allocation3 + $0xb80] sm:$0xff]
          %v4268 = vld [vmem:[#allocation3 + $0xb88] sm:$0xff]
          %v4269 = vld [vmem:[#allocation3 + $0xb90] sm:$0xff]
          %v4270 = vld [vmem:[#allocation3 + $0xb98] sm:$0xff]
          %v4271 = vld [vmem:[#allocation3 + $0xba0] sm:$0xff]
          %v4272 = vld [vmem:[#allocation3 + $0xba8] sm:$0xff]
          %v4273 = vld [vmem:[#allocation3 + $0xbb0] sm:$0xff]
          %v4274 = vld [vmem:[#allocation3 + $0xbb8] sm:$0xff]
          %v4275 = vld [vmem:[#allocation3 + $0xbc0] sm:$0xff]
          %v4276 = vld [vmem:[#allocation3 + $0xbc8] sm:$0xff]
          %v4277 = vld [vmem:[#allocation3 + $0xbd0] sm:$0xff]
          %v4278 = vld [vmem:[#allocation3 + $0xbd8] sm:$0xff]
          %v4279 = vld [vmem:[#allocation3 + $0xbe0] sm:$0xff]
          %v4280 = vld [vmem:[#allocation3 + $0xbe8] sm:$0xff]
          %v4281 = vld [vmem:[#allocation3 + $0xbf0] sm:$0xff]
          %v4282 = vld [vmem:[#allocation3 + $0xbf8] sm:$0xff]
          %v4283 = vld [vmem:[#allocation3 + $0xc00] sm:$0xff]
          %v4284 = vld [vmem:[#allocation3 + $0xc08] sm:$0xff]
          %v4285 = vld [vmem:[#allocation3 + $0xc10] sm:$0xff]
          %v4286 = vld [vmem:[#allocation3 + $0xc18] sm:$0xff]
          %v4287 = vld [vmem:[#allocation3 + $0xc20] sm:$0xff]
          %v4288 = vld [vmem:[#allocation3 + $0xc28] sm:$0xff]
          %v4289 = vld [vmem:[#allocation3 + $0xc30] sm:$0xff]
          %v4290 = vld [vmem:[#allocation3 + $0xc38] sm:$0xff]
          %v4291 = vld [vmem:[#allocation3 + $0xc40] sm:$0xff]
          %v4292 = vld [vmem:[#allocation3 + $0xc48] sm:$0xff]
          %v4293 = vld [vmem:[#allocation3 + $0xc50] sm:$0xff]
          %v4294 = vld [vmem:[#allocation3 + $0xc58] sm:$0xff]
          %v4295 = vld [vmem:[#allocation3 + $0xc60] sm:$0xff]
          %v4296 = vld [vmem:[#allocation3 + $0xc68] sm:$0xff]
          %v4297 = vld [vmem:[#allocation3 + $0xc70] sm:$0xff]
          %v4298 = vld [vmem:[#allocation3 + $0xc78] sm:$0xff]
          %v4299 = vld [vmem:[#allocation3 + $0xc80] sm:$0xff]
          %v4300 = vld [vmem:[#allocation3 + $0xc88] sm:$0xff]
          %v4301 = vld [vmem:[#allocation3 + $0xc90] sm:$0xff]
          %v4302 = vld [vmem:[#allocation3 + $0xc98] sm:$0xff]
          %v4303 = vld [vmem:[#allocation3 + $0xca0] sm:$0xff]
          %v4304 = vld [vmem:[#allocation3 + $0xca8] sm:$0xff]
          %v4305 = vld [vmem:[#allocation3 + $0xcb0] sm:$0xff]
          %v4306 = vld [vmem:[#allocation3 + $0xcb8] sm:$0xff]
          %v4307 = vld [vmem:[#allocation3 + $0xcc0] sm:$0xff]
          %v4308 = vld [vmem:[#allocation3 + $0xcc8] sm:$0xff]
          %v4309 = vld [vmem:[#allocation3 + $0xcd0] sm:$0xff]
          %v4310 = vld [vmem:[#allocation3 + $0xcd8] sm:$0xff]
          %v4311 = vld [vmem:[#allocation3 + $0xce0] sm:$0xff]
          %v4312 = vld [vmem:[#allocation3 + $0xce8] sm:$0xff]
          %v4313 = vld [vmem:[#allocation3 + $0xcf0] sm:$0xff]
          %v4314 = vld [vmem:[#allocation3 + $0xcf8] sm:$0xff]
          %v4315 = vld [vmem:[#allocation3 + $0xd00] sm:$0xff]
          %v4316 = vld [vmem:[#allocation3 + $0xd08] sm:$0xff]
          %v4317 = vld [vmem:[#allocation3 + $0xd10] sm:$0xff]
          %v4318 = vld [vmem:[#allocation3 + $0xd18] sm:$0xff]
          %v4319 = vld [vmem:[#allocation3 + $0xd20] sm:$0xff]
          %v4320 = vld [vmem:[#allocation3 + $0xd28] sm:$0xff]
          %v4321 = vld [vmem:[#allocation3 + $0xd30] sm:$0xff]
          %v4322 = vld [vmem:[#allocation3 + $0xd38] sm:$0xff]
          %v4323 = vld [vmem:[#allocation3 + $0xd40] sm:$0xff]
          %v4324 = vld [vmem:[#allocation3 + $0xd48] sm:$0xff]
          %v4325 = vld [vmem:[#allocation3 + $0xd50] sm:$0xff]
          %v4326 = vld [vmem:[#allocation3 + $0xd58] sm:$0xff]
          %v4327 = vld [vmem:[#allocation3 + $0xd60] sm:$0xff]
          %v4328 = vld [vmem:[#allocation3 + $0xd68] sm:$0xff]
          %v4329 = vld [vmem:[#allocation3 + $0xd70] sm:$0xff]
          %v4330 = vld [vmem:[#allocation3 + $0xd78] sm:$0xff]
          %v4331 = vld [vmem:[#allocation3 + $0xd80] sm:$0xff]
          %v4332 = vld [vmem:[#allocation3 + $0xd88] sm:$0xff]
          %v4333 = vld [vmem:[#allocation3 + $0xd90] sm:$0xff]
          %v4334 = vld [vmem:[#allocation3 + $0xd98] sm:$0xff]
          %v4335 = vld [vmem:[#allocation3 + $0xda0] sm:$0xff]
          %v4336 = vld [vmem:[#allocation3 + $0xda8] sm:$0xff]
          %v4337 = vld [vmem:[#allocation3 + $0xdb0] sm:$0xff]
          %v4338 = vld [vmem:[#allocation3 + $0xdb8] sm:$0xff]
          %v4339 = vld [vmem:[#allocation3 + $0xdc0] sm:$0xff]
          %v4340 = vld [vmem:[#allocation3 + $0xdc8] sm:$0xff]
          %v4341 = vld [vmem:[#allocation3 + $0xdd0] sm:$0xff]
          %v4342 = vld [vmem:[#allocation3 + $0xdd8] sm:$0xff]
          %v4343 = vld [vmem:[#allocation3 + $0xde0] sm:$0xff]
          %v4344 = vld [vmem:[#allocation3 + $0xde8] sm:$0xff]
          %v4345 = vld [vmem:[#allocation3 + $0xdf0] sm:$0xff]
          %v4346 = vld [vmem:[#allocation3 + $0xdf8] sm:$0xff]
          %v4347 = vld [vmem:[#allocation3 + $0xe00] sm:$0xff]
          %v4348 = vld [vmem:[#allocation3 + $0xe08] sm:$0xff]
          %v4349 = vld [vmem:[#allocation3 + $0xe10] sm:$0xff]
          %v4350 = vld [vmem:[#allocation3 + $0xe18] sm:$0xff]
          %v4351 = vld [vmem:[#allocation3 + $0xe20] sm:$0xff]
          %v4352 = vld [vmem:[#allocation3 + $0xe28] sm:$0xff]
          %v4353 = vld [vmem:[#allocation3 + $0xe30] sm:$0xff]
          %v4354 = vld [vmem:[#allocation3 + $0xe38] sm:$0xff]
          %v4355 = vld [vmem:[#allocation3 + $0xe40] sm:$0xff]
          %v4356 = vld [vmem:[#allocation3 + $0xe48] sm:$0xff]
          %v4357 = vld [vmem:[#allocation3 + $0xe50] sm:$0xff]
          %v4358 = vld [vmem:[#allocation3 + $0xe58] sm:$0xff]
          %v4359 = vld [vmem:[#allocation3 + $0xe60] sm:$0xff]
          %v4360 = vld [vmem:[#allocation3 + $0xe68] sm:$0xff]
          %v4361 = vld [vmem:[#allocation3 + $0xe70] sm:$0xff]
          %v4362 = vld [vmem:[#allocation3 + $0xe78] sm:$0xff]
          %v4363 = vld [vmem:[#allocation3 + $0xe80] sm:$0xff]
          %v4364 = vld [vmem:[#allocation3 + $0xe88] sm:$0xff]
          %v4365 = vld [vmem:[#allocation3 + $0xe90] sm:$0xff]
          %v4366 = vld [vmem:[#allocation3 + $0xe98] sm:$0xff]
          %v4367 = vld [vmem:[#allocation3 + $0xea0] sm:$0xff]
          %v4368 = vld [vmem:[#allocation3 + $0xea8] sm:$0xff]
          %v4369 = vld [vmem:[#allocation3 + $0xeb0] sm:$0xff]
          %v4370 = vld [vmem:[#allocation3 + $0xeb8] sm:$0xff]
          %v4371 = vld [vmem:[#allocation3 + $0xec0] sm:$0xff]
          %v4372 = vld [vmem:[#allocation3 + $0xec8] sm:$0xff]
          %v4373 = vld [vmem:[#allocation3 + $0xed0] sm:$0xff]
          %v4374 = vld [vmem:[#allocation3 + $0xed8] sm:$0xff]
          %v4375 = vld [vmem:[#allocation3 + $0xee0] sm:$0xff]
          %v4376 = vld [vmem:[#allocation3 + $0xee8] sm:$0xff]
          %v4377 = vld [vmem:[#allocation3 + $0xef0] sm:$0xff]
          %v4378 = vld [vmem:[#allocation3 + $0xef8] sm:$0xff]
          %v4379 = vld [vmem:[#allocation3 + $0xf00] sm:$0xff]
          %v4380 = vld [vmem:[#allocation3 + $0xf08] sm:$0xff]
          %v4381 = vld [vmem:[#allocation3 + $0xf10] sm:$0xff]
          %v4382 = vld [vmem:[#allocation3 + $0xf18] sm:$0xff]
          %v4383 = vld [vmem:[#allocation3 + $0xf20] sm:$0xff]
          %v4384 = vld [vmem:[#allocation3 + $0xf28] sm:$0xff]
          %v4385 = vld [vmem:[#allocation3 + $0xf30] sm:$0xff]
          %v4386 = vld [vmem:[#allocation3 + $0xf38] sm:$0xff]
          %v4387 = vld [vmem:[#allocation3 + $0xf40] sm:$0xff]
          %v4388 = vld [vmem:[#allocation3 + $0xf48] sm:$0xff]
          %v4389 = vld [vmem:[#allocation3 + $0xf50] sm:$0xff]
          %v4390 = vld [vmem:[#allocation3 + $0xf58] sm:$0xff]
          %v4391 = vld [vmem:[#allocation3 + $0xf60] sm:$0xff]
          %v4392 = vld [vmem:[#allocation3 + $0xf68] sm:$0xff]
          %v4393 = vld [vmem:[#allocation3 + $0xf70] sm:$0xff]
          %v4394 = vld [vmem:[#allocation3 + $0xf78] sm:$0xff]
          %v4395 = vld [vmem:[#allocation3 + $0xf80] sm:$0xff]
          %v4396 = vld [vmem:[#allocation3 + $0xf88] sm:$0xff]
          %v4397 = vld [vmem:[#allocation3 + $0xf90] sm:$0xff]
          %v4398 = vld [vmem:[#allocation3 + $0xf98] sm:$0xff]
          %v4399 = vld [vmem:[#allocation3 + $0xfa0] sm:$0xff]
          %v4400 = vld [vmem:[#allocation3 + $0xfa8] sm:$0xff]
          %v4401 = vld [vmem:[#allocation3 + $0xfb0] sm:$0xff]
          %v4402 = vld [vmem:[#allocation3 + $0xfb8] sm:$0xff]
          %v4403 = vld [vmem:[#allocation3 + $0xfc0] sm:$0xff]
          %v4404 = vld [vmem:[#allocation3 + $0xfc8] sm:$0xff]
          %v4405 = vld [vmem:[#allocation3 + $0xfd0] sm:$0xff]
          %v4406 = vld [vmem:[#allocation3 + $0xfd8] sm:$0xff]
          %v4407 = vld [vmem:[#allocation3 + $0xfe0] sm:$0xff]
          %v4408 = vld [vmem:[#allocation3 + $0xfe8] sm:$0xff]
          %v4409 = vld [vmem:[#allocation3 + $0xff0] sm:$0xff]
          %v4410 = vld [vmem:[#allocation3 + $0xff8] sm:$0xff]
          %v4411 = vld [vmem:[%s4] sm:$0xff]
          %v4413 = vperm.slane %v4411, 0
          %v4414 = vperm.slane %v4411, 1
          %v4415 = vperm.slane %v4411, 2
          %v4416 = vperm.slane %v4411, 3
          %v4417 = vperm.slane %v4411, 4
          %v4418 = vperm.slane %v4411, 5
          %v4419 = vperm.slane %v4411, 6
          %v4420 = vperm.slane %v4411, 7
          %v4941 = vunpack.c.l.b16 %v3899
          %v4942 = vunpack.c.h.b16 %v3899
          %v4943 = vunpack.c.l.b16 %v3900
          %v4944 = vunpack.c.h.b16 %v3900
          %v4945 = vunpack.c.l.b16 %v3901
          %v4946 = vunpack.c.h.b16 %v3901
          %v4947 = vunpack.c.l.b16 %v3902
          %v4948 = vunpack.c.h.b16 %v3902
          %v4949 = vunpack.c.l.b16 %v3903
          %v4950 = vunpack.c.h.b16 %v3903
          %v4951 = vunpack.c.l.b16 %v3904
          %v4952 = vunpack.c.h.b16 %v3904
          %v4953 = vunpack.c.l.b16 %v3905
          %v4954 = vunpack.c.h.b16 %v3905
          %v4955 = vunpack.c.l.b16 %v3906
          %v4956 = vunpack.c.h.b16 %v3906
          %v4957 = vunpack.c.l.b16 %v3907
          %v4958 = vunpack.c.h.b16 %v3907
          %v4959 = vunpack.c.l.b16 %v3908
          %v4960 = vunpack.c.h.b16 %v3908
          %v4961 = vunpack.c.l.b16 %v3909
          %v4962 = vunpack.c.h.b16 %v3909
          %v4963 = vunpack.c.l.b16 %v3910
          %v4964 = vunpack.c.h.b16 %v3910
          %v4965 = vunpack.c.l.b16 %v3911
          %v4966 = vunpack.c.h.b16 %v3911
          %v4967 = vunpack.c.l.b16 %v3912
          %v4968 = vunpack.c.h.b16 %v3912
          %v4969 = vunpack.c.l.b16 %v3913
          %v4970 = vunpack.c.h.b16 %v3913
          %v4971 = vunpack.c.l.b16 %v3914
          %v4972 = vunpack.c.h.b16 %v3914
          %v4973 = vunpack.c.l.b16 %v3915
          %v4974 = vunpack.c.h.b16 %v3915
          %v4975 = vunpack.c.l.b16 %v3916
          %v4976 = vunpack.c.h.b16 %v3916
          %v4977 = vunpack.c.l.b16 %v3917
          %v4978 = vunpack.c.h.b16 %v3917
          %v4979 = vunpack.c.l.b16 %v3918
          %v4980 = vunpack.c.h.b16 %v3918
          %v4981 = vunpack.c.l.b16 %v3919
          %v4982 = vunpack.c.h.b16 %v3919
          %v4983 = vunpack.c.l.b16 %v3920
          %v4984 = vunpack.c.h.b16 %v3920
          %v4985 = vunpack.c.l.b16 %v3921
          %v4986 = vunpack.c.h.b16 %v3921
          %v4987 = vunpack.c.l.b16 %v3922
          %v4988 = vunpack.c.h.b16 %v3922
          %v4989 = vunpack.c.l.b16 %v3923
          %v4990 = vunpack.c.h.b16 %v3923
          %v4991 = vunpack.c.l.b16 %v3924
          %v4992 = vunpack.c.h.b16 %v3924
          %v4993 = vunpack.c.l.b16 %v3925
          %v4994 = vunpack.c.h.b16 %v3925
          %v4995 = vunpack.c.l.b16 %v3926
          %v4996 = vunpack.c.h.b16 %v3926
          %v4997 = vunpack.c.l.b16 %v3927
          %v4998 = vunpack.c.h.b16 %v3927
          %v4999 = vunpack.c.l.b16 %v3928
          %v5000 = vunpack.c.h.b16 %v3928
          %v5001 = vunpack.c.l.b16 %v3929
          %v5002 = vunpack.c.h.b16 %v3929
          %v5003 = vunpack.c.l.b16 %v3930
          %v5004 = vunpack.c.h.b16 %v3930
          %v5005 = vunpack.c.l.b16 %v3931
          %v5006 = vunpack.c.h.b16 %v3931
          %v5007 = vunpack.c.l.b16 %v3932
          %v5008 = vunpack.c.h.b16 %v3932
          %v5009 = vunpack.c.l.b16 %v3933
          %v5010 = vunpack.c.h.b16 %v3933
          %v5011 = vunpack.c.l.b16 %v3934
          %v5012 = vunpack.c.h.b16 %v3934
          %v5013 = vunpack.c.l.b16 %v3935
          %v5014 = vunpack.c.h.b16 %v3935
          %v5015 = vunpack.c.l.b16 %v3936
          %v5016 = vunpack.c.h.b16 %v3936
          %v5017 = vunpack.c.l.b16 %v3937
          %v5018 = vunpack.c.h.b16 %v3937
          %v5019 = vunpack.c.l.b16 %v3938
          %v5020 = vunpack.c.h.b16 %v3938
          %v5021 = vunpack.c.l.b16 %v3939
          %v5022 = vunpack.c.h.b16 %v3939
          %v5023 = vunpack.c.l.b16 %v3940
          %v5024 = vunpack.c.h.b16 %v3940
          %v5025 = vunpack.c.l.b16 %v3941
          %v5026 = vunpack.c.h.b16 %v3941
          %v5027 = vunpack.c.l.b16 %v3942
          %v5028 = vunpack.c.h.b16 %v3942
          %v5029 = vunpack.c.l.b16 %v3943
          %v5030 = vunpack.c.h.b16 %v3943
          %v5031 = vunpack.c.l.b16 %v3944
          %v5032 = vunpack.c.h.b16 %v3944
          %v5033 = vunpack.c.l.b16 %v3945
          %v5034 = vunpack.c.h.b16 %v3945
          %v5035 = vunpack.c.l.b16 %v3946
          %v5036 = vunpack.c.h.b16 %v3946
          %v5037 = vunpack.c.l.b16 %v3947
          %v5038 = vunpack.c.h.b16 %v3947
          %v5039 = vunpack.c.l.b16 %v3948
          %v5040 = vunpack.c.h.b16 %v3948
          %v5041 = vunpack.c.l.b16 %v3949
          %v5042 = vunpack.c.h.b16 %v3949
          %v5043 = vunpack.c.l.b16 %v3950
          %v5044 = vunpack.c.h.b16 %v3950
          %v5045 = vunpack.c.l.b16 %v3951
          %v5046 = vunpack.c.h.b16 %v3951
          %v5047 = vunpack.c.l.b16 %v3952
          %v5048 = vunpack.c.h.b16 %v3952
          %v5049 = vunpack.c.l.b16 %v3953
          %v5050 = vunpack.c.h.b16 %v3953
          %v5051 = vunpack.c.l.b16 %v3954
          %v5052 = vunpack.c.h.b16 %v3954
          %v5053 = vunpack.c.l.b16 %v3955
          %v5054 = vunpack.c.h.b16 %v3955
          %v5055 = vunpack.c.l.b16 %v3956
          %v5056 = vunpack.c.h.b16 %v3956
          %v5057 = vunpack.c.l.b16 %v3957
          %v5058 = vunpack.c.h.b16 %v3957
          %v5059 = vunpack.c.l.b16 %v3958
          %v5060 = vunpack.c.h.b16 %v3958
          %v5061 = vunpack.c.l.b16 %v3959
          %v5062 = vunpack.c.h.b16 %v3959
          %v5063 = vunpack.c.l.b16 %v3960
          %v5064 = vunpack.c.h.b16 %v3960
          %v5065 = vunpack.c.l.b16 %v3961
          %v5066 = vunpack.c.h.b16 %v3961
          %v5067 = vunpack.c.l.b16 %v3962
          %v5068 = vunpack.c.h.b16 %v3962
          %v5069 = vunpack.c.l.b16 %v3963
          %v5070 = vunpack.c.h.b16 %v3963
          %v5071 = vunpack.c.l.b16 %v3964
          %v5072 = vunpack.c.h.b16 %v3964
          %v5073 = vunpack.c.l.b16 %v3965
          %v5074 = vunpack.c.h.b16 %v3965
          %v5075 = vunpack.c.l.b16 %v3966
          %v5076 = vunpack.c.h.b16 %v3966
          %v5077 = vunpack.c.l.b16 %v3967
          %v5078 = vunpack.c.h.b16 %v3967
          %v5079 = vunpack.c.l.b16 %v3968
          %v5080 = vunpack.c.h.b16 %v3968
          %v5081 = vunpack.c.l.b16 %v3969
          %v5082 = vunpack.c.h.b16 %v3969
          %v5083 = vunpack.c.l.b16 %v3970
          %v5084 = vunpack.c.h.b16 %v3970
          %v5085 = vunpack.c.l.b16 %v3971
          %v5086 = vunpack.c.h.b16 %v3971
          %v5087 = vunpack.c.l.b16 %v3972
          %v5088 = vunpack.c.h.b16 %v3972
          %v5089 = vunpack.c.l.b16 %v3973
          %v5090 = vunpack.c.h.b16 %v3973
          %v5091 = vunpack.c.l.b16 %v3974
          %v5092 = vunpack.c.h.b16 %v3974
          %v5093 = vunpack.c.l.b16 %v3975
          %v5094 = vunpack.c.h.b16 %v3975
          %v5095 = vunpack.c.l.b16 %v3976
          %v5096 = vunpack.c.h.b16 %v3976
          %v5097 = vunpack.c.l.b16 %v3977
          %v5098 = vunpack.c.h.b16 %v3977
          %v5099 = vunpack.c.l.b16 %v3978
          %v5100 = vunpack.c.h.b16 %v3978
          %v5101 = vunpack.c.l.b16 %v3979
          %v5102 = vunpack.c.h.b16 %v3979
          %v5103 = vunpack.c.l.b16 %v3980
          %v5104 = vunpack.c.h.b16 %v3980
          %v5105 = vunpack.c.l.b16 %v3981
          %v5106 = vunpack.c.h.b16 %v3981
          %v5107 = vunpack.c.l.b16 %v3982
          %v5108 = vunpack.c.h.b16 %v3982
          %v5109 = vunpack.c.l.b16 %v3983
          %v5110 = vunpack.c.h.b16 %v3983
          %v5111 = vunpack.c.l.b16 %v3984
          %v5112 = vunpack.c.h.b16 %v3984
          %v5113 = vunpack.c.l.b16 %v3985
          %v5114 = vunpack.c.h.b16 %v3985
          %v5115 = vunpack.c.l.b16 %v3986
          %v5116 = vunpack.c.h.b16 %v3986
          %v5117 = vunpack.c.l.b16 %v3987
          %v5118 = vunpack.c.h.b16 %v3987
          %v5119 = vunpack.c.l.b16 %v3988
          %v5120 = vunpack.c.h.b16 %v3988
          %v5121 = vunpack.c.l.b16 %v3989
          %v5122 = vunpack.c.h.b16 %v3989
          %v5123 = vunpack.c.l.b16 %v3990
          %v5124 = vunpack.c.h.b16 %v3990
          %v5125 = vunpack.c.l.b16 %v3991
          %v5126 = vunpack.c.h.b16 %v3991
          %v5127 = vunpack.c.l.b16 %v3992
          %v5128 = vunpack.c.h.b16 %v3992
          %v5129 = vunpack.c.l.b16 %v3993
          %v5130 = vunpack.c.h.b16 %v3993
          %v5131 = vunpack.c.l.b16 %v3994
          %v5132 = vunpack.c.h.b16 %v3994
          %v5133 = vunpack.c.l.b16 %v3995
          %v5134 = vunpack.c.h.b16 %v3995
          %v5135 = vunpack.c.l.b16 %v3996
          %v5136 = vunpack.c.h.b16 %v3996
          %v5137 = vunpack.c.l.b16 %v3997
          %v5138 = vunpack.c.h.b16 %v3997
          %v5139 = vunpack.c.l.b16 %v3998
          %v5140 = vunpack.c.h.b16 %v3998
          %v5141 = vunpack.c.l.b16 %v3999
          %v5142 = vunpack.c.h.b16 %v3999
          %v5143 = vunpack.c.l.b16 %v4000
          %v5144 = vunpack.c.h.b16 %v4000
          %v5145 = vunpack.c.l.b16 %v4001
          %v5146 = vunpack.c.h.b16 %v4001
          %v5147 = vunpack.c.l.b16 %v4002
          %v5148 = vunpack.c.h.b16 %v4002
          %v5149 = vunpack.c.l.b16 %v4003
          %v5150 = vunpack.c.h.b16 %v4003
          %v5151 = vunpack.c.l.b16 %v4004
          %v5152 = vunpack.c.h.b16 %v4004
          %v5153 = vunpack.c.l.b16 %v4005
          %v5154 = vunpack.c.h.b16 %v4005
          %v5155 = vunpack.c.l.b16 %v4006
          %v5156 = vunpack.c.h.b16 %v4006
          %v5157 = vunpack.c.l.b16 %v4007
          %v5158 = vunpack.c.h.b16 %v4007
          %v5159 = vunpack.c.l.b16 %v4008
          %v5160 = vunpack.c.h.b16 %v4008
          %v5161 = vunpack.c.l.b16 %v4009
          %v5162 = vunpack.c.h.b16 %v4009
          %v5163 = vunpack.c.l.b16 %v4010
          %v5164 = vunpack.c.h.b16 %v4010
          %v5165 = vunpack.c.l.b16 %v4011
          %v5166 = vunpack.c.h.b16 %v4011
          %v5167 = vunpack.c.l.b16 %v4012
          %v5168 = vunpack.c.h.b16 %v4012
          %v5169 = vunpack.c.l.b16 %v4013
          %v5170 = vunpack.c.h.b16 %v4013
          %v5171 = vunpack.c.l.b16 %v4014
          %v5172 = vunpack.c.h.b16 %v4014
          %v5173 = vunpack.c.l.b16 %v4015
          %v5174 = vunpack.c.h.b16 %v4015
          %v5175 = vunpack.c.l.b16 %v4016
          %v5176 = vunpack.c.h.b16 %v4016
          %v5177 = vunpack.c.l.b16 %v4017
          %v5178 = vunpack.c.h.b16 %v4017
          %v5179 = vunpack.c.l.b16 %v4018
          %v5180 = vunpack.c.h.b16 %v4018
          %v5181 = vunpack.c.l.b16 %v4019
          %v5182 = vunpack.c.h.b16 %v4019
          %v5183 = vunpack.c.l.b16 %v4020
          %v5184 = vunpack.c.h.b16 %v4020
          %v5185 = vunpack.c.l.b16 %v4021
          %v5186 = vunpack.c.h.b16 %v4021
          %v5187 = vunpack.c.l.b16 %v4022
          %v5188 = vunpack.c.h.b16 %v4022
          %v5189 = vunpack.c.l.b16 %v4023
          %v5190 = vunpack.c.h.b16 %v4023
          %v5191 = vunpack.c.l.b16 %v4024
          %v5192 = vunpack.c.h.b16 %v4024
          %v5193 = vunpack.c.l.b16 %v4025
          %v5194 = vunpack.c.h.b16 %v4025
          %v5195 = vunpack.c.l.b16 %v4026
          %v5196 = vunpack.c.h.b16 %v4026
          %v5197 = vunpack.c.l.b16 %v4027
          %v5198 = vunpack.c.h.b16 %v4027
          %v5199 = vunpack.c.l.b16 %v4028
          %v5200 = vunpack.c.h.b16 %v4028
          %v5201 = vunpack.c.l.b16 %v4029
          %v5202 = vunpack.c.h.b16 %v4029
          %v5203 = vunpack.c.l.b16 %v4030
          %v5204 = vunpack.c.h.b16 %v4030
          %v5205 = vunpack.c.l.b16 %v4031
          %v5206 = vunpack.c.h.b16 %v4031
          %v5207 = vunpack.c.l.b16 %v4032
          %v5208 = vunpack.c.h.b16 %v4032
          %v5209 = vunpack.c.l.b16 %v4033
          %v5210 = vunpack.c.h.b16 %v4033
          %v5211 = vunpack.c.l.b16 %v4034
          %v5212 = vunpack.c.h.b16 %v4034
          %v5213 = vunpack.c.l.b16 %v4035
          %v5214 = vunpack.c.h.b16 %v4035
          %v5215 = vunpack.c.l.b16 %v4036
          %v5216 = vunpack.c.h.b16 %v4036
          %v5217 = vunpack.c.l.b16 %v4037
          %v5218 = vunpack.c.h.b16 %v4037
          %v5219 = vunpack.c.l.b16 %v4038
          %v5220 = vunpack.c.h.b16 %v4038
          %v5221 = vunpack.c.l.b16 %v4039
          %v5222 = vunpack.c.h.b16 %v4039
          %v5223 = vunpack.c.l.b16 %v4040
          %v5224 = vunpack.c.h.b16 %v4040
          %v5225 = vunpack.c.l.b16 %v4041
          %v5226 = vunpack.c.h.b16 %v4041
          %v5227 = vunpack.c.l.b16 %v4042
          %v5228 = vunpack.c.h.b16 %v4042
          %v5229 = vunpack.c.l.b16 %v4043
          %v5230 = vunpack.c.h.b16 %v4043
          %v5231 = vunpack.c.l.b16 %v4044
          %v5232 = vunpack.c.h.b16 %v4044
          %v5233 = vunpack.c.l.b16 %v4045
          %v5234 = vunpack.c.h.b16 %v4045
          %v5235 = vunpack.c.l.b16 %v4046
          %v5236 = vunpack.c.h.b16 %v4046
          %v5237 = vunpack.c.l.b16 %v4047
          %v5238 = vunpack.c.h.b16 %v4047
          %v5239 = vunpack.c.l.b16 %v4048
          %v5240 = vunpack.c.h.b16 %v4048
          %v5241 = vunpack.c.l.b16 %v4049
          %v5242 = vunpack.c.h.b16 %v4049
          %v5243 = vunpack.c.l.b16 %v4050
          %v5244 = vunpack.c.h.b16 %v4050
          %v5245 = vunpack.c.l.b16 %v4051
          %v5246 = vunpack.c.h.b16 %v4051
          %v5247 = vunpack.c.l.b16 %v4052
          %v5248 = vunpack.c.h.b16 %v4052
          %v5249 = vunpack.c.l.b16 %v4053
          %v5250 = vunpack.c.h.b16 %v4053
          %v5251 = vunpack.c.l.b16 %v4054
          %v5252 = vunpack.c.h.b16 %v4054
          %v5253 = vunpack.c.l.b16 %v4055
          %v5254 = vunpack.c.h.b16 %v4055
          %v5255 = vunpack.c.l.b16 %v4056
          %v5256 = vunpack.c.h.b16 %v4056
          %v5257 = vunpack.c.l.b16 %v4057
          %v5258 = vunpack.c.h.b16 %v4057
          %v5259 = vunpack.c.l.b16 %v4058
          %v5260 = vunpack.c.h.b16 %v4058
          %v5261 = vunpack.c.l.b16 %v4059
          %v5262 = vunpack.c.h.b16 %v4059
          %v5263 = vunpack.c.l.b16 %v4060
          %v5264 = vunpack.c.h.b16 %v4060
          %v5265 = vunpack.c.l.b16 %v4061
          %v5266 = vunpack.c.h.b16 %v4061
          %v5267 = vunpack.c.l.b16 %v4062
          %v5268 = vunpack.c.h.b16 %v4062
          %v5269 = vunpack.c.l.b16 %v4063
          %v5270 = vunpack.c.h.b16 %v4063
          %v5271 = vunpack.c.l.b16 %v4064
          %v5272 = vunpack.c.h.b16 %v4064
          %v5273 = vunpack.c.l.b16 %v4065
          %v5274 = vunpack.c.h.b16 %v4065
          %v5275 = vunpack.c.l.b16 %v4066
          %v5276 = vunpack.c.h.b16 %v4066
          %v5277 = vunpack.c.l.b16 %v4067
          %v5278 = vunpack.c.h.b16 %v4067
          %v5279 = vunpack.c.l.b16 %v4068
          %v5280 = vunpack.c.h.b16 %v4068
          %v5281 = vunpack.c.l.b16 %v4069
          %v5282 = vunpack.c.h.b16 %v4069
          %v5283 = vunpack.c.l.b16 %v4070
          %v5284 = vunpack.c.h.b16 %v4070
          %v5285 = vunpack.c.l.b16 %v4071
          %v5286 = vunpack.c.h.b16 %v4071
          %v5287 = vunpack.c.l.b16 %v4072
          %v5288 = vunpack.c.h.b16 %v4072
          %v5289 = vunpack.c.l.b16 %v4073
          %v5290 = vunpack.c.h.b16 %v4073
          %v5291 = vunpack.c.l.b16 %v4074
          %v5292 = vunpack.c.h.b16 %v4074
          %v5293 = vunpack.c.l.b16 %v4075
          %v5294 = vunpack.c.h.b16 %v4075
          %v5295 = vunpack.c.l.b16 %v4076
          %v5296 = vunpack.c.h.b16 %v4076
          %v5297 = vunpack.c.l.b16 %v4077
          %v5298 = vunpack.c.h.b16 %v4077
          %v5299 = vunpack.c.l.b16 %v4078
          %v5300 = vunpack.c.h.b16 %v4078
          %v5301 = vunpack.c.l.b16 %v4079
          %v5302 = vunpack.c.h.b16 %v4079
          %v5303 = vunpack.c.l.b16 %v4080
          %v5304 = vunpack.c.h.b16 %v4080
          %v5305 = vunpack.c.l.b16 %v4081
          %v5306 = vunpack.c.h.b16 %v4081
          %v5307 = vunpack.c.l.b16 %v4082
          %v5308 = vunpack.c.h.b16 %v4082
          %v5309 = vunpack.c.l.b16 %v4083
          %v5310 = vunpack.c.h.b16 %v4083
          %v5311 = vunpack.c.l.b16 %v4084
          %v5312 = vunpack.c.h.b16 %v4084
          %v5313 = vunpack.c.l.b16 %v4085
          %v5314 = vunpack.c.h.b16 %v4085
          %v5315 = vunpack.c.l.b16 %v4086
          %v5316 = vunpack.c.h.b16 %v4086
          %v5317 = vunpack.c.l.b16 %v4087
          %v5318 = vunpack.c.h.b16 %v4087
          %v5319 = vunpack.c.l.b16 %v4088
          %v5320 = vunpack.c.h.b16 %v4088
          %v5321 = vunpack.c.l.b16 %v4089
          %v5322 = vunpack.c.h.b16 %v4089
          %v5323 = vunpack.c.l.b16 %v4090
          %v5324 = vunpack.c.h.b16 %v4090
          %v5325 = vunpack.c.l.b16 %v4091
          %v5326 = vunpack.c.h.b16 %v4091
          %v5327 = vunpack.c.l.b16 %v4092
          %v5328 = vunpack.c.h.b16 %v4092
          %v5329 = vunpack.c.l.b16 %v4093
          %v5330 = vunpack.c.h.b16 %v4093
          %v5331 = vunpack.c.l.b16 %v4094
          %v5332 = vunpack.c.h.b16 %v4094
          %v5333 = vunpack.c.l.b16 %v4095
          %v5334 = vunpack.c.h.b16 %v4095
          %v5335 = vunpack.c.l.b16 %v4096
          %v5336 = vunpack.c.h.b16 %v4096
          %v5337 = vunpack.c.l.b16 %v4097
          %v5338 = vunpack.c.h.b16 %v4097
          %v5339 = vunpack.c.l.b16 %v4098
          %v5340 = vunpack.c.h.b16 %v4098
          %v5341 = vunpack.c.l.b16 %v4099
          %v5342 = vunpack.c.h.b16 %v4099
          %v5343 = vunpack.c.l.b16 %v4100
          %v5344 = vunpack.c.h.b16 %v4100
          %v5345 = vunpack.c.l.b16 %v4101
          %v5346 = vunpack.c.h.b16 %v4101
          %v5347 = vunpack.c.l.b16 %v4102
          %v5348 = vunpack.c.h.b16 %v4102
          %v5349 = vunpack.c.l.b16 %v4103
          %v5350 = vunpack.c.h.b16 %v4103
          %v5351 = vunpack.c.l.b16 %v4104
          %v5352 = vunpack.c.h.b16 %v4104
          %v5353 = vunpack.c.l.b16 %v4105
          %v5354 = vunpack.c.h.b16 %v4105
          %v5355 = vunpack.c.l.b16 %v4106
          %v5356 = vunpack.c.h.b16 %v4106
          %v5357 = vunpack.c.l.b16 %v4107
          %v5358 = vunpack.c.h.b16 %v4107
          %v5359 = vunpack.c.l.b16 %v4108
          %v5360 = vunpack.c.h.b16 %v4108
          %v5361 = vunpack.c.l.b16 %v4109
          %v5362 = vunpack.c.h.b16 %v4109
          %v5363 = vunpack.c.l.b16 %v4110
          %v5364 = vunpack.c.h.b16 %v4110
          %v5365 = vunpack.c.l.b16 %v4111
          %v5366 = vunpack.c.h.b16 %v4111
          %v5367 = vunpack.c.l.b16 %v4112
          %v5368 = vunpack.c.h.b16 %v4112
          %v5369 = vunpack.c.l.b16 %v4113
          %v5370 = vunpack.c.h.b16 %v4113
          %v5371 = vunpack.c.l.b16 %v4114
          %v5372 = vunpack.c.h.b16 %v4114
          %v5373 = vunpack.c.l.b16 %v4115
          %v5374 = vunpack.c.h.b16 %v4115
          %v5375 = vunpack.c.l.b16 %v4116
          %v5376 = vunpack.c.h.b16 %v4116
          %v5377 = vunpack.c.l.b16 %v4117
          %v5378 = vunpack.c.h.b16 %v4117
          %v5379 = vunpack.c.l.b16 %v4118
          %v5380 = vunpack.c.h.b16 %v4118
          %v5381 = vunpack.c.l.b16 %v4119
          %v5382 = vunpack.c.h.b16 %v4119
          %v5383 = vunpack.c.l.b16 %v4120
          %v5384 = vunpack.c.h.b16 %v4120
          %v5385 = vunpack.c.l.b16 %v4121
          %v5386 = vunpack.c.h.b16 %v4121
          %v5387 = vunpack.c.l.b16 %v4122
          %v5388 = vunpack.c.h.b16 %v4122
          %v5389 = vunpack.c.l.b16 %v4123
          %v5390 = vunpack.c.h.b16 %v4123
          %v5391 = vunpack.c.l.b16 %v4124
          %v5392 = vunpack.c.h.b16 %v4124
          %v5393 = vunpack.c.l.b16 %v4125
          %v5394 = vunpack.c.h.b16 %v4125
          %v5395 = vunpack.c.l.b16 %v4126
          %v5396 = vunpack.c.h.b16 %v4126
          %v5397 = vunpack.c.l.b16 %v4127
          %v5398 = vunpack.c.h.b16 %v4127
          %v5399 = vunpack.c.l.b16 %v4128
          %v5400 = vunpack.c.h.b16 %v4128
          %v5401 = vunpack.c.l.b16 %v4129
          %v5402 = vunpack.c.h.b16 %v4129
          %v5403 = vunpack.c.l.b16 %v4130
          %v5404 = vunpack.c.h.b16 %v4130
          %v5405 = vunpack.c.l.b16 %v4131
          %v5406 = vunpack.c.h.b16 %v4131
          %v5407 = vunpack.c.l.b16 %v4132
          %v5408 = vunpack.c.h.b16 %v4132
          %v5409 = vunpack.c.l.b16 %v4133
          %v5410 = vunpack.c.h.b16 %v4133
          %v5411 = vunpack.c.l.b16 %v4134
          %v5412 = vunpack.c.h.b16 %v4134
          %v5413 = vunpack.c.l.b16 %v4135
          %v5414 = vunpack.c.h.b16 %v4135
          %v5415 = vunpack.c.l.b16 %v4136
          %v5416 = vunpack.c.h.b16 %v4136
          %v5417 = vunpack.c.l.b16 %v4137
          %v5418 = vunpack.c.h.b16 %v4137
          %v5419 = vunpack.c.l.b16 %v4138
          %v5420 = vunpack.c.h.b16 %v4138
          %v5421 = vunpack.c.l.b16 %v4139
          %v5422 = vunpack.c.h.b16 %v4139
          %v5423 = vunpack.c.l.b16 %v4140
          %v5424 = vunpack.c.h.b16 %v4140
          %v5425 = vunpack.c.l.b16 %v4141
          %v5426 = vunpack.c.h.b16 %v4141
          %v5427 = vunpack.c.l.b16 %v4142
          %v5428 = vunpack.c.h.b16 %v4142
          %v5429 = vunpack.c.l.b16 %v4143
          %v5430 = vunpack.c.h.b16 %v4143
          %v5431 = vunpack.c.l.b16 %v4144
          %v5432 = vunpack.c.h.b16 %v4144
          %v5433 = vunpack.c.l.b16 %v4145
          %v5434 = vunpack.c.h.b16 %v4145
          %v5435 = vunpack.c.l.b16 %v4146
          %v5436 = vunpack.c.h.b16 %v4146
          %v5437 = vunpack.c.l.b16 %v4147
          %v5438 = vunpack.c.h.b16 %v4147
          %v5439 = vunpack.c.l.b16 %v4148
          %v5440 = vunpack.c.h.b16 %v4148
          %v5441 = vunpack.c.l.b16 %v4149
          %v5442 = vunpack.c.h.b16 %v4149
          %v5443 = vunpack.c.l.b16 %v4150
          %v5444 = vunpack.c.h.b16 %v4150
          %v5445 = vunpack.c.l.b16 %v4151
          %v5446 = vunpack.c.h.b16 %v4151
          %v5447 = vunpack.c.l.b16 %v4152
          %v5448 = vunpack.c.h.b16 %v4152
          %v5449 = vunpack.c.l.b16 %v4153
          %v5450 = vunpack.c.h.b16 %v4153
          %v5451 = vunpack.c.l.b16 %v4154
          %v5452 = vunpack.c.h.b16 %v4154
          %v5453 = vunpack.c.l.b16 %v4155
          %v5454 = vunpack.c.h.b16 %v4155
          %v5455 = vunpack.c.l.b16 %v4156
          %v5456 = vunpack.c.h.b16 %v4156
          %v5457 = vunpack.c.l.b16 %v4157
          %v5458 = vunpack.c.h.b16 %v4157
          %v5459 = vunpack.c.l.b16 %v4158
          %v5460 = vunpack.c.h.b16 %v4158
          %v5461 = vunpack.c.l.b16 %v4159
          %v5462 = vunpack.c.h.b16 %v4159
          %v5463 = vunpack.c.l.b16 %v4160
          %v5464 = vunpack.c.h.b16 %v4160
          %v5465 = vunpack.c.l.b16 %v4161
          %v5466 = vunpack.c.h.b16 %v4161
          %v5467 = vunpack.c.l.b16 %v4162
          %v5468 = vunpack.c.h.b16 %v4162
          %v5469 = vunpack.c.l.b16 %v4163
          %v5470 = vunpack.c.h.b16 %v4163
          %v5471 = vunpack.c.l.b16 %v4164
          %v5472 = vunpack.c.h.b16 %v4164
          %v5473 = vunpack.c.l.b16 %v4165
          %v5474 = vunpack.c.h.b16 %v4165
          %v5475 = vunpack.c.l.b16 %v4166
          %v5476 = vunpack.c.h.b16 %v4166
          %v5477 = vunpack.c.l.b16 %v4167
          %v5478 = vunpack.c.h.b16 %v4167
          %v5479 = vunpack.c.l.b16 %v4168
          %v5480 = vunpack.c.h.b16 %v4168
          %v5481 = vunpack.c.l.b16 %v4169
          %v5482 = vunpack.c.h.b16 %v4169
          %v5483 = vunpack.c.l.b16 %v4170
          %v5484 = vunpack.c.h.b16 %v4170
          %v5485 = vunpack.c.l.b16 %v4171
          %v5486 = vunpack.c.h.b16 %v4171
          %v5487 = vunpack.c.l.b16 %v4172
          %v5488 = vunpack.c.h.b16 %v4172
          %v5489 = vunpack.c.l.b16 %v4173
          %v5490 = vunpack.c.h.b16 %v4173
          %v5491 = vunpack.c.l.b16 %v4174
          %v5492 = vunpack.c.h.b16 %v4174
          %v5493 = vunpack.c.l.b16 %v4175
          %v5494 = vunpack.c.h.b16 %v4175
          %v5495 = vunpack.c.l.b16 %v4176
          %v5496 = vunpack.c.h.b16 %v4176
          %v5497 = vunpack.c.l.b16 %v4177
          %v5498 = vunpack.c.h.b16 %v4177
          %v5499 = vunpack.c.l.b16 %v4178
          %v5500 = vunpack.c.h.b16 %v4178
          %v5501 = vunpack.c.l.b16 %v4179
          %v5502 = vunpack.c.h.b16 %v4179
          %v5503 = vunpack.c.l.b16 %v4180
          %v5504 = vunpack.c.h.b16 %v4180
          %v5505 = vunpack.c.l.b16 %v4181
          %v5506 = vunpack.c.h.b16 %v4181
          %v5507 = vunpack.c.l.b16 %v4182
          %v5508 = vunpack.c.h.b16 %v4182
          %v5509 = vunpack.c.l.b16 %v4183
          %v5510 = vunpack.c.h.b16 %v4183
          %v5511 = vunpack.c.l.b16 %v4184
          %v5512 = vunpack.c.h.b16 %v4184
          %v5513 = vunpack.c.l.b16 %v4185
          %v5514 = vunpack.c.h.b16 %v4185
          %v5515 = vunpack.c.l.b16 %v4186
          %v5516 = vunpack.c.h.b16 %v4186
          %v5517 = vunpack.c.l.b16 %v4187
          %v5518 = vunpack.c.h.b16 %v4187
          %v5519 = vunpack.c.l.b16 %v4188
          %v5520 = vunpack.c.h.b16 %v4188
          %v5521 = vunpack.c.l.b16 %v4189
          %v5522 = vunpack.c.h.b16 %v4189
          %v5523 = vunpack.c.l.b16 %v4190
          %v5524 = vunpack.c.h.b16 %v4190
          %v5525 = vunpack.c.l.b16 %v4191
          %v5526 = vunpack.c.h.b16 %v4191
          %v5527 = vunpack.c.l.b16 %v4192
          %v5528 = vunpack.c.h.b16 %v4192
          %v5529 = vunpack.c.l.b16 %v4193
          %v5530 = vunpack.c.h.b16 %v4193
          %v5531 = vunpack.c.l.b16 %v4194
          %v5532 = vunpack.c.h.b16 %v4194
          %v5533 = vunpack.c.l.b16 %v4195
          %v5534 = vunpack.c.h.b16 %v4195
          %v5535 = vunpack.c.l.b16 %v4196
          %v5536 = vunpack.c.h.b16 %v4196
          %v5537 = vunpack.c.l.b16 %v4197
          %v5538 = vunpack.c.h.b16 %v4197
          %v5539 = vunpack.c.l.b16 %v4198
          %v5540 = vunpack.c.h.b16 %v4198
          %v5541 = vunpack.c.l.b16 %v4199
          %v5542 = vunpack.c.h.b16 %v4199
          %v5543 = vunpack.c.l.b16 %v4200
          %v5544 = vunpack.c.h.b16 %v4200
          %v5545 = vunpack.c.l.b16 %v4201
          %v5546 = vunpack.c.h.b16 %v4201
          %v5547 = vunpack.c.l.b16 %v4202
          %v5548 = vunpack.c.h.b16 %v4202
          %v5549 = vunpack.c.l.b16 %v4203
          %v5550 = vunpack.c.h.b16 %v4203
          %v5551 = vunpack.c.l.b16 %v4204
          %v5552 = vunpack.c.h.b16 %v4204
          %v5553 = vunpack.c.l.b16 %v4205
          %v5554 = vunpack.c.h.b16 %v4205
          %v5555 = vunpack.c.l.b16 %v4206
          %v5556 = vunpack.c.h.b16 %v4206
          %v5557 = vunpack.c.l.b16 %v4207
          %v5558 = vunpack.c.h.b16 %v4207
          %v5559 = vunpack.c.l.b16 %v4208
          %v5560 = vunpack.c.h.b16 %v4208
          %v5561 = vunpack.c.l.b16 %v4209
          %v5562 = vunpack.c.h.b16 %v4209
          %v5563 = vunpack.c.l.b16 %v4210
          %v5564 = vunpack.c.h.b16 %v4210
          %v5565 = vunpack.c.l.b16 %v4211
          %v5566 = vunpack.c.h.b16 %v4211
          %v5567 = vunpack.c.l.b16 %v4212
          %v5568 = vunpack.c.h.b16 %v4212
          %v5569 = vunpack.c.l.b16 %v4213
          %v5570 = vunpack.c.h.b16 %v4213
          %v5571 = vunpack.c.l.b16 %v4214
          %v5572 = vunpack.c.h.b16 %v4214
          %v5573 = vunpack.c.l.b16 %v4215
          %v5574 = vunpack.c.h.b16 %v4215
          %v5575 = vunpack.c.l.b16 %v4216
          %v5576 = vunpack.c.h.b16 %v4216
          %v5577 = vunpack.c.l.b16 %v4217
          %v5578 = vunpack.c.h.b16 %v4217
          %v5579 = vunpack.c.l.b16 %v4218
          %v5580 = vunpack.c.h.b16 %v4218
          %v5581 = vunpack.c.l.b16 %v4219
          %v5582 = vunpack.c.h.b16 %v4219
          %v5583 = vunpack.c.l.b16 %v4220
          %v5584 = vunpack.c.h.b16 %v4220
          %v5585 = vunpack.c.l.b16 %v4221
          %v5586 = vunpack.c.h.b16 %v4221
          %v5587 = vunpack.c.l.b16 %v4222
          %v5588 = vunpack.c.h.b16 %v4222
          %v5589 = vunpack.c.l.b16 %v4223
          %v5590 = vunpack.c.h.b16 %v4223
          %v5591 = vunpack.c.l.b16 %v4224
          %v5592 = vunpack.c.h.b16 %v4224
          %v5593 = vunpack.c.l.b16 %v4225
          %v5594 = vunpack.c.h.b16 %v4225
          %v5595 = vunpack.c.l.b16 %v4226
          %v5596 = vunpack.c.h.b16 %v4226
          %v5597 = vunpack.c.l.b16 %v4227
          %v5598 = vunpack.c.h.b16 %v4227
          %v5599 = vunpack.c.l.b16 %v4228
          %v5600 = vunpack.c.h.b16 %v4228
          %v5601 = vunpack.c.l.b16 %v4229
          %v5602 = vunpack.c.h.b16 %v4229
          %v5603 = vunpack.c.l.b16 %v4230
          %v5604 = vunpack.c.h.b16 %v4230
          %v5605 = vunpack.c.l.b16 %v4231
          %v5606 = vunpack.c.h.b16 %v4231
          %v5607 = vunpack.c.l.b16 %v4232
          %v5608 = vunpack.c.h.b16 %v4232
          %v5609 = vunpack.c.l.b16 %v4233
          %v5610 = vunpack.c.h.b16 %v4233
          %v5611 = vunpack.c.l.b16 %v4234
          %v5612 = vunpack.c.h.b16 %v4234
          %v5613 = vunpack.c.l.b16 %v4235
          %v5614 = vunpack.c.h.b16 %v4235
          %v5615 = vunpack.c.l.b16 %v4236
          %v5616 = vunpack.c.h.b16 %v4236
          %v5617 = vunpack.c.l.b16 %v4237
          %v5618 = vunpack.c.h.b16 %v4237
          %v5619 = vunpack.c.l.b16 %v4238
          %v5620 = vunpack.c.h.b16 %v4238
          %v5621 = vunpack.c.l.b16 %v4239
          %v5622 = vunpack.c.h.b16 %v4239
          %v5623 = vunpack.c.l.b16 %v4240
          %v5624 = vunpack.c.h.b16 %v4240
          %v5625 = vunpack.c.l.b16 %v4241
          %v5626 = vunpack.c.h.b16 %v4241
          %v5627 = vunpack.c.l.b16 %v4242
          %v5628 = vunpack.c.h.b16 %v4242
          %v5629 = vunpack.c.l.b16 %v4243
          %v5630 = vunpack.c.h.b16 %v4243
          %v5631 = vunpack.c.l.b16 %v4244
          %v5632 = vunpack.c.h.b16 %v4244
          %v5633 = vunpack.c.l.b16 %v4245
          %v5634 = vunpack.c.h.b16 %v4245
          %v5635 = vunpack.c.l.b16 %v4246
          %v5636 = vunpack.c.h.b16 %v4246
          %v5637 = vunpack.c.l.b16 %v4247
          %v5638 = vunpack.c.h.b16 %v4247
          %v5639 = vunpack.c.l.b16 %v4248
          %v5640 = vunpack.c.h.b16 %v4248
          %v5641 = vunpack.c.l.b16 %v4249
          %v5642 = vunpack.c.h.b16 %v4249
          %v5643 = vunpack.c.l.b16 %v4250
          %v5644 = vunpack.c.h.b16 %v4250
          %v5645 = vunpack.c.l.b16 %v4251
          %v5646 = vunpack.c.h.b16 %v4251
          %v5647 = vunpack.c.l.b16 %v4252
          %v5648 = vunpack.c.h.b16 %v4252
          %v5649 = vunpack.c.l.b16 %v4253
          %v5650 = vunpack.c.h.b16 %v4253
          %v5651 = vunpack.c.l.b16 %v4254
          %v5652 = vunpack.c.h.b16 %v4254
          %v5653 = vunpack.c.l.b16 %v4255
          %v5654 = vunpack.c.h.b16 %v4255
          %v5655 = vunpack.c.l.b16 %v4256
          %v5656 = vunpack.c.h.b16 %v4256
          %v5657 = vunpack.c.l.b16 %v4257
          %v5658 = vunpack.c.h.b16 %v4257
          %v5659 = vunpack.c.l.b16 %v4258
          %v5660 = vunpack.c.h.b16 %v4258
          %v5661 = vunpack.c.l.b16 %v4259
          %v5662 = vunpack.c.h.b16 %v4259
          %v5663 = vunpack.c.l.b16 %v4260
          %v5664 = vunpack.c.h.b16 %v4260
          %v5665 = vunpack.c.l.b16 %v4261
          %v5666 = vunpack.c.h.b16 %v4261
          %v5667 = vunpack.c.l.b16 %v4262
          %v5668 = vunpack.c.h.b16 %v4262
          %v5669 = vunpack.c.l.b16 %v4263
          %v5670 = vunpack.c.h.b16 %v4263
          %v5671 = vunpack.c.l.b16 %v4264
          %v5672 = vunpack.c.h.b16 %v4264
          %v5673 = vunpack.c.l.b16 %v4265
          %v5674 = vunpack.c.h.b16 %v4265
          %v5675 = vunpack.c.l.b16 %v4266
          %v5676 = vunpack.c.h.b16 %v4266
          %v5677 = vunpack.c.l.b16 %v4267
          %v5678 = vunpack.c.h.b16 %v4267
          %v5679 = vunpack.c.l.b16 %v4268
          %v5680 = vunpack.c.h.b16 %v4268
          %v5681 = vunpack.c.l.b16 %v4269
          %v5682 = vunpack.c.h.b16 %v4269
          %v5683 = vunpack.c.l.b16 %v4270
          %v5684 = vunpack.c.h.b16 %v4270
          %v5685 = vunpack.c.l.b16 %v4271
          %v5686 = vunpack.c.h.b16 %v4271
          %v5687 = vunpack.c.l.b16 %v4272
          %v5688 = vunpack.c.h.b16 %v4272
          %v5689 = vunpack.c.l.b16 %v4273
          %v5690 = vunpack.c.h.b16 %v4273
          %v5691 = vunpack.c.l.b16 %v4274
          %v5692 = vunpack.c.h.b16 %v4274
          %v5693 = vunpack.c.l.b16 %v4275
          %v5694 = vunpack.c.h.b16 %v4275
          %v5695 = vunpack.c.l.b16 %v4276
          %v5696 = vunpack.c.h.b16 %v4276
          %v5697 = vunpack.c.l.b16 %v4277
          %v5698 = vunpack.c.h.b16 %v4277
          %v5699 = vunpack.c.l.b16 %v4278
          %v5700 = vunpack.c.h.b16 %v4278
          %v5701 = vunpack.c.l.b16 %v4279
          %v5702 = vunpack.c.h.b16 %v4279
          %v5703 = vunpack.c.l.b16 %v4280
          %v5704 = vunpack.c.h.b16 %v4280
          %v5705 = vunpack.c.l.b16 %v4281
          %v5706 = vunpack.c.h.b16 %v4281
          %v5707 = vunpack.c.l.b16 %v4282
          %v5708 = vunpack.c.h.b16 %v4282
          %v5709 = vunpack.c.l.b16 %v4283
          %v5710 = vunpack.c.h.b16 %v4283
          %v5711 = vunpack.c.l.b16 %v4284
          %v5712 = vunpack.c.h.b16 %v4284
          %v5713 = vunpack.c.l.b16 %v4285
          %v5714 = vunpack.c.h.b16 %v4285
          %v5715 = vunpack.c.l.b16 %v4286
          %v5716 = vunpack.c.h.b16 %v4286
          %v5717 = vunpack.c.l.b16 %v4287
          %v5718 = vunpack.c.h.b16 %v4287
          %v5719 = vunpack.c.l.b16 %v4288
          %v5720 = vunpack.c.h.b16 %v4288
          %v5721 = vunpack.c.l.b16 %v4289
          %v5722 = vunpack.c.h.b16 %v4289
          %v5723 = vunpack.c.l.b16 %v4290
          %v5724 = vunpack.c.h.b16 %v4290
          %v5725 = vunpack.c.l.b16 %v4291
          %v5726 = vunpack.c.h.b16 %v4291
          %v5727 = vunpack.c.l.b16 %v4292
          %v5728 = vunpack.c.h.b16 %v4292
          %v5729 = vunpack.c.l.b16 %v4293
          %v5730 = vunpack.c.h.b16 %v4293
          %v5731 = vunpack.c.l.b16 %v4294
          %v5732 = vunpack.c.h.b16 %v4294
          %v5733 = vunpack.c.l.b16 %v4295
          %v5734 = vunpack.c.h.b16 %v4295
          %v5735 = vunpack.c.l.b16 %v4296
          %v5736 = vunpack.c.h.b16 %v4296
          %v5737 = vunpack.c.l.b16 %v4297
          %v5738 = vunpack.c.h.b16 %v4297
          %v5739 = vunpack.c.l.b16 %v4298
          %v5740 = vunpack.c.h.b16 %v4298
          %v5741 = vunpack.c.l.b16 %v4299
          %v5742 = vunpack.c.h.b16 %v4299
          %v5743 = vunpack.c.l.b16 %v4300
          %v5744 = vunpack.c.h.b16 %v4300
          %v5745 = vunpack.c.l.b16 %v4301
          %v5746 = vunpack.c.h.b16 %v4301
          %v5747 = vunpack.c.l.b16 %v4302
          %v5748 = vunpack.c.h.b16 %v4302
          %v5749 = vunpack.c.l.b16 %v4303
          %v5750 = vunpack.c.h.b16 %v4303
          %v5751 = vunpack.c.l.b16 %v4304
          %v5752 = vunpack.c.h.b16 %v4304
          %v5753 = vunpack.c.l.b16 %v4305
          %v5754 = vunpack.c.h.b16 %v4305
          %v5755 = vunpack.c.l.b16 %v4306
          %v5756 = vunpack.c.h.b16 %v4306
          %v5757 = vunpack.c.l.b16 %v4307
          %v5758 = vunpack.c.h.b16 %v4307
          %v5759 = vunpack.c.l.b16 %v4308
          %v5760 = vunpack.c.h.b16 %v4308
          %v5761 = vunpack.c.l.b16 %v4309
          %v5762 = vunpack.c.h.b16 %v4309
          %v5763 = vunpack.c.l.b16 %v4310
          %v5764 = vunpack.c.h.b16 %v4310
          %v5765 = vunpack.c.l.b16 %v4311
          %v5766 = vunpack.c.h.b16 %v4311
          %v5767 = vunpack.c.l.b16 %v4312
          %v5768 = vunpack.c.h.b16 %v4312
          %v5769 = vunpack.c.l.b16 %v4313
          %v5770 = vunpack.c.h.b16 %v4313
          %v5771 = vunpack.c.l.b16 %v4314
          %v5772 = vunpack.c.h.b16 %v4314
          %v5773 = vunpack.c.l.b16 %v4315
          %v5774 = vunpack.c.h.b16 %v4315
          %v5775 = vunpack.c.l.b16 %v4316
          %v5776 = vunpack.c.h.b16 %v4316
          %v5777 = vunpack.c.l.b16 %v4317
          %v5778 = vunpack.c.h.b16 %v4317
          %v5779 = vunpack.c.l.b16 %v4318
          %v5780 = vunpack.c.h.b16 %v4318
          %v5781 = vunpack.c.l.b16 %v4319
          %v5782 = vunpack.c.h.b16 %v4319
          %v5783 = vunpack.c.l.b16 %v4320
          %v5784 = vunpack.c.h.b16 %v4320
          %v5785 = vunpack.c.l.b16 %v4321
          %v5786 = vunpack.c.h.b16 %v4321
          %v5787 = vunpack.c.l.b16 %v4322
          %v5788 = vunpack.c.h.b16 %v4322
          %v5789 = vunpack.c.l.b16 %v4323
          %v5790 = vunpack.c.h.b16 %v4323
          %v5791 = vunpack.c.l.b16 %v4324
          %v5792 = vunpack.c.h.b16 %v4324
          %v5793 = vunpack.c.l.b16 %v4325
          %v5794 = vunpack.c.h.b16 %v4325
          %v5795 = vunpack.c.l.b16 %v4326
          %v5796 = vunpack.c.h.b16 %v4326
          %v5797 = vunpack.c.l.b16 %v4327
          %v5798 = vunpack.c.h.b16 %v4327
          %v5799 = vunpack.c.l.b16 %v4328
          %v5800 = vunpack.c.h.b16 %v4328
          %v5801 = vunpack.c.l.b16 %v4329
          %v5802 = vunpack.c.h.b16 %v4329
          %v5803 = vunpack.c.l.b16 %v4330
          %v5804 = vunpack.c.h.b16 %v4330
          %v5805 = vunpack.c.l.b16 %v4331
          %v5806 = vunpack.c.h.b16 %v4331
          %v5807 = vunpack.c.l.b16 %v4332
          %v5808 = vunpack.c.h.b16 %v4332
          %v5809 = vunpack.c.l.b16 %v4333
          %v5810 = vunpack.c.h.b16 %v4333
          %v5811 = vunpack.c.l.b16 %v4334
          %v5812 = vunpack.c.h.b16 %v4334
          %v5813 = vunpack.c.l.b16 %v4335
          %v5814 = vunpack.c.h.b16 %v4335
          %v5815 = vunpack.c.l.b16 %v4336
          %v5816 = vunpack.c.h.b16 %v4336
          %v5817 = vunpack.c.l.b16 %v4337
          %v5818 = vunpack.c.h.b16 %v4337
          %v5819 = vunpack.c.l.b16 %v4338
          %v5820 = vunpack.c.h.b16 %v4338
          %v5821 = vunpack.c.l.b16 %v4339
          %v5822 = vunpack.c.h.b16 %v4339
          %v5823 = vunpack.c.l.b16 %v4340
          %v5824 = vunpack.c.h.b16 %v4340
          %v5825 = vunpack.c.l.b16 %v4341
          %v5826 = vunpack.c.h.b16 %v4341
          %v5827 = vunpack.c.l.b16 %v4342
          %v5828 = vunpack.c.h.b16 %v4342
          %v5829 = vunpack.c.l.b16 %v4343
          %v5830 = vunpack.c.h.b16 %v4343
          %v5831 = vunpack.c.l.b16 %v4344
          %v5832 = vunpack.c.h.b16 %v4344
          %v5833 = vunpack.c.l.b16 %v4345
          %v5834 = vunpack.c.h.b16 %v4345
          %v5835 = vunpack.c.l.b16 %v4346
          %v5836 = vunpack.c.h.b16 %v4346
          %v5837 = vunpack.c.l.b16 %v4347
          %v5838 = vunpack.c.h.b16 %v4347
          %v5839 = vunpack.c.l.b16 %v4348
          %v5840 = vunpack.c.h.b16 %v4348
          %v5841 = vunpack.c.l.b16 %v4349
          %v5842 = vunpack.c.h.b16 %v4349
          %v5843 = vunpack.c.l.b16 %v4350
          %v5844 = vunpack.c.h.b16 %v4350
          %v5845 = vunpack.c.l.b16 %v4351
          %v5846 = vunpack.c.h.b16 %v4351
          %v5847 = vunpack.c.l.b16 %v4352
          %v5848 = vunpack.c.h.b16 %v4352
          %v5849 = vunpack.c.l.b16 %v4353
          %v5850 = vunpack.c.h.b16 %v4353
          %v5851 = vunpack.c.l.b16 %v4354
          %v5852 = vunpack.c.h.b16 %v4354
          %v5853 = vunpack.c.l.b16 %v4355
          %v5854 = vunpack.c.h.b16 %v4355
          %v5855 = vunpack.c.l.b16 %v4356
          %v5856 = vunpack.c.h.b16 %v4356
          %v5857 = vunpack.c.l.b16 %v4357
          %v5858 = vunpack.c.h.b16 %v4357
          %v5859 = vunpack.c.l.b16 %v4358
          %v5860 = vunpack.c.h.b16 %v4358
          %v5861 = vunpack.c.l.b16 %v4359
          %v5862 = vunpack.c.h.b16 %v4359
          %v5863 = vunpack.c.l.b16 %v4360
          %v5864 = vunpack.c.h.b16 %v4360
          %v5865 = vunpack.c.l.b16 %v4361
          %v5866 = vunpack.c.h.b16 %v4361
          %v5867 = vunpack.c.l.b16 %v4362
          %v5868 = vunpack.c.h.b16 %v4362
          %v5869 = vunpack.c.l.b16 %v4363
          %v5870 = vunpack.c.h.b16 %v4363
          %v5871 = vunpack.c.l.b16 %v4364
          %v5872 = vunpack.c.h.b16 %v4364
          %v5873 = vunpack.c.l.b16 %v4365
          %v5874 = vunpack.c.h.b16 %v4365
          %v5875 = vunpack.c.l.b16 %v4366
          %v5876 = vunpack.c.h.b16 %v4366
          %v5877 = vunpack.c.l.b16 %v4367
          %v5878 = vunpack.c.h.b16 %v4367
          %v5879 = vunpack.c.l.b16 %v4368
          %v5880 = vunpack.c.h.b16 %v4368
          %v5881 = vunpack.c.l.b16 %v4369
          %v5882 = vunpack.c.h.b16 %v4369
          %v5883 = vunpack.c.l.b16 %v4370
          %v5884 = vunpack.c.h.b16 %v4370
          %v5885 = vunpack.c.l.b16 %v4371
          %v5886 = vunpack.c.h.b16 %v4371
          %v5887 = vunpack.c.l.b16 %v4372
          %v5888 = vunpack.c.h.b16 %v4372
          %v5889 = vunpack.c.l.b16 %v4373
          %v5890 = vunpack.c.h.b16 %v4373
          %v5891 = vunpack.c.l.b16 %v4374
          %v5892 = vunpack.c.h.b16 %v4374
          %v5893 = vunpack.c.l.b16 %v4375
          %v5894 = vunpack.c.h.b16 %v4375
          %v5895 = vunpack.c.l.b16 %v4376
          %v5896 = vunpack.c.h.b16 %v4376
          %v5897 = vunpack.c.l.b16 %v4377
          %v5898 = vunpack.c.h.b16 %v4377
          %v5899 = vunpack.c.l.b16 %v4378
          %v5900 = vunpack.c.h.b16 %v4378
          %v5901 = vunpack.c.l.b16 %v4379
          %v5902 = vunpack.c.h.b16 %v4379
          %v5903 = vunpack.c.l.b16 %v4380
          %v5904 = vunpack.c.h.b16 %v4380
          %v5905 = vunpack.c.l.b16 %v4381
          %v5906 = vunpack.c.h.b16 %v4381
          %v5907 = vunpack.c.l.b16 %v4382
          %v5908 = vunpack.c.h.b16 %v4382
          %v5909 = vunpack.c.l.b16 %v4383
          %v5910 = vunpack.c.h.b16 %v4383
          %v5911 = vunpack.c.l.b16 %v4384
          %v5912 = vunpack.c.h.b16 %v4384
          %v5913 = vunpack.c.l.b16 %v4385
          %v5914 = vunpack.c.h.b16 %v4385
          %v5915 = vunpack.c.l.b16 %v4386
          %v5916 = vunpack.c.h.b16 %v4386
          %v5917 = vunpack.c.l.b16 %v4387
          %v5918 = vunpack.c.h.b16 %v4387
          %v5919 = vunpack.c.l.b16 %v4388
          %v5920 = vunpack.c.h.b16 %v4388
          %v5921 = vunpack.c.l.b16 %v4389
          %v5922 = vunpack.c.h.b16 %v4389
          %v5923 = vunpack.c.l.b16 %v4390
          %v5924 = vunpack.c.h.b16 %v4390
          %v5925 = vunpack.c.l.b16 %v4391
          %v5926 = vunpack.c.h.b16 %v4391
          %v5927 = vunpack.c.l.b16 %v4392
          %v5928 = vunpack.c.h.b16 %v4392
          %v5929 = vunpack.c.l.b16 %v4393
          %v5930 = vunpack.c.h.b16 %v4393
          %v5931 = vunpack.c.l.b16 %v4394
          %v5932 = vunpack.c.h.b16 %v4394
          %v5933 = vunpack.c.l.b16 %v4395
          %v5934 = vunpack.c.h.b16 %v4395
          %v5935 = vunpack.c.l.b16 %v4396
          %v5936 = vunpack.c.h.b16 %v4396
          %v5937 = vunpack.c.l.b16 %v4397
          %v5938 = vunpack.c.h.b16 %v4397
          %v5939 = vunpack.c.l.b16 %v4398
          %v5940 = vunpack.c.h.b16 %v4398
          %v5941 = vunpack.c.l.b16 %v4399
          %v5942 = vunpack.c.h.b16 %v4399
          %v5943 = vunpack.c.l.b16 %v4400
          %v5944 = vunpack.c.h.b16 %v4400
          %v5945 = vunpack.c.l.b16 %v4401
          %v5946 = vunpack.c.h.b16 %v4401
          %v5947 = vunpack.c.l.b16 %v4402
          %v5948 = vunpack.c.h.b16 %v4402
          %v5949 = vunpack.c.l.b16 %v4403
          %v5950 = vunpack.c.h.b16 %v4403
          %v5951 = vunpack.c.l.b16 %v4404
          %v5952 = vunpack.c.h.b16 %v4404
          %v5953 = vunpack.c.l.b16 %v4405
          %v5954 = vunpack.c.h.b16 %v4405
          %v5955 = vunpack.c.l.b16 %v4406
          %v5956 = vunpack.c.h.b16 %v4406
          %v5957 = vunpack.c.l.b16 %v4407
          %v5958 = vunpack.c.h.b16 %v4407
          %v5959 = vunpack.c.l.b16 %v4408
          %v5960 = vunpack.c.h.b16 %v4408
          %v5961 = vunpack.c.l.b16 %v4409
          %v5962 = vunpack.c.h.b16 %v4409
          %v5963 = vunpack.c.l.b16 %v4410
          %v5964 = vunpack.c.h.b16 %v4410
          %v5965 = vpack.c.b16 %v4949, %v4941
          %v5966 = vpack.c.b16 %v4950, %v4942
          %v5967 = vpack.c.b16 %v4951, %v4943
          %v5968 = vpack.c.b16 %v4952, %v4944
          %v5969 = vpack.c.b16 %v4953, %v4945
          %v5970 = vpack.c.b16 %v4954, %v4946
          %v5971 = vpack.c.b16 %v4955, %v4947
          %v5972 = vpack.c.b16 %v4956, %v4948
          %v5973 = vpack.c.b16 %v4965, %v4957
          %v5974 = vpack.c.b16 %v4966, %v4958
          %v5975 = vpack.c.b16 %v4967, %v4959
          %v5976 = vpack.c.b16 %v4968, %v4960
          %v5977 = vpack.c.b16 %v4969, %v4961
          %v5978 = vpack.c.b16 %v4970, %v4962
          %v5979 = vpack.c.b16 %v4971, %v4963
          %v5980 = vpack.c.b16 %v4972, %v4964
          %v5981 = vpack.c.b16 %v4981, %v4973
          %v5982 = vpack.c.b16 %v4982, %v4974
          %v5983 = vpack.c.b16 %v4983, %v4975
          %v5984 = vpack.c.b16 %v4984, %v4976
          %v5985 = vpack.c.b16 %v4985, %v4977
          %v5986 = vpack.c.b16 %v4986, %v4978
          %v5987 = vpack.c.b16 %v4987, %v4979
          %v5988 = vpack.c.b16 %v4988, %v4980
          %v5989 = vpack.c.b16 %v4997, %v4989
          %v5990 = vpack.c.b16 %v4998, %v4990
          %v5991 = vpack.c.b16 %v4999, %v4991
          %v5992 = vpack.c.b16 %v5000, %v4992
          %v5993 = vpack.c.b16 %v5001, %v4993
          %v5994 = vpack.c.b16 %v5002, %v4994
          %v5995 = vpack.c.b16 %v5003, %v4995
          %v5996 = vpack.c.b16 %v5004, %v4996
          %v5997 = vpack.c.b16 %v5013, %v5005
          %v5998 = vpack.c.b16 %v5014, %v5006
          %v5999 = vpack.c.b16 %v5015, %v5007
          %v6000 = vpack.c.b16 %v5016, %v5008
          %v6001 = vpack.c.b16 %v5017, %v5009
          %v6002 = vpack.c.b16 %v5018, %v5010
          %v6003 = vpack.c.b16 %v5019, %v5011
          %v6004 = vpack.c.b16 %v5020, %v5012
          %v6005 = vpack.c.b16 %v5029, %v5021
          %v6006 = vpack.c.b16 %v5030, %v5022
          %v6007 = vpack.c.b16 %v5031, %v5023
          %v6008 = vpack.c.b16 %v5032, %v5024
          %v6009 = vpack.c.b16 %v5033, %v5025
          %v6010 = vpack.c.b16 %v5034, %v5026
          %v6011 = vpack.c.b16 %v5035, %v5027
          %v6012 = vpack.c.b16 %v5036, %v5028
          %v6013 = vpack.c.b16 %v5045, %v5037
          %v6014 = vpack.c.b16 %v5046, %v5038
          %v6015 = vpack.c.b16 %v5047, %v5039
          %v6016 = vpack.c.b16 %v5048, %v5040
          %v6017 = vpack.c.b16 %v5049, %v5041
          %v6018 = vpack.c.b16 %v5050, %v5042
          %v6019 = vpack.c.b16 %v5051, %v5043
          %v6020 = vpack.c.b16 %v5052, %v5044
          %v6021 = vpack.c.b16 %v5061, %v5053
          %v6022 = vpack.c.b16 %v5062, %v5054
          %v6023 = vpack.c.b16 %v5063, %v5055
          %v6024 = vpack.c.b16 %v5064, %v5056
          %v6025 = vpack.c.b16 %v5065, %v5057
          %v6026 = vpack.c.b16 %v5066, %v5058
          %v6027 = vpack.c.b16 %v5067, %v5059
          %v6028 = vpack.c.b16 %v5068, %v5060
          %v6029 = vpack.c.b16 %v5077, %v5069
          %v6030 = vpack.c.b16 %v5078, %v5070
          %v6031 = vpack.c.b16 %v5079, %v5071
          %v6032 = vpack.c.b16 %v5080, %v5072
          %v6033 = vpack.c.b16 %v5081, %v5073
          %v6034 = vpack.c.b16 %v5082, %v5074
          %v6035 = vpack.c.b16 %v5083, %v5075
          %v6036 = vpack.c.b16 %v5084, %v5076
          %v6037 = vpack.c.b16 %v5093, %v5085
          %v6038 = vpack.c.b16 %v5094, %v5086
          %v6039 = vpack.c.b16 %v5095, %v5087
          %v6040 = vpack.c.b16 %v5096, %v5088
          %v6041 = vpack.c.b16 %v5097, %v5089
          %v6042 = vpack.c.b16 %v5098, %v5090
          %v6043 = vpack.c.b16 %v5099, %v5091
          %v6044 = vpack.c.b16 %v5100, %v5092
          %v6045 = vpack.c.b16 %v5109, %v5101
          %v6046 = vpack.c.b16 %v5110, %v5102
          %v6047 = vpack.c.b16 %v5111, %v5103
          %v6048 = vpack.c.b16 %v5112, %v5104
          %v6049 = vpack.c.b16 %v5113, %v5105
          %v6050 = vpack.c.b16 %v5114, %v5106
          %v6051 = vpack.c.b16 %v5115, %v5107
          %v6052 = vpack.c.b16 %v5116, %v5108
          %v6053 = vpack.c.b16 %v5125, %v5117
          %v6054 = vpack.c.b16 %v5126, %v5118
          %v6055 = vpack.c.b16 %v5127, %v5119
          %v6056 = vpack.c.b16 %v5128, %v5120
          %v6057 = vpack.c.b16 %v5129, %v5121
          %v6058 = vpack.c.b16 %v5130, %v5122
          %v6059 = vpack.c.b16 %v5131, %v5123
          %v6060 = vpack.c.b16 %v5132, %v5124
          %v6061 = vpack.c.b16 %v5141, %v5133
          %v6062 = vpack.c.b16 %v5142, %v5134
          %v6063 = vpack.c.b16 %v5143, %v5135
          %v6064 = vpack.c.b16 %v5144, %v5136
          %v6065 = vpack.c.b16 %v5145, %v5137
          %v6066 = vpack.c.b16 %v5146, %v5138
          %v6067 = vpack.c.b16 %v5147, %v5139
          %v6068 = vpack.c.b16 %v5148, %v5140
          %v6069 = vpack.c.b16 %v5157, %v5149
          %v6070 = vpack.c.b16 %v5158, %v5150
          %v6071 = vpack.c.b16 %v5159, %v5151
          %v6072 = vpack.c.b16 %v5160, %v5152
          %v6073 = vpack.c.b16 %v5161, %v5153
          %v6074 = vpack.c.b16 %v5162, %v5154
          %v6075 = vpack.c.b16 %v5163, %v5155
          %v6076 = vpack.c.b16 %v5164, %v5156
          %v6077 = vpack.c.b16 %v5173, %v5165
          %v6078 = vpack.c.b16 %v5174, %v5166
          %v6079 = vpack.c.b16 %v5175, %v5167
          %v6080 = vpack.c.b16 %v5176, %v5168
          %v6081 = vpack.c.b16 %v5177, %v5169
          %v6082 = vpack.c.b16 %v5178, %v5170
          %v6083 = vpack.c.b16 %v5179, %v5171
          %v6084 = vpack.c.b16 %v5180, %v5172
          %v6085 = vpack.c.b16 %v5189, %v5181
          %v6086 = vpack.c.b16 %v5190, %v5182
          %v6087 = vpack.c.b16 %v5191, %v5183
          %v6088 = vpack.c.b16 %v5192, %v5184
          %v6089 = vpack.c.b16 %v5193, %v5185
          %v6090 = vpack.c.b16 %v5194, %v5186
          %v6091 = vpack.c.b16 %v5195, %v5187
          %v6092 = vpack.c.b16 %v5196, %v5188
          %v6093 = vpack.c.b16 %v5205, %v5197
          %v6094 = vpack.c.b16 %v5206, %v5198
          %v6095 = vpack.c.b16 %v5207, %v5199
          %v6096 = vpack.c.b16 %v5208, %v5200
          %v6097 = vpack.c.b16 %v5209, %v5201
          %v6098 = vpack.c.b16 %v5210, %v5202
          %v6099 = vpack.c.b16 %v5211, %v5203
          %v6100 = vpack.c.b16 %v5212, %v5204
          %v6101 = vpack.c.b16 %v5221, %v5213
          %v6102 = vpack.c.b16 %v5222, %v5214
          %v6103 = vpack.c.b16 %v5223, %v5215
          %v6104 = vpack.c.b16 %v5224, %v5216
          %v6105 = vpack.c.b16 %v5225, %v5217
          %v6106 = vpack.c.b16 %v5226, %v5218
          %v6107 = vpack.c.b16 %v5227, %v5219
          %v6108 = vpack.c.b16 %v5228, %v5220
          %v6109 = vpack.c.b16 %v5237, %v5229
          %v6110 = vpack.c.b16 %v5238, %v5230
          %v6111 = vpack.c.b16 %v5239, %v5231
          %v6112 = vpack.c.b16 %v5240, %v5232
          %v6113 = vpack.c.b16 %v5241, %v5233
          %v6114 = vpack.c.b16 %v5242, %v5234
          %v6115 = vpack.c.b16 %v5243, %v5235
          %v6116 = vpack.c.b16 %v5244, %v5236
          %v6117 = vpack.c.b16 %v5253, %v5245
          %v6118 = vpack.c.b16 %v5254, %v5246
          %v6119 = vpack.c.b16 %v5255, %v5247
          %v6120 = vpack.c.b16 %v5256, %v5248
          %v6121 = vpack.c.b16 %v5257, %v5249
          %v6122 = vpack.c.b16 %v5258, %v5250
          %v6123 = vpack.c.b16 %v5259, %v5251
          %v6124 = vpack.c.b16 %v5260, %v5252
          %v6125 = vpack.c.b16 %v5269, %v5261
          %v6126 = vpack.c.b16 %v5270, %v5262
          %v6127 = vpack.c.b16 %v5271, %v5263
          %v6128 = vpack.c.b16 %v5272, %v5264
          %v6129 = vpack.c.b16 %v5273, %v5265
          %v6130 = vpack.c.b16 %v5274, %v5266
          %v6131 = vpack.c.b16 %v5275, %v5267
          %v6132 = vpack.c.b16 %v5276, %v5268
          %v6133 = vpack.c.b16 %v5285, %v5277
          %v6134 = vpack.c.b16 %v5286, %v5278
          %v6135 = vpack.c.b16 %v5287, %v5279
          %v6136 = vpack.c.b16 %v5288, %v5280
          %v6137 = vpack.c.b16 %v5289, %v5281
          %v6138 = vpack.c.b16 %v5290, %v5282
          %v6139 = vpack.c.b16 %v5291, %v5283
          %v6140 = vpack.c.b16 %v5292, %v5284
          %v6141 = vpack.c.b16 %v5301, %v5293
          %v6142 = vpack.c.b16 %v5302, %v5294
          %v6143 = vpack.c.b16 %v5303, %v5295
          %v6144 = vpack.c.b16 %v5304, %v5296
          %v6145 = vpack.c.b16 %v5305, %v5297
          %v6146 = vpack.c.b16 %v5306, %v5298
          %v6147 = vpack.c.b16 %v5307, %v5299
          %v6148 = vpack.c.b16 %v5308, %v5300
          %v6149 = vpack.c.b16 %v5317, %v5309
          %v6150 = vpack.c.b16 %v5318, %v5310
          %v6151 = vpack.c.b16 %v5319, %v5311
          %v6152 = vpack.c.b16 %v5320, %v5312
          %v6153 = vpack.c.b16 %v5321, %v5313
          %v6154 = vpack.c.b16 %v5322, %v5314
          %v6155 = vpack.c.b16 %v5323, %v5315
          %v6156 = vpack.c.b16 %v5324, %v5316
          %v6157 = vpack.c.b16 %v5333, %v5325
          %v6158 = vpack.c.b16 %v5334, %v5326
          %v6159 = vpack.c.b16 %v5335, %v5327
          %v6160 = vpack.c.b16 %v5336, %v5328
          %v6161 = vpack.c.b16 %v5337, %v5329
          %v6162 = vpack.c.b16 %v5338, %v5330
          %v6163 = vpack.c.b16 %v5339, %v5331
          %v6164 = vpack.c.b16 %v5340, %v5332
          %v6165 = vpack.c.b16 %v5349, %v5341
          %v6166 = vpack.c.b16 %v5350, %v5342
          %v6167 = vpack.c.b16 %v5351, %v5343
          %v6168 = vpack.c.b16 %v5352, %v5344
          %v6169 = vpack.c.b16 %v5353, %v5345
          %v6170 = vpack.c.b16 %v5354, %v5346
          %v6171 = vpack.c.b16 %v5355, %v5347
          %v6172 = vpack.c.b16 %v5356, %v5348
          %v6173 = vpack.c.b16 %v5365, %v5357
          %v6174 = vpack.c.b16 %v5366, %v5358
          %v6175 = vpack.c.b16 %v5367, %v5359
          %v6176 = vpack.c.b16 %v5368, %v5360
          %v6177 = vpack.c.b16 %v5369, %v5361
          %v6178 = vpack.c.b16 %v5370, %v5362
          %v6179 = vpack.c.b16 %v5371, %v5363
          %v6180 = vpack.c.b16 %v5372, %v5364
          %v6181 = vpack.c.b16 %v5381, %v5373
          %v6182 = vpack.c.b16 %v5382, %v5374
          %v6183 = vpack.c.b16 %v5383, %v5375
          %v6184 = vpack.c.b16 %v5384, %v5376
          %v6185 = vpack.c.b16 %v5385, %v5377
          %v6186 = vpack.c.b16 %v5386, %v5378
          %v6187 = vpack.c.b16 %v5387, %v5379
          %v6188 = vpack.c.b16 %v5388, %v5380
          %v6189 = vpack.c.b16 %v5397, %v5389
          %v6190 = vpack.c.b16 %v5398, %v5390
          %v6191 = vpack.c.b16 %v5399, %v5391
          %v6192 = vpack.c.b16 %v5400, %v5392
          %v6193 = vpack.c.b16 %v5401, %v5393
          %v6194 = vpack.c.b16 %v5402, %v5394
          %v6195 = vpack.c.b16 %v5403, %v5395
          %v6196 = vpack.c.b16 %v5404, %v5396
          %v6197 = vpack.c.b16 %v5413, %v5405
          %v6198 = vpack.c.b16 %v5414, %v5406
          %v6199 = vpack.c.b16 %v5415, %v5407
          %v6200 = vpack.c.b16 %v5416, %v5408
          %v6201 = vpack.c.b16 %v5417, %v5409
          %v6202 = vpack.c.b16 %v5418, %v5410
          %v6203 = vpack.c.b16 %v5419, %v5411
          %v6204 = vpack.c.b16 %v5420, %v5412
          %v6205 = vpack.c.b16 %v5429, %v5421
          %v6206 = vpack.c.b16 %v5430, %v5422
          %v6207 = vpack.c.b16 %v5431, %v5423
          %v6208 = vpack.c.b16 %v5432, %v5424
          %v6209 = vpack.c.b16 %v5433, %v5425
          %v6210 = vpack.c.b16 %v5434, %v5426
          %v6211 = vpack.c.b16 %v5435, %v5427
          %v6212 = vpack.c.b16 %v5436, %v5428
          %v6213 = vpack.c.b16 %v5445, %v5437
          %v6214 = vpack.c.b16 %v5446, %v5438
          %v6215 = vpack.c.b16 %v5447, %v5439
          %v6216 = vpack.c.b16 %v5448, %v5440
          %v6217 = vpack.c.b16 %v5449, %v5441
          %v6218 = vpack.c.b16 %v5450, %v5442
          %v6219 = vpack.c.b16 %v5451, %v5443
          %v6220 = vpack.c.b16 %v5452, %v5444
          %v6221 = vpack.c.b16 %v5461, %v5453
          %v6222 = vpack.c.b16 %v5462, %v5454
          %v6223 = vpack.c.b16 %v5463, %v5455
          %v6224 = vpack.c.b16 %v5464, %v5456
          %v6225 = vpack.c.b16 %v5465, %v5457
          %v6226 = vpack.c.b16 %v5466, %v5458
          %v6227 = vpack.c.b16 %v5467, %v5459
          %v6228 = vpack.c.b16 %v5468, %v5460
          %v6229 = vpack.c.b16 %v5477, %v5469
          %v6230 = vpack.c.b16 %v5478, %v5470
          %v6231 = vpack.c.b16 %v5479, %v5471
          %v6232 = vpack.c.b16 %v5480, %v5472
          %v6233 = vpack.c.b16 %v5481, %v5473
          %v6234 = vpack.c.b16 %v5482, %v5474
          %v6235 = vpack.c.b16 %v5483, %v5475
          %v6236 = vpack.c.b16 %v5484, %v5476
          %v6237 = vpack.c.b16 %v5493, %v5485
          %v6238 = vpack.c.b16 %v5494, %v5486
          %v6239 = vpack.c.b16 %v5495, %v5487
          %v6240 = vpack.c.b16 %v5496, %v5488
          %v6241 = vpack.c.b16 %v5497, %v5489
          %v6242 = vpack.c.b16 %v5498, %v5490
          %v6243 = vpack.c.b16 %v5499, %v5491
          %v6244 = vpack.c.b16 %v5500, %v5492
          %v6245 = vpack.c.b16 %v5509, %v5501
          %v6246 = vpack.c.b16 %v5510, %v5502
          %v6247 = vpack.c.b16 %v5511, %v5503
          %v6248 = vpack.c.b16 %v5512, %v5504
          %v6249 = vpack.c.b16 %v5513, %v5505
          %v6250 = vpack.c.b16 %v5514, %v5506
          %v6251 = vpack.c.b16 %v5515, %v5507
          %v6252 = vpack.c.b16 %v5516, %v5508
          %v6253 = vpack.c.b16 %v5525, %v5517
          %v6254 = vpack.c.b16 %v5526, %v5518
          %v6255 = vpack.c.b16 %v5527, %v5519
          %v6256 = vpack.c.b16 %v5528, %v5520
          %v6257 = vpack.c.b16 %v5529, %v5521
          %v6258 = vpack.c.b16 %v5530, %v5522
          %v6259 = vpack.c.b16 %v5531, %v5523
          %v6260 = vpack.c.b16 %v5532, %v5524
          %v6261 = vpack.c.b16 %v5541, %v5533
          %v6262 = vpack.c.b16 %v5542, %v5534
          %v6263 = vpack.c.b16 %v5543, %v5535
          %v6264 = vpack.c.b16 %v5544, %v5536
          %v6265 = vpack.c.b16 %v5545, %v5537
          %v6266 = vpack.c.b16 %v5546, %v5538
          %v6267 = vpack.c.b16 %v5547, %v5539
          %v6268 = vpack.c.b16 %v5548, %v5540
          %v6269 = vpack.c.b16 %v5557, %v5549
          %v6270 = vpack.c.b16 %v5558, %v5550
          %v6271 = vpack.c.b16 %v5559, %v5551
          %v6272 = vpack.c.b16 %v5560, %v5552
          %v6273 = vpack.c.b16 %v5561, %v5553
          %v6274 = vpack.c.b16 %v5562, %v5554
          %v6275 = vpack.c.b16 %v5563, %v5555
          %v6276 = vpack.c.b16 %v5564, %v5556
          %v6277 = vpack.c.b16 %v5573, %v5565
          %v6278 = vpack.c.b16 %v5574, %v5566
          %v6279 = vpack.c.b16 %v5575, %v5567
          %v6280 = vpack.c.b16 %v5576, %v5568
          %v6281 = vpack.c.b16 %v5577, %v5569
          %v6282 = vpack.c.b16 %v5578, %v5570
          %v6283 = vpack.c.b16 %v5579, %v5571
          %v6284 = vpack.c.b16 %v5580, %v5572
          %v6285 = vpack.c.b16 %v5589, %v5581
          %v6286 = vpack.c.b16 %v5590, %v5582
          %v6287 = vpack.c.b16 %v5591, %v5583
          %v6288 = vpack.c.b16 %v5592, %v5584
          %v6289 = vpack.c.b16 %v5593, %v5585
          %v6290 = vpack.c.b16 %v5594, %v5586
          %v6291 = vpack.c.b16 %v5595, %v5587
          %v6292 = vpack.c.b16 %v5596, %v5588
          %v6293 = vpack.c.b16 %v5605, %v5597
          %v6294 = vpack.c.b16 %v5606, %v5598
          %v6295 = vpack.c.b16 %v5607, %v5599
          %v6296 = vpack.c.b16 %v5608, %v5600
          %v6297 = vpack.c.b16 %v5609, %v5601
          %v6298 = vpack.c.b16 %v5610, %v5602
          %v6299 = vpack.c.b16 %v5611, %v5603
          %v6300 = vpack.c.b16 %v5612, %v5604
          %v6301 = vpack.c.b16 %v5621, %v5613
          %v6302 = vpack.c.b16 %v5622, %v5614
          %v6303 = vpack.c.b16 %v5623, %v5615
          %v6304 = vpack.c.b16 %v5624, %v5616
          %v6305 = vpack.c.b16 %v5625, %v5617
          %v6306 = vpack.c.b16 %v5626, %v5618
          %v6307 = vpack.c.b16 %v5627, %v5619
          %v6308 = vpack.c.b16 %v5628, %v5620
          %v6309 = vpack.c.b16 %v5637, %v5629
          %v6310 = vpack.c.b16 %v5638, %v5630
          %v6311 = vpack.c.b16 %v5639, %v5631
          %v6312 = vpack.c.b16 %v5640, %v5632
          %v6313 = vpack.c.b16 %v5641, %v5633
          %v6314 = vpack.c.b16 %v5642, %v5634
          %v6315 = vpack.c.b16 %v5643, %v5635
          %v6316 = vpack.c.b16 %v5644, %v5636
          %v6317 = vpack.c.b16 %v5653, %v5645
          %v6318 = vpack.c.b16 %v5654, %v5646
          %v6319 = vpack.c.b16 %v5655, %v5647
          %v6320 = vpack.c.b16 %v5656, %v5648
          %v6321 = vpack.c.b16 %v5657, %v5649
          %v6322 = vpack.c.b16 %v5658, %v5650
          %v6323 = vpack.c.b16 %v5659, %v5651
          %v6324 = vpack.c.b16 %v5660, %v5652
          %v6325 = vpack.c.b16 %v5669, %v5661
          %v6326 = vpack.c.b16 %v5670, %v5662
          %v6327 = vpack.c.b16 %v5671, %v5663
          %v6328 = vpack.c.b16 %v5672, %v5664
          %v6329 = vpack.c.b16 %v5673, %v5665
          %v6330 = vpack.c.b16 %v5674, %v5666
          %v6331 = vpack.c.b16 %v5675, %v5667
          %v6332 = vpack.c.b16 %v5676, %v5668
          %v6333 = vpack.c.b16 %v5685, %v5677
          %v6334 = vpack.c.b16 %v5686, %v5678
          %v6335 = vpack.c.b16 %v5687, %v5679
          %v6336 = vpack.c.b16 %v5688, %v5680
          %v6337 = vpack.c.b16 %v5689, %v5681
          %v6338 = vpack.c.b16 %v5690, %v5682
          %v6339 = vpack.c.b16 %v5691, %v5683
          %v6340 = vpack.c.b16 %v5692, %v5684
          %v6341 = vpack.c.b16 %v5701, %v5693
          %v6342 = vpack.c.b16 %v5702, %v5694
          %v6343 = vpack.c.b16 %v5703, %v5695
          %v6344 = vpack.c.b16 %v5704, %v5696
          %v6345 = vpack.c.b16 %v5705, %v5697
          %v6346 = vpack.c.b16 %v5706, %v5698
          %v6347 = vpack.c.b16 %v5707, %v5699
          %v6348 = vpack.c.b16 %v5708, %v5700
          %v6349 = vpack.c.b16 %v5717, %v5709
          %v6350 = vpack.c.b16 %v5718, %v5710
          %v6351 = vpack.c.b16 %v5719, %v5711
          %v6352 = vpack.c.b16 %v5720, %v5712
          %v6353 = vpack.c.b16 %v5721, %v5713
          %v6354 = vpack.c.b16 %v5722, %v5714
          %v6355 = vpack.c.b16 %v5723, %v5715
          %v6356 = vpack.c.b16 %v5724, %v5716
          %v6357 = vpack.c.b16 %v5733, %v5725
          %v6358 = vpack.c.b16 %v5734, %v5726
          %v6359 = vpack.c.b16 %v5735, %v5727
          %v6360 = vpack.c.b16 %v5736, %v5728
          %v6361 = vpack.c.b16 %v5737, %v5729
          %v6362 = vpack.c.b16 %v5738, %v5730
          %v6363 = vpack.c.b16 %v5739, %v5731
          %v6364 = vpack.c.b16 %v5740, %v5732
          %v6365 = vpack.c.b16 %v5749, %v5741
          %v6366 = vpack.c.b16 %v5750, %v5742
          %v6367 = vpack.c.b16 %v5751, %v5743
          %v6368 = vpack.c.b16 %v5752, %v5744
          %v6369 = vpack.c.b16 %v5753, %v5745
          %v6370 = vpack.c.b16 %v5754, %v5746
          %v6371 = vpack.c.b16 %v5755, %v5747
          %v6372 = vpack.c.b16 %v5756, %v5748
          %v6373 = vpack.c.b16 %v5765, %v5757
          %v6374 = vpack.c.b16 %v5766, %v5758
          %v6375 = vpack.c.b16 %v5767, %v5759
          %v6376 = vpack.c.b16 %v5768, %v5760
          %v6377 = vpack.c.b16 %v5769, %v5761
          %v6378 = vpack.c.b16 %v5770, %v5762
          %v6379 = vpack.c.b16 %v5771, %v5763
          %v6380 = vpack.c.b16 %v5772, %v5764
          %v6381 = vpack.c.b16 %v5781, %v5773
          %v6382 = vpack.c.b16 %v5782, %v5774
          %v6383 = vpack.c.b16 %v5783, %v5775
          %v6384 = vpack.c.b16 %v5784, %v5776
          %v6385 = vpack.c.b16 %v5785, %v5777
          %v6386 = vpack.c.b16 %v5786, %v5778
          %v6387 = vpack.c.b16 %v5787, %v5779
          %v6388 = vpack.c.b16 %v5788, %v5780
          %v6389 = vpack.c.b16 %v5797, %v5789
          %v6390 = vpack.c.b16 %v5798, %v5790
          %v6391 = vpack.c.b16 %v5799, %v5791
          %v6392 = vpack.c.b16 %v5800, %v5792
          %v6393 = vpack.c.b16 %v5801, %v5793
          %v6394 = vpack.c.b16 %v5802, %v5794
          %v6395 = vpack.c.b16 %v5803, %v5795
          %v6396 = vpack.c.b16 %v5804, %v5796
          %v6397 = vpack.c.b16 %v5813, %v5805
          %v6398 = vpack.c.b16 %v5814, %v5806
          %v6399 = vpack.c.b16 %v5815, %v5807
          %v6400 = vpack.c.b16 %v5816, %v5808
          %v6401 = vpack.c.b16 %v5817, %v5809
          %v6402 = vpack.c.b16 %v5818, %v5810
          %v6403 = vpack.c.b16 %v5819, %v5811
          %v6404 = vpack.c.b16 %v5820, %v5812
          %v6405 = vpack.c.b16 %v5829, %v5821
          %v6406 = vpack.c.b16 %v5830, %v5822
          %v6407 = vpack.c.b16 %v5831, %v5823
          %v6408 = vpack.c.b16 %v5832, %v5824
          %v6409 = vpack.c.b16 %v5833, %v5825
          %v6410 = vpack.c.b16 %v5834, %v5826
          %v6411 = vpack.c.b16 %v5835, %v5827
          %v6412 = vpack.c.b16 %v5836, %v5828
          %v6413 = vpack.c.b16 %v5845, %v5837
          %v6414 = vpack.c.b16 %v5846, %v5838
          %v6415 = vpack.c.b16 %v5847, %v5839
          %v6416 = vpack.c.b16 %v5848, %v5840
          %v6417 = vpack.c.b16 %v5849, %v5841
          %v6418 = vpack.c.b16 %v5850, %v5842
          %v6419 = vpack.c.b16 %v5851, %v5843
          %v6420 = vpack.c.b16 %v5852, %v5844
          %v6421 = vpack.c.b16 %v5861, %v5853
          %v6422 = vpack.c.b16 %v5862, %v5854
          %v6423 = vpack.c.b16 %v5863, %v5855
          %v6424 = vpack.c.b16 %v5864, %v5856
          %v6425 = vpack.c.b16 %v5865, %v5857
          %v6426 = vpack.c.b16 %v5866, %v5858
          %v6427 = vpack.c.b16 %v5867, %v5859
          %v6428 = vpack.c.b16 %v5868, %v5860
          %v6429 = vpack.c.b16 %v5877, %v5869
          %v6430 = vpack.c.b16 %v5878, %v5870
          %v6431 = vpack.c.b16 %v5879, %v5871
          %v6432 = vpack.c.b16 %v5880, %v5872
          %v6433 = vpack.c.b16 %v5881, %v5873
          %v6434 = vpack.c.b16 %v5882, %v5874
          %v6435 = vpack.c.b16 %v5883, %v5875
          %v6436 = vpack.c.b16 %v5884, %v5876
          %v6437 = vpack.c.b16 %v5893, %v5885
          %v6438 = vpack.c.b16 %v5894, %v5886
          %v6439 = vpack.c.b16 %v5895, %v5887
          %v6440 = vpack.c.b16 %v5896, %v5888
          %v6441 = vpack.c.b16 %v5897, %v5889
          %v6442 = vpack.c.b16 %v5898, %v5890
          %v6443 = vpack.c.b16 %v5899, %v5891
          %v6444 = vpack.c.b16 %v5900, %v5892
          %v6445 = vpack.c.b16 %v5909, %v5901
          %v6446 = vpack.c.b16 %v5910, %v5902
          %v6447 = vpack.c.b16 %v5911, %v5903
          %v6448 = vpack.c.b16 %v5912, %v5904
          %v6449 = vpack.c.b16 %v5913, %v5905
          %v6450 = vpack.c.b16 %v5914, %v5906
          %v6451 = vpack.c.b16 %v5915, %v5907
          %v6452 = vpack.c.b16 %v5916, %v5908
          %v6453 = vpack.c.b16 %v5925, %v5917
          %v6454 = vpack.c.b16 %v5926, %v5918
          %v6455 = vpack.c.b16 %v5927, %v5919
          %v6456 = vpack.c.b16 %v5928, %v5920
          %v6457 = vpack.c.b16 %v5929, %v5921
          %v6458 = vpack.c.b16 %v5930, %v5922
          %v6459 = vpack.c.b16 %v5931, %v5923
          %v6460 = vpack.c.b16 %v5932, %v5924
          %v6461 = vpack.c.b16 %v5941, %v5933
          %v6462 = vpack.c.b16 %v5942, %v5934
          %v6463 = vpack.c.b16 %v5943, %v5935
          %v6464 = vpack.c.b16 %v5944, %v5936
          %v6465 = vpack.c.b16 %v5945, %v5937
          %v6466 = vpack.c.b16 %v5946, %v5938
          %v6467 = vpack.c.b16 %v5947, %v5939
          %v6468 = vpack.c.b16 %v5948, %v5940
          %v6469 = vpack.c.b16 %v5957, %v5949
          %v6470 = vpack.c.b16 %v5958, %v5950
          %v6471 = vpack.c.b16 %v5959, %v5951
          %v6472 = vpack.c.b16 %v5960, %v5952
          %v6473 = vpack.c.b16 %v5961, %v5953
          %v6474 = vpack.c.b16 %v5962, %v5954
          %v6475 = vpack.c.b16 %v5963, %v5955
          %v6476 = vpack.c.b16 %v5964, %v5956
          %6989 = vmatpush.bf16.msra.mxu0 %v6021
          %6990 = vmatpush.bf16.msra.mxu0 %v6013
          %6991 = vmatpush.bf16.msra.mxu0 %v6005
          %6992 = vmatpush.bf16.msra.mxu0 %v5997
          %6993 = vmatpush.bf16.msra.mxu0 %v5989
          %6994 = vmatpush.bf16.msra.mxu0 %v5981
          %6995 = vmatpush.bf16.msra.mxu0 %v5973
          %6996 = vmatpush.bf16.msra.mxu0 %v5965
          %6997 = vmatmul.bf16.gmra.mxu0 %v3891
          %v6998 = vpop.f32.mrf.mxu0
          %v6999 = vadd.f32 %v4413, %v6998
          %v7000 = vpop.f32.mrf.mxu0
          %7001 = vdwg.mxu0
          %7002 = vmatpush.bf16.msra.mxu0 %v6085
          %7003 = vmatpush.bf16.msra.mxu0 %v6077
          %7004 = vmatpush.bf16.msra.mxu0 %v6069
          %7005 = vmatpush.bf16.msra.mxu0 %v6061
          %7006 = vmatpush.bf16.msra.mxu0 %v6053
          %7007 = vmatpush.bf16.msra.mxu0 %v6045
          %7008 = vmatpush.bf16.msra.mxu0 %v6037
          %7009 = vmatpush.bf16.msra.mxu0 %v6029
          %7010 = vmatmul.bf16.gmra.mxu0 %v3892
          %v7011 = vpop.f32.mrf.mxu0
          %v7012 = vadd.f32 %v6999, %v7011
          %v7013 = vpop.f32.mrf.mxu0
          %7014 = vdwg.mxu0
          %7015 = vmatpush.bf16.msra.mxu0 %v6149
          %7016 = vmatpush.bf16.msra.mxu0 %v6141
          %7017 = vmatpush.bf16.msra.mxu0 %v6133
          %7018 = vmatpush.bf16.msra.mxu0 %v6125
          %7019 = vmatpush.bf16.msra.mxu0 %v6117
          %7020 = vmatpush.bf16.msra.mxu0 %v6109
          %7021 = vmatpush.bf16.msra.mxu0 %v6101
          %7022 = vmatpush.bf16.msra.mxu0 %v6093
          %7023 = vmatmul.bf16.gmra.mxu0 %v3893
          %v7024 = vpop.f32.mrf.mxu0
          %v7025 = vadd.f32 %v7012, %v7024
          %v7026 = vpop.f32.mrf.mxu0
          %7027 = vdwg.mxu0
          %7028 = vmatpush.bf16.msra.mxu0 %v6213
          %7029 = vmatpush.bf16.msra.mxu0 %v6205
          %7030 = vmatpush.bf16.msra.mxu0 %v6197
          %7031 = vmatpush.bf16.msra.mxu0 %v6189
          %7032 = vmatpush.bf16.msra.mxu0 %v6181
          %7033 = vmatpush.bf16.msra.mxu0 %v6173
          %7034 = vmatpush.bf16.msra.mxu0 %v6165
          %7035 = vmatpush.bf16.msra.mxu0 %v6157
          %7036 = vmatmul.bf16.gmra.mxu0 %v3894
          %v7037 = vpop.f32.mrf.mxu0
          %v7038 = vadd.f32 %v7025, %v7037
          %v7039 = vpop.f32.mrf.mxu0
          %7040 = vdwg.mxu0
          %7041 = vmatpush.bf16.msra.mxu0 %v6277
          %7042 = vmatpush.bf16.msra.mxu0 %v6269
          %7043 = vmatpush.bf16.msra.mxu0 %v6261
          %7044 = vmatpush.bf16.msra.mxu0 %v6253
          %7045 = vmatpush.bf16.msra.mxu0 %v6245
          %7046 = vmatpush.bf16.msra.mxu0 %v6237
          %7047 = vmatpush.bf16.msra.mxu0 %v6229
          %7048 = vmatpush.bf16.msra.mxu0 %v6221
          %7049 = vmatmul.bf16.gmra.mxu0 %v3895
          %v7050 = vpop.f32.mrf.mxu0
          %v7051 = vadd.f32 %v7038, %v7050
          %v7052 = vpop.f32.mrf.mxu0
          %7053 = vdwg.mxu0
          %7054 = vmatpush.bf16.msra.mxu0 %v6341
          %7055 = vmatpush.bf16.msra.mxu0 %v6333
          %7056 = vmatpush.bf16.msra.mxu0 %v6325
          %7057 = vmatpush.bf16.msra.mxu0 %v6317
          %7058 = vmatpush.bf16.msra.mxu0 %v6309
          %7059 = vmatpush.bf16.msra.mxu0 %v6301
          %7060 = vmatpush.bf16.msra.mxu0 %v6293
          %7061 = vmatpush.bf16.msra.mxu0 %v6285
          %7062 = vmatmul.bf16.gmra.mxu0 %v3896
          %v7063 = vpop.f32.mrf.mxu0
          %v7064 = vadd.f32 %v7051, %v7063
          %v7065 = vpop.f32.mrf.mxu0
          %7066 = vdwg.mxu0
          %7067 = vmatpush.bf16.msra.mxu0 %v6405
          %7068 = vmatpush.bf16.msra.mxu0 %v6397
          %7069 = vmatpush.bf16.msra.mxu0 %v6389
          %7070 = vmatpush.bf16.msra.mxu0 %v6381
          %7071 = vmatpush.bf16.msra.mxu0 %v6373
          %7072 = vmatpush.bf16.msra.mxu0 %v6365
          %7073 = vmatpush.bf16.msra.mxu0 %v6357
          %7074 = vmatpush.bf16.msra.mxu0 %v6349
          %7075 = vmatmul.bf16.gmra.mxu0 %v3897
          %v7076 = vpop.f32.mrf.mxu0
          %v7077 = vadd.f32 %v7064, %v7076
          %v7078 = vpop.f32.mrf.mxu0
          %7079 = vdwg.mxu0
          %7080 = vmatpush.bf16.msra.mxu0 %v6469
          %7081 = vmatpush.bf16.msra.mxu0 %v6461
          %7082 = vmatpush.bf16.msra.mxu0 %v6453
          %7083 = vmatpush.bf16.msra.mxu0 %v6445
          %7084 = vmatpush.bf16.msra.mxu0 %v6437
          %7085 = vmatpush.bf16.msra.mxu0 %v6429
          %7086 = vmatpush.bf16.msra.mxu0 %v6421
          %7087 = vmatpush.bf16.msra.mxu0 %v6413
          %7088 = vmatmul.bf16.gmra.mxu0 %v3898
          %v7089 = vpop.f32.mrf.mxu0
          %v7090 = vadd.f32 %v7077, %v7089
          %v7091 = vpop.f32.mrf.mxu0
          %7092 = vdwg.mxu0
          %7093 = vmatpush.bf16.msra.mxu0 %v6022
          %7094 = vmatpush.bf16.msra.mxu0 %v6014
          %7095 = vmatpush.bf16.msra.mxu0 %v6006
          %7096 = vmatpush.bf16.msra.mxu0 %v5998
          %7097 = vmatpush.bf16.msra.mxu0 %v5990
          %7098 = vmatpush.bf16.msra.mxu0 %v5982
          %7099 = vmatpush.bf16.msra.mxu0 %v5974
          %7100 = vmatpush.bf16.msra.mxu0 %v5966
          %7101 = vmatmul.bf16.gmra.mxu0 %v3891
          %v7102 = vpop.f32.mrf.mxu0
          %v7103 = vadd.f32 %v4414, %v7102
          %v7104 = vpop.f32.mrf.mxu0
          %7105 = vdwg.mxu0
          %7106 = vmatpush.bf16.msra.mxu0 %v6086
          %7107 = vmatpush.bf16.msra.mxu0 %v6078
          %7108 = vmatpush.bf16.msra.mxu0 %v6070
          %7109 = vmatpush.bf16.msra.mxu0 %v6062
          %7110 = vmatpush.bf16.msra.mxu0 %v6054
          %7111 = vmatpush.bf16.msra.mxu0 %v6046
          %7112 = vmatpush.bf16.msra.mxu0 %v6038
          %7113 = vmatpush.bf16.msra.mxu0 %v6030
          %7114 = vmatmul.bf16.gmra.mxu0 %v3892
          %v7115 = vpop.f32.mrf.mxu0
          %v7116 = vadd.f32 %v7103, %v7115
          %v7117 = vpop.f32.mrf.mxu0
          %7118 = vdwg.mxu0
          %7119 = vmatpush.bf16.msra.mxu0 %v6150
          %7120 = vmatpush.bf16.msra.mxu0 %v6142
          %7121 = vmatpush.bf16.msra.mxu0 %v6134
          %7122 = vmatpush.bf16.msra.mxu0 %v6126
          %7123 = vmatpush.bf16.msra.mxu0 %v6118
          %7124 = vmatpush.bf16.msra.mxu0 %v6110
          %7125 = vmatpush.bf16.msra.mxu0 %v6102
          %7126 = vmatpush.bf16.msra.mxu0 %v6094
          %7127 = vmatmul.bf16.gmra.mxu0 %v3893
          %v7128 = vpop.f32.mrf.mxu0
          %v7129 = vadd.f32 %v7116, %v7128
          %v7130 = vpop.f32.mrf.mxu0
          %7131 = vdwg.mxu0
          %7132 = vmatpush.bf16.msra.mxu0 %v6214
          %7133 = vmatpush.bf16.msra.mxu0 %v6206
          %7134 = vmatpush.bf16.msra.mxu0 %v6198
          %7135 = vmatpush.bf16.msra.mxu0 %v6190
          %7136 = vmatpush.bf16.msra.mxu0 %v6182
          %7137 = vmatpush.bf16.msra.mxu0 %v6174
          %7138 = vmatpush.bf16.msra.mxu0 %v6166
          %7139 = vmatpush.bf16.msra.mxu0 %v6158
          %7140 = vmatmul.bf16.gmra.mxu0 %v3894
          %v7141 = vpop.f32.mrf.mxu0
          %v7142 = vadd.f32 %v7129, %v7141
          %v7143 = vpop.f32.mrf.mxu0
          %7144 = vdwg.mxu0
          %7145 = vmatpush.bf16.msra.mxu0 %v6278
          %7146 = vmatpush.bf16.msra.mxu0 %v6270
          %7147 = vmatpush.bf16.msra.mxu0 %v6262
          %7148 = vmatpush.bf16.msra.mxu0 %v6254
          %7149 = vmatpush.bf16.msra.mxu0 %v6246
          %7150 = vmatpush.bf16.msra.mxu0 %v6238
          %7151 = vmatpush.bf16.msra.mxu0 %v6230
          %7152 = vmatpush.bf16.msra.mxu0 %v6222
          %7153 = vmatmul.bf16.gmra.mxu0 %v3895
          %v7154 = vpop.f32.mrf.mxu0
          %v7155 = vadd.f32 %v7142, %v7154
          %v7156 = vpop.f32.mrf.mxu0
          %7157 = vdwg.mxu0
          %7158 = vmatpush.bf16.msra.mxu0 %v6342
          %7159 = vmatpush.bf16.msra.mxu0 %v6334
          %7160 = vmatpush.bf16.msra.mxu0 %v6326
          %7161 = vmatpush.bf16.msra.mxu0 %v6318
          %7162 = vmatpush.bf16.msra.mxu0 %v6310
          %7163 = vmatpush.bf16.msra.mxu0 %v6302
          %7164 = vmatpush.bf16.msra.mxu0 %v6294
          %7165 = vmatpush.bf16.msra.mxu0 %v6286
          %7166 = vmatmul.bf16.gmra.mxu0 %v3896
          %v7167 = vpop.f32.mrf.mxu0
          %v7168 = vadd.f32 %v7155, %v7167
          %v7169 = vpop.f32.mrf.mxu0
          %7170 = vdwg.mxu0
          %7171 = vmatpush.bf16.msra.mxu0 %v6406
          %7172 = vmatpush.bf16.msra.mxu0 %v6398
          %7173 = vmatpush.bf16.msra.mxu0 %v6390
          %7174 = vmatpush.bf16.msra.mxu0 %v6382
          %7175 = vmatpush.bf16.msra.mxu0 %v6374
          %7176 = vmatpush.bf16.msra.mxu0 %v6366
          %7177 = vmatpush.bf16.msra.mxu0 %v6358
          %7178 = vmatpush.bf16.msra.mxu0 %v6350
          %7179 = vmatmul.bf16.gmra.mxu0 %v3897
          %v7180 = vpop.f32.mrf.mxu0
          %v7181 = vadd.f32 %v7168, %v7180
          %v7182 = vpop.f32.mrf.mxu0
          %7183 = vdwg.mxu0
          %7184 = vmatpush.bf16.msra.mxu0 %v6470
          %7185 = vmatpush.bf16.msra.mxu0 %v6462
          %7186 = vmatpush.bf16.msra.mxu0 %v6454
          %7187 = vmatpush.bf16.msra.mxu0 %v6446
          %7188 = vmatpush.bf16.msra.mxu0 %v6438
          %7189 = vmatpush.bf16.msra.mxu0 %v6430
          %7190 = vmatpush.bf16.msra.mxu0 %v6422
          %7191 = vmatpush.bf16.msra.mxu0 %v6414
          %7192 = vmatmul.bf16.gmra.mxu0 %v3898
          %v7193 = vpop.f32.mrf.mxu0
          %v7194 = vadd.f32 %v7181, %v7193
          %v7195 = vpop.f32.mrf.mxu0
          %7196 = vdwg.mxu0
          %7197 = vmatpush.bf16.msra.mxu0 %v6023
          %7198 = vmatpush.bf16.msra.mxu0 %v6015
          %7199 = vmatpush.bf16.msra.mxu0 %v6007
          %7200 = vmatpush.bf16.msra.mxu0 %v5999
          %7201 = vmatpush.bf16.msra.mxu0 %v5991
          %7202 = vmatpush.bf16.msra.mxu0 %v5983
          %7203 = vmatpush.bf16.msra.mxu0 %v5975
          %7204 = vmatpush.bf16.msra.mxu0 %v5967
          %7205 = vmatmul.bf16.gmra.mxu0 %v3891
          %v7206 = vpop.f32.mrf.mxu0
          %v7207 = vadd.f32 %v4415, %v7206
          %v7208 = vpop.f32.mrf.mxu0
          %7209 = vdwg.mxu0
          %7210 = vmatpush.bf16.msra.mxu0 %v6087
          %7211 = vmatpush.bf16.msra.mxu0 %v6079
          %7212 = vmatpush.bf16.msra.mxu0 %v6071
          %7213 = vmatpush.bf16.msra.mxu0 %v6063
          %7214 = vmatpush.bf16.msra.mxu0 %v6055
          %7215 = vmatpush.bf16.msra.mxu0 %v6047
          %7216 = vmatpush.bf16.msra.mxu0 %v6039
          %7217 = vmatpush.bf16.msra.mxu0 %v6031
          %7218 = vmatmul.bf16.gmra.mxu0 %v3892
          %v7219 = vpop.f32.mrf.mxu0
          %v7220 = vadd.f32 %v7207, %v7219
          %v7221 = vpop.f32.mrf.mxu0
          %7222 = vdwg.mxu0
          %7223 = vmatpush.bf16.msra.mxu0 %v6151
          %7224 = vmatpush.bf16.msra.mxu0 %v6143
          %7225 = vmatpush.bf16.msra.mxu0 %v6135
          %7226 = vmatpush.bf16.msra.mxu0 %v6127
          %7227 = vmatpush.bf16.msra.mxu0 %v6119
          %7228 = vmatpush.bf16.msra.mxu0 %v6111
          %7229 = vmatpush.bf16.msra.mxu0 %v6103
          %7230 = vmatpush.bf16.msra.mxu0 %v6095
          %7231 = vmatmul.bf16.gmra.mxu0 %v3893
          %v7232 = vpop.f32.mrf.mxu0
          %v7233 = vadd.f32 %v7220, %v7232
          %v7234 = vpop.f32.mrf.mxu0
          %7235 = vdwg.mxu0
          %7236 = vmatpush.bf16.msra.mxu0 %v6215
          %7237 = vmatpush.bf16.msra.mxu0 %v6207
          %7238 = vmatpush.bf16.msra.mxu0 %v6199
          %7239 = vmatpush.bf16.msra.mxu0 %v6191
          %7240 = vmatpush.bf16.msra.mxu0 %v6183
          %7241 = vmatpush.bf16.msra.mxu0 %v6175
          %7242 = vmatpush.bf16.msra.mxu0 %v6167
          %7243 = vmatpush.bf16.msra.mxu0 %v6159
          %7244 = vmatmul.bf16.gmra.mxu0 %v3894
          %v7245 = vpop.f32.mrf.mxu0
          %v7246 = vadd.f32 %v7233, %v7245
          %v7247 = vpop.f32.mrf.mxu0
          %7248 = vdwg.mxu0
          %7249 = vmatpush.bf16.msra.mxu0 %v6279
          %7250 = vmatpush.bf16.msra.mxu0 %v6271
          %7251 = vmatpush.bf16.msra.mxu0 %v6263
          %7252 = vmatpush.bf16.msra.mxu0 %v6255
          %7253 = vmatpush.bf16.msra.mxu0 %v6247
          %7254 = vmatpush.bf16.msra.mxu0 %v6239
          %7255 = vmatpush.bf16.msra.mxu0 %v6231
          %7256 = vmatpush.bf16.msra.mxu0 %v6223
          %7257 = vmatmul.bf16.gmra.mxu0 %v3895
          %v7258 = vpop.f32.mrf.mxu0
          %v7259 = vadd.f32 %v7246, %v7258
          %v7260 = vpop.f32.mrf.mxu0
          %7261 = vdwg.mxu0
          %7262 = vmatpush.bf16.msra.mxu0 %v6343
          %7263 = vmatpush.bf16.msra.mxu0 %v6335
          %7264 = vmatpush.bf16.msra.mxu0 %v6327
          %7265 = vmatpush.bf16.msra.mxu0 %v6319
          %7266 = vmatpush.bf16.msra.mxu0 %v6311
          %7267 = vmatpush.bf16.msra.mxu0 %v6303
          %7268 = vmatpush.bf16.msra.mxu0 %v6295
          %7269 = vmatpush.bf16.msra.mxu0 %v6287
          %7270 = vmatmul.bf16.gmra.mxu0 %v3896
          %v7271 = vpop.f32.mrf.mxu0
          %v7272 = vadd.f32 %v7259, %v7271
          %v7273 = vpop.f32.mrf.mxu0
          %7274 = vdwg.mxu0
          %7275 = vmatpush.bf16.msra.mxu0 %v6407
          %7276 = vmatpush.bf16.msra.mxu0 %v6399
          %7277 = vmatpush.bf16.msra.mxu0 %v6391
          %7278 = vmatpush.bf16.msra.mxu0 %v6383
          %7279 = vmatpush.bf16.msra.mxu0 %v6375
          %7280 = vmatpush.bf16.msra.mxu0 %v6367
          %7281 = vmatpush.bf16.msra.mxu0 %v6359
          %7282 = vmatpush.bf16.msra.mxu0 %v6351
          %7283 = vmatmul.bf16.gmra.mxu0 %v3897
          %v7284 = vpop.f32.mrf.mxu0
          %v7285 = vadd.f32 %v7272, %v7284
          %v7286 = vpop.f32.mrf.mxu0
          %7287 = vdwg.mxu0
          %7288 = vmatpush.bf16.msra.mxu0 %v6471
          %7289 = vmatpush.bf16.msra.mxu0 %v6463
          %7290 = vmatpush.bf16.msra.mxu0 %v6455
          %7291 = vmatpush.bf16.msra.mxu0 %v6447
          %7292 = vmatpush.bf16.msra.mxu0 %v6439
          %7293 = vmatpush.bf16.msra.mxu0 %v6431
          %7294 = vmatpush.bf16.msra.mxu0 %v6423
          %7295 = vmatpush.bf16.msra.mxu0 %v6415
          %7296 = vmatmul.bf16.gmra.mxu0 %v3898
          %v7297 = vpop.f32.mrf.mxu0
          %v7298 = vadd.f32 %v7285, %v7297
          %v7299 = vpop.f32.mrf.mxu0
          %7300 = vdwg.mxu0
          %7301 = vmatpush.bf16.msra.mxu0 %v6024
          %7302 = vmatpush.bf16.msra.mxu0 %v6016
          %7303 = vmatpush.bf16.msra.mxu0 %v6008
          %7304 = vmatpush.bf16.msra.mxu0 %v6000
          %7305 = vmatpush.bf16.msra.mxu0 %v5992
          %7306 = vmatpush.bf16.msra.mxu0 %v5984
          %7307 = vmatpush.bf16.msra.mxu0 %v5976
          %7308 = vmatpush.bf16.msra.mxu0 %v5968
          %7309 = vmatmul.bf16.gmra.mxu0 %v3891
          %v7310 = vpop.f32.mrf.mxu0
          %v7311 = vadd.f32 %v4416, %v7310
          %v7312 = vpop.f32.mrf.mxu0
          %7313 = vdwg.mxu0
          %7314 = vmatpush.bf16.msra.mxu0 %v6088
          %7315 = vmatpush.bf16.msra.mxu0 %v6080
          %7316 = vmatpush.bf16.msra.mxu0 %v6072
          %7317 = vmatpush.bf16.msra.mxu0 %v6064
          %7318 = vmatpush.bf16.msra.mxu0 %v6056
          %7319 = vmatpush.bf16.msra.mxu0 %v6048
          %7320 = vmatpush.bf16.msra.mxu0 %v6040
          %7321 = vmatpush.bf16.msra.mxu0 %v6032
          %7322 = vmatmul.bf16.gmra.mxu0 %v3892
          %v7323 = vpop.f32.mrf.mxu0
          %v7324 = vadd.f32 %v7311, %v7323
          %v7325 = vpop.f32.mrf.mxu0
          %7326 = vdwg.mxu0
          %7327 = vmatpush.bf16.msra.mxu0 %v6152
          %7328 = vmatpush.bf16.msra.mxu0 %v6144
          %7329 = vmatpush.bf16.msra.mxu0 %v6136
          %7330 = vmatpush.bf16.msra.mxu0 %v6128
          %7331 = vmatpush.bf16.msra.mxu0 %v6120
          %7332 = vmatpush.bf16.msra.mxu0 %v6112
          %7333 = vmatpush.bf16.msra.mxu0 %v6104
          %7334 = vmatpush.bf16.msra.mxu0 %v6096
          %7335 = vmatmul.bf16.gmra.mxu0 %v3893
          %v7336 = vpop.f32.mrf.mxu0
          %v7337 = vadd.f32 %v7324, %v7336
          %v7338 = vpop.f32.mrf.mxu0
          %7339 = vdwg.mxu0
          %7340 = vmatpush.bf16.msra.mxu0 %v6216
          %7341 = vmatpush.bf16.msra.mxu0 %v6208
          %7342 = vmatpush.bf16.msra.mxu0 %v6200
          %7343 = vmatpush.bf16.msra.mxu0 %v6192
          %7344 = vmatpush.bf16.msra.mxu0 %v6184
          %7345 = vmatpush.bf16.msra.mxu0 %v6176
          %7346 = vmatpush.bf16.msra.mxu0 %v6168
          %7347 = vmatpush.bf16.msra.mxu0 %v6160
          %7348 = vmatmul.bf16.gmra.mxu0 %v3894
          %v7349 = vpop.f32.mrf.mxu0
          %v7350 = vadd.f32 %v7337, %v7349
          %v7351 = vpop.f32.mrf.mxu0
          %7352 = vdwg.mxu0
          %7353 = vmatpush.bf16.msra.mxu0 %v6280
          %7354 = vmatpush.bf16.msra.mxu0 %v6272
          %7355 = vmatpush.bf16.msra.mxu0 %v6264
          %7356 = vmatpush.bf16.msra.mxu0 %v6256
          %7357 = vmatpush.bf16.msra.mxu0 %v6248
          %7358 = vmatpush.bf16.msra.mxu0 %v6240
          %7359 = vmatpush.bf16.msra.mxu0 %v6232
          %7360 = vmatpush.bf16.msra.mxu0 %v6224
          %7361 = vmatmul.bf16.gmra.mxu0 %v3895
          %v7362 = vpop.f32.mrf.mxu0
          %v7363 = vadd.f32 %v7350, %v7362
          %v7364 = vpop.f32.mrf.mxu0
          %7365 = vdwg.mxu0
          %7366 = vmatpush.bf16.msra.mxu0 %v6344
          %7367 = vmatpush.bf16.msra.mxu0 %v6336
          %7368 = vmatpush.bf16.msra.mxu0 %v6328
          %7369 = vmatpush.bf16.msra.mxu0 %v6320
          %7370 = vmatpush.bf16.msra.mxu0 %v6312
          %7371 = vmatpush.bf16.msra.mxu0 %v6304
          %7372 = vmatpush.bf16.msra.mxu0 %v6296
          %7373 = vmatpush.bf16.msra.mxu0 %v6288
          %7374 = vmatmul.bf16.gmra.mxu0 %v3896
          %v7375 = vpop.f32.mrf.mxu0
          %v7376 = vadd.f32 %v7363, %v7375
          %v7377 = vpop.f32.mrf.mxu0
          %7378 = vdwg.mxu0
          %7379 = vmatpush.bf16.msra.mxu0 %v6408
          %7380 = vmatpush.bf16.msra.mxu0 %v6400
          %7381 = vmatpush.bf16.msra.mxu0 %v6392
          %7382 = vmatpush.bf16.msra.mxu0 %v6384
          %7383 = vmatpush.bf16.msra.mxu0 %v6376
          %7384 = vmatpush.bf16.msra.mxu0 %v6368
          %7385 = vmatpush.bf16.msra.mxu0 %v6360
          %7386 = vmatpush.bf16.msra.mxu0 %v6352
          %7387 = vmatmul.bf16.gmra.mxu0 %v3897
          %v7388 = vpop.f32.mrf.mxu0
          %v7389 = vadd.f32 %v7376, %v7388
          %v7390 = vpop.f32.mrf.mxu0
          %7391 = vdwg.mxu0
          %7392 = vmatpush.bf16.msra.mxu0 %v6472
          %7393 = vmatpush.bf16.msra.mxu0 %v6464
          %7394 = vmatpush.bf16.msra.mxu0 %v6456
          %7395 = vmatpush.bf16.msra.mxu0 %v6448
          %7396 = vmatpush.bf16.msra.mxu0 %v6440
          %7397 = vmatpush.bf16.msra.mxu0 %v6432
          %7398 = vmatpush.bf16.msra.mxu0 %v6424
          %7399 = vmatpush.bf16.msra.mxu0 %v6416
          %7400 = vmatmul.bf16.gmra.mxu0 %v3898
          %v7401 = vpop.f32.mrf.mxu0
          %v7402 = vadd.f32 %v7389, %v7401
          %v7403 = vpop.f32.mrf.mxu0
          %7404 = vdwg.mxu0
          %7405 = vmatpush.bf16.msra.mxu0 %v6025
          %7406 = vmatpush.bf16.msra.mxu0 %v6017
          %7407 = vmatpush.bf16.msra.mxu0 %v6009
          %7408 = vmatpush.bf16.msra.mxu0 %v6001
          %7409 = vmatpush.bf16.msra.mxu0 %v5993
          %7410 = vmatpush.bf16.msra.mxu0 %v5985
          %7411 = vmatpush.bf16.msra.mxu0 %v5977
          %7412 = vmatpush.bf16.msra.mxu0 %v5969
          %7413 = vmatmul.bf16.gmra.mxu0 %v3891
          %v7414 = vpop.f32.mrf.mxu0
          %v7415 = vadd.f32 %v4417, %v7414
          %v7416 = vpop.f32.mrf.mxu0
          %7417 = vdwg.mxu0
          %7418 = vmatpush.bf16.msra.mxu0 %v6089
          %7419 = vmatpush.bf16.msra.mxu0 %v6081
          %7420 = vmatpush.bf16.msra.mxu0 %v6073
          %7421 = vmatpush.bf16.msra.mxu0 %v6065
          %7422 = vmatpush.bf16.msra.mxu0 %v6057
          %7423 = vmatpush.bf16.msra.mxu0 %v6049
          %7424 = vmatpush.bf16.msra.mxu0 %v6041
          %7425 = vmatpush.bf16.msra.mxu0 %v6033
          %7426 = vmatmul.bf16.gmra.mxu0 %v3892
          %v7427 = vpop.f32.mrf.mxu0
          %v7428 = vadd.f32 %v7415, %v7427
          %v7429 = vpop.f32.mrf.mxu0
          %7430 = vdwg.mxu0
          %7431 = vmatpush.bf16.msra.mxu0 %v6153
          %7432 = vmatpush.bf16.msra.mxu0 %v6145
          %7433 = vmatpush.bf16.msra.mxu0 %v6137
          %7434 = vmatpush.bf16.msra.mxu0 %v6129
          %7435 = vmatpush.bf16.msra.mxu0 %v6121
          %7436 = vmatpush.bf16.msra.mxu0 %v6113
          %7437 = vmatpush.bf16.msra.mxu0 %v6105
          %7438 = vmatpush.bf16.msra.mxu0 %v6097
          %7439 = vmatmul.bf16.gmra.mxu0 %v3893
          %v7440 = vpop.f32.mrf.mxu0
          %v7441 = vadd.f32 %v7428, %v7440
          %v7442 = vpop.f32.mrf.mxu0
          %7443 = vdwg.mxu0
          %7444 = vmatpush.bf16.msra.mxu0 %v6217
          %7445 = vmatpush.bf16.msra.mxu0 %v6209
          %7446 = vmatpush.bf16.msra.mxu0 %v6201
          %7447 = vmatpush.bf16.msra.mxu0 %v6193
          %7448 = vmatpush.bf16.msra.mxu0 %v6185
          %7449 = vmatpush.bf16.msra.mxu0 %v6177
          %7450 = vmatpush.bf16.msra.mxu0 %v6169
          %7451 = vmatpush.bf16.msra.mxu0 %v6161
          %7452 = vmatmul.bf16.gmra.mxu0 %v3894
          %v7453 = vpop.f32.mrf.mxu0
          %v7454 = vadd.f32 %v7441, %v7453
          %v7455 = vpop.f32.mrf.mxu0
          %7456 = vdwg.mxu0
          %7457 = vmatpush.bf16.msra.mxu0 %v6281
          %7458 = vmatpush.bf16.msra.mxu0 %v6273
          %7459 = vmatpush.bf16.msra.mxu0 %v6265
          %7460 = vmatpush.bf16.msra.mxu0 %v6257
          %7461 = vmatpush.bf16.msra.mxu0 %v6249
          %7462 = vmatpush.bf16.msra.mxu0 %v6241
          %7463 = vmatpush.bf16.msra.mxu0 %v6233
          %7464 = vmatpush.bf16.msra.mxu0 %v6225
          %7465 = vmatmul.bf16.gmra.mxu0 %v3895
          %v7466 = vpop.f32.mrf.mxu0
          %v7467 = vadd.f32 %v7454, %v7466
          %v7468 = vpop.f32.mrf.mxu0
          %7469 = vdwg.mxu0
          %7470 = vmatpush.bf16.msra.mxu0 %v6345
          %7471 = vmatpush.bf16.msra.mxu0 %v6337
          %7472 = vmatpush.bf16.msra.mxu0 %v6329
          %7473 = vmatpush.bf16.msra.mxu0 %v6321
          %7474 = vmatpush.bf16.msra.mxu0 %v6313
          %7475 = vmatpush.bf16.msra.mxu0 %v6305
          %7476 = vmatpush.bf16.msra.mxu0 %v6297
          %7477 = vmatpush.bf16.msra.mxu0 %v6289
          %7478 = vmatmul.bf16.gmra.mxu0 %v3896
          %v7479 = vpop.f32.mrf.mxu0
          %v7480 = vadd.f32 %v7467, %v7479
          %v7481 = vpop.f32.mrf.mxu0
          %7482 = vdwg.mxu0
          %7483 = vmatpush.bf16.msra.mxu0 %v6409
          %7484 = vmatpush.bf16.msra.mxu0 %v6401
          %7485 = vmatpush.bf16.msra.mxu0 %v6393
          %7486 = vmatpush.bf16.msra.mxu0 %v6385
          %7487 = vmatpush.bf16.msra.mxu0 %v6377
          %7488 = vmatpush.bf16.msra.mxu0 %v6369
          %7489 = vmatpush.bf16.msra.mxu0 %v6361
          %7490 = vmatpush.bf16.msra.mxu0 %v6353
          %7491 = vmatmul.bf16.gmra.mxu0 %v3897
          %v7492 = vpop.f32.mrf.mxu0
          %v7493 = vadd.f32 %v7480, %v7492
          %v7494 = vpop.f32.mrf.mxu0
          %7495 = vdwg.mxu0
          %7496 = vmatpush.bf16.msra.mxu0 %v6473
          %7497 = vmatpush.bf16.msra.mxu0 %v6465
          %7498 = vmatpush.bf16.msra.mxu0 %v6457
          %7499 = vmatpush.bf16.msra.mxu0 %v6449
          %7500 = vmatpush.bf16.msra.mxu0 %v6441
          %7501 = vmatpush.bf16.msra.mxu0 %v6433
          %7502 = vmatpush.bf16.msra.mxu0 %v6425
          %7503 = vmatpush.bf16.msra.mxu0 %v6417
          %7504 = vmatmul.bf16.gmra.mxu0 %v3898
          %v7505 = vpop.f32.mrf.mxu0
          %v7506 = vadd.f32 %v7493, %v7505
          %v7507 = vpop.f32.mrf.mxu0
          %7508 = vdwg.mxu0
          %7509 = vmatpush.bf16.msra.mxu0 %v6026
          %7510 = vmatpush.bf16.msra.mxu0 %v6018
          %7511 = vmatpush.bf16.msra.mxu0 %v6010
          %7512 = vmatpush.bf16.msra.mxu0 %v6002
          %7513 = vmatpush.bf16.msra.mxu0 %v5994
          %7514 = vmatpush.bf16.msra.mxu0 %v5986
          %7515 = vmatpush.bf16.msra.mxu0 %v5978
          %7516 = vmatpush.bf16.msra.mxu0 %v5970
          %7517 = vmatmul.bf16.gmra.mxu0 %v3891
          %v7518 = vpop.f32.mrf.mxu0
          %v7519 = vadd.f32 %v4418, %v7518
          %v7520 = vpop.f32.mrf.mxu0
          %7521 = vdwg.mxu0
          %7522 = vmatpush.bf16.msra.mxu0 %v6090
          %7523 = vmatpush.bf16.msra.mxu0 %v6082
          %7524 = vmatpush.bf16.msra.mxu0 %v6074
          %7525 = vmatpush.bf16.msra.mxu0 %v6066
          %7526 = vmatpush.bf16.msra.mxu0 %v6058
          %7527 = vmatpush.bf16.msra.mxu0 %v6050
          %7528 = vmatpush.bf16.msra.mxu0 %v6042
          %7529 = vmatpush.bf16.msra.mxu0 %v6034
          %7530 = vmatmul.bf16.gmra.mxu0 %v3892
          %v7531 = vpop.f32.mrf.mxu0
          %v7532 = vadd.f32 %v7519, %v7531
          %v7533 = vpop.f32.mrf.mxu0
          %7534 = vdwg.mxu0
          %7535 = vmatpush.bf16.msra.mxu0 %v6154
          %7536 = vmatpush.bf16.msra.mxu0 %v6146
          %7537 = vmatpush.bf16.msra.mxu0 %v6138
          %7538 = vmatpush.bf16.msra.mxu0 %v6130
          %7539 = vmatpush.bf16.msra.mxu0 %v6122
          %7540 = vmatpush.bf16.msra.mxu0 %v6114
          %7541 = vmatpush.bf16.msra.mxu0 %v6106
          %7542 = vmatpush.bf16.msra.mxu0 %v6098
          %7543 = vmatmul.bf16.gmra.mxu0 %v3893
          %v7544 = vpop.f32.mrf.mxu0
          %v7545 = vadd.f32 %v7532, %v7544
          %v7546 = vpop.f32.mrf.mxu0
          %7547 = vdwg.mxu0
          %7548 = vmatpush.bf16.msra.mxu0 %v6218
          %7549 = vmatpush.bf16.msra.mxu0 %v6210
          %7550 = vmatpush.bf16.msra.mxu0 %v6202
          %7551 = vmatpush.bf16.msra.mxu0 %v6194
          %7552 = vmatpush.bf16.msra.mxu0 %v6186
          %7553 = vmatpush.bf16.msra.mxu0 %v6178
          %7554 = vmatpush.bf16.msra.mxu0 %v6170
          %7555 = vmatpush.bf16.msra.mxu0 %v6162
          %7556 = vmatmul.bf16.gmra.mxu0 %v3894
          %v7557 = vpop.f32.mrf.mxu0
          %v7558 = vadd.f32 %v7545, %v7557
          %v7559 = vpop.f32.mrf.mxu0
          %7560 = vdwg.mxu0
          %7561 = vmatpush.bf16.msra.mxu0 %v6282
          %7562 = vmatpush.bf16.msra.mxu0 %v6274
          %7563 = vmatpush.bf16.msra.mxu0 %v6266
          %7564 = vmatpush.bf16.msra.mxu0 %v6258
          %7565 = vmatpush.bf16.msra.mxu0 %v6250
          %7566 = vmatpush.bf16.msra.mxu0 %v6242
          %7567 = vmatpush.bf16.msra.mxu0 %v6234
          %7568 = vmatpush.bf16.msra.mxu0 %v6226
          %7569 = vmatmul.bf16.gmra.mxu0 %v3895
          %v7570 = vpop.f32.mrf.mxu0
          %v7571 = vadd.f32 %v7558, %v7570
          %v7572 = vpop.f32.mrf.mxu0
          %7573 = vdwg.mxu0
          %7574 = vmatpush.bf16.msra.mxu0 %v6346
          %7575 = vmatpush.bf16.msra.mxu0 %v6338
          %7576 = vmatpush.bf16.msra.mxu0 %v6330
          %7577 = vmatpush.bf16.msra.mxu0 %v6322
          %7578 = vmatpush.bf16.msra.mxu0 %v6314
          %7579 = vmatpush.bf16.msra.mxu0 %v6306
          %7580 = vmatpush.bf16.msra.mxu0 %v6298
          %7581 = vmatpush.bf16.msra.mxu0 %v6290
          %7582 = vmatmul.bf16.gmra.mxu0 %v3896
          %v7583 = vpop.f32.mrf.mxu0
          %v7584 = vadd.f32 %v7571, %v7583
          %v7585 = vpop.f32.mrf.mxu0
          %7586 = vdwg.mxu0
          %7587 = vmatpush.bf16.msra.mxu0 %v6410
          %7588 = vmatpush.bf16.msra.mxu0 %v6402
          %7589 = vmatpush.bf16.msra.mxu0 %v6394
          %7590 = vmatpush.bf16.msra.mxu0 %v6386
          %7591 = vmatpush.bf16.msra.mxu0 %v6378
          %7592 = vmatpush.bf16.msra.mxu0 %v6370
          %7593 = vmatpush.bf16.msra.mxu0 %v6362
          %7594 = vmatpush.bf16.msra.mxu0 %v6354
          %7595 = vmatmul.bf16.gmra.mxu0 %v3897
          %v7596 = vpop.f32.mrf.mxu0
          %v7597 = vadd.f32 %v7584, %v7596
          %v7598 = vpop.f32.mrf.mxu0
          %7599 = vdwg.mxu0
          %7600 = vmatpush.bf16.msra.mxu0 %v6474
          %7601 = vmatpush.bf16.msra.mxu0 %v6466
          %7602 = vmatpush.bf16.msra.mxu0 %v6458
          %7603 = vmatpush.bf16.msra.mxu0 %v6450
          %7604 = vmatpush.bf16.msra.mxu0 %v6442
          %7605 = vmatpush.bf16.msra.mxu0 %v6434
          %7606 = vmatpush.bf16.msra.mxu0 %v6426
          %7607 = vmatpush.bf16.msra.mxu0 %v6418
          %7608 = vmatmul.bf16.gmra.mxu0 %v3898
          %v7609 = vpop.f32.mrf.mxu0
          %v7610 = vadd.f32 %v7597, %v7609
          %v7611 = vpop.f32.mrf.mxu0
          %7612 = vdwg.mxu0
          %7613 = vmatpush.bf16.msra.mxu0 %v6027
          %7614 = vmatpush.bf16.msra.mxu0 %v6019
          %7615 = vmatpush.bf16.msra.mxu0 %v6011
          %7616 = vmatpush.bf16.msra.mxu0 %v6003
          %7617 = vmatpush.bf16.msra.mxu0 %v5995
          %7618 = vmatpush.bf16.msra.mxu0 %v5987
          %7619 = vmatpush.bf16.msra.mxu0 %v5979
          %7620 = vmatpush.bf16.msra.mxu0 %v5971
          %7621 = vmatmul.bf16.gmra.mxu0 %v3891
          %v7622 = vpop.f32.mrf.mxu0
          %v7623 = vadd.f32 %v4419, %v7622
          %v7624 = vpop.f32.mrf.mxu0
          %7625 = vdwg.mxu0
          %7626 = vmatpush.bf16.msra.mxu0 %v6091
          %7627 = vmatpush.bf16.msra.mxu0 %v6083
          %7628 = vmatpush.bf16.msra.mxu0 %v6075
          %7629 = vmatpush.bf16.msra.mxu0 %v6067
          %7630 = vmatpush.bf16.msra.mxu0 %v6059
          %7631 = vmatpush.bf16.msra.mxu0 %v6051
          %7632 = vmatpush.bf16.msra.mxu0 %v6043
          %7633 = vmatpush.bf16.msra.mxu0 %v6035
          %7634 = vmatmul.bf16.gmra.mxu0 %v3892
          %v7635 = vpop.f32.mrf.mxu0
          %v7636 = vadd.f32 %v7623, %v7635
          %v7637 = vpop.f32.mrf.mxu0
          %7638 = vdwg.mxu0
          %7639 = vmatpush.bf16.msra.mxu0 %v6155
          %7640 = vmatpush.bf16.msra.mxu0 %v6147
          %7641 = vmatpush.bf16.msra.mxu0 %v6139
          %7642 = vmatpush.bf16.msra.mxu0 %v6131
          %7643 = vmatpush.bf16.msra.mxu0 %v6123
          %7644 = vmatpush.bf16.msra.mxu0 %v6115
          %7645 = vmatpush.bf16.msra.mxu0 %v6107
          %7646 = vmatpush.bf16.msra.mxu0 %v6099
          %7647 = vmatmul.bf16.gmra.mxu0 %v3893
          %v7648 = vpop.f32.mrf.mxu0
          %v7649 = vadd.f32 %v7636, %v7648
          %v7650 = vpop.f32.mrf.mxu0
          %7651 = vdwg.mxu0
          %7652 = vmatpush.bf16.msra.mxu0 %v6219
          %7653 = vmatpush.bf16.msra.mxu0 %v6211
          %7654 = vmatpush.bf16.msra.mxu0 %v6203
          %7655 = vmatpush.bf16.msra.mxu0 %v6195
          %7656 = vmatpush.bf16.msra.mxu0 %v6187
          %7657 = vmatpush.bf16.msra.mxu0 %v6179
          %7658 = vmatpush.bf16.msra.mxu0 %v6171
          %7659 = vmatpush.bf16.msra.mxu0 %v6163
          %7660 = vmatmul.bf16.gmra.mxu0 %v3894
          %v7661 = vpop.f32.mrf.mxu0
          %v7662 = vadd.f32 %v7649, %v7661
          %v7663 = vpop.f32.mrf.mxu0
          %7664 = vdwg.mxu0
          %7665 = vmatpush.bf16.msra.mxu0 %v6283
          %7666 = vmatpush.bf16.msra.mxu0 %v6275
          %7667 = vmatpush.bf16.msra.mxu0 %v6267
          %7668 = vmatpush.bf16.msra.mxu0 %v6259
          %7669 = vmatpush.bf16.msra.mxu0 %v6251
          %7670 = vmatpush.bf16.msra.mxu0 %v6243
          %7671 = vmatpush.bf16.msra.mxu0 %v6235
          %7672 = vmatpush.bf16.msra.mxu0 %v6227
          %7673 = vmatmul.bf16.gmra.mxu0 %v3895
          %v7674 = vpop.f32.mrf.mxu0
          %v7675 = vadd.f32 %v7662, %v7674
          %v7676 = vpop.f32.mrf.mxu0
          %7677 = vdwg.mxu0
          %7678 = vmatpush.bf16.msra.mxu0 %v6347
          %7679 = vmatpush.bf16.msra.mxu0 %v6339
          %7680 = vmatpush.bf16.msra.mxu0 %v6331
          %7681 = vmatpush.bf16.msra.mxu0 %v6323
          %7682 = vmatpush.bf16.msra.mxu0 %v6315
          %7683 = vmatpush.bf16.msra.mxu0 %v6307
          %7684 = vmatpush.bf16.msra.mxu0 %v6299
          %7685 = vmatpush.bf16.msra.mxu0 %v6291
          %7686 = vmatmul.bf16.gmra.mxu0 %v3896
          %v7687 = vpop.f32.mrf.mxu0
          %v7688 = vadd.f32 %v7675, %v7687
          %v7689 = vpop.f32.mrf.mxu0
          %7690 = vdwg.mxu0
          %7691 = vmatpush.bf16.msra.mxu0 %v6411
          %7692 = vmatpush.bf16.msra.mxu0 %v6403
          %7693 = vmatpush.bf16.msra.mxu0 %v6395
          %7694 = vmatpush.bf16.msra.mxu0 %v6387
          %7695 = vmatpush.bf16.msra.mxu0 %v6379
          %7696 = vmatpush.bf16.msra.mxu0 %v6371
          %7697 = vmatpush.bf16.msra.mxu0 %v6363
          %7698 = vmatpush.bf16.msra.mxu0 %v6355
          %7699 = vmatmul.bf16.gmra.mxu0 %v3897
          %v7700 = vpop.f32.mrf.mxu0
          %v7701 = vadd.f32 %v7688, %v7700
          %v7702 = vpop.f32.mrf.mxu0
          %7703 = vdwg.mxu0
          %7704 = vmatpush.bf16.msra.mxu0 %v6475
          %7705 = vmatpush.bf16.msra.mxu0 %v6467
          %7706 = vmatpush.bf16.msra.mxu0 %v6459
          %7707 = vmatpush.bf16.msra.mxu0 %v6451
          %7708 = vmatpush.bf16.msra.mxu0 %v6443
          %7709 = vmatpush.bf16.msra.mxu0 %v6435
          %7710 = vmatpush.bf16.msra.mxu0 %v6427
          %7711 = vmatpush.bf16.msra.mxu0 %v6419
          %7712 = vmatmul.bf16.gmra.mxu0 %v3898
          %v7713 = vpop.f32.mrf.mxu0
          %v7714 = vadd.f32 %v7701, %v7713
          %v7715 = vpop.f32.mrf.mxu0
          %7716 = vdwg.mxu0
          %7717 = vmatpush.bf16.msra.mxu0 %v6028
          %7718 = vmatpush.bf16.msra.mxu0 %v6020
          %7719 = vmatpush.bf16.msra.mxu0 %v6012
          %7720 = vmatpush.bf16.msra.mxu0 %v6004
          %7721 = vmatpush.bf16.msra.mxu0 %v5996
          %7722 = vmatpush.bf16.msra.mxu0 %v5988
          %7723 = vmatpush.bf16.msra.mxu0 %v5980
          %7724 = vmatpush.bf16.msra.mxu0 %v5972
          %7725 = vmatmul.bf16.gmra.mxu0 %v3891
          %v7726 = vpop.f32.mrf.mxu0
          %v7727 = vadd.f32 %v4420, %v7726
          %v7728 = vpop.f32.mrf.mxu0
          %7729 = vdwg.mxu0
          %7730 = vmatpush.bf16.msra.mxu0 %v6092
          %7731 = vmatpush.bf16.msra.mxu0 %v6084
          %7732 = vmatpush.bf16.msra.mxu0 %v6076
          %7733 = vmatpush.bf16.msra.mxu0 %v6068
          %7734 = vmatpush.bf16.msra.mxu0 %v6060
          %7735 = vmatpush.bf16.msra.mxu0 %v6052
          %7736 = vmatpush.bf16.msra.mxu0 %v6044
          %7737 = vmatpush.bf16.msra.mxu0 %v6036
          %7738 = vmatmul.bf16.gmra.mxu0 %v3892
          %v7739 = vpop.f32.mrf.mxu0
          %v7740 = vadd.f32 %v7727, %v7739
          %v7741 = vpop.f32.mrf.mxu0
          %7742 = vdwg.mxu0
          %7743 = vmatpush.bf16.msra.mxu0 %v6156
          %7744 = vmatpush.bf16.msra.mxu0 %v6148
          %7745 = vmatpush.bf16.msra.mxu0 %v6140
          %7746 = vmatpush.bf16.msra.mxu0 %v6132
          %7747 = vmatpush.bf16.msra.mxu0 %v6124
          %7748 = vmatpush.bf16.msra.mxu0 %v6116
          %7749 = vmatpush.bf16.msra.mxu0 %v6108
          %7750 = vmatpush.bf16.msra.mxu0 %v6100
          %7751 = vmatmul.bf16.gmra.mxu0 %v3893
          %v7752 = vpop.f32.mrf.mxu0
          %v7753 = vadd.f32 %v7740, %v7752
          %v7754 = vpop.f32.mrf.mxu0
          %7755 = vdwg.mxu0
          %7756 = vmatpush.bf16.msra.mxu0 %v6220
          %7757 = vmatpush.bf16.msra.mxu0 %v6212
          %7758 = vmatpush.bf16.msra.mxu0 %v6204
          %7759 = vmatpush.bf16.msra.mxu0 %v6196
          %7760 = vmatpush.bf16.msra.mxu0 %v6188
          %7761 = vmatpush.bf16.msra.mxu0 %v6180
          %7762 = vmatpush.bf16.msra.mxu0 %v6172
          %7763 = vmatpush.bf16.msra.mxu0 %v6164
          %7764 = vmatmul.bf16.gmra.mxu0 %v3894
          %v7765 = vpop.f32.mrf.mxu0
          %v7766 = vadd.f32 %v7753, %v7765
          %v7767 = vpop.f32.mrf.mxu0
          %7768 = vdwg.mxu0
          %7769 = vmatpush.bf16.msra.mxu0 %v6284
          %7770 = vmatpush.bf16.msra.mxu0 %v6276
          %7771 = vmatpush.bf16.msra.mxu0 %v6268
          %7772 = vmatpush.bf16.msra.mxu0 %v6260
          %7773 = vmatpush.bf16.msra.mxu0 %v6252
          %7774 = vmatpush.bf16.msra.mxu0 %v6244
          %7775 = vmatpush.bf16.msra.mxu0 %v6236
          %7776 = vmatpush.bf16.msra.mxu0 %v6228
          %7777 = vmatmul.bf16.gmra.mxu0 %v3895
          %v7778 = vpop.f32.mrf.mxu0
          %v7779 = vadd.f32 %v7766, %v7778
          %v7780 = vpop.f32.mrf.mxu0
          %7781 = vdwg.mxu0
          %7782 = vmatpush.bf16.msra.mxu0 %v6348
          %7783 = vmatpush.bf16.msra.mxu0 %v6340
          %7784 = vmatpush.bf16.msra.mxu0 %v6332
          %7785 = vmatpush.bf16.msra.mxu0 %v6324
          %7786 = vmatpush.bf16.msra.mxu0 %v6316
          %7787 = vmatpush.bf16.msra.mxu0 %v6308
          %7788 = vmatpush.bf16.msra.mxu0 %v6300
          %7789 = vmatpush.bf16.msra.mxu0 %v6292
          %7790 = vmatmul.bf16.gmra.mxu0 %v3896
          %v7791 = vpop.f32.mrf.mxu0
          %v7792 = vadd.f32 %v7779, %v7791
          %v7793 = vpop.f32.mrf.mxu0
          %7794 = vdwg.mxu0
          %7795 = vmatpush.bf16.msra.mxu0 %v6412
          %7796 = vmatpush.bf16.msra.mxu0 %v6404
          %7797 = vmatpush.bf16.msra.mxu0 %v6396
          %7798 = vmatpush.bf16.msra.mxu0 %v6388
          %7799 = vmatpush.bf16.msra.mxu0 %v6380
          %7800 = vmatpush.bf16.msra.mxu0 %v6372
          %7801 = vmatpush.bf16.msra.mxu0 %v6364
          %7802 = vmatpush.bf16.msra.mxu0 %v6356
          %7803 = vmatmul.bf16.gmra.mxu0 %v3897
          %v7804 = vpop.f32.mrf.mxu0
          %v7805 = vadd.f32 %v7792, %v7804
          %v7806 = vpop.f32.mrf.mxu0
          %7807 = vdwg.mxu0
          %7808 = vmatpush.bf16.msra.mxu0 %v6476
          %7809 = vmatpush.bf16.msra.mxu0 %v6468
          %7810 = vmatpush.bf16.msra.mxu0 %v6460
          %7811 = vmatpush.bf16.msra.mxu0 %v6452
          %7812 = vmatpush.bf16.msra.mxu0 %v6444
          %7813 = vmatpush.bf16.msra.mxu0 %v6436
          %7814 = vmatpush.bf16.msra.mxu0 %v6428
          %7815 = vmatpush.bf16.msra.mxu0 %v6420
          %7816 = vmatmul.bf16.gmra.mxu0 %v3898
          %v7817 = vpop.f32.mrf.mxu0
          %v7818 = vadd.f32 %v7805, %v7817
          %v7819 = vpop.f32.mrf.mxu0
          %7820 = vdwg.mxu0
          %v7829 = vrot.slane %v7194, 6
          %v7830 = vrot.slane %v7298, 4
          %v7831 = vrot.slane %v7402, 2
          %v7832 = vrot.slane %v7610, 6
          %v7833 = vrot.slane %v7714, 4
          %v7834 = vrot.slane %v7818, 2
          %v7835 = vsel %vm3731, %v7090, %v7829
          %v7836 = vsel %vm3733, %v7830, %v7831
          %v7837 = vsel %vm3735, %v7835, %v7836
          %v7838 = vsel %vm3731, %v7506, %v7832
          %v7839 = vsel %vm3733, %v7833, %v7834
          %v7840 = vsel %vm3735, %v7838, %v7839
          %v7843 = vadd.f32 %v3780, %v7837
          %v7844 = vadd.f32 %v3781, %v7840
          %7847 = vst [vmem:[#allocation1] ss:$4 sm:$0xff] %v7843
          %s7848 = scalar_lea.vmem [#allocation1], 32
          %7849 = vst [vmem:[%s7848] ss:$4 sm:$0xff] %v7844
          %v7850 = vld.sshfl [vmem:[#allocation1] sm:$0xff pattern:$0x73625140]
          %v7851 = vld.sshfl [vmem:[#allocation1 + $0x8] sm:$0xff pattern:$0x73625140]
          %v7852 = vld.sshfl [vmem:[#allocation1 + $0x10] sm:$0xff pattern:$0x73625140]
          %v7853 = vld.sshfl [vmem:[#allocation1 + $0x18] sm:$0xff pattern:$0x73625140]
          %v7854 = vld.sshfl [vmem:[#allocation1 + $0x20] sm:$0xff pattern:$0x73625140]
          %v7855 = vld.sshfl [vmem:[#allocation1 + $0x28] sm:$0xff pattern:$0x73625140]
          %v7856 = vld.sshfl [vmem:[#allocation1 + $0x30] sm:$0xff pattern:$0x73625140]
          %v7857 = vld.sshfl [vmem:[#allocation1 + $0x38] sm:$0xff pattern:$0x73625140]
          %v7866 = vsel %vm3731, %v7850, 0.0
          %v7867 = vsel %vm3731, %v7851, 0.0
          %v7868 = vadd.f32 %v7866, %v7867
          %v7869 = vsel %vm3731, %v7852, 0.0
          %v7870 = vadd.f32 %v7868, %v7869
          %v7871 = vsel %vm3731, %v7853, 0.0
          %v7872 = vadd.f32 %v7870, %v7871
          %v7873 = vsel %vm3731, %v7854, 0.0
          %v7874 = vadd.f32 %v7872, %v7873
          %v7875 = vsel %vm3731, %v7855, 0.0
          %v7876 = vadd.f32 %v7874, %v7875
          %v7877 = vsel %vm3731, %v7856, 0.0
          %v7878 = vadd.f32 %v7876, %v7877
          %v7879 = vsel %vm3731, %v7857, 0.0
          %v7880 = vadd.f32 %v7878, %v7879
          %7881 = vadd.xlane.f32.xlu0 %v7880
          %v7882 = vpop.xlane.xlu0 %7881
          %v7883 = vrcp.pop 1024.0
          %v7884 = vmul.f32 1024.0, %v7883
          %v7885 = vsub.f32 1.0, %v7884
          %v7886 = vmul.f32 %v7883, %v7885
          %v7887 = vadd.f32 %v7883, %v7886
          %vm7888 = vweird.f32 %v7883
          %v7889 = vsel %vm7888, %v7883, %v7887
          %v7890 = vmul.f32 %v7882, %v7889
          %v7893 = vunpack.c.l.s4 269488144
          %v7894 = vunpack.c.0.s8 %v7893
          %v7895 = vperm.slane %v7890, %v7894
          %v7897 = vsub.f32 %v7843, %v7895
          %v7898 = vsub.f32 %v7844, %v7895
          %v7899 = vmul.f32 %v7897, %v7897
          %v7900 = vmul.f32 %v7898, %v7898
          %7903 = vst [vmem:[#allocation1] ss:$4 sm:$0xff] %v7899
          %s7904 = scalar_lea.vmem [#allocation1], 32
          %7905 = vst [vmem:[%s7904] ss:$4 sm:$0xff] %v7900
          %v7906 = vld.sshfl [vmem:[#allocation1] sm:$0xff pattern:$0x73625140]
          %v7907 = vld.sshfl [vmem:[#allocation1 + $0x8] sm:$0xff pattern:$0x73625140]
          %v7908 = vld.sshfl [vmem:[#allocation1 + $0x10] sm:$0xff pattern:$0x73625140]
          %v7909 = vld.sshfl [vmem:[#allocation1 + $0x18] sm:$0xff pattern:$0x73625140]
          %v7910 = vld.sshfl [vmem:[#allocation1 + $0x20] sm:$0xff pattern:$0x73625140]
          %v7911 = vld.sshfl [vmem:[#allocation1 + $0x28] sm:$0xff pattern:$0x73625140]
          %v7912 = vld.sshfl [vmem:[#allocation1 + $0x30] sm:$0xff pattern:$0x73625140]
          %v7913 = vld.sshfl [vmem:[#allocation1 + $0x38] sm:$0xff pattern:$0x73625140]
          %v7922 = vsel %vm3731, %v7906, 0.0
          %v7923 = vsel %vm3731, %v7907, 0.0
          %v7924 = vadd.f32 %v7922, %v7923
          %v7925 = vsel %vm3731, %v7908, 0.0
          %v7926 = vadd.f32 %v7924, %v7925
          %v7927 = vsel %vm3731, %v7909, 0.0
          %v7928 = vadd.f32 %v7926, %v7927
          %v7929 = vsel %vm3731, %v7910, 0.0
          %v7930 = vadd.f32 %v7928, %v7929
          %v7931 = vsel %vm3731, %v7911, 0.0
          %v7932 = vadd.f32 %v7930, %v7931
          %v7933 = vsel %vm3731, %v7912, 0.0
          %v7934 = vadd.f32 %v7932, %v7933
          %v7935 = vsel %vm3731, %v7913, 0.0
          %v7936 = vadd.f32 %v7934, %v7935
          %7937 = vadd.xlane.f32.xlu0 %v7936
          %v7938 = vpop.xlane.xlu0 %7937
          %v7939 = vmul.f32 %v7938, %v7889
          %v7940 = vadd.f32 %v7939, 1e-05
          %v7941 = vrsqrt.pop %v7940
          %v7942 = vmul.f32 %v7941, %v7940
          %v7943 = vmul.f32 %v7942, %v7941
          %v7944 = vmul.f32 0.5, %v7943
          %v7945 = vsub.f32 1.5, %v7944
          %v7946 = vmul.f32 %v7941, %v7945
          %vm7947 = vweird.f32 %v7940
          %vm7948 = vweird.f32 %v7941
          %vm7949 = vmor %vm7947, %vm7948
          %v7950 = vsel %vm7949, %v7941, %v7946
          %v7953 = vunpack.c.l.s4 269488144
          %v7954 = vunpack.c.0.s8 %v7953
          %v7955 = vperm.slane %v7950, %v7954
          %v7957 = vmul.f32 %v7897, %v7955
          %v7958 = vmul.f32 %v7898, %v7955
          %v7959 = vld [vmem:[%s5] sm:$0xff]
          %v7961 = vperm.slane %v7959, 0
          %v7962 = vperm.slane %v7959, 1
          %v7963 = vperm.slane %v7959, 2
          %v7964 = vperm.slane %v7959, 3
          %v7965 = vperm.slane %v7959, 4
          %v7966 = vperm.slane %v7959, 5
          %v7967 = vperm.slane %v7959, 6
          %v7968 = vperm.slane %v7959, 7
          %v7969 = vrot.slane %v7962, 6
          %v7970 = vrot.slane %v7963, 4
          %v7971 = vrot.slane %v7964, 2
          %v7972 = vrot.slane %v7966, 6
          %v7973 = vrot.slane %v7967, 4
          %v7974 = vrot.slane %v7968, 2
          %v7975 = vsel %vm3731, %v7961, %v7969
          %v7976 = vsel %vm3733, %v7970, %v7971
          %v7977 = vsel %vm3735, %v7975, %v7976
          %v7978 = vsel %vm3731, %v7965, %v7972
          %v7979 = vsel %vm3733, %v7973, %v7974
          %v7980 = vsel %vm3735, %v7978, %v7979
          %v7983 = vmul.f32 %v7957, %v7977
          %v7984 = vmul.f32 %v7958, %v7980
          %v7985 = vld [vmem:[%s6] sm:$0xff]
          %v7987 = vperm.slane %v7985, 0
          %v7988 = vperm.slane %v7985, 1
          %v7989 = vperm.slane %v7985, 2
          %v7990 = vperm.slane %v7985, 3
          %v7991 = vperm.slane %v7985, 4
          %v7992 = vperm.slane %v7985, 5
          %v7993 = vperm.slane %v7985, 6
          %v7994 = vperm.slane %v7985, 7
          %v7995 = vrot.slane %v7988, 6
          %v7996 = vrot.slane %v7989, 4
          %v7997 = vrot.slane %v7990, 2
          %v7998 = vrot.slane %v7992, 6
          %v7999 = vrot.slane %v7993, 4
          %v8000 = vrot.slane %v7994, 2
          %v8001 = vsel %vm3731, %v7987, %v7995
          %v8002 = vsel %vm3733, %v7996, %v7997
          %v8003 = vsel %vm3735, %v8001, %v8002
          %v8004 = vsel %vm3731, %v7991, %v7998
          %v8005 = vsel %vm3733, %v7999, %v8000
          %v8006 = vsel %vm3735, %v8004, %v8005
          %v8009 = vadd.f32 %v7983, %v8003
          %v8010 = vadd.f32 %v7984, %v8006
          %8011 = vst [vmem:[#allocation5] sm:$0xff] %v8009
          %8012 = vst [vmem:[#allocation5 + $0x8] sm:$0xff] %v8010
        $region56: #{encoder_forward.3} parent=43 // pred_fallthru
          _
        // Predicated region
        $region57: #{encoder_forward.3} parent=43 // pred_check
          %p8013 = pneg %p168
        $region58: #{encoder_forward.3} parent=43 // pred_check_branch
          %8015 = sbr.rel (%p8013) target = $region60
        $region59: #{encoder_forward.3} parent=43 // pred_region
          %8017 = vsyncadd [#allocation6], 0
          %s8019 = sshll.u32 [#allocation5], 4
          %s8020 = int_to_ptr.vmem [resolvable:$true] %s8019
          %s8021 = sshll.u32 %s7, 4
          %s8022 = int_to_ptr.hbm [resolvable:$true] %s8021
          %8024 = dma.vmem_to_hbm [thread:$0]  %s8020, 256, %s8022, [#allocation6]
        $region60: #{encoder_forward.3} parent=43 // pred_fallthru
          _
        // Predicated region
        $region61: #{encoder_forward.3} parent=43 // pred_check
          %p8025 = pneg %p168
        $region62: #{encoder_forward.3} parent=43 // pred_check_branch
          %8027 = sbr.rel (%p8025) target = $region64
        $region63: #{encoder_forward.3} parent=43 // pred_region
          %8029 = dma.done [#allocation6], 256
        $region64: #{encoder_forward.3} parent=43 // pred_fallthru
          _
      $region44: #{encoder_forward.3} parent=5 // pred_fallthru
        _
      %p8030 = scmp.le.s32.totalorder 2, %s14
      // Predicated region
      $region65: #{encoder_forward.3} parent=5 // pred_check
        %p8031 = pneg %p8030
      $region66: #{encoder_forward.3} parent=5 // pred_check_branch
        %8033 = sbr.rel (%p8031) target = $region68
      $region67: #{encoder_forward.3} parent=5 // pred_region
        %s8034 = ssub.s32 %s14, 2
      $region68: #{encoder_forward.3} parent=5 // pred_fallthru
        _
    $region6: #{encoder_forward.3} parent=1 // loop_footer
      %s18 = sadd.s32 1, %s14
    $region7: #{encoder_forward.3} parent=1 // loop_footer_branch
      %13 = sbr.rel target = $region3
    $region8: #{encoder_forward.3} parent=1 // loop_exit
      _
    %8035 = vsyncpa [#allocation6], 1
    %s8036 = scalar_lea.sflag [#allocation6], 1
    %8037 = vsyncpa %s8036, 1
  %8038 = vsyncmov [#allocation4]
  %s8039 = vpop.sfrf %8038
  %p8040 = scmp.eq.s32.totalorder %s8039, 0
  %p8041 = pneg %p8040
  %8043 = shalt.err (%p8041)

</llo_original>
